<compile_context>
chip_gen: v7x
topology: tpu7x:2x2x1
jax: 0.10.0
libtpu: 0.0.40
codegen_flags: <defaults>
</compile_context>

<pallas_src>
import functools

import jax
import jax.numpy as jnp
from jax.experimental import pallas as pl
from jax.experimental.pallas import tpu as pltpu

# ------------------------- model hyper-parameters -------------------------
BASE_CH = 16          # SEANet base channels
STRIDES = (2, 4)      # SEANet downsampling ratios (total /8)
LATENT = 32           # latent / transformer width
NUM_HEADS = 2
MLP_DIM = 64
NUM_QUANTIZERS = 4
CODEBOOK_SIZE = 64
DOWNSAMPLE_STRIDE = 2  # extra frame-rate downsample after SEANet (like Mimi)


# ----------------------------- in-kernel helpers -----------------------------

def _mm(a, b):
    """MXU matmul: bf16 operands, f32 accumulation."""
    return jnp.dot(a.astype(jnp.bfloat16), b.astype(jnp.bfloat16),
                   preferred_element_type=jnp.float32)


def _mm_t(a, b):
    """a @ b.T without materializing a transpose (contract last dims)."""
    return jax.lax.dot_general(a.astype(jnp.bfloat16), b.astype(jnp.bfloat16),
                               (((1,), (1,)), ((), ())),
                               preferred_element_type=jnp.float32)


def _elu(x):
    return jnp.where(x > 0, x, jnp.exp(x) - 1.0)


def _layer_norm(x, g, b, eps=1e-5):
    mu = jnp.mean(x, axis=-1, keepdims=True)
    xc = x - mu
    var = jnp.mean(xc * xc, axis=-1, keepdims=True)
    return xc * jax.lax.rsqrt(var + eps) * g + b


def _phase_select(t_out, ncols, stride):
    """0/1 matrix selecting rows 0, s, 2s, ... (replaces strided sublane loads)."""
    ri = jax.lax.broadcasted_iota(jnp.int32, (t_out, ncols), 0)
    ci = jax.lax.broadcasted_iota(jnp.int32, (t_out, ncols), 1)
    return (ci == ri * stride).astype(jnp.float32)


def _causal_conv(x, w_flat, b, stride, act):
    """Causal Conv1d on a VMEM-resident activation.

    x: (T, Cin) f32 value; w_flat: (K*Cin, Cout); b: (1, Cout).
    Pre-activation is applied once (hoisted out of the tap loop); the K taps
    are gathered im2col-style into one (t_out, K*Cin) patch matrix feeding a
    single MXU matmul.
    """
    t_in, cin = x.shape
    cout = w_flat.shape[-1]
    k = w_flat.shape[0] // cin

    if act == "elu":
        x = _elu(x)
    elif act == "gelu":
        x = jax.nn.gelu(x)

    t_out = -(-t_in // stride)                    # ceil(T / stride), Mimi framing
    pad_left = max(0, k - stride)                 # causal padding_total
    ncols = (t_out - 1) * stride + 1              # stride-1 positions needed
    pad_right = max(0, ncols + k - 1 - (t_in + pad_left))

    parts = []
    if pad_left:
        parts.append(jnp.zeros((pad_left, cin), x.dtype))
    parts.append(x)
    if pad_right:
        parts.append(jnp.zeros((pad_right, cin), x.dtype))
    xp = jnp.concatenate(parts, axis=0) if len(parts) > 1 else x

    if cin == 1:
        # Single input channel (raw audio): broadcast multiply-add on the VPU.
        rows = jnp.zeros((ncols, cout), jnp.float32)
        for kk in range(k):
            rows = rows + xp[kk:kk + ncols, :] * w_flat[kk:kk + 1, :]
        if stride > 1:
            rows = _mm(_phase_select(t_out, ncols, stride), rows)
        return rows + b

    taps = [xp[kk:kk + ncols, :] for kk in range(k)]
    patches = jnp.concatenate(taps, axis=-1) if k > 1 else taps[0]   # (ncols, K*Cin)
    if stride > 1:
        patches = _mm(_phase_select(t_out, ncols, stride), patches)  # pick strided rows
    return _mm(patches, w_flat) + b


def _transformer_layer(x, p):
    """Pre-LN causal transformer layer, fully in-kernel. x: (T, D) f32."""
    t, d = x.shape
    dh = d // NUM_HEADS
    scale = 1.0 / float(dh) ** 0.5

    h = _layer_norm(x, p["ln1_g"], p["ln1_b"])
    qkv = _mm(h, p["wqkv"]) + p["bqkv"]                      # (T, 3D) fused QKV

    ri = jax.lax.broadcasted_iota(jnp.int32, (t, t), 0)
    ci = jax.lax.broadcasted_iota(jnp.int32, (t, t), 1)
    causal = ci <= ri

    attn = jnp.zeros((t, d), jnp.float32)
    for hh in range(NUM_HEADS):
        lo = hh * dh
        q = qkv[:, lo:lo + dh]
        k = qkv[:, d + lo:d + lo + dh]
        v = qkv[:, 2 * d + lo:2 * d + lo + dh]
        s = _mm_t(q, k) * scale                              # (T, T)
        s = jnp.where(causal, s, -1e30)
        m = jnp.max(s, axis=-1, keepdims=True)
        e = jnp.exp(s - m)
        pr = e * pl.reciprocal(jnp.sum(e, axis=-1, keepdims=True), approx=True)
        o = _mm(pr, v)                                       # (T, Dh)
        # fold the head concat into the output projection
        attn = attn + _mm(o, p["wo"][lo:lo + dh, :])
    x = x + attn + p["bo"]

    h = _layer_norm(x, p["ln2_g"], p["ln2_b"])
    h = _mm(h, p["w1"]) + p["b1"]
    h = _mm(jax.nn.gelu(h), p["w2"]) + p["b2"]               # GELU on fc2 input
    return x + h


def _rvq(h, codebooks, cb_sq):
    """All RVQ stages fused; residual stays in vregs. Returns (N, n_q) codes (f32)."""
    n, _ = h.shape
    nq, v, _ = codebooks.shape
    col = jax.lax.broadcasted_iota(jnp.int32, (n, v), 1).astype(jnp.float32)
    qpos = jax.lax.broadcasted_iota(jnp.int32, (n, nq), 1)
    residual = h
    codes = jnp.zeros((n, nq), jnp.float32)
    for qi in range(nq):
        cb = codebooks[qi]                                               # (V, D)
        scores = jax.lax.dot_general(residual, cb, (((1,), (1,)), ((), ())),
                                     preferred_element_type=jnp.float32)  # (N, V)
        dist = cb_sq[qi] - 2.0 * scores        # ||x||^2 omitted (row-constant)
        min_d = jnp.min(dist, axis=-1, keepdims=True)
        # argmin via min + first-match (matches torch.argmin tie-breaking)
        code_q = jnp.min(jnp.where(dist <= min_d, col, float(v)),
                         axis=-1, keepdims=True)                          # (N, 1)
        onehot = (col == code_q).astype(jnp.float32)                      # (N, V)
        quant = jnp.dot(onehot, cb, preferred_element_type=jnp.float32)   # (N, D)
        residual = residual - quant
        codes = jnp.where(qpos == qi, code_q, codes)                      # column qi
    return codes


# =============================== the fused kernel ==============================

def _mimi_encoder_kernel(*refs, treedef):
    x_ref = refs[0]
    o_ref = refs[-1]
    p = jax.tree_util.tree_unflatten(treedef, [r[...] for r in refs[1:-1]])

    x = x_ref[0].astype(jnp.float32)                          # (T, 1)

    # ---- SEANet causal conv encoder (all activations stay in VMEM) ----
    h = _causal_conv(x, p["conv_in_w"], p["conv_in_b"], 1, None)
    for i, s in enumerate(STRIDES):
        r = _causal_conv(h, p[f"b{i}_res1_w"], p[f"b{i}_res1_b"], 1, "elu")
        r = _causal_conv(r, p[f"b{i}_res2_w"], p[f"b{i}_res2_b"], 1, "elu")
        h = h + r                                             # residual skip
        h = _causal_conv(h, p[f"b{i}_down_w"], p[f"b{i}_down_b"], s, "elu")
    h = _causal_conv(h, p["conv_out_w"], p["conv_out_b"], 1, "elu")

    # ---- frame-rate downsample ----
    h = _causal_conv(h, p["down_w"], p["down_b"], DOWNSAMPLE_STRIDE, None)

    # ---- 1-layer causal encoder transformer ----
    h = _transformer_layer(h, p)

    # ---- residual vector quantization -> integer codes ----
    codes = _rvq(h, p["codebooks"], p["cb_sq"])               # (frames, n_q)
    o_ref[0] = codes.astype(jnp.int32)


# =============================== host-side glue ===============================

def _const_index_map(b, *, ndim):
    return (0,) * ndim


def _encoded_frames(t):
    for s in STRIDES:
        t = -(-t // s)
    return -(-t // DOWNSAMPLE_STRIDE)


def _prepare_kernel_params(p):
    """Reshape user-facing params into kernel-friendly 2-D / 3-D arrays."""
    def wflat(w):                     # (K, Cin, Cout) -> (K*Cin, Cout)
        k, cin, cout = w.shape
        return w.reshape(k * cin, cout)

    def row(v):                       # (C,) -> (1, C)
        return v.reshape(1, -1)

    sn = p["seanet"]
    kp = {
        "conv_in_w": wflat(sn["conv_in_w"]), "conv_in_b": row(sn["conv_in_b"]),
        "conv_out_w": wflat(sn["conv_out_w"]), "conv_out_b": row(sn["conv_out_b"]),
        "down_w": wflat(p["down_w"]), "down_b": row(p["down_b"]),
        "codebooks": p["codebooks"],
        "cb_sq": jnp.sum(p["codebooks"] ** 2, axis=-1)[:, None, :],   # (n_q, 1, V)
    }
    for i in range(len(STRIDES)):
        blk = sn[f"block{i}"]
        kp[f"b{i}_res1_w"] = wflat(blk["res1_w"]); kp[f"b{i}_res1_b"] = row(blk["res1_b"])
        kp[f"b{i}_res2_w"] = wflat(blk["res2_w"]); kp[f"b{i}_res2_b"] = row(blk["res2_b"])
        kp[f"b{i}_down_w"] = wflat(blk["down_w"]); kp[f"b{i}_down_b"] = row(blk["down_b"])
    t = p["transformer"]
    kp["ln1_g"] = row(t["ln1_g"]); kp["ln1_b"] = row(t["ln1_b"])
    kp["ln2_g"] = row(t["ln2_g"]); kp["ln2_b"] = row(t["ln2_b"])
    kp["wqkv"] = jnp.concatenate([t["wq"], t["wk"], t["wv"]], axis=1)     # (D, 3D)
    kp["bqkv"] = row(jnp.concatenate([t["bq"], t["bk"], t["bv"]], axis=0))
    kp["wo"] = t["wo"]; kp["bo"] = row(t["bo"])
    kp["w1"] = t["w1"]; kp["b1"] = row(t["b1"])
    kp["w2"] = t["w2"]; kp["b2"] = row(t["b2"])
    return kp


def mimi_encode(x_ncw, params):
    """x_ncw: [B, 1, T] (PyTorch NCW audio) -> codes [B, n_q, frames] int32."""
    x = jnp.transpose(x_ncw, (0, 2, 1)).astype(jnp.float32)   # -> [B, T, 1]
    B, T, _ = x.shape
    frames = _encoded_frames(T)

    kp = _prepare_kernel_params(params)
    leaves, treedef = jax.tree_util.tree_flatten(kp)

    in_specs = [pl.BlockSpec((1, T, 1), lambda b: (b, 0, 0))]
    for leaf in leaves:
        in_specs.append(pl.BlockSpec(
            leaf.shape, functools.partial(_const_index_map, ndim=leaf.ndim)))

    codes = pl.pallas_call(
        functools.partial(_mimi_encoder_kernel, treedef=treedef),
        out_shape=jax.ShapeDtypeStruct((B, frames, NUM_QUANTIZERS), jnp.int32),
        grid=(B,),
        in_specs=in_specs,
        out_specs=pl.BlockSpec((1, frames, NUM_QUANTIZERS), lambda b: (b, 0, 0)),
        compiler_params=pltpu.CompilerParams(dimension_semantics=("parallel",)),
    )(x, *leaves)
    return jnp.transpose(codes, (0, 2, 1))                    # [B, n_q, frames]


# ============================ deterministic weights ===========================

def init_params(key):
    keys = iter(jax.random.split(key, 64))

    def conv_w(k, cin, cout):
        return (jax.random.normal(next(keys), (k, cin, cout), jnp.float32)
                / jnp.sqrt(float(k * cin)))

    def bias(c):
        return 0.01 * jax.random.normal(next(keys), (c,), jnp.float32)

    seanet = {"conv_in_w": conv_w(7, 1, BASE_CH), "conv_in_b": bias(BASE_CH)}
    ch = BASE_CH
    for i, s in enumerate(STRIDES):
        seanet[f"block{i}"] = {
            "res1_w": conv_w(3, ch, ch // 2), "res1_b": bias(ch // 2),
            "res2_w": conv_w(1, ch // 2, ch), "res2_b": bias(ch),
            "down_w": conv_w(2 * s, ch, 2 * ch), "down_b": bias(2 * ch),
        }
        ch *= 2
    seanet["conv_out_w"] = conv_w(3, ch, LATENT)
    seanet["conv_out_b"] = bias(LATENT)

    def dense(din, dout):
        return (jax.random.normal(next(keys), (din, dout), jnp.float32)
                / jnp.sqrt(float(din)))

    transformer = {
        "ln1_g": jnp.ones((LATENT,), jnp.float32), "ln1_b": jnp.zeros((LATENT,), jnp.float32),
        "ln2_g": jnp.ones((LATENT,), jnp.float32), "ln2_b": jnp.zeros((LATENT,), jnp.float32),
        "wq": dense(LATENT, LATENT), "bq": bias(LATENT),
        "wk": dense(LATENT, LATENT), "bk": bias(LATENT),
        "wv": dense(LATENT, LATENT), "bv": bias(LATENT),
        "wo": dense(LATENT, LATENT), "bo": bias(LATENT),
        "w1": dense(LATENT, MLP_DIM), "b1": bias(MLP_DIM),
        "w2": dense(MLP_DIM, LATENT), "b2": bias(LATENT),
    }

    return {
        "seanet": seanet,
        "down_w": conv_w(2 * DOWNSAMPLE_STRIDE, LATENT, LATENT),
        "down_b": bias(LATENT),
        "transformer": transformer,
        "codebooks": jax.random.normal(
            next(keys), (NUM_QUANTIZERS, CODEBOOK_SIZE, LATENT), jnp.float32),
    }


# ==================================== main ====================================

if __name__ == "__main__":
    key = jax.random.PRNGKey(0)
    pkey, xkey = jax.random.split(key)
    params = init_params(pkey)

    B, T = 2, 128
    x = jax.random.normal(xkey, (B, 1, T), jnp.float32)        # [B, C=1, T] NCW audio

    codes = jax.jit(mimi_encode)(x, params)
    jax.block_until_ready(codes)

    frames = T // (STRIDES[0] * STRIDES[1] * DOWNSAMPLE_STRIDE)  # 128/8/2 = 8
    assert codes.shape == (B, NUM_QUANTIZERS, frames), codes.shape
    assert codes.dtype == jnp.int32
    assert bool(jnp.all((codes >= 0) & (codes < CODEBOOK_SIZE)))
    print("KERNEL_OK")
</pallas_src>

<mosaic_0001>
module attributes {stable_mosaic.version = 11 : i64} {
  func.func @_mimi_encoder_kernel(%arg0: i32, %arg1: memref<1x128x1xf32, #tpu.memory_space<vmem>>, %arg2: memref<1x32xf32, #tpu.memory_space<vmem>>, %arg3: memref<64x32xf32, #tpu.memory_space<vmem>>, %arg4: memref<1x8xf32, #tpu.memory_space<vmem>>, %arg5: memref<48x8xf32, #tpu.memory_space<vmem>>, %arg6: memref<1x16xf32, #tpu.memory_space<vmem>>, %arg7: memref<8x16xf32, #tpu.memory_space<vmem>>, %arg8: memref<1x64xf32, #tpu.memory_space<vmem>>, %arg9: memref<1x64xf32, #tpu.memory_space<vmem>>, %arg10: memref<256x64xf32, #tpu.memory_space<vmem>>, %arg11: memref<1x16xf32, #tpu.memory_space<vmem>>, %arg12: memref<96x16xf32, #tpu.memory_space<vmem>>, %arg13: memref<1x32xf32, #tpu.memory_space<vmem>>, %arg14: memref<16x32xf32, #tpu.memory_space<vmem>>, %arg15: memref<1x32xf32, #tpu.memory_space<vmem>>, %arg16: memref<1x32xf32, #tpu.memory_space<vmem>>, %arg17: memref<1x96xf32, #tpu.memory_space<vmem>>, %arg18: memref<4x1x64xf32, #tpu.memory_space<vmem>>, %arg19: memref<4x64x32xf32, #tpu.memory_space<vmem>>, %arg20: memref<1x16xf32, #tpu.memory_space<vmem>>, %arg21: memref<7x16xf32, #tpu.memory_space<vmem>>, %arg22: memref<1x32xf32, #tpu.memory_space<vmem>>, %arg23: memref<192x32xf32, #tpu.memory_space<vmem>>, %arg24: memref<1x32xf32, #tpu.memory_space<vmem>>, %arg25: memref<128x32xf32, #tpu.memory_space<vmem>>, %arg26: memref<1x32xf32, #tpu.memory_space<vmem>>, %arg27: memref<1x32xf32, #tpu.memory_space<vmem>>, %arg28: memref<1x32xf32, #tpu.memory_space<vmem>>, %arg29: memref<1x32xf32, #tpu.memory_space<vmem>>, %arg30: memref<32x64xf32, #tpu.memory_space<vmem>>, %arg31: memref<64x32xf32, #tpu.memory_space<vmem>>, %arg32: memref<32x32xf32, #tpu.memory_space<vmem>>, %arg33: memref<32x96xf32, #tpu.memory_space<vmem>>, %arg34: memref<1x8x4xi32, #tpu.memory_space<vmem>>) attributes {dimension_semantics = [#tpu.dimension_semantics<parallel>], iteration_bounds = array<i64: 2>, scalar_prefetch = 0 : i64, scratch_operands = 0 : i64, tpu.core_type = #tpu.core_type<tc>, window_params = [{transform_indices = @transform_0, window_bounds = array<i64: 1, 128, 1>}, {pipeline_mode = #tpu.pipeline_mode<synchronous>, transform_indices = @transform_1, window_bounds = array<i64: 1, 32>}, {pipeline_mode = #tpu.pipeline_mode<synchronous>, transform_indices = @transform_2, window_bounds = array<i64: 64, 32>}, {pipeline_mode = #tpu.pipeline_mode<synchronous>, transform_indices = @transform_3, window_bounds = array<i64: 1, 8>}, {pipeline_mode = #tpu.pipeline_mode<synchronous>, transform_indices = @transform_4, window_bounds = array<i64: 48, 8>}, {pipeline_mode = #tpu.pipeline_mode<synchronous>, transform_indices = @transform_5, window_bounds = array<i64: 1, 16>}, {pipeline_mode = #tpu.pipeline_mode<synchronous>, transform_indices = @transform_6, window_bounds = array<i64: 8, 16>}, {pipeline_mode = #tpu.pipeline_mode<synchronous>, transform_indices = @transform_7, window_bounds = array<i64: 1, 64>}, {pipeline_mode = #tpu.pipeline_mode<synchronous>, transform_indices = @transform_8, window_bounds = array<i64: 1, 64>}, {pipeline_mode = #tpu.pipeline_mode<synchronous>, transform_indices = @transform_9, window_bounds = array<i64: 256, 64>}, {pipeline_mode = #tpu.pipeline_mode<synchronous>, transform_indices = @transform_10, window_bounds = array<i64: 1, 16>}, {pipeline_mode = #tpu.pipeline_mode<synchronous>, transform_indices = @transform_11, window_bounds = array<i64: 96, 16>}, {pipeline_mode = #tpu.pipeline_mode<synchronous>, transform_indices = @transform_12, window_bounds = array<i64: 1, 32>}, {pipeline_mode = #tpu.pipeline_mode<synchronous>, transform_indices = @transform_13, window_bounds = array<i64: 16, 32>}, {pipeline_mode = #tpu.pipeline_mode<synchronous>, transform_indices = @transform_14, window_bounds = array<i64: 1, 32>}, {pipeline_mode = #tpu.pipeline_mode<synchronous>, transform_indices = @transform_15, window_bounds = array<i64: 1, 32>}, {pipeline_mode = #tpu.pipeline_mode<synchronous>, transform_indices = @transform_16, window_bounds = array<i64: 1, 96>}, {pipeline_mode = #tpu.pipeline_mode<synchronous>, transform_indices = @transform_17, window_bounds = array<i64: 4, 1, 64>}, {pipeline_mode = #tpu.pipeline_mode<synchronous>, transform_indices = @transform_18, window_bounds = array<i64: 4, 64, 32>}, {pipeline_mode = #tpu.pipeline_mode<synchronous>, transform_indices = @transform_19, window_bounds = array<i64: 1, 16>}, {pipeline_mode = #tpu.pipeline_mode<synchronous>, transform_indices = @transform_20, window_bounds = array<i64: 7, 16>}, {pipeline_mode = #tpu.pipeline_mode<synchronous>, transform_indices = @transform_21, window_bounds = array<i64: 1, 32>}, {pipeline_mode = #tpu.pipeline_mode<synchronous>, transform_indices = @transform_22, window_bounds = array<i64: 192, 32>}, {pipeline_mode = #tpu.pipeline_mode<synchronous>, transform_indices = @transform_23, window_bounds = array<i64: 1, 32>}, {pipeline_mode = #tpu.pipeline_mode<synchronous>, transform_indices = @transform_24, window_bounds = array<i64: 128, 32>}, {pipeline_mode = #tpu.pipeline_mode<synchronous>, transform_indices = @transform_25, window_bounds = array<i64: 1, 32>}, {pipeline_mode = #tpu.pipeline_mode<synchronous>, transform_indices = @transform_26, window_bounds = array<i64: 1, 32>}, {pipeline_mode = #tpu.pipeline_mode<synchronous>, transform_indices = @transform_27, window_bounds = array<i64: 1, 32>}, {pipeline_mode = #tpu.pipeline_mode<synchronous>, transform_indices = @transform_28, window_bounds = array<i64: 1, 32>}, {pipeline_mode = #tpu.pipeline_mode<synchronous>, transform_indices = @transform_29, window_bounds = array<i64: 32, 64>}, {pipeline_mode = #tpu.pipeline_mode<synchronous>, transform_indices = @transform_30, window_bounds = array<i64: 64, 32>}, {pipeline_mode = #tpu.pipeline_mode<synchronous>, transform_indices = @transform_31, window_bounds = array<i64: 32, 32>}, {pipeline_mode = #tpu.pipeline_mode<synchronous>, transform_indices = @transform_32, window_bounds = array<i64: 32, 96>}, {transform_indices = @transform_33, window_bounds = array<i64: 1, 8, 4>}]} {
    %c0 = arith.constant 0 : index
    %c0_0 = arith.constant 0 : index
    %0 = vector.load %arg2[%c0, %c0_0] : memref<1x32xf32, #tpu.memory_space<vmem>>, vector<1x32xf32>
    %c0_1 = arith.constant 0 : index
    %c0_2 = arith.constant 0 : index
    %1 = vector.load %arg3[%c0_1, %c0_2] : memref<64x32xf32, #tpu.memory_space<vmem>>, vector<64x32xf32>
    %c0_3 = arith.constant 0 : index
    %c0_4 = arith.constant 0 : index
    %2 = vector.load %arg4[%c0_3, %c0_4] : memref<1x8xf32, #tpu.memory_space<vmem>>, vector<1x8xf32>
    %c0_5 = arith.constant 0 : index
    %c0_6 = arith.constant 0 : index
    %3 = vector.load %arg5[%c0_5, %c0_6] : memref<48x8xf32, #tpu.memory_space<vmem>>, vector<48x8xf32>
    %c0_7 = arith.constant 0 : index
    %c0_8 = arith.constant 0 : index
    %4 = vector.load %arg6[%c0_7, %c0_8] : memref<1x16xf32, #tpu.memory_space<vmem>>, vector<1x16xf32>
    %c0_9 = arith.constant 0 : index
    %c0_10 = arith.constant 0 : index
    %5 = vector.load %arg7[%c0_9, %c0_10] : memref<8x16xf32, #tpu.memory_space<vmem>>, vector<8x16xf32>
    %c0_11 = arith.constant 0 : index
    %c0_12 = arith.constant 0 : index
    %6 = vector.load %arg8[%c0_11, %c0_12] : memref<1x64xf32, #tpu.memory_space<vmem>>, vector<1x64xf32>
    %c0_13 = arith.constant 0 : index
    %c0_14 = arith.constant 0 : index
    %7 = vector.load %arg9[%c0_13, %c0_14] : memref<1x64xf32, #tpu.memory_space<vmem>>, vector<1x64xf32>
    %c0_15 = arith.constant 0 : index
    %c0_16 = arith.constant 0 : index
    %8 = vector.load %arg10[%c0_15, %c0_16] : memref<256x64xf32, #tpu.memory_space<vmem>>, vector<256x64xf32>
    %c0_17 = arith.constant 0 : index
    %c0_18 = arith.constant 0 : index
    %9 = vector.load %arg11[%c0_17, %c0_18] : memref<1x16xf32, #tpu.memory_space<vmem>>, vector<1x16xf32>
    %c0_19 = arith.constant 0 : index
    %c0_20 = arith.constant 0 : index
    %10 = vector.load %arg12[%c0_19, %c0_20] : memref<96x16xf32, #tpu.memory_space<vmem>>, vector<96x16xf32>
    %c0_21 = arith.constant 0 : index
    %c0_22 = arith.constant 0 : index
    %11 = vector.load %arg13[%c0_21, %c0_22] : memref<1x32xf32, #tpu.memory_space<vmem>>, vector<1x32xf32>
    %c0_23 = arith.constant 0 : index
    %c0_24 = arith.constant 0 : index
    %12 = vector.load %arg14[%c0_23, %c0_24] : memref<16x32xf32, #tpu.memory_space<vmem>>, vector<16x32xf32>
    %c0_25 = arith.constant 0 : index
    %c0_26 = arith.constant 0 : index
    %13 = vector.load %arg15[%c0_25, %c0_26] : memref<1x32xf32, #tpu.memory_space<vmem>>, vector<1x32xf32>
    %c0_27 = arith.constant 0 : index
    %c0_28 = arith.constant 0 : index
    %14 = vector.load %arg16[%c0_27, %c0_28] : memref<1x32xf32, #tpu.memory_space<vmem>>, vector<1x32xf32>
    %c0_29 = arith.constant 0 : index
    %c0_30 = arith.constant 0 : index
    %15 = vector.load %arg17[%c0_29, %c0_30] : memref<1x96xf32, #tpu.memory_space<vmem>>, vector<1x96xf32>
    %c0_31 = arith.constant 0 : index
    %c0_32 = arith.constant 0 : index
    %c0_33 = arith.constant 0 : index
    %16 = vector.load %arg18[%c0_31, %c0_32, %c0_33] : memref<4x1x64xf32, #tpu.memory_space<vmem>>, vector<4x1x64xf32>
    %c0_34 = arith.constant 0 : index
    %c0_35 = arith.constant 0 : index
    %c0_36 = arith.constant 0 : index
    %17 = vector.load %arg19[%c0_34, %c0_35, %c0_36] : memref<4x64x32xf32, #tpu.memory_space<vmem>>, vector<4x64x32xf32>
    %c0_37 = arith.constant 0 : index
    %c0_38 = arith.constant 0 : index
    %18 = vector.load %arg20[%c0_37, %c0_38] : memref<1x16xf32, #tpu.memory_space<vmem>>, vector<1x16xf32>
    %c0_39 = arith.constant 0 : index
    %c0_40 = arith.constant 0 : index
    %19 = vector.load %arg21[%c0_39, %c0_40] : memref<7x16xf32, #tpu.memory_space<vmem>>, vector<7x16xf32>
    %c0_41 = arith.constant 0 : index
    %c0_42 = arith.constant 0 : index
    %20 = vector.load %arg22[%c0_41, %c0_42] : memref<1x32xf32, #tpu.memory_space<vmem>>, vector<1x32xf32>
    %c0_43 = arith.constant 0 : index
    %c0_44 = arith.constant 0 : index
    %21 = vector.load %arg23[%c0_43, %c0_44] : memref<192x32xf32, #tpu.memory_space<vmem>>, vector<192x32xf32>
    %c0_45 = arith.constant 0 : index
    %c0_46 = arith.constant 0 : index
    %22 = vector.load %arg24[%c0_45, %c0_46] : memref<1x32xf32, #tpu.memory_space<vmem>>, vector<1x32xf32>
    %c0_47 = arith.constant 0 : index
    %c0_48 = arith.constant 0 : index
    %23 = vector.load %arg25[%c0_47, %c0_48] : memref<128x32xf32, #tpu.memory_space<vmem>>, vector<128x32xf32>
    %c0_49 = arith.constant 0 : index
    %c0_50 = arith.constant 0 : index
    %24 = vector.load %arg26[%c0_49, %c0_50] : memref<1x32xf32, #tpu.memory_space<vmem>>, vector<1x32xf32>
    %c0_51 = arith.constant 0 : index
    %c0_52 = arith.constant 0 : index
    %25 = vector.load %arg27[%c0_51, %c0_52] : memref<1x32xf32, #tpu.memory_space<vmem>>, vector<1x32xf32>
    %c0_53 = arith.constant 0 : index
    %c0_54 = arith.constant 0 : index
    %26 = vector.load %arg28[%c0_53, %c0_54] : memref<1x32xf32, #tpu.memory_space<vmem>>, vector<1x32xf32>
    %c0_55 = arith.constant 0 : index
    %c0_56 = arith.constant 0 : index
    %27 = vector.load %arg29[%c0_55, %c0_56] : memref<1x32xf32, #tpu.memory_space<vmem>>, vector<1x32xf32>
    %c0_57 = arith.constant 0 : index
    %c0_58 = arith.constant 0 : index
    %28 = vector.load %arg30[%c0_57, %c0_58] : memref<32x64xf32, #tpu.memory_space<vmem>>, vector<32x64xf32>
    %c0_59 = arith.constant 0 : index
    %c0_60 = arith.constant 0 : index
    %29 = vector.load %arg31[%c0_59, %c0_60] : memref<64x32xf32, #tpu.memory_space<vmem>>, vector<64x32xf32>
    %c0_61 = arith.constant 0 : index
    %c0_62 = arith.constant 0 : index
    %30 = vector.load %arg32[%c0_61, %c0_62] : memref<32x32xf32, #tpu.memory_space<vmem>>, vector<32x32xf32>
    %c0_63 = arith.constant 0 : index
    %c0_64 = arith.constant 0 : index
    %31 = vector.load %arg33[%c0_63, %c0_64] : memref<32x96xf32, #tpu.memory_space<vmem>>, vector<32x96xf32>
    %c0_65 = arith.constant 0 : index
    %c0_66 = arith.constant 0 : index
    %c0_67 = arith.constant 0 : index
    %32 = vector.load %arg1[%c0_65, %c0_66, %c0_67] : memref<1x128x1xf32, #tpu.memory_space<vmem>>, vector<1x128x1xf32>
    %33 = vector.shape_cast %32 : vector<1x128x1xf32> to vector<128x1xf32>
    %cst = arith.constant 0.000000e+00 : f32
    %34 = vector.broadcast %cst : f32 to vector<6x1xf32>
    %35 = tpu.concatenate %34, %33 in 0 : vector<6x1xf32>, vector<128x1xf32> -> vector<134x1xf32>
    %cst_68 = arith.constant 0.000000e+00 : f32
    %36 = vector.broadcast %cst_68 : f32 to vector<128x16xf32>
    %37 = vector.extract_strided_slice %35 {offsets = [0, 0], sizes = [128, 1], strides = [1, 1]} : vector<134x1xf32> to vector<128x1xf32>
    %38 = vector.extract_strided_slice %19 {offsets = [0, 0], sizes = [1, 16], strides = [1, 1]} : vector<7x16xf32> to vector<1x16xf32>
    %39 = vector.broadcast %37 : vector<128x1xf32> to vector<128x16xf32>
    %40 = vector.broadcast %38 : vector<1x16xf32> to vector<128x16xf32>
    %41 = arith.mulf %39, %40 : vector<128x16xf32>
    %42 = arith.addf %36, %41 : vector<128x16xf32>
    %43 = vector.extract_strided_slice %35 {offsets = [1, 0], sizes = [128, 1], strides = [1, 1]} : vector<134x1xf32> to vector<128x1xf32>
    %44 = vector.extract_strided_slice %19 {offsets = [1, 0], sizes = [1, 16], strides = [1, 1]} : vector<7x16xf32> to vector<1x16xf32>
    %45 = vector.broadcast %43 : vector<128x1xf32> to vector<128x16xf32>
    %46 = vector.broadcast %44 : vector<1x16xf32> to vector<128x16xf32>
    %47 = arith.mulf %45, %46 : vector<128x16xf32>
    %48 = arith.addf %42, %47 : vector<128x16xf32>
    %49 = vector.extract_strided_slice %35 {offsets = [2, 0], sizes = [128, 1], strides = [1, 1]} : vector<134x1xf32> to vector<128x1xf32>
    %50 = vector.extract_strided_slice %19 {offsets = [2, 0], sizes = [1, 16], strides = [1, 1]} : vector<7x16xf32> to vector<1x16xf32>
    %51 = vector.broadcast %49 : vector<128x1xf32> to vector<128x16xf32>
    %52 = vector.broadcast %50 : vector<1x16xf32> to vector<128x16xf32>
    %53 = arith.mulf %51, %52 : vector<128x16xf32>
    %54 = arith.addf %48, %53 : vector<128x16xf32>
    %55 = vector.extract_strided_slice %35 {offsets = [3, 0], sizes = [128, 1], strides = [1, 1]} : vector<134x1xf32> to vector<128x1xf32>
    %56 = vector.extract_strided_slice %19 {offsets = [3, 0], sizes = [1, 16], strides = [1, 1]} : vector<7x16xf32> to vector<1x16xf32>
    %57 = vector.broadcast %55 : vector<128x1xf32> to vector<128x16xf32>
    %58 = vector.broadcast %56 : vector<1x16xf32> to vector<128x16xf32>
    %59 = arith.mulf %57, %58 : vector<128x16xf32>
    %60 = arith.addf %54, %59 : vector<128x16xf32>
    %61 = vector.extract_strided_slice %35 {offsets = [4, 0], sizes = [128, 1], strides = [1, 1]} : vector<134x1xf32> to vector<128x1xf32>
    %62 = vector.extract_strided_slice %19 {offsets = [4, 0], sizes = [1, 16], strides = [1, 1]} : vector<7x16xf32> to vector<1x16xf32>
    %63 = vector.broadcast %61 : vector<128x1xf32> to vector<128x16xf32>
    %64 = vector.broadcast %62 : vector<1x16xf32> to vector<128x16xf32>
    %65 = arith.mulf %63, %64 : vector<128x16xf32>
    %66 = arith.addf %60, %65 : vector<128x16xf32>
    %67 = vector.extract_strided_slice %35 {offsets = [5, 0], sizes = [128, 1], strides = [1, 1]} : vector<134x1xf32> to vector<128x1xf32>
    %68 = vector.extract_strided_slice %19 {offsets = [5, 0], sizes = [1, 16], strides = [1, 1]} : vector<7x16xf32> to vector<1x16xf32>
    %69 = vector.broadcast %67 : vector<128x1xf32> to vector<128x16xf32>
    %70 = vector.broadcast %68 : vector<1x16xf32> to vector<128x16xf32>
    %71 = arith.mulf %69, %70 : vector<128x16xf32>
    %72 = arith.addf %66, %71 : vector<128x16xf32>
    %73 = vector.extract_strided_slice %35 {offsets = [6, 0], sizes = [128, 1], strides = [1, 1]} : vector<134x1xf32> to vector<128x1xf32>
    %74 = vector.extract_strided_slice %19 {offsets = [6, 0], sizes = [1, 16], strides = [1, 1]} : vector<7x16xf32> to vector<1x16xf32>
    %75 = vector.broadcast %73 : vector<128x1xf32> to vector<128x16xf32>
    %76 = vector.broadcast %74 : vector<1x16xf32> to vector<128x16xf32>
    %77 = arith.mulf %75, %76 : vector<128x16xf32>
    %78 = arith.addf %72, %77 : vector<128x16xf32>
    %79 = vector.broadcast %18 : vector<1x16xf32> to vector<128x16xf32>
    %80 = arith.addf %78, %79 : vector<128x16xf32>
    %cst_69 = arith.constant 0.000000e+00 : f32
    %81 = vector.broadcast %cst_69 : f32 to vector<128x16xf32>
    %82 = arith.cmpf ogt, %80, %81 : vector<128x16xf32>
    %83 = math.exp %80 : vector<128x16xf32>
    %cst_70 = arith.constant 1.000000e+00 : f32
    %84 = vector.broadcast %cst_70 : f32 to vector<128x16xf32>
    %85 = arith.subf %83, %84 : vector<128x16xf32>
    %86 = arith.select %82, %80, %85 : vector<128x16xi1>, vector<128x16xf32>
    %cst_71 = arith.constant 0.000000e+00 : f32
    %87 = vector.broadcast %cst_71 : f32 to vector<2x16xf32>
    %88 = tpu.concatenate %87, %86 in 0 : vector<2x16xf32>, vector<128x16xf32> -> vector<130x16xf32>
    %89 = vector.extract_strided_slice %88 {offsets = [0, 0], sizes = [128, 16], strides = [1, 1]} : vector<130x16xf32> to vector<128x16xf32>
    %90 = vector.extract_strided_slice %88 {offsets = [1, 0], sizes = [128, 16], strides = [1, 1]} : vector<130x16xf32> to vector<128x16xf32>
    %91 = vector.extract_strided_slice %88 {offsets = [2, 0], sizes = [128, 16], strides = [1, 1]} : vector<130x16xf32> to vector<128x16xf32>
    %92 = tpu.concatenate %89, %90, %91 in 1 : vector<128x16xf32>, vector<128x16xf32>, vector<128x16xf32> -> vector<128x48xf32>
    %93 = arith.truncf %92 : vector<128x48xf32> to vector<128x48xbf16>
    %94 = arith.truncf %3 : vector<48x8xf32> to vector<48x8xbf16>
    %cst_72 = arith.constant dense<0.000000e+00> : vector<128x8xf32>
    %95 = tpu.matmul %93, %94, %cst_72 {dimension_numbers = #tpu.dot_dimension_numbers<[1], [0], [0], [1], [0, 0, 1, 1], [], []>} : vector<128x48xbf16>, vector<48x8xbf16>, vector<128x8xf32> -> vector<128x8xf32>
    %96 = vector.broadcast %2 : vector<1x8xf32> to vector<128x8xf32>
    %97 = arith.addf %95, %96 : vector<128x8xf32>
    %cst_73 = arith.constant 0.000000e+00 : f32
    %98 = vector.broadcast %cst_73 : f32 to vector<128x8xf32>
    %99 = arith.cmpf ogt, %97, %98 : vector<128x8xf32>
    %100 = math.exp %97 : vector<128x8xf32>
    %cst_74 = arith.constant 1.000000e+00 : f32
    %101 = vector.broadcast %cst_74 : f32 to vector<128x8xf32>
    %102 = arith.subf %100, %101 : vector<128x8xf32>
    %103 = arith.select %99, %97, %102 : vector<128x8xi1>, vector<128x8xf32>
    %104 = arith.truncf %103 : vector<128x8xf32> to vector<128x8xbf16>
    %105 = arith.truncf %5 : vector<8x16xf32> to vector<8x16xbf16>
    %cst_75 = arith.constant dense<0.000000e+00> : vector<128x16xf32>
    %106 = tpu.matmul %104, %105, %cst_75 {dimension_numbers = #tpu.dot_dimension_numbers<[1], [0], [0], [1], [0, 0, 1, 1], [], []>} : vector<128x8xbf16>, vector<8x16xbf16>, vector<128x16xf32> -> vector<128x16xf32>
    %107 = vector.broadcast %4 : vector<1x16xf32> to vector<128x16xf32>
    %108 = arith.addf %106, %107 : vector<128x16xf32>
    %109 = arith.addf %80, %108 : vector<128x16xf32>
    %cst_76 = arith.constant 0.000000e+00 : f32
    %110 = vector.broadcast %cst_76 : f32 to vector<128x16xf32>
    %111 = arith.cmpf ogt, %109, %110 : vector<128x16xf32>
    %112 = math.exp %109 : vector<128x16xf32>
    %cst_77 = arith.constant 1.000000e+00 : f32
    %113 = vector.broadcast %cst_77 : f32 to vector<128x16xf32>
    %114 = arith.subf %112, %113 : vector<128x16xf32>
    %115 = arith.select %111, %109, %114 : vector<128x16xi1>, vector<128x16xf32>
    %cst_78 = arith.constant 0.000000e+00 : f32
    %116 = vector.broadcast %cst_78 : f32 to vector<2x16xf32>
    %117 = tpu.concatenate %116, %115 in 0 : vector<2x16xf32>, vector<128x16xf32> -> vector<130x16xf32>
    %118 = vector.extract_strided_slice %117 {offsets = [0, 0], sizes = [127, 16], strides = [1, 1]} : vector<130x16xf32> to vector<127x16xf32>
    %119 = vector.extract_strided_slice %117 {offsets = [1, 0], sizes = [127, 16], strides = [1, 1]} : vector<130x16xf32> to vector<127x16xf32>
    %120 = vector.extract_strided_slice %117 {offsets = [2, 0], sizes = [127, 16], strides = [1, 1]} : vector<130x16xf32> to vector<127x16xf32>
    %121 = vector.extract_strided_slice %117 {offsets = [3, 0], sizes = [127, 16], strides = [1, 1]} : vector<130x16xf32> to vector<127x16xf32>
    %122 = tpu.concatenate %118, %119, %120, %121 in 1 : vector<127x16xf32>, vector<127x16xf32>, vector<127x16xf32>, vector<127x16xf32> -> vector<127x64xf32>
    %123 = tpu.iota {dimensions = array<i32: 0>} : vector<64x127xi32>
    %124 = tpu.iota {dimensions = array<i32: 1>} : vector<64x127xi32>
    %c2_i32 = arith.constant 2 : i32
    %125 = vector.broadcast %c2_i32 : i32 to vector<64x127xi32>
    %126 = arith.muli %123, %125 : vector<64x127xi32>
    %127 = arith.cmpi eq, %124, %126 : vector<64x127xi32>
    %128 = arith.extui %127 : vector<64x127xi1> to vector<64x127xi32>
    %129 = arith.sitofp %128 : vector<64x127xi32> to vector<64x127xf32>
    %130 = arith.truncf %129 : vector<64x127xf32> to vector<64x127xbf16>
    %131 = arith.truncf %122 : vector<127x64xf32> to vector<127x64xbf16>
    %cst_79 = arith.constant dense<0.000000e+00> : vector<64x64xf32>
    %132 = tpu.matmul %130, %131, %cst_79 {dimension_numbers = #tpu.dot_dimension_numbers<[1], [0], [0], [1], [0, 0, 1, 1], [], []>} : vector<64x127xbf16>, vector<127x64xbf16>, vector<64x64xf32> -> vector<64x64xf32>
    %133 = arith.truncf %132 : vector<64x64xf32> to vector<64x64xbf16>
    %134 = arith.truncf %1 : vector<64x32xf32> to vector<64x32xbf16>
    %cst_80 = arith.constant dense<0.000000e+00> : vector<64x32xf32>
    %135 = tpu.matmul %133, %134, %cst_80 {dimension_numbers = #tpu.dot_dimension_numbers<[1], [0], [0], [1], [0, 0, 1, 1], [], []>} : vector<64x64xbf16>, vector<64x32xbf16>, vector<64x32xf32> -> vector<64x32xf32>
    %136 = vector.broadcast %0 : vector<1x32xf32> to vector<64x32xf32>
    %137 = arith.addf %135, %136 : vector<64x32xf32>
    %cst_81 = arith.constant 0.000000e+00 : f32
    %138 = vector.broadcast %cst_81 : f32 to vector<64x32xf32>
    %139 = arith.cmpf ogt, %137, %138 : vector<64x32xf32>
    %140 = math.exp %137 : vector<64x32xf32>
    %cst_82 = arith.constant 1.000000e+00 : f32
    %141 = vector.broadcast %cst_82 : f32 to vector<64x32xf32>
    %142 = arith.subf %140, %141 : vector<64x32xf32>
    %143 = arith.select %139, %137, %142 : vector<64x32xi1>, vector<64x32xf32>
    %cst_83 = arith.constant 0.000000e+00 : f32
    %144 = vector.broadcast %cst_83 : f32 to vector<2x32xf32>
    %145 = tpu.concatenate %144, %143 in 0 : vector<2x32xf32>, vector<64x32xf32> -> vector<66x32xf32>
    %146 = vector.extract_strided_slice %145 {offsets = [0, 0], sizes = [64, 32], strides = [1, 1]} : vector<66x32xf32> to vector<64x32xf32>
    %147 = vector.extract_strided_slice %145 {offsets = [1, 0], sizes = [64, 32], strides = [1, 1]} : vector<66x32xf32> to vector<64x32xf32>
    %148 = vector.extract_strided_slice %145 {offsets = [2, 0], sizes = [64, 32], strides = [1, 1]} : vector<66x32xf32> to vector<64x32xf32>
    %149 = tpu.concatenate %146, %147, %148 in 1 : vector<64x32xf32>, vector<64x32xf32>, vector<64x32xf32> -> vector<64x96xf32>
    %150 = arith.truncf %149 : vector<64x96xf32> to vector<64x96xbf16>
    %151 = arith.truncf %10 : vector<96x16xf32> to vector<96x16xbf16>
    %cst_84 = arith.constant dense<0.000000e+00> : vector<64x16xf32>
    %152 = tpu.matmul %150, %151, %cst_84 {dimension_numbers = #tpu.dot_dimension_numbers<[1], [0], [0], [1], [0, 0, 1, 1], [], []>} : vector<64x96xbf16>, vector<96x16xbf16>, vector<64x16xf32> -> vector<64x16xf32>
    %153 = vector.broadcast %9 : vector<1x16xf32> to vector<64x16xf32>
    %154 = arith.addf %152, %153 : vector<64x16xf32>
    %cst_85 = arith.constant 0.000000e+00 : f32
    %155 = vector.broadcast %cst_85 : f32 to vector<64x16xf32>
    %156 = arith.cmpf ogt, %154, %155 : vector<64x16xf32>
    %157 = math.exp %154 : vector<64x16xf32>
    %cst_86 = arith.constant 1.000000e+00 : f32
    %158 = vector.broadcast %cst_86 : f32 to vector<64x16xf32>
    %159 = arith.subf %157, %158 : vector<64x16xf32>
    %160 = arith.select %156, %154, %159 : vector<64x16xi1>, vector<64x16xf32>
    %161 = arith.truncf %160 : vector<64x16xf32> to vector<64x16xbf16>
    %162 = arith.truncf %12 : vector<16x32xf32> to vector<16x32xbf16>
    %cst_87 = arith.constant dense<0.000000e+00> : vector<64x32xf32>
    %163 = tpu.matmul %161, %162, %cst_87 {dimension_numbers = #tpu.dot_dimension_numbers<[1], [0], [0], [1], [0, 0, 1, 1], [], []>} : vector<64x16xbf16>, vector<16x32xbf16>, vector<64x32xf32> -> vector<64x32xf32>
    %164 = vector.broadcast %11 : vector<1x32xf32> to vector<64x32xf32>
    %165 = arith.addf %163, %164 : vector<64x32xf32>
    %166 = arith.addf %137, %165 : vector<64x32xf32>
    %cst_88 = arith.constant 0.000000e+00 : f32
    %167 = vector.broadcast %cst_88 : f32 to vector<64x32xf32>
    %168 = arith.cmpf ogt, %166, %167 : vector<64x32xf32>
    %169 = math.exp %166 : vector<64x32xf32>
    %cst_89 = arith.constant 1.000000e+00 : f32
    %170 = vector.broadcast %cst_89 : f32 to vector<64x32xf32>
    %171 = arith.subf %169, %170 : vector<64x32xf32>
    %172 = arith.select %168, %166, %171 : vector<64x32xi1>, vector<64x32xf32>
    %cst_90 = arith.constant 0.000000e+00 : f32
    %173 = vector.broadcast %cst_90 : f32 to vector<4x32xf32>
    %174 = tpu.concatenate %173, %172 in 0 : vector<4x32xf32>, vector<64x32xf32> -> vector<68x32xf32>
    %175 = vector.extract_strided_slice %174 {offsets = [0, 0], sizes = [61, 32], strides = [1, 1]} : vector<68x32xf32> to vector<61x32xf32>
    %176 = vector.extract_strided_slice %174 {offsets = [1, 0], sizes = [61, 32], strides = [1, 1]} : vector<68x32xf32> to vector<61x32xf32>
    %177 = vector.extract_strided_slice %174 {offsets = [2, 0], sizes = [61, 32], strides = [1, 1]} : vector<68x32xf32> to vector<61x32xf32>
    %178 = vector.extract_strided_slice %174 {offsets = [3, 0], sizes = [61, 32], strides = [1, 1]} : vector<68x32xf32> to vector<61x32xf32>
    %179 = vector.extract_strided_slice %174 {offsets = [4, 0], sizes = [61, 32], strides = [1, 1]} : vector<68x32xf32> to vector<61x32xf32>
    %180 = vector.extract_strided_slice %174 {offsets = [5, 0], sizes = [61, 32], strides = [1, 1]} : vector<68x32xf32> to vector<61x32xf32>
    %181 = vector.extract_strided_slice %174 {offsets = [6, 0], sizes = [61, 32], strides = [1, 1]} : vector<68x32xf32> to vector<61x32xf32>
    %182 = vector.extract_strided_slice %174 {offsets = [7, 0], sizes = [61, 32], strides = [1, 1]} : vector<68x32xf32> to vector<61x32xf32>
    %183 = tpu.concatenate %175, %176, %177, %178, %179, %180, %181, %182 in 1 : vector<61x32xf32>, vector<61x32xf32>, vector<61x32xf32>, vector<61x32xf32>, vector<61x32xf32>, vector<61x32xf32>, vector<61x32xf32>, vector<61x32xf32> -> vector<61x256xf32>
    %184 = tpu.iota {dimensions = array<i32: 0>} : vector<16x61xi32>
    %185 = tpu.iota {dimensions = array<i32: 1>} : vector<16x61xi32>
    %c4_i32 = arith.constant 4 : i32
    %186 = vector.broadcast %c4_i32 : i32 to vector<16x61xi32>
    %187 = arith.muli %184, %186 : vector<16x61xi32>
    %188 = arith.cmpi eq, %185, %187 : vector<16x61xi32>
    %189 = arith.extui %188 : vector<16x61xi1> to vector<16x61xi32>
    %190 = arith.sitofp %189 : vector<16x61xi32> to vector<16x61xf32>
    %191 = arith.truncf %190 : vector<16x61xf32> to vector<16x61xbf16>
    %192 = arith.truncf %183 : vector<61x256xf32> to vector<61x256xbf16>
    %cst_91 = arith.constant dense<0.000000e+00> : vector<16x256xf32>
    %193 = tpu.matmul %191, %192, %cst_91 {dimension_numbers = #tpu.dot_dimension_numbers<[1], [0], [0], [1], [0, 0, 1, 1], [], []>} : vector<16x61xbf16>, vector<61x256xbf16>, vector<16x256xf32> -> vector<16x256xf32>
    %194 = arith.truncf %193 : vector<16x256xf32> to vector<16x256xbf16>
    %195 = arith.truncf %8 : vector<256x64xf32> to vector<256x64xbf16>
    %cst_92 = arith.constant dense<0.000000e+00> : vector<16x64xf32>
    %196 = tpu.matmul %194, %195, %cst_92 {dimension_numbers = #tpu.dot_dimension_numbers<[1], [0], [0], [1], [0, 0, 1, 1], [], []>} : vector<16x256xbf16>, vector<256x64xbf16>, vector<16x64xf32> -> vector<16x64xf32>
    %197 = vector.broadcast %7 : vector<1x64xf32> to vector<16x64xf32>
    %198 = arith.addf %196, %197 : vector<16x64xf32>
    %cst_93 = arith.constant 0.000000e+00 : f32
    %199 = vector.broadcast %cst_93 : f32 to vector<16x64xf32>
    %200 = arith.cmpf ogt, %198, %199 : vector<16x64xf32>
    %201 = math.exp %198 : vector<16x64xf32>
    %cst_94 = arith.constant 1.000000e+00 : f32
    %202 = vector.broadcast %cst_94 : f32 to vector<16x64xf32>
    %203 = arith.subf %201, %202 : vector<16x64xf32>
    %204 = arith.select %200, %198, %203 : vector<16x64xi1>, vector<16x64xf32>
    %cst_95 = arith.constant 0.000000e+00 : f32
    %205 = vector.broadcast %cst_95 : f32 to vector<2x64xf32>
    %206 = tpu.concatenate %205, %204 in 0 : vector<2x64xf32>, vector<16x64xf32> -> vector<18x64xf32>
    %207 = vector.extract_strided_slice %206 {offsets = [0, 0], sizes = [16, 64], strides = [1, 1]} : vector<18x64xf32> to vector<16x64xf32>
    %208 = vector.extract_strided_slice %206 {offsets = [1, 0], sizes = [16, 64], strides = [1, 1]} : vector<18x64xf32> to vector<16x64xf32>
    %209 = vector.extract_strided_slice %206 {offsets = [2, 0], sizes = [16, 64], strides = [1, 1]} : vector<18x64xf32> to vector<16x64xf32>
    %210 = tpu.concatenate %207, %208, %209 in 1 : vector<16x64xf32>, vector<16x64xf32>, vector<16x64xf32> -> vector<16x192xf32>
    %211 = arith.truncf %210 : vector<16x192xf32> to vector<16x192xbf16>
    %212 = arith.truncf %21 : vector<192x32xf32> to vector<192x32xbf16>
    %cst_96 = arith.constant dense<0.000000e+00> : vector<16x32xf32>
    %213 = tpu.matmul %211, %212, %cst_96 {dimension_numbers = #tpu.dot_dimension_numbers<[1], [0], [0], [1], [0, 0, 1, 1], [], []>} : vector<16x192xbf16>, vector<192x32xbf16>, vector<16x32xf32> -> vector<16x32xf32>
    %214 = vector.broadcast %20 : vector<1x32xf32> to vector<16x32xf32>
    %215 = arith.addf %213, %214 : vector<16x32xf32>
    %cst_97 = arith.constant 0.000000e+00 : f32
    %216 = vector.broadcast %cst_97 : f32 to vector<2x32xf32>
    %217 = tpu.concatenate %216, %215 in 0 : vector<2x32xf32>, vector<16x32xf32> -> vector<18x32xf32>
    %218 = vector.extract_strided_slice %217 {offsets = [0, 0], sizes = [15, 32], strides = [1, 1]} : vector<18x32xf32> to vector<15x32xf32>
    %219 = vector.extract_strided_slice %217 {offsets = [1, 0], sizes = [15, 32], strides = [1, 1]} : vector<18x32xf32> to vector<15x32xf32>
    %220 = vector.extract_strided_slice %217 {offsets = [2, 0], sizes = [15, 32], strides = [1, 1]} : vector<18x32xf32> to vector<15x32xf32>
    %221 = vector.extract_strided_slice %217 {offsets = [3, 0], sizes = [15, 32], strides = [1, 1]} : vector<18x32xf32> to vector<15x32xf32>
    %222 = tpu.concatenate %218, %219, %220, %221 in 1 : vector<15x32xf32>, vector<15x32xf32>, vector<15x32xf32>, vector<15x32xf32> -> vector<15x128xf32>
    %223 = tpu.iota {dimensions = array<i32: 0>} : vector<8x15xi32>
    %224 = tpu.iota {dimensions = array<i32: 1>} : vector<8x15xi32>
    %c2_i32_98 = arith.constant 2 : i32
    %225 = vector.broadcast %c2_i32_98 : i32 to vector<8x15xi32>
    %226 = arith.muli %223, %225 : vector<8x15xi32>
    %227 = arith.cmpi eq, %224, %226 : vector<8x15xi32>
    %228 = arith.extui %227 : vector<8x15xi1> to vector<8x15xi32>
    %229 = arith.sitofp %228 : vector<8x15xi32> to vector<8x15xf32>
    %230 = arith.truncf %229 : vector<8x15xf32> to vector<8x15xbf16>
    %231 = arith.truncf %222 : vector<15x128xf32> to vector<15x128xbf16>
    %cst_99 = arith.constant dense<0.000000e+00> : vector<8x128xf32>
    %232 = tpu.matmul %230, %231, %cst_99 {dimension_numbers = #tpu.dot_dimension_numbers<[1], [0], [0], [1], [0, 0, 1, 1], [], []>} : vector<8x15xbf16>, vector<15x128xbf16>, vector<8x128xf32> -> vector<8x128xf32>
    %233 = arith.truncf %232 : vector<8x128xf32> to vector<8x128xbf16>
    %234 = arith.truncf %23 : vector<128x32xf32> to vector<128x32xbf16>
    %cst_100 = arith.constant dense<0.000000e+00> : vector<8x32xf32>
    %235 = tpu.matmul %233, %234, %cst_100 {dimension_numbers = #tpu.dot_dimension_numbers<[1], [0], [0], [1], [0, 0, 1, 1], [], []>} : vector<8x128xbf16>, vector<128x32xbf16>, vector<8x32xf32> -> vector<8x32xf32>
    %236 = vector.broadcast %22 : vector<1x32xf32> to vector<8x32xf32>
    %237 = arith.addf %235, %236 : vector<8x32xf32>
    %cst_101 = arith.constant dense<0.000000e+00> : vector<8xf32>
    %238 = vector.multi_reduction <add>, %237, %cst_101 [1] : vector<8x32xf32> to vector<8xf32>
    %239 = vector.shape_cast %238 : vector<8xf32> to vector<8x1xf32>
    %cst_102 = arith.constant 3.200000e+01 : f32
    %240 = vector.broadcast %cst_102 : f32 to vector<8x1xf32>
    %241 = arith.divf %239, %240 : vector<8x1xf32>
    %242 = vector.broadcast %241 : vector<8x1xf32> to vector<8x32xf32>
    %243 = arith.subf %237, %242 : vector<8x32xf32>
    %244 = arith.mulf %243, %243 : vector<8x32xf32>
    %cst_103 = arith.constant dense<0.000000e+00> : vector<8xf32>
    %245 = vector.multi_reduction <add>, %244, %cst_103 [1] : vector<8x32xf32> to vector<8xf32>
    %246 = vector.shape_cast %245 : vector<8xf32> to vector<8x1xf32>
    %cst_104 = arith.constant 3.200000e+01 : f32
    %247 = vector.broadcast %cst_104 : f32 to vector<8x1xf32>
    %248 = arith.divf %246, %247 : vector<8x1xf32>
    %cst_105 = arith.constant 9.99999974E-6 : f32
    %249 = vector.broadcast %cst_105 : f32 to vector<8x1xf32>
    %250 = arith.addf %248, %249 : vector<8x1xf32>
    %251 = math.rsqrt %250 : vector<8x1xf32>
    %252 = vector.broadcast %251 : vector<8x1xf32> to vector<8x32xf32>
    %253 = arith.mulf %243, %252 : vector<8x32xf32>
    %254 = vector.broadcast %25 : vector<1x32xf32> to vector<8x32xf32>
    %255 = arith.mulf %253, %254 : vector<8x32xf32>
    %256 = vector.broadcast %24 : vector<1x32xf32> to vector<8x32xf32>
    %257 = arith.addf %255, %256 : vector<8x32xf32>
    %258 = arith.truncf %257 : vector<8x32xf32> to vector<8x32xbf16>
    %259 = arith.truncf %31 : vector<32x96xf32> to vector<32x96xbf16>
    %cst_106 = arith.constant dense<0.000000e+00> : vector<8x96xf32>
    %260 = tpu.matmul %258, %259, %cst_106 {dimension_numbers = #tpu.dot_dimension_numbers<[1], [0], [0], [1], [0, 0, 1, 1], [], []>} : vector<8x32xbf16>, vector<32x96xbf16>, vector<8x96xf32> -> vector<8x96xf32>
    %261 = vector.broadcast %15 : vector<1x96xf32> to vector<8x96xf32>
    %262 = arith.addf %260, %261 : vector<8x96xf32>
    %263 = tpu.iota {dimensions = array<i32: 0>} : vector<8x8xi32>
    %264 = tpu.iota {dimensions = array<i32: 1>} : vector<8x8xi32>
    %265 = arith.cmpi sle, %264, %263 : vector<8x8xi32>
    %cst_107 = arith.constant 0.000000e+00 : f32
    %266 = vector.broadcast %cst_107 : f32 to vector<8x32xf32>
    %267 = vector.extract_strided_slice %262 {offsets = [0, 0], sizes = [8, 16], strides = [1, 1]} : vector<8x96xf32> to vector<8x16xf32>
    %268 = vector.extract_strided_slice %262 {offsets = [0, 32], sizes = [8, 16], strides = [1, 1]} : vector<8x96xf32> to vector<8x16xf32>
    %269 = vector.extract_strided_slice %262 {offsets = [0, 64], sizes = [8, 16], strides = [1, 1]} : vector<8x96xf32> to vector<8x16xf32>
    %270 = arith.truncf %267 : vector<8x16xf32> to vector<8x16xbf16>
    %271 = arith.truncf %268 : vector<8x16xf32> to vector<8x16xbf16>
    %cst_108 = arith.constant dense<0.000000e+00> : vector<8x8xf32>
    %272 = tpu.matmul %270, %271, %cst_108 {dimension_numbers = #tpu.dot_dimension_numbers<[1], [1], [0], [0], [0, 0, 1, 0], [], []>} : vector<8x16xbf16>, vector<8x16xbf16>, vector<8x8xf32> -> vector<8x8xf32>
    %cst_109 = arith.constant 2.500000e-01 : f32
    %273 = vector.broadcast %cst_109 : f32 to vector<8x8xf32>
    %274 = arith.mulf %272, %273 : vector<8x8xf32>
    %cst_110 = arith.constant -1.000000e+30 : f32
    %275 = vector.broadcast %cst_110 : f32 to vector<8x8xf32>
    %276 = arith.select %265, %274, %275 : vector<8x8xi1>, vector<8x8xf32>
    %cst_111 = arith.constant dense<0xFF800000> : vector<8xf32>
    %277 = vector.multi_reduction <maximumf>, %276, %cst_111 [1] : vector<8x8xf32> to vector<8xf32>
    %278 = vector.shape_cast %277 : vector<8xf32> to vector<8x1xf32>
    %279 = vector.broadcast %278 : vector<8x1xf32> to vector<8x8xf32>
    %280 = arith.subf %276, %279 : vector<8x8xf32>
    %281 = math.exp %280 : vector<8x8xf32>
    %cst_112 = arith.constant dense<0.000000e+00> : vector<8xf32>
    %282 = vector.multi_reduction <add>, %281, %cst_112 [1] : vector<8x8xf32> to vector<8xf32>
    %283 = vector.shape_cast %282 : vector<8xf32> to vector<8x1xf32>
    %284 = tpu.reciprocal %283 {approx = true} : vector<8x1xf32> -> vector<8x1xf32>
    %285 = vector.broadcast %284 : vector<8x1xf32> to vector<8x8xf32>
    %286 = arith.mulf %281, %285 : vector<8x8xf32>
    %287 = arith.truncf %286 : vector<8x8xf32> to vector<8x8xbf16>
    %288 = arith.truncf %269 : vector<8x16xf32> to vector<8x16xbf16>
    %cst_113 = arith.constant dense<0.000000e+00> : vector<8x16xf32>
    %289 = tpu.matmul %287, %288, %cst_113 {dimension_numbers = #tpu.dot_dimension_numbers<[1], [0], [0], [1], [0, 0, 1, 1], [], []>} : vector<8x8xbf16>, vector<8x16xbf16>, vector<8x16xf32> -> vector<8x16xf32>
    %290 = vector.extract_strided_slice %30 {offsets = [0, 0], sizes = [16, 32], strides = [1, 1]} : vector<32x32xf32> to vector<16x32xf32>
    %291 = arith.truncf %289 : vector<8x16xf32> to vector<8x16xbf16>
    %292 = arith.truncf %290 : vector<16x32xf32> to vector<16x32xbf16>
    %cst_114 = arith.constant dense<0.000000e+00> : vector<8x32xf32>
    %293 = tpu.matmul %291, %292, %cst_114 {dimension_numbers = #tpu.dot_dimension_numbers<[1], [0], [0], [1], [0, 0, 1, 1], [], []>} : vector<8x16xbf16>, vector<16x32xbf16>, vector<8x32xf32> -> vector<8x32xf32>
    %294 = arith.addf %266, %293 : vector<8x32xf32>
    %295 = vector.extract_strided_slice %262 {offsets = [0, 16], sizes = [8, 16], strides = [1, 1]} : vector<8x96xf32> to vector<8x16xf32>
    %296 = vector.extract_strided_slice %262 {offsets = [0, 48], sizes = [8, 16], strides = [1, 1]} : vector<8x96xf32> to vector<8x16xf32>
    %297 = vector.extract_strided_slice %262 {offsets = [0, 80], sizes = [8, 16], strides = [1, 1]} : vector<8x96xf32> to vector<8x16xf32>
    %298 = arith.truncf %295 : vector<8x16xf32> to vector<8x16xbf16>
    %299 = arith.truncf %296 : vector<8x16xf32> to vector<8x16xbf16>
    %cst_115 = arith.constant dense<0.000000e+00> : vector<8x8xf32>
    %300 = tpu.matmul %298, %299, %cst_115 {dimension_numbers = #tpu.dot_dimension_numbers<[1], [1], [0], [0], [0, 0, 1, 0], [], []>} : vector<8x16xbf16>, vector<8x16xbf16>, vector<8x8xf32> -> vector<8x8xf32>
    %cst_116 = arith.constant 2.500000e-01 : f32
    %301 = vector.broadcast %cst_116 : f32 to vector<8x8xf32>
    %302 = arith.mulf %300, %301 : vector<8x8xf32>
    %cst_117 = arith.constant -1.000000e+30 : f32
    %303 = vector.broadcast %cst_117 : f32 to vector<8x8xf32>
    %304 = arith.select %265, %302, %303 : vector<8x8xi1>, vector<8x8xf32>
    %cst_118 = arith.constant dense<0xFF800000> : vector<8xf32>
    %305 = vector.multi_reduction <maximumf>, %304, %cst_118 [1] : vector<8x8xf32> to vector<8xf32>
    %306 = vector.shape_cast %305 : vector<8xf32> to vector<8x1xf32>
    %307 = vector.broadcast %306 : vector<8x1xf32> to vector<8x8xf32>
    %308 = arith.subf %304, %307 : vector<8x8xf32>
    %309 = math.exp %308 : vector<8x8xf32>
    %cst_119 = arith.constant dense<0.000000e+00> : vector<8xf32>
    %310 = vector.multi_reduction <add>, %309, %cst_119 [1] : vector<8x8xf32> to vector<8xf32>
    %311 = vector.shape_cast %310 : vector<8xf32> to vector<8x1xf32>
    %312 = tpu.reciprocal %311 {approx = true} : vector<8x1xf32> -> vector<8x1xf32>
    %313 = vector.broadcast %312 : vector<8x1xf32> to vector<8x8xf32>
    %314 = arith.mulf %309, %313 : vector<8x8xf32>
    %315 = arith.truncf %314 : vector<8x8xf32> to vector<8x8xbf16>
    %316 = arith.truncf %297 : vector<8x16xf32> to vector<8x16xbf16>
    %cst_120 = arith.constant dense<0.000000e+00> : vector<8x16xf32>
    %317 = tpu.matmul %315, %316, %cst_120 {dimension_numbers = #tpu.dot_dimension_numbers<[1], [0], [0], [1], [0, 0, 1, 1], [], []>} : vector<8x8xbf16>, vector<8x16xbf16>, vector<8x16xf32> -> vector<8x16xf32>
    %318 = vector.extract_strided_slice %30 {offsets = [16, 0], sizes = [16, 32], strides = [1, 1]} : vector<32x32xf32> to vector<16x32xf32>
    %319 = arith.truncf %317 : vector<8x16xf32> to vector<8x16xbf16>
    %320 = arith.truncf %318 : vector<16x32xf32> to vector<16x32xbf16>
    %cst_121 = arith.constant dense<0.000000e+00> : vector<8x32xf32>
    %321 = tpu.matmul %319, %320, %cst_121 {dimension_numbers = #tpu.dot_dimension_numbers<[1], [0], [0], [1], [0, 0, 1, 1], [], []>} : vector<8x16xbf16>, vector<16x32xbf16>, vector<8x32xf32> -> vector<8x32xf32>
    %322 = arith.addf %294, %321 : vector<8x32xf32>
    %323 = arith.addf %237, %322 : vector<8x32xf32>
    %324 = vector.broadcast %14 : vector<1x32xf32> to vector<8x32xf32>
    %325 = arith.addf %323, %324 : vector<8x32xf32>
    %cst_122 = arith.constant dense<0.000000e+00> : vector<8xf32>
    %326 = vector.multi_reduction <add>, %325, %cst_122 [1] : vector<8x32xf32> to vector<8xf32>
    %327 = vector.shape_cast %326 : vector<8xf32> to vector<8x1xf32>
    %cst_123 = arith.constant 3.200000e+01 : f32
    %328 = vector.broadcast %cst_123 : f32 to vector<8x1xf32>
    %329 = arith.divf %327, %328 : vector<8x1xf32>
    %330 = vector.broadcast %329 : vector<8x1xf32> to vector<8x32xf32>
    %331 = arith.subf %325, %330 : vector<8x32xf32>
    %332 = arith.mulf %331, %331 : vector<8x32xf32>
    %cst_124 = arith.constant dense<0.000000e+00> : vector<8xf32>
    %333 = vector.multi_reduction <add>, %332, %cst_124 [1] : vector<8x32xf32> to vector<8xf32>
    %334 = vector.shape_cast %333 : vector<8xf32> to vector<8x1xf32>
    %cst_125 = arith.constant 3.200000e+01 : f32
    %335 = vector.broadcast %cst_125 : f32 to vector<8x1xf32>
    %336 = arith.divf %334, %335 : vector<8x1xf32>
    %cst_126 = arith.constant 9.99999974E-6 : f32
    %337 = vector.broadcast %cst_126 : f32 to vector<8x1xf32>
    %338 = arith.addf %336, %337 : vector<8x1xf32>
    %339 = math.rsqrt %338 : vector<8x1xf32>
    %340 = vector.broadcast %339 : vector<8x1xf32> to vector<8x32xf32>
    %341 = arith.mulf %331, %340 : vector<8x32xf32>
    %342 = vector.broadcast %27 : vector<1x32xf32> to vector<8x32xf32>
    %343 = arith.mulf %341, %342 : vector<8x32xf32>
    %344 = vector.broadcast %26 : vector<1x32xf32> to vector<8x32xf32>
    %345 = arith.addf %343, %344 : vector<8x32xf32>
    %346 = arith.truncf %345 : vector<8x32xf32> to vector<8x32xbf16>
    %347 = arith.truncf %28 : vector<32x64xf32> to vector<32x64xbf16>
    %cst_127 = arith.constant dense<0.000000e+00> : vector<8x64xf32>
    %348 = tpu.matmul %346, %347, %cst_127 {dimension_numbers = #tpu.dot_dimension_numbers<[1], [0], [0], [1], [0, 0, 1, 1], [], []>} : vector<8x32xbf16>, vector<32x64xbf16>, vector<8x64xf32> -> vector<8x64xf32>
    %349 = vector.broadcast %6 : vector<1x64xf32> to vector<8x64xf32>
    %350 = arith.addf %348, %349 : vector<8x64xf32>
    %351 = arith.mulf %350, %350 : vector<8x64xf32>
    %352 = arith.mulf %350, %351 : vector<8x64xf32>
    %cst_128 = arith.constant 4.471500e-02 : f32
    %353 = vector.broadcast %cst_128 : f32 to vector<8x64xf32>
    %354 = arith.mulf %353, %352 : vector<8x64xf32>
    %355 = arith.addf %350, %354 : vector<8x64xf32>
    %cst_129 = arith.constant 0.797884583 : f32
    %356 = vector.broadcast %cst_129 : f32 to vector<8x64xf32>
    %357 = arith.mulf %356, %355 : vector<8x64xf32>
    %358 = math.tanh %357 : vector<8x64xf32>
    %cst_130 = arith.constant 1.000000e+00 : f32
    %359 = vector.broadcast %cst_130 : f32 to vector<8x64xf32>
    %360 = arith.addf %359, %358 : vector<8x64xf32>
    %cst_131 = arith.constant 5.000000e-01 : f32
    %361 = vector.broadcast %cst_131 : f32 to vector<8x64xf32>
    %362 = arith.mulf %361, %360 : vector<8x64xf32>
    %363 = arith.mulf %350, %362 : vector<8x64xf32>
    %364 = arith.truncf %363 : vector<8x64xf32> to vector<8x64xbf16>
    %365 = arith.truncf %29 : vector<64x32xf32> to vector<64x32xbf16>
    %cst_132 = arith.constant dense<0.000000e+00> : vector<8x32xf32>
    %366 = tpu.matmul %364, %365, %cst_132 {dimension_numbers = #tpu.dot_dimension_numbers<[1], [0], [0], [1], [0, 0, 1, 1], [], []>} : vector<8x64xbf16>, vector<64x32xbf16>, vector<8x32xf32> -> vector<8x32xf32>
    %367 = vector.broadcast %13 : vector<1x32xf32> to vector<8x32xf32>
    %368 = arith.addf %366, %367 : vector<8x32xf32>
    %369 = arith.addf %325, %368 : vector<8x32xf32>
    %370 = tpu.iota {dimensions = array<i32: 1>} : vector<8x64xi32>
    %371 = arith.sitofp %370 : vector<8x64xi32> to vector<8x64xf32>
    %372 = tpu.iota {dimensions = array<i32: 1>} : vector<8x4xi32>
    %cst_133 = arith.constant 0.000000e+00 : f32
    %373 = vector.broadcast %cst_133 : f32 to vector<8x4xf32>
    %374 = vector.extract_strided_slice %17 {offsets = [0, 0, 0], sizes = [1, 64, 32], strides = [1, 1, 1]} : vector<4x64x32xf32> to vector<1x64x32xf32>
    %375 = vector.shape_cast %374 : vector<1x64x32xf32> to vector<64x32xf32>
    %cst_134 = arith.constant dense<0.000000e+00> : vector<8x64xf32>
    %376 = tpu.matmul %369, %375, %cst_134 {dimension_numbers = #tpu.dot_dimension_numbers<[1], [1], [0], [0], [0, 0, 1, 0], [], []>} : vector<8x32xf32>, vector<64x32xf32>, vector<8x64xf32> -> vector<8x64xf32>
    %377 = vector.extract_strided_slice %16 {offsets = [0, 0, 0], sizes = [1, 1, 64], strides = [1, 1, 1]} : vector<4x1x64xf32> to vector<1x1x64xf32>
    %378 = vector.shape_cast %377 : vector<1x1x64xf32> to vector<1x64xf32>
    %cst_135 = arith.constant 2.000000e+00 : f32
    %379 = vector.broadcast %cst_135 : f32 to vector<8x64xf32>
    %380 = arith.mulf %379, %376 : vector<8x64xf32>
    %381 = vector.broadcast %378 : vector<1x64xf32> to vector<8x64xf32>
    %382 = arith.subf %381, %380 : vector<8x64xf32>
    %cst_136 = arith.constant dense<0x7F800000> : vector<8xf32>
    %383 = vector.multi_reduction <minimumf>, %382, %cst_136 [1] : vector<8x64xf32> to vector<8xf32>
    %384 = vector.shape_cast %383 : vector<8xf32> to vector<8x1xf32>
    %385 = vector.broadcast %384 : vector<8x1xf32> to vector<8x64xf32>
    %386 = arith.cmpf ole, %382, %385 : vector<8x64xf32>
    %cst_137 = arith.constant 6.400000e+01 : f32
    %387 = vector.broadcast %cst_137 : f32 to vector<8x64xf32>
    %388 = arith.select %386, %371, %387 : vector<8x64xi1>, vector<8x64xf32>
    %cst_138 = arith.constant dense<0x7F800000> : vector<8xf32>
    %389 = vector.multi_reduction <minimumf>, %388, %cst_138 [1] : vector<8x64xf32> to vector<8xf32>
    %390 = vector.shape_cast %389 : vector<8xf32> to vector<8x1xf32>
    %391 = vector.broadcast %390 : vector<8x1xf32> to vector<8x64xf32>
    %392 = arith.cmpf oeq, %371, %391 : vector<8x64xf32>
    %393 = arith.extui %392 : vector<8x64xi1> to vector<8x64xi32>
    %394 = arith.sitofp %393 : vector<8x64xi32> to vector<8x64xf32>
    %cst_139 = arith.constant dense<0.000000e+00> : vector<8x32xf32>
    %395 = tpu.matmul %394, %375, %cst_139 {dimension_numbers = #tpu.dot_dimension_numbers<[1], [0], [0], [1], [0, 0, 1, 1], [], []>} : vector<8x64xf32>, vector<64x32xf32>, vector<8x32xf32> -> vector<8x32xf32>
    %396 = arith.subf %369, %395 : vector<8x32xf32>
    %c0_i32 = arith.constant 0 : i32
    %397 = vector.broadcast %c0_i32 : i32 to vector<8x4xi32>
    %398 = arith.cmpi eq, %372, %397 : vector<8x4xi32>
    %399 = vector.shape_cast %390 : vector<8x1xf32> to vector<8x1xf32>
    %400 = vector.broadcast %399 : vector<8x1xf32> to vector<8x4xf32>
    %401 = arith.select %398, %400, %373 : vector<8x4xi1>, vector<8x4xf32>
    %402 = vector.extract_strided_slice %17 {offsets = [1, 0, 0], sizes = [1, 64, 32], strides = [1, 1, 1]} : vector<4x64x32xf32> to vector<1x64x32xf32>
    %403 = vector.shape_cast %402 : vector<1x64x32xf32> to vector<64x32xf32>
    %cst_140 = arith.constant dense<0.000000e+00> : vector<8x64xf32>
    %404 = tpu.matmul %396, %403, %cst_140 {dimension_numbers = #tpu.dot_dimension_numbers<[1], [1], [0], [0], [0, 0, 1, 0], [], []>} : vector<8x32xf32>, vector<64x32xf32>, vector<8x64xf32> -> vector<8x64xf32>
    %405 = vector.extract_strided_slice %16 {offsets = [1, 0, 0], sizes = [1, 1, 64], strides = [1, 1, 1]} : vector<4x1x64xf32> to vector<1x1x64xf32>
    %406 = vector.shape_cast %405 : vector<1x1x64xf32> to vector<1x64xf32>
    %cst_141 = arith.constant 2.000000e+00 : f32
    %407 = vector.broadcast %cst_141 : f32 to vector<8x64xf32>
    %408 = arith.mulf %407, %404 : vector<8x64xf32>
    %409 = vector.broadcast %406 : vector<1x64xf32> to vector<8x64xf32>
    %410 = arith.subf %409, %408 : vector<8x64xf32>
    %cst_142 = arith.constant dense<0x7F800000> : vector<8xf32>
    %411 = vector.multi_reduction <minimumf>, %410, %cst_142 [1] : vector<8x64xf32> to vector<8xf32>
    %412 = vector.shape_cast %411 : vector<8xf32> to vector<8x1xf32>
    %413 = vector.broadcast %412 : vector<8x1xf32> to vector<8x64xf32>
    %414 = arith.cmpf ole, %410, %413 : vector<8x64xf32>
    %cst_143 = arith.constant 6.400000e+01 : f32
    %415 = vector.broadcast %cst_143 : f32 to vector<8x64xf32>
    %416 = arith.select %414, %371, %415 : vector<8x64xi1>, vector<8x64xf32>
    %cst_144 = arith.constant dense<0x7F800000> : vector<8xf32>
    %417 = vector.multi_reduction <minimumf>, %416, %cst_144 [1] : vector<8x64xf32> to vector<8xf32>
    %418 = vector.shape_cast %417 : vector<8xf32> to vector<8x1xf32>
    %419 = vector.broadcast %418 : vector<8x1xf32> to vector<8x64xf32>
    %420 = arith.cmpf oeq, %371, %419 : vector<8x64xf32>
    %421 = arith.extui %420 : vector<8x64xi1> to vector<8x64xi32>
    %422 = arith.sitofp %421 : vector<8x64xi32> to vector<8x64xf32>
    %cst_145 = arith.constant dense<0.000000e+00> : vector<8x32xf32>
    %423 = tpu.matmul %422, %403, %cst_145 {dimension_numbers = #tpu.dot_dimension_numbers<[1], [0], [0], [1], [0, 0, 1, 1], [], []>} : vector<8x64xf32>, vector<64x32xf32>, vector<8x32xf32> -> vector<8x32xf32>
    %424 = arith.subf %396, %423 : vector<8x32xf32>
    %c1_i32 = arith.constant 1 : i32
    %425 = vector.broadcast %c1_i32 : i32 to vector<8x4xi32>
    %426 = arith.cmpi eq, %372, %425 : vector<8x4xi32>
    %427 = vector.shape_cast %418 : vector<8x1xf32> to vector<8x1xf32>
    %428 = vector.broadcast %427 : vector<8x1xf32> to vector<8x4xf32>
    %429 = arith.select %426, %428, %401 : vector<8x4xi1>, vector<8x4xf32>
    %430 = vector.extract_strided_slice %17 {offsets = [2, 0, 0], sizes = [1, 64, 32], strides = [1, 1, 1]} : vector<4x64x32xf32> to vector<1x64x32xf32>
    %431 = vector.shape_cast %430 : vector<1x64x32xf32> to vector<64x32xf32>
    %cst_146 = arith.constant dense<0.000000e+00> : vector<8x64xf32>
    %432 = tpu.matmul %424, %431, %cst_146 {dimension_numbers = #tpu.dot_dimension_numbers<[1], [1], [0], [0], [0, 0, 1, 0], [], []>} : vector<8x32xf32>, vector<64x32xf32>, vector<8x64xf32> -> vector<8x64xf32>
    %433 = vector.extract_strided_slice %16 {offsets = [2, 0, 0], sizes = [1, 1, 64], strides = [1, 1, 1]} : vector<4x1x64xf32> to vector<1x1x64xf32>
    %434 = vector.shape_cast %433 : vector<1x1x64xf32> to vector<1x64xf32>
    %cst_147 = arith.constant 2.000000e+00 : f32
    %435 = vector.broadcast %cst_147 : f32 to vector<8x64xf32>
    %436 = arith.mulf %435, %432 : vector<8x64xf32>
    %437 = vector.broadcast %434 : vector<1x64xf32> to vector<8x64xf32>
    %438 = arith.subf %437, %436 : vector<8x64xf32>
    %cst_148 = arith.constant dense<0x7F800000> : vector<8xf32>
    %439 = vector.multi_reduction <minimumf>, %438, %cst_148 [1] : vector<8x64xf32> to vector<8xf32>
    %440 = vector.shape_cast %439 : vector<8xf32> to vector<8x1xf32>
    %441 = vector.broadcast %440 : vector<8x1xf32> to vector<8x64xf32>
    %442 = arith.cmpf ole, %438, %441 : vector<8x64xf32>
    %cst_149 = arith.constant 6.400000e+01 : f32
    %443 = vector.broadcast %cst_149 : f32 to vector<8x64xf32>
    %444 = arith.select %442, %371, %443 : vector<8x64xi1>, vector<8x64xf32>
    %cst_150 = arith.constant dense<0x7F800000> : vector<8xf32>
    %445 = vector.multi_reduction <minimumf>, %444, %cst_150 [1] : vector<8x64xf32> to vector<8xf32>
    %446 = vector.shape_cast %445 : vector<8xf32> to vector<8x1xf32>
    %447 = vector.broadcast %446 : vector<8x1xf32> to vector<8x64xf32>
    %448 = arith.cmpf oeq, %371, %447 : vector<8x64xf32>
    %449 = arith.extui %448 : vector<8x64xi1> to vector<8x64xi32>
    %450 = arith.sitofp %449 : vector<8x64xi32> to vector<8x64xf32>
    %cst_151 = arith.constant dense<0.000000e+00> : vector<8x32xf32>
    %451 = tpu.matmul %450, %431, %cst_151 {dimension_numbers = #tpu.dot_dimension_numbers<[1], [0], [0], [1], [0, 0, 1, 1], [], []>} : vector<8x64xf32>, vector<64x32xf32>, vector<8x32xf32> -> vector<8x32xf32>
    %452 = arith.subf %424, %451 : vector<8x32xf32>
    %c2_i32_152 = arith.constant 2 : i32
    %453 = vector.broadcast %c2_i32_152 : i32 to vector<8x4xi32>
    %454 = arith.cmpi eq, %372, %453 : vector<8x4xi32>
    %455 = vector.shape_cast %446 : vector<8x1xf32> to vector<8x1xf32>
    %456 = vector.broadcast %455 : vector<8x1xf32> to vector<8x4xf32>
    %457 = arith.select %454, %456, %429 : vector<8x4xi1>, vector<8x4xf32>
    %458 = vector.extract_strided_slice %17 {offsets = [3, 0, 0], sizes = [1, 64, 32], strides = [1, 1, 1]} : vector<4x64x32xf32> to vector<1x64x32xf32>
    %459 = vector.shape_cast %458 : vector<1x64x32xf32> to vector<64x32xf32>
    %cst_153 = arith.constant dense<0.000000e+00> : vector<8x64xf32>
    %460 = tpu.matmul %452, %459, %cst_153 {dimension_numbers = #tpu.dot_dimension_numbers<[1], [1], [0], [0], [0, 0, 1, 0], [], []>} : vector<8x32xf32>, vector<64x32xf32>, vector<8x64xf32> -> vector<8x64xf32>
    %461 = vector.extract_strided_slice %16 {offsets = [3, 0, 0], sizes = [1, 1, 64], strides = [1, 1, 1]} : vector<4x1x64xf32> to vector<1x1x64xf32>
    %462 = vector.shape_cast %461 : vector<1x1x64xf32> to vector<1x64xf32>
    %cst_154 = arith.constant 2.000000e+00 : f32
    %463 = vector.broadcast %cst_154 : f32 to vector<8x64xf32>
    %464 = arith.mulf %463, %460 : vector<8x64xf32>
    %465 = vector.broadcast %462 : vector<1x64xf32> to vector<8x64xf32>
    %466 = arith.subf %465, %464 : vector<8x64xf32>
    %cst_155 = arith.constant dense<0x7F800000> : vector<8xf32>
    %467 = vector.multi_reduction <minimumf>, %466, %cst_155 [1] : vector<8x64xf32> to vector<8xf32>
    %468 = vector.shape_cast %467 : vector<8xf32> to vector<8x1xf32>
    %469 = vector.broadcast %468 : vector<8x1xf32> to vector<8x64xf32>
    %470 = arith.cmpf ole, %466, %469 : vector<8x64xf32>
    %cst_156 = arith.constant 6.400000e+01 : f32
    %471 = vector.broadcast %cst_156 : f32 to vector<8x64xf32>
    %472 = arith.select %470, %371, %471 : vector<8x64xi1>, vector<8x64xf32>
    %cst_157 = arith.constant dense<0x7F800000> : vector<8xf32>
    %473 = vector.multi_reduction <minimumf>, %472, %cst_157 [1] : vector<8x64xf32> to vector<8xf32>
    %474 = vector.shape_cast %473 : vector<8xf32> to vector<8x1xf32>
    %c3_i32 = arith.constant 3 : i32
    %475 = vector.broadcast %c3_i32 : i32 to vector<8x4xi32>
    %476 = arith.cmpi eq, %372, %475 : vector<8x4xi32>
    %477 = vector.shape_cast %474 : vector<8x1xf32> to vector<8x1xf32>
    %478 = vector.broadcast %477 : vector<8x1xf32> to vector<8x4xf32>
    %479 = arith.select %476, %478, %457 : vector<8x4xi1>, vector<8x4xf32>
    %480 = arith.fptosi %479 : vector<8x4xf32> to vector<8x4xi32>
    %c0_158 = arith.constant 0 : index
    %c0_159 = arith.constant 0 : index
    %c0_160 = arith.constant 0 : index
    %481 = vector.load %arg34[%c0_158, %c0_159, %c0_160] : memref<1x8x4xi32, #tpu.memory_space<vmem>>, vector<1x8x4xi32>
    %482 = vector.shape_cast %481 : vector<1x8x4xi32> to vector<8x4xi32>
    %483 = vector.shape_cast %480 : vector<8x4xi32> to vector<1x8x4xi32>
    tpu.vector_store %arg34[%c0_158, %c0_159, %c0_160], %483 {strides = array<i32>} : memref<1x8x4xi32, #tpu.memory_space<vmem>>, vector<1x8x4xi32>,
    return
  }
  func.func @transform_0(%arg0: i32) -> (i32, i32, i32) {
    %c0_i32 = arith.constant 0 : i32
    %c0_i32_0 = arith.constant 0 : i32
    %c0_i32_1 = arith.constant 0 : i32
    return %arg0, %c0_i32, %c0_i32_0 : i32, i32, i32
  }
  func.func @transform_1(%arg0: i32) -> (i32, i32) {
    %c0_i32 = arith.constant 0 : i32
    %c0_i32_0 = arith.constant 0 : i32
    %c0_i32_1 = arith.constant 0 : i32
    return %c0_i32, %c0_i32_0 : i32, i32
  }
  func.func @transform_2(%arg0: i32) -> (i32, i32) {
    %c0_i32 = arith.constant 0 : i32
    %c0_i32_0 = arith.constant 0 : i32
    %c0_i32_1 = arith.constant 0 : i32
    return %c0_i32, %c0_i32_0 : i32, i32
  }
  func.func @transform_3(%arg0: i32) -> (i32, i32) {
    %c0_i32 = arith.constant 0 : i32
    %c0_i32_0 = arith.constant 0 : i32
    %c0_i32_1 = arith.constant 0 : i32
    return %c0_i32, %c0_i32_0 : i32, i32
  }
  func.func @transform_4(%arg0: i32) -> (i32, i32) {
    %c0_i32 = arith.constant 0 : i32
    %c0_i32_0 = arith.constant 0 : i32
    %c0_i32_1 = arith.constant 0 : i32
    return %c0_i32, %c0_i32_0 : i32, i32
  }
  func.func @transform_5(%arg0: i32) -> (i32, i32) {
    %c0_i32 = arith.constant 0 : i32
    %c0_i32_0 = arith.constant 0 : i32
    %c0_i32_1 = arith.constant 0 : i32
    return %c0_i32, %c0_i32_0 : i32, i32
  }
  func.func @transform_6(%arg0: i32) -> (i32, i32) {
    %c0_i32 = arith.constant 0 : i32
    %c0_i32_0 = arith.constant 0 : i32
    %c0_i32_1 = arith.constant 0 : i32
    return %c0_i32, %c0_i32_0 : i32, i32
  }
  func.func @transform_7(%arg0: i32) -> (i32, i32) {
    %c0_i32 = arith.constant 0 : i32
    %c0_i32_0 = arith.constant 0 : i32
    %c0_i32_1 = arith.constant 0 : i32
    return %c0_i32, %c0_i32_0 : i32, i32
  }
  func.func @transform_8(%arg0: i32) -> (i32, i32) {
    %c0_i32 = arith.constant 0 : i32
    %c0_i32_0 = arith.constant 0 : i32
    %c0_i32_1 = arith.constant 0 : i32
    return %c0_i32, %c0_i32_0 : i32, i32
  }
  func.func @transform_9(%arg0: i32) -> (i32, i32) {
    %c0_i32 = arith.constant 0 : i32
    %c0_i32_0 = arith.constant 0 : i32
    %c0_i32_1 = arith.constant 0 : i32
    return %c0_i32, %c0_i32_0 : i32, i32
  }
  func.func @transform_10(%arg0: i32) -> (i32, i32) {
    %c0_i32 = arith.constant 0 : i32
    %c0_i32_0 = arith.constant 0 : i32
    %c0_i32_1 = arith.constant 0 : i32
    return %c0_i32, %c0_i32_0 : i32, i32
  }
  func.func @transform_11(%arg0: i32) -> (i32, i32) {
    %c0_i32 = arith.constant 0 : i32
    %c0_i32_0 = arith.constant 0 : i32
    %c0_i32_1 = arith.constant 0 : i32
    return %c0_i32, %c0_i32_0 : i32, i32
  }
  func.func @transform_12(%arg0: i32) -> (i32, i32) {
    %c0_i32 = arith.constant 0 : i32
    %c0_i32_0 = arith.constant 0 : i32
    %c0_i32_1 = arith.constant 0 : i32
    return %c0_i32, %c0_i32_0 : i32, i32
  }
  func.func @transform_13(%arg0: i32) -> (i32, i32) {
    %c0_i32 = arith.constant 0 : i32
    %c0_i32_0 = arith.constant 0 : i32
    %c0_i32_1 = arith.constant 0 : i32
    return %c0_i32, %c0_i32_0 : i32, i32
  }
  func.func @transform_14(%arg0: i32) -> (i32, i32) {
    %c0_i32 = arith.constant 0 : i32
    %c0_i32_0 = arith.constant 0 : i32
    %c0_i32_1 = arith.constant 0 : i32
    return %c0_i32, %c0_i32_0 : i32, i32
  }
  func.func @transform_15(%arg0: i32) -> (i32, i32) {
    %c0_i32 = arith.constant 0 : i32
    %c0_i32_0 = arith.constant 0 : i32
    %c0_i32_1 = arith.constant 0 : i32
    return %c0_i32, %c0_i32_0 : i32, i32
  }
  func.func @transform_16(%arg0: i32) -> (i32, i32) {
    %c0_i32 = arith.constant 0 : i32
    %c0_i32_0 = arith.constant 0 : i32
    %c0_i32_1 = arith.constant 0 : i32
    return %c0_i32, %c0_i32_0 : i32, i32
  }
  func.func @transform_17(%arg0: i32) -> (i32, i32, i32) {
    %c0_i32 = arith.constant 0 : i32
    %c0_i32_0 = arith.constant 0 : i32
    %c0_i32_1 = arith.constant 0 : i32
    %c0_i32_2 = arith.constant 0 : i32
    return %c0_i32, %c0_i32_0, %c0_i32_1 : i32, i32, i32
  }
  func.func @transform_18(%arg0: i32) -> (i32, i32, i32) {
    %c0_i32 = arith.constant 0 : i32
    %c0_i32_0 = arith.constant 0 : i32
    %c0_i32_1 = arith.constant 0 : i32
    %c0_i32_2 = arith.constant 0 : i32
    return %c0_i32, %c0_i32_0, %c0_i32_1 : i32, i32, i32
  }
  func.func @transform_19(%arg0: i32) -> (i32, i32) {
    %c0_i32 = arith.constant 0 : i32
    %c0_i32_0 = arith.constant 0 : i32
    %c0_i32_1 = arith.constant 0 : i32
    return %c0_i32, %c0_i32_0 : i32, i32
  }
  func.func @transform_20(%arg0: i32) -> (i32, i32) {
    %c0_i32 = arith.constant 0 : i32
    %c0_i32_0 = arith.constant 0 : i32
    %c0_i32_1 = arith.constant 0 : i32
    return %c0_i32, %c0_i32_0 : i32, i32
  }
  func.func @transform_21(%arg0: i32) -> (i32, i32) {
    %c0_i32 = arith.constant 0 : i32
    %c0_i32_0 = arith.constant 0 : i32
    %c0_i32_1 = arith.constant 0 : i32
    return %c0_i32, %c0_i32_0 : i32, i32
  }
  func.func @transform_22(%arg0: i32) -> (i32, i32) {
    %c0_i32 = arith.constant 0 : i32
    %c0_i32_0 = arith.constant 0 : i32
    %c0_i32_1 = arith.constant 0 : i32
    return %c0_i32, %c0_i32_0 : i32, i32
  }
  func.func @transform_23(%arg0: i32) -> (i32, i32) {
    %c0_i32 = arith.constant 0 : i32
    %c0_i32_0 = arith.constant 0 : i32
    %c0_i32_1 = arith.constant 0 : i32
    return %c0_i32, %c0_i32_0 : i32, i32
  }
  func.func @transform_24(%arg0: i32) -> (i32, i32) {
    %c0_i32 = arith.constant 0 : i32
    %c0_i32_0 = arith.constant 0 : i32
    %c0_i32_1 = arith.constant 0 : i32
    return %c0_i32, %c0_i32_0 : i32, i32
  }
  func.func @transform_25(%arg0: i32) -> (i32, i32) {
    %c0_i32 = arith.constant 0 : i32
    %c0_i32_0 = arith.constant 0 : i32
    %c0_i32_1 = arith.constant 0 : i32
    return %c0_i32, %c0_i32_0 : i32, i32
  }
  func.func @transform_26(%arg0: i32) -> (i32, i32) {
    %c0_i32 = arith.constant 0 : i32
    %c0_i32_0 = arith.constant 0 : i32
    %c0_i32_1 = arith.constant 0 : i32
    return %c0_i32, %c0_i32_0 : i32, i32
  }
  func.func @transform_27(%arg0: i32) -> (i32, i32) {
    %c0_i32 = arith.constant 0 : i32
    %c0_i32_0 = arith.constant 0 : i32
    %c0_i32_1 = arith.constant 0 : i32
    return %c0_i32, %c0_i32_0 : i32, i32
  }
  func.func @transform_28(%arg0: i32) -> (i32, i32) {
    %c0_i32 = arith.constant 0 : i32
    %c0_i32_0 = arith.constant 0 : i32
    %c0_i32_1 = arith.constant 0 : i32
    return %c0_i32, %c0_i32_0 : i32, i32
  }
  func.func @transform_29(%arg0: i32) -> (i32, i32) {
    %c0_i32 = arith.constant 0 : i32
    %c0_i32_0 = arith.constant 0 : i32
    %c0_i32_1 = arith.constant 0 : i32
    return %c0_i32, %c0_i32_0 : i32, i32
  }
  func.func @transform_30(%arg0: i32) -> (i32, i32) {
    %c0_i32 = arith.constant 0 : i32
    %c0_i32_0 = arith.constant 0 : i32
    %c0_i32_1 = arith.constant 0 : i32
    return %c0_i32, %c0_i32_0 : i32, i32
  }
  func.func @transform_31(%arg0: i32) -> (i32, i32) {
    %c0_i32 = arith.constant 0 : i32
    %c0_i32_0 = arith.constant 0 : i32
    %c0_i32_1 = arith.constant 0 : i32
    return %c0_i32, %c0_i32_0 : i32, i32
  }
  func.func @transform_32(%arg0: i32) -> (i32, i32) {
    %c0_i32 = arith.constant 0 : i32
    %c0_i32_0 = arith.constant 0 : i32
    %c0_i32_1 = arith.constant 0 : i32
    return %c0_i32, %c0_i32_0 : i32, i32
  }
  func.func @transform_33(%arg0: i32) -> (i32, i32, i32) {
    %c0_i32 = arith.constant 0 : i32
    %c0_i32_0 = arith.constant 0 : i32
    %c0_i32_1 = arith.constant 0 : i32
    return %arg0, %c0_i32, %c0_i32_0 : i32, i32, i32
  }
}

</mosaic_0001>

<llo_original>
// kernel: mimi_encode.1
$region0: #{mimi_encode.1}
  #allocation0 [shape = 'u32[]', space=smem, size = 0x4, offset = 0x4, fixed_abs, tag = 'smem constant byte address 0x4 - core index']
  #allocation1 [shape = 'u32[144,128]{1,0:T(1,128)}', space=vmem, size = 0x12000, scoped, tag = 'internal scratch']
  %s0 = inlined_call_operand.smem [shape: u32[34], index: -1, kind: input, shape index: {}]
  %s1 = sld [smem:[%s0]]
  %s2 = scalar_lea.smem %s0, 1
  %s3 = sld [smem:[%s2]]
  %s4 = scalar_lea.smem %s0, 2
  %s5 = sld [smem:[%s4]]
  %s6 = scalar_lea.smem %s0, 3
  %s7 = sld [smem:[%s6]]
  %s8 = scalar_lea.smem %s0, 4
  %s9 = sld [smem:[%s8]]
  %s10 = scalar_lea.smem %s0, 5
  %s11 = sld [smem:[%s10]]
  %s12 = scalar_lea.smem %s0, 6
  %s13 = sld [smem:[%s12]]
  %s14 = scalar_lea.smem %s0, 7
  %s15 = sld [smem:[%s14]]
  %s16 = scalar_lea.smem %s0, 8
  %s17 = sld [smem:[%s16]]
  %s18 = scalar_lea.smem %s0, 9
  %s19 = sld [smem:[%s18]]
  %s20 = scalar_lea.smem %s0, 10
  %s21 = sld [smem:[%s20]]
  %s22 = scalar_lea.smem %s0, 11
  %s23 = sld [smem:[%s22]]
  %s24 = scalar_lea.smem %s0, 12
  %s25 = sld [smem:[%s24]]
  %s26 = scalar_lea.smem %s0, 13
  %s27 = sld [smem:[%s26]]
  %s28 = scalar_lea.smem %s0, 14
  %s29 = sld [smem:[%s28]]
  %s30 = scalar_lea.smem %s0, 15
  %s31 = sld [smem:[%s30]]
  %s32 = scalar_lea.smem %s0, 16
  %s33 = sld [smem:[%s32]]
  %s34 = scalar_lea.smem %s0, 17
  %s35 = sld [smem:[%s34]]
  %s36 = scalar_lea.smem %s0, 18
  %s37 = sld [smem:[%s36]]
  %s38 = scalar_lea.smem %s0, 19
  %s39 = sld [smem:[%s38]]
  %s40 = scalar_lea.smem %s0, 20
  %s41 = sld [smem:[%s40]]
  %s42 = scalar_lea.smem %s0, 21
  %s43 = sld [smem:[%s42]]
  %s44 = scalar_lea.smem %s0, 22
  %s45 = sld [smem:[%s44]]
  %s46 = scalar_lea.smem %s0, 23
  %s47 = sld [smem:[%s46]]
  %s48 = scalar_lea.smem %s0, 24
  %s49 = sld [smem:[%s48]]
  %s50 = scalar_lea.smem %s0, 25
  %s51 = sld [smem:[%s50]]
  %s52 = scalar_lea.smem %s0, 26
  %s53 = sld [smem:[%s52]]
  %s54 = scalar_lea.smem %s0, 27
  %s55 = sld [smem:[%s54]]
  %s56 = scalar_lea.smem %s0, 28
  %s57 = sld [smem:[%s56]]
  %s58 = scalar_lea.smem %s0, 29
  %s59 = sld [smem:[%s58]]
  %s60 = scalar_lea.smem %s0, 30
  %s61 = sld [smem:[%s60]]
  %s62 = scalar_lea.smem %s0, 31
  %s63 = sld [smem:[%s62]]
  %s64 = scalar_lea.smem %s0, 32
  %s65 = sld [smem:[%s64]]
  %s66 = scalar_lea.smem %s0, 33
  %s67 = sld [smem:[%s66]]
  %s68 = sld [smem:[#allocation0]]
  $region165: #{mimi_encode.1} parent=0
    _
  %s70 = ssub.s32 1, %s68
  %s71 = scalar_select 0, %s70, %s68
  loop: start=0, step=1, limit=4
  $region2: #{mimi_encode.1} parent=0 // loop_pre_header
    _
  $region3: #{mimi_encode.1} parent=0 // loop_header
    %s73 = sphi 0, %s77
    %p74 = scmp.ge.s32.totalorder %s73, 4
    %s83 = sphi 0, %s85
    %s86 = sphi 0, %s83
    %s87 = sphi 0, %s86
    %s103 = sphi 0, %s87
    %s107 = sphi 0, %s107
    %s109 = sphi 0, %s107
    %s110 = sphi 0, %s109
    %s124 = sphi 0, %s110
    %s128 = sphi 0, %s128
    %s130 = sphi 0, %s128
    %s131 = sphi 0, %s130
    %s145 = sphi 0, %s131
    %s149 = sphi 0, %s149
    %s151 = sphi 0, %s149
    %s152 = sphi 0, %s151
    %s166 = sphi 0, %s152
    %s170 = sphi 0, %s170
    %s172 = sphi 0, %s170
    %s173 = sphi 0, %s172
    %s187 = sphi 0, %s173
    %s191 = sphi 0, %s191
    %s193 = sphi 0, %s191
    %s194 = sphi 0, %s193
    %s208 = sphi 0, %s194
    %s212 = sphi 0, %s212
    %s214 = sphi 0, %s212
    %s215 = sphi 0, %s214
    %s229 = sphi 0, %s215
    %s233 = sphi 0, %s233
    %s235 = sphi 0, %s233
    %s236 = sphi 0, %s235
    %s250 = sphi 0, %s236
    %s254 = sphi 0, %s254
    %s256 = sphi 0, %s254
    %s257 = sphi 0, %s256
    %s271 = sphi 0, %s257
    %s275 = sphi 0, %s275
    %s277 = sphi 0, %s275
    %s278 = sphi 0, %s277
    %s292 = sphi 0, %s278
    %s296 = sphi 0, %s296
    %s298 = sphi 0, %s296
    %s299 = sphi 0, %s298
    %s313 = sphi 0, %s299
    %s317 = sphi 0, %s317
    %s319 = sphi 0, %s317
    %s320 = sphi 0, %s319
    %s334 = sphi 0, %s320
    %s338 = sphi 0, %s338
    %s340 = sphi 0, %s338
    %s341 = sphi 0, %s340
    %s355 = sphi 0, %s341
    %s359 = sphi 0, %s359
    %s361 = sphi 0, %s359
    %s362 = sphi 0, %s361
    %s376 = sphi 0, %s362
    %s380 = sphi 0, %s380
    %s382 = sphi 0, %s380
    %s383 = sphi 0, %s382
    %s397 = sphi 0, %s383
    %s401 = sphi 0, %s401
    %s403 = sphi 0, %s401
    %s404 = sphi 0, %s403
    %s418 = sphi 0, %s404
    %s422 = sphi 0, %s422
    %s424 = sphi 0, %s422
    %s425 = sphi 0, %s424
    %s439 = sphi 0, %s425
    %s443 = sphi 0, %s443
    %s445 = sphi 0, %s443
    %s446 = sphi 0, %s445
    %s460 = sphi 0, %s446
    %s464 = sphi 0, %s464
    %s466 = sphi 0, %s464
    %s467 = sphi 0, %s466
    %s481 = sphi 0, %s467
    %s485 = sphi 0, %s485
    %s487 = sphi 0, %s485
    %s488 = sphi 0, %s487
    %s502 = sphi 0, %s488
    %s506 = sphi 0, %s506
    %s508 = sphi 0, %s506
    %s509 = sphi 0, %s508
    %s523 = sphi 0, %s509
    %s527 = sphi 0, %s527
    %s529 = sphi 0, %s527
    %s530 = sphi 0, %s529
    %s544 = sphi 0, %s530
    %s548 = sphi 0, %s548
    %s550 = sphi 0, %s548
    %s551 = sphi 0, %s550
    %s565 = sphi 0, %s551
    %s569 = sphi 0, %s569
    %s571 = sphi 0, %s569
    %s572 = sphi 0, %s571
    %s586 = sphi 0, %s572
    %s590 = sphi 0, %s590
    %s592 = sphi 0, %s590
    %s593 = sphi 0, %s592
    %s607 = sphi 0, %s593
    %s611 = sphi 0, %s611
    %s613 = sphi 0, %s611
    %s614 = sphi 0, %s613
    %s628 = sphi 0, %s614
    %s632 = sphi 0, %s632
    %s634 = sphi 0, %s632
    %s635 = sphi 0, %s634
    %s649 = sphi 0, %s635
    %s653 = sphi 0, %s653
    %s655 = sphi 0, %s653
    %s656 = sphi 0, %s655
    %s670 = sphi 0, %s656
    %s674 = sphi 0, %s674
    %s676 = sphi 0, %s674
    %s677 = sphi 0, %s676
    %s691 = sphi 0, %s677
    %s695 = sphi 0, %s695
    %s697 = sphi 0, %s695
    %s698 = sphi 0, %s697
    %s712 = sphi 0, %s698
    %s716 = sphi 0, %s716
    %s718 = sphi 0, %s716
    %s719 = sphi 0, %s718
    %s733 = sphi 0, %s719
    %s737 = sphi 0, %s737
    %s739 = sphi 0, %s737
    %s740 = sphi 0, %s739
    %s754 = sphi 0, %s740
    %s758 = sphi 0, %s758
    %s760 = sphi 0, %s758
    %s761 = sphi 0, %s760
    %s775 = sphi 0, %s761
    %s781 = sphi 0, %s783
    %s784 = sphi 0, %s781
    %s785 = sphi 0, %s784
    %s801 = sphi 0, %s785
  $region4: #{mimi_encode.1} parent=0 // loop_header_branch
    %76 = sbr.rel (%p74) target = $region8
  $region5: #{mimi_encode.1} parent=0 // loop_body
    %s78 = ssub.s32 %s73, 1
    %s79 = ssub.s32 %s73, 2
    %s80 = sadd.s32 %s73, 1
    %s81 = ssub.s32 %s73, %s80
    %p82 = scmp.eq.s32.totalorder %s81, 0
    %s84 = sadd.s32 %s83, 1
    %s85 = scalar_select %p82, %s83, %s84
    %p88 = pneg %p82
    %p89 = scmp.eq.s32.totalorder %s73, 1
    %p90 = por %p88, %p89
    %p91 = scmp.ne.s32.totalorder %s83, %s86
    %p92 = scmp.eq.s32.totalorder %s73, 0
    %p93 = por %p91, %p92
    %p94 = scmp.ne.s32.totalorder %s83, %s86
    %p95 = scmp.eq.s32.totalorder %s78, 1
    %p96 = por %p94, %p95
    %p97 = scmp.ne.s32.totalorder %s86, %s87
    %p98 = scmp.eq.s32.totalorder %s78, 0
    %p99 = por %p97, %p98
    %p100 = scmp.ne.s32.totalorder %s86, %s87
    %p101 = scmp.eq.s32.totalorder %s79, 1
    %p102 = por %p100, %p101
    %p104 = scmp.ne.s32.totalorder %s87, %s103
    %p105 = scmp.eq.s32.totalorder %s79, 0
    %p106 = por %p104, %p105
    %s108 = sadd.s32 %s107, 1
    %p111 = scmp.eq.s32.totalorder %s73, 1
    %p112 = scmp.ne.s32.totalorder %s107, %s109
    %p113 = scmp.eq.s32.totalorder %s73, 0
    %p114 = por %p112, %p113
    %p115 = scmp.ne.s32.totalorder %s107, %s109
    %p116 = scmp.eq.s32.totalorder %s78, 1
    %p117 = por %p115, %p116
    %p118 = scmp.ne.s32.totalorder %s109, %s110
    %p119 = scmp.eq.s32.totalorder %s78, 0
    %p120 = por %p118, %p119
    %p121 = scmp.ne.s32.totalorder %s109, %s110
    %p122 = scmp.eq.s32.totalorder %s79, 1
    %p123 = por %p121, %p122
    %p125 = scmp.ne.s32.totalorder %s110, %s124
    %p126 = scmp.eq.s32.totalorder %s79, 0
    %p127 = por %p125, %p126
    %s129 = sadd.s32 %s128, 1
    %p132 = scmp.eq.s32.totalorder %s73, 1
    %p133 = scmp.ne.s32.totalorder %s128, %s130
    %p134 = scmp.eq.s32.totalorder %s73, 0
    %p135 = por %p133, %p134
    %p136 = scmp.ne.s32.totalorder %s128, %s130
    %p137 = scmp.eq.s32.totalorder %s78, 1
    %p138 = por %p136, %p137
    %p139 = scmp.ne.s32.totalorder %s130, %s131
    %p140 = scmp.eq.s32.totalorder %s78, 0
    %p141 = por %p139, %p140
    %p142 = scmp.ne.s32.totalorder %s130, %s131
    %p143 = scmp.eq.s32.totalorder %s79, 1
    %p144 = por %p142, %p143
    %p146 = scmp.ne.s32.totalorder %s131, %s145
    %p147 = scmp.eq.s32.totalorder %s79, 0
    %p148 = por %p146, %p147
    %s150 = sadd.s32 %s149, 1
    %p153 = scmp.eq.s32.totalorder %s73, 1
    %p154 = scmp.ne.s32.totalorder %s149, %s151
    %p155 = scmp.eq.s32.totalorder %s73, 0
    %p156 = por %p154, %p155
    %p157 = scmp.ne.s32.totalorder %s149, %s151
    %p158 = scmp.eq.s32.totalorder %s78, 1
    %p159 = por %p157, %p158
    %p160 = scmp.ne.s32.totalorder %s151, %s152
    %p161 = scmp.eq.s32.totalorder %s78, 0
    %p162 = por %p160, %p161
    %p163 = scmp.ne.s32.totalorder %s151, %s152
    %p164 = scmp.eq.s32.totalorder %s79, 1
    %p165 = por %p163, %p164
    %p167 = scmp.ne.s32.totalorder %s152, %s166
    %p168 = scmp.eq.s32.totalorder %s79, 0
    %p169 = por %p167, %p168
    %s171 = sadd.s32 %s170, 1
    %p174 = scmp.eq.s32.totalorder %s73, 1
    %p175 = scmp.ne.s32.totalorder %s170, %s172
    %p176 = scmp.eq.s32.totalorder %s73, 0
    %p177 = por %p175, %p176
    %p178 = scmp.ne.s32.totalorder %s170, %s172
    %p179 = scmp.eq.s32.totalorder %s78, 1
    %p180 = por %p178, %p179
    %p181 = scmp.ne.s32.totalorder %s172, %s173
    %p182 = scmp.eq.s32.totalorder %s78, 0
    %p183 = por %p181, %p182
    %p184 = scmp.ne.s32.totalorder %s172, %s173
    %p185 = scmp.eq.s32.totalorder %s79, 1
    %p186 = por %p184, %p185
    %p188 = scmp.ne.s32.totalorder %s173, %s187
    %p189 = scmp.eq.s32.totalorder %s79, 0
    %p190 = por %p188, %p189
    %s192 = sadd.s32 %s191, 1
    %p195 = scmp.eq.s32.totalorder %s73, 1
    %p196 = scmp.ne.s32.totalorder %s191, %s193
    %p197 = scmp.eq.s32.totalorder %s73, 0
    %p198 = por %p196, %p197
    %p199 = scmp.ne.s32.totalorder %s191, %s193
    %p200 = scmp.eq.s32.totalorder %s78, 1
    %p201 = por %p199, %p200
    %p202 = scmp.ne.s32.totalorder %s193, %s194
    %p203 = scmp.eq.s32.totalorder %s78, 0
    %p204 = por %p202, %p203
    %p205 = scmp.ne.s32.totalorder %s193, %s194
    %p206 = scmp.eq.s32.totalorder %s79, 1
    %p207 = por %p205, %p206
    %p209 = scmp.ne.s32.totalorder %s194, %s208
    %p210 = scmp.eq.s32.totalorder %s79, 0
    %p211 = por %p209, %p210
    %s213 = sadd.s32 %s212, 1
    %p216 = scmp.eq.s32.totalorder %s73, 1
    %p217 = scmp.ne.s32.totalorder %s212, %s214
    %p218 = scmp.eq.s32.totalorder %s73, 0
    %p219 = por %p217, %p218
    %p220 = scmp.ne.s32.totalorder %s212, %s214
    %p221 = scmp.eq.s32.totalorder %s78, 1
    %p222 = por %p220, %p221
    %p223 = scmp.ne.s32.totalorder %s214, %s215
    %p224 = scmp.eq.s32.totalorder %s78, 0
    %p225 = por %p223, %p224
    %p226 = scmp.ne.s32.totalorder %s214, %s215
    %p227 = scmp.eq.s32.totalorder %s79, 1
    %p228 = por %p226, %p227
    %p230 = scmp.ne.s32.totalorder %s215, %s229
    %p231 = scmp.eq.s32.totalorder %s79, 0
    %p232 = por %p230, %p231
    %s234 = sadd.s32 %s233, 1
    %p237 = scmp.eq.s32.totalorder %s73, 1
    %p238 = scmp.ne.s32.totalorder %s233, %s235
    %p239 = scmp.eq.s32.totalorder %s73, 0
    %p240 = por %p238, %p239
    %p241 = scmp.ne.s32.totalorder %s233, %s235
    %p242 = scmp.eq.s32.totalorder %s78, 1
    %p243 = por %p241, %p242
    %p244 = scmp.ne.s32.totalorder %s235, %s236
    %p245 = scmp.eq.s32.totalorder %s78, 0
    %p246 = por %p244, %p245
    %p247 = scmp.ne.s32.totalorder %s235, %s236
    %p248 = scmp.eq.s32.totalorder %s79, 1
    %p249 = por %p247, %p248
    %p251 = scmp.ne.s32.totalorder %s236, %s250
    %p252 = scmp.eq.s32.totalorder %s79, 0
    %p253 = por %p251, %p252
    %s255 = sadd.s32 %s254, 1
    %p258 = scmp.eq.s32.totalorder %s73, 1
    %p259 = scmp.ne.s32.totalorder %s254, %s256
    %p260 = scmp.eq.s32.totalorder %s73, 0
    %p261 = por %p259, %p260
    %p262 = scmp.ne.s32.totalorder %s254, %s256
    %p263 = scmp.eq.s32.totalorder %s78, 1
    %p264 = por %p262, %p263
    %p265 = scmp.ne.s32.totalorder %s256, %s257
    %p266 = scmp.eq.s32.totalorder %s78, 0
    %p267 = por %p265, %p266
    %p268 = scmp.ne.s32.totalorder %s256, %s257
    %p269 = scmp.eq.s32.totalorder %s79, 1
    %p270 = por %p268, %p269
    %p272 = scmp.ne.s32.totalorder %s257, %s271
    %p273 = scmp.eq.s32.totalorder %s79, 0
    %p274 = por %p272, %p273
    %s276 = sadd.s32 %s275, 1
    %p279 = scmp.eq.s32.totalorder %s73, 1
    %p280 = scmp.ne.s32.totalorder %s275, %s277
    %p281 = scmp.eq.s32.totalorder %s73, 0
    %p282 = por %p280, %p281
    %p283 = scmp.ne.s32.totalorder %s275, %s277
    %p284 = scmp.eq.s32.totalorder %s78, 1
    %p285 = por %p283, %p284
    %p286 = scmp.ne.s32.totalorder %s277, %s278
    %p287 = scmp.eq.s32.totalorder %s78, 0
    %p288 = por %p286, %p287
    %p289 = scmp.ne.s32.totalorder %s277, %s278
    %p290 = scmp.eq.s32.totalorder %s79, 1
    %p291 = por %p289, %p290
    %p293 = scmp.ne.s32.totalorder %s278, %s292
    %p294 = scmp.eq.s32.totalorder %s79, 0
    %p295 = por %p293, %p294
    %s297 = sadd.s32 %s296, 1
    %p300 = scmp.eq.s32.totalorder %s73, 1
    %p301 = scmp.ne.s32.totalorder %s296, %s298
    %p302 = scmp.eq.s32.totalorder %s73, 0
    %p303 = por %p301, %p302
    %p304 = scmp.ne.s32.totalorder %s296, %s298
    %p305 = scmp.eq.s32.totalorder %s78, 1
    %p306 = por %p304, %p305
    %p307 = scmp.ne.s32.totalorder %s298, %s299
    %p308 = scmp.eq.s32.totalorder %s78, 0
    %p309 = por %p307, %p308
    %p310 = scmp.ne.s32.totalorder %s298, %s299
    %p311 = scmp.eq.s32.totalorder %s79, 1
    %p312 = por %p310, %p311
    %p314 = scmp.ne.s32.totalorder %s299, %s313
    %p315 = scmp.eq.s32.totalorder %s79, 0
    %p316 = por %p314, %p315
    %s318 = sadd.s32 %s317, 1
    %p321 = scmp.eq.s32.totalorder %s73, 1
    %p322 = scmp.ne.s32.totalorder %s317, %s319
    %p323 = scmp.eq.s32.totalorder %s73, 0
    %p324 = por %p322, %p323
    %p325 = scmp.ne.s32.totalorder %s317, %s319
    %p326 = scmp.eq.s32.totalorder %s78, 1
    %p327 = por %p325, %p326
    %p328 = scmp.ne.s32.totalorder %s319, %s320
    %p329 = scmp.eq.s32.totalorder %s78, 0
    %p330 = por %p328, %p329
    %p331 = scmp.ne.s32.totalorder %s319, %s320
    %p332 = scmp.eq.s32.totalorder %s79, 1
    %p333 = por %p331, %p332
    %p335 = scmp.ne.s32.totalorder %s320, %s334
    %p336 = scmp.eq.s32.totalorder %s79, 0
    %p337 = por %p335, %p336
    %s339 = sadd.s32 %s338, 1
    %p342 = scmp.eq.s32.totalorder %s73, 1
    %p343 = scmp.ne.s32.totalorder %s338, %s340
    %p344 = scmp.eq.s32.totalorder %s73, 0
    %p345 = por %p343, %p344
    %p346 = scmp.ne.s32.totalorder %s338, %s340
    %p347 = scmp.eq.s32.totalorder %s78, 1
    %p348 = por %p346, %p347
    %p349 = scmp.ne.s32.totalorder %s340, %s341
    %p350 = scmp.eq.s32.totalorder %s78, 0
    %p351 = por %p349, %p350
    %p352 = scmp.ne.s32.totalorder %s340, %s341
    %p353 = scmp.eq.s32.totalorder %s79, 1
    %p354 = por %p352, %p353
    %p356 = scmp.ne.s32.totalorder %s341, %s355
    %p357 = scmp.eq.s32.totalorder %s79, 0
    %p358 = por %p356, %p357
    %s360 = sadd.s32 %s359, 1
    %p363 = scmp.eq.s32.totalorder %s73, 1
    %p364 = scmp.ne.s32.totalorder %s359, %s361
    %p365 = scmp.eq.s32.totalorder %s73, 0
    %p366 = por %p364, %p365
    %p367 = scmp.ne.s32.totalorder %s359, %s361
    %p368 = scmp.eq.s32.totalorder %s78, 1
    %p369 = por %p367, %p368
    %p370 = scmp.ne.s32.totalorder %s361, %s362
    %p371 = scmp.eq.s32.totalorder %s78, 0
    %p372 = por %p370, %p371
    %p373 = scmp.ne.s32.totalorder %s361, %s362
    %p374 = scmp.eq.s32.totalorder %s79, 1
    %p375 = por %p373, %p374
    %p377 = scmp.ne.s32.totalorder %s362, %s376
    %p378 = scmp.eq.s32.totalorder %s79, 0
    %p379 = por %p377, %p378
    %s381 = sadd.s32 %s380, 1
    %p384 = scmp.eq.s32.totalorder %s73, 1
    %p385 = scmp.ne.s32.totalorder %s380, %s382
    %p386 = scmp.eq.s32.totalorder %s73, 0
    %p387 = por %p385, %p386
    %p388 = scmp.ne.s32.totalorder %s380, %s382
    %p389 = scmp.eq.s32.totalorder %s78, 1
    %p390 = por %p388, %p389
    %p391 = scmp.ne.s32.totalorder %s382, %s383
    %p392 = scmp.eq.s32.totalorder %s78, 0
    %p393 = por %p391, %p392
    %p394 = scmp.ne.s32.totalorder %s382, %s383
    %p395 = scmp.eq.s32.totalorder %s79, 1
    %p396 = por %p394, %p395
    %p398 = scmp.ne.s32.totalorder %s383, %s397
    %p399 = scmp.eq.s32.totalorder %s79, 0
    %p400 = por %p398, %p399
    %s402 = sadd.s32 %s401, 1
    %p405 = scmp.eq.s32.totalorder %s73, 1
    %p406 = scmp.ne.s32.totalorder %s401, %s403
    %p407 = scmp.eq.s32.totalorder %s73, 0
    %p408 = por %p406, %p407
    %p409 = scmp.ne.s32.totalorder %s401, %s403
    %p410 = scmp.eq.s32.totalorder %s78, 1
    %p411 = por %p409, %p410
    %p412 = scmp.ne.s32.totalorder %s403, %s404
    %p413 = scmp.eq.s32.totalorder %s78, 0
    %p414 = por %p412, %p413
    %p415 = scmp.ne.s32.totalorder %s403, %s404
    %p416 = scmp.eq.s32.totalorder %s79, 1
    %p417 = por %p415, %p416
    %p419 = scmp.ne.s32.totalorder %s404, %s418
    %p420 = scmp.eq.s32.totalorder %s79, 0
    %p421 = por %p419, %p420
    %s423 = sadd.s32 %s422, 1
    %p426 = scmp.eq.s32.totalorder %s73, 1
    %p427 = scmp.ne.s32.totalorder %s422, %s424
    %p428 = scmp.eq.s32.totalorder %s73, 0
    %p429 = por %p427, %p428
    %p430 = scmp.ne.s32.totalorder %s422, %s424
    %p431 = scmp.eq.s32.totalorder %s78, 1
    %p432 = por %p430, %p431
    %p433 = scmp.ne.s32.totalorder %s424, %s425
    %p434 = scmp.eq.s32.totalorder %s78, 0
    %p435 = por %p433, %p434
    %p436 = scmp.ne.s32.totalorder %s424, %s425
    %p437 = scmp.eq.s32.totalorder %s79, 1
    %p438 = por %p436, %p437
    %p440 = scmp.ne.s32.totalorder %s425, %s439
    %p441 = scmp.eq.s32.totalorder %s79, 0
    %p442 = por %p440, %p441
    %s444 = sadd.s32 %s443, 1
    %p447 = scmp.eq.s32.totalorder %s73, 1
    %p448 = scmp.ne.s32.totalorder %s443, %s445
    %p449 = scmp.eq.s32.totalorder %s73, 0
    %p450 = por %p448, %p449
    %p451 = scmp.ne.s32.totalorder %s443, %s445
    %p452 = scmp.eq.s32.totalorder %s78, 1
    %p453 = por %p451, %p452
    %p454 = scmp.ne.s32.totalorder %s445, %s446
    %p455 = scmp.eq.s32.totalorder %s78, 0
    %p456 = por %p454, %p455
    %p457 = scmp.ne.s32.totalorder %s445, %s446
    %p458 = scmp.eq.s32.totalorder %s79, 1
    %p459 = por %p457, %p458
    %p461 = scmp.ne.s32.totalorder %s446, %s460
    %p462 = scmp.eq.s32.totalorder %s79, 0
    %p463 = por %p461, %p462
    %s465 = sadd.s32 %s464, 1
    %p468 = scmp.eq.s32.totalorder %s73, 1
    %p469 = scmp.ne.s32.totalorder %s464, %s466
    %p470 = scmp.eq.s32.totalorder %s73, 0
    %p471 = por %p469, %p470
    %p472 = scmp.ne.s32.totalorder %s464, %s466
    %p473 = scmp.eq.s32.totalorder %s78, 1
    %p474 = por %p472, %p473
    %p475 = scmp.ne.s32.totalorder %s466, %s467
    %p476 = scmp.eq.s32.totalorder %s78, 0
    %p477 = por %p475, %p476
    %p478 = scmp.ne.s32.totalorder %s466, %s467
    %p479 = scmp.eq.s32.totalorder %s79, 1
    %p480 = por %p478, %p479
    %p482 = scmp.ne.s32.totalorder %s467, %s481
    %p483 = scmp.eq.s32.totalorder %s79, 0
    %p484 = por %p482, %p483
    %s486 = sadd.s32 %s485, 1
    %p489 = scmp.eq.s32.totalorder %s73, 1
    %p490 = scmp.ne.s32.totalorder %s485, %s487
    %p491 = scmp.eq.s32.totalorder %s73, 0
    %p492 = por %p490, %p491
    %p493 = scmp.ne.s32.totalorder %s485, %s487
    %p494 = scmp.eq.s32.totalorder %s78, 1
    %p495 = por %p493, %p494
    %p496 = scmp.ne.s32.totalorder %s487, %s488
    %p497 = scmp.eq.s32.totalorder %s78, 0
    %p498 = por %p496, %p497
    %p499 = scmp.ne.s32.totalorder %s487, %s488
    %p500 = scmp.eq.s32.totalorder %s79, 1
    %p501 = por %p499, %p500
    %p503 = scmp.ne.s32.totalorder %s488, %s502
    %p504 = scmp.eq.s32.totalorder %s79, 0
    %p505 = por %p503, %p504
    %s507 = sadd.s32 %s506, 1
    %p510 = scmp.eq.s32.totalorder %s73, 1
    %p511 = scmp.ne.s32.totalorder %s506, %s508
    %p512 = scmp.eq.s32.totalorder %s73, 0
    %p513 = por %p511, %p512
    %p514 = scmp.ne.s32.totalorder %s506, %s508
    %p515 = scmp.eq.s32.totalorder %s78, 1
    %p516 = por %p514, %p515
    %p517 = scmp.ne.s32.totalorder %s508, %s509
    %p518 = scmp.eq.s32.totalorder %s78, 0
    %p519 = por %p517, %p518
    %p520 = scmp.ne.s32.totalorder %s508, %s509
    %p521 = scmp.eq.s32.totalorder %s79, 1
    %p522 = por %p520, %p521
    %p524 = scmp.ne.s32.totalorder %s509, %s523
    %p525 = scmp.eq.s32.totalorder %s79, 0
    %p526 = por %p524, %p525
    %s528 = sadd.s32 %s527, 1
    %p531 = scmp.eq.s32.totalorder %s73, 1
    %p532 = scmp.ne.s32.totalorder %s527, %s529
    %p533 = scmp.eq.s32.totalorder %s73, 0
    %p534 = por %p532, %p533
    %p535 = scmp.ne.s32.totalorder %s527, %s529
    %p536 = scmp.eq.s32.totalorder %s78, 1
    %p537 = por %p535, %p536
    %p538 = scmp.ne.s32.totalorder %s529, %s530
    %p539 = scmp.eq.s32.totalorder %s78, 0
    %p540 = por %p538, %p539
    %p541 = scmp.ne.s32.totalorder %s529, %s530
    %p542 = scmp.eq.s32.totalorder %s79, 1
    %p543 = por %p541, %p542
    %p545 = scmp.ne.s32.totalorder %s530, %s544
    %p546 = scmp.eq.s32.totalorder %s79, 0
    %p547 = por %p545, %p546
    %s549 = sadd.s32 %s548, 1
    %p552 = scmp.eq.s32.totalorder %s73, 1
    %p553 = scmp.ne.s32.totalorder %s548, %s550
    %p554 = scmp.eq.s32.totalorder %s73, 0
    %p555 = por %p553, %p554
    %p556 = scmp.ne.s32.totalorder %s548, %s550
    %p557 = scmp.eq.s32.totalorder %s78, 1
    %p558 = por %p556, %p557
    %p559 = scmp.ne.s32.totalorder %s550, %s551
    %p560 = scmp.eq.s32.totalorder %s78, 0
    %p561 = por %p559, %p560
    %p562 = scmp.ne.s32.totalorder %s550, %s551
    %p563 = scmp.eq.s32.totalorder %s79, 1
    %p564 = por %p562, %p563
    %p566 = scmp.ne.s32.totalorder %s551, %s565
    %p567 = scmp.eq.s32.totalorder %s79, 0
    %p568 = por %p566, %p567
    %s570 = sadd.s32 %s569, 1
    %p573 = scmp.eq.s32.totalorder %s73, 1
    %p574 = scmp.ne.s32.totalorder %s569, %s571
    %p575 = scmp.eq.s32.totalorder %s73, 0
    %p576 = por %p574, %p575
    %p577 = scmp.ne.s32.totalorder %s569, %s571
    %p578 = scmp.eq.s32.totalorder %s78, 1
    %p579 = por %p577, %p578
    %p580 = scmp.ne.s32.totalorder %s571, %s572
    %p581 = scmp.eq.s32.totalorder %s78, 0
    %p582 = por %p580, %p581
    %p583 = scmp.ne.s32.totalorder %s571, %s572
    %p584 = scmp.eq.s32.totalorder %s79, 1
    %p585 = por %p583, %p584
    %p587 = scmp.ne.s32.totalorder %s572, %s586
    %p588 = scmp.eq.s32.totalorder %s79, 0
    %p589 = por %p587, %p588
    %s591 = sadd.s32 %s590, 1
    %p594 = scmp.eq.s32.totalorder %s73, 1
    %p595 = scmp.ne.s32.totalorder %s590, %s592
    %p596 = scmp.eq.s32.totalorder %s73, 0
    %p597 = por %p595, %p596
    %p598 = scmp.ne.s32.totalorder %s590, %s592
    %p599 = scmp.eq.s32.totalorder %s78, 1
    %p600 = por %p598, %p599
    %p601 = scmp.ne.s32.totalorder %s592, %s593
    %p602 = scmp.eq.s32.totalorder %s78, 0
    %p603 = por %p601, %p602
    %p604 = scmp.ne.s32.totalorder %s592, %s593
    %p605 = scmp.eq.s32.totalorder %s79, 1
    %p606 = por %p604, %p605
    %p608 = scmp.ne.s32.totalorder %s593, %s607
    %p609 = scmp.eq.s32.totalorder %s79, 0
    %p610 = por %p608, %p609
    %s612 = sadd.s32 %s611, 1
    %p615 = scmp.eq.s32.totalorder %s73, 1
    %p616 = scmp.ne.s32.totalorder %s611, %s613
    %p617 = scmp.eq.s32.totalorder %s73, 0
    %p618 = por %p616, %p617
    %p619 = scmp.ne.s32.totalorder %s611, %s613
    %p620 = scmp.eq.s32.totalorder %s78, 1
    %p621 = por %p619, %p620
    %p622 = scmp.ne.s32.totalorder %s613, %s614
    %p623 = scmp.eq.s32.totalorder %s78, 0
    %p624 = por %p622, %p623
    %p625 = scmp.ne.s32.totalorder %s613, %s614
    %p626 = scmp.eq.s32.totalorder %s79, 1
    %p627 = por %p625, %p626
    %p629 = scmp.ne.s32.totalorder %s614, %s628
    %p630 = scmp.eq.s32.totalorder %s79, 0
    %p631 = por %p629, %p630
    %s633 = sadd.s32 %s632, 1
    %p636 = scmp.eq.s32.totalorder %s73, 1
    %p637 = scmp.ne.s32.totalorder %s632, %s634
    %p638 = scmp.eq.s32.totalorder %s73, 0
    %p639 = por %p637, %p638
    %p640 = scmp.ne.s32.totalorder %s632, %s634
    %p641 = scmp.eq.s32.totalorder %s78, 1
    %p642 = por %p640, %p641
    %p643 = scmp.ne.s32.totalorder %s634, %s635
    %p644 = scmp.eq.s32.totalorder %s78, 0
    %p645 = por %p643, %p644
    %p646 = scmp.ne.s32.totalorder %s634, %s635
    %p647 = scmp.eq.s32.totalorder %s79, 1
    %p648 = por %p646, %p647
    %p650 = scmp.ne.s32.totalorder %s635, %s649
    %p651 = scmp.eq.s32.totalorder %s79, 0
    %p652 = por %p650, %p651
    %s654 = sadd.s32 %s653, 1
    %p657 = scmp.eq.s32.totalorder %s73, 1
    %p658 = scmp.ne.s32.totalorder %s653, %s655
    %p659 = scmp.eq.s32.totalorder %s73, 0
    %p660 = por %p658, %p659
    %p661 = scmp.ne.s32.totalorder %s653, %s655
    %p662 = scmp.eq.s32.totalorder %s78, 1
    %p663 = por %p661, %p662
    %p664 = scmp.ne.s32.totalorder %s655, %s656
    %p665 = scmp.eq.s32.totalorder %s78, 0
    %p666 = por %p664, %p665
    %p667 = scmp.ne.s32.totalorder %s655, %s656
    %p668 = scmp.eq.s32.totalorder %s79, 1
    %p669 = por %p667, %p668
    %p671 = scmp.ne.s32.totalorder %s656, %s670
    %p672 = scmp.eq.s32.totalorder %s79, 0
    %p673 = por %p671, %p672
    %s675 = sadd.s32 %s674, 1
    %p678 = scmp.eq.s32.totalorder %s73, 1
    %p679 = scmp.ne.s32.totalorder %s674, %s676
    %p680 = scmp.eq.s32.totalorder %s73, 0
    %p681 = por %p679, %p680
    %p682 = scmp.ne.s32.totalorder %s674, %s676
    %p683 = scmp.eq.s32.totalorder %s78, 1
    %p684 = por %p682, %p683
    %p685 = scmp.ne.s32.totalorder %s676, %s677
    %p686 = scmp.eq.s32.totalorder %s78, 0
    %p687 = por %p685, %p686
    %p688 = scmp.ne.s32.totalorder %s676, %s677
    %p689 = scmp.eq.s32.totalorder %s79, 1
    %p690 = por %p688, %p689
    %p692 = scmp.ne.s32.totalorder %s677, %s691
    %p693 = scmp.eq.s32.totalorder %s79, 0
    %p694 = por %p692, %p693
    %s696 = sadd.s32 %s695, 1
    %p699 = scmp.eq.s32.totalorder %s73, 1
    %p700 = scmp.ne.s32.totalorder %s695, %s697
    %p701 = scmp.eq.s32.totalorder %s73, 0
    %p702 = por %p700, %p701
    %p703 = scmp.ne.s32.totalorder %s695, %s697
    %p704 = scmp.eq.s32.totalorder %s78, 1
    %p705 = por %p703, %p704
    %p706 = scmp.ne.s32.totalorder %s697, %s698
    %p707 = scmp.eq.s32.totalorder %s78, 0
    %p708 = por %p706, %p707
    %p709 = scmp.ne.s32.totalorder %s697, %s698
    %p710 = scmp.eq.s32.totalorder %s79, 1
    %p711 = por %p709, %p710
    %p713 = scmp.ne.s32.totalorder %s698, %s712
    %p714 = scmp.eq.s32.totalorder %s79, 0
    %p715 = por %p713, %p714
    %s717 = sadd.s32 %s716, 1
    %p720 = scmp.eq.s32.totalorder %s73, 1
    %p721 = scmp.ne.s32.totalorder %s716, %s718
    %p722 = scmp.eq.s32.totalorder %s73, 0
    %p723 = por %p721, %p722
    %p724 = scmp.ne.s32.totalorder %s716, %s718
    %p725 = scmp.eq.s32.totalorder %s78, 1
    %p726 = por %p724, %p725
    %p727 = scmp.ne.s32.totalorder %s718, %s719
    %p728 = scmp.eq.s32.totalorder %s78, 0
    %p729 = por %p727, %p728
    %p730 = scmp.ne.s32.totalorder %s718, %s719
    %p731 = scmp.eq.s32.totalorder %s79, 1
    %p732 = por %p730, %p731
    %p734 = scmp.ne.s32.totalorder %s719, %s733
    %p735 = scmp.eq.s32.totalorder %s79, 0
    %p736 = por %p734, %p735
    %s738 = sadd.s32 %s737, 1
    %p741 = scmp.eq.s32.totalorder %s73, 1
    %p742 = scmp.ne.s32.totalorder %s737, %s739
    %p743 = scmp.eq.s32.totalorder %s73, 0
    %p744 = por %p742, %p743
    %p745 = scmp.ne.s32.totalorder %s737, %s739
    %p746 = scmp.eq.s32.totalorder %s78, 1
    %p747 = por %p745, %p746
    %p748 = scmp.ne.s32.totalorder %s739, %s740
    %p749 = scmp.eq.s32.totalorder %s78, 0
    %p750 = por %p748, %p749
    %p751 = scmp.ne.s32.totalorder %s739, %s740
    %p752 = scmp.eq.s32.totalorder %s79, 1
    %p753 = por %p751, %p752
    %p755 = scmp.ne.s32.totalorder %s740, %s754
    %p756 = scmp.eq.s32.totalorder %s79, 0
    %p757 = por %p755, %p756
    %s759 = sadd.s32 %s758, 1
    %p762 = scmp.eq.s32.totalorder %s73, 1
    %p763 = scmp.ne.s32.totalorder %s758, %s760
    %p764 = scmp.eq.s32.totalorder %s73, 0
    %p765 = por %p763, %p764
    %p766 = scmp.ne.s32.totalorder %s758, %s760
    %p767 = scmp.eq.s32.totalorder %s78, 1
    %p768 = por %p766, %p767
    %p769 = scmp.ne.s32.totalorder %s760, %s761
    %p770 = scmp.eq.s32.totalorder %s78, 0
    %p771 = por %p769, %p770
    %p772 = scmp.ne.s32.totalorder %s760, %s761
    %p773 = scmp.eq.s32.totalorder %s79, 1
    %p774 = por %p772, %p773
    %p776 = scmp.ne.s32.totalorder %s761, %s775
    %p777 = scmp.eq.s32.totalorder %s79, 0
    %p778 = por %p776, %p777
    %s779 = ssub.s32 %s73, %s80
    %p780 = scmp.eq.s32.totalorder %s779, 0
    %s782 = sadd.s32 %s781, 1
    %s783 = scalar_select %p780, %s781, %s782
    %p786 = pneg %p780
    %p787 = scmp.eq.s32.totalorder %s73, 1
    %p788 = por %p786, %p787
    %p789 = scmp.ne.s32.totalorder %s781, %s784
    %p790 = scmp.eq.s32.totalorder %s73, 0
    %p791 = por %p789, %p790
    %p792 = scmp.ne.s32.totalorder %s781, %s784
    %p793 = scmp.eq.s32.totalorder %s78, 1
    %p794 = por %p792, %p793
    %p795 = scmp.ne.s32.totalorder %s784, %s785
    %p796 = scmp.eq.s32.totalorder %s78, 0
    %p797 = por %p795, %p796
    %p798 = scmp.ne.s32.totalorder %s784, %s785
    %p799 = scmp.eq.s32.totalorder %s79, 1
    %p800 = por %p798, %p799
    %p802 = scmp.ne.s32.totalorder %s785, %s801
    %p803 = scmp.eq.s32.totalorder %s79, 0
    %p804 = por %p802, %p803
    %p805 = scmp.le.s32.totalorder 1, %s73
    %p806 = scmp.lt.s32.totalorder %s73, 3
    %p807 = pnand %p805, %p806
    %p808 = pneg %p807
    // Predicated region
    $region9: #{mimi_encode.1} parent=5 // pred_check
      _
    $region10: #{mimi_encode.1} parent=5 // pred_check_branch
      %810 = sbr.rel (%p807) target = $region12
    $region11: #{mimi_encode.1} parent=5 // pred_region
      %s811 = ssub.s32 %s73, 1
      // Predicated region
      $region13: #{mimi_encode.1} parent=11 // pred_check
        %p812 = pneg %p120
      $region14: #{mimi_encode.1} parent=11 // pred_check_branch
        %814 = sbr.rel (%p812) target = $region16
      $region15: #{mimi_encode.1} parent=11 // pred_region
        _
      $region16: #{mimi_encode.1} parent=11 // pred_fallthru
        _
      // Predicated region
      $region17: #{mimi_encode.1} parent=11 // pred_check
        %p815 = pneg %p141
      $region18: #{mimi_encode.1} parent=11 // pred_check_branch
        %817 = sbr.rel (%p815) target = $region20
      $region19: #{mimi_encode.1} parent=11 // pred_region
        _
      $region20: #{mimi_encode.1} parent=11 // pred_fallthru
        _
      // Predicated region
      $region21: #{mimi_encode.1} parent=11 // pred_check
        %p818 = pneg %p162
      $region22: #{mimi_encode.1} parent=11 // pred_check_branch
        %820 = sbr.rel (%p818) target = $region24
      $region23: #{mimi_encode.1} parent=11 // pred_region
        _
      $region24: #{mimi_encode.1} parent=11 // pred_fallthru
        _
      // Predicated region
      $region25: #{mimi_encode.1} parent=11 // pred_check
        %p821 = pneg %p183
      $region26: #{mimi_encode.1} parent=11 // pred_check_branch
        %823 = sbr.rel (%p821) target = $region28
      $region27: #{mimi_encode.1} parent=11 // pred_region
        _
      $region28: #{mimi_encode.1} parent=11 // pred_fallthru
        _
      // Predicated region
      $region29: #{mimi_encode.1} parent=11 // pred_check
        %p824 = pneg %p204
      $region30: #{mimi_encode.1} parent=11 // pred_check_branch
        %826 = sbr.rel (%p824) target = $region32
      $region31: #{mimi_encode.1} parent=11 // pred_region
        _
      $region32: #{mimi_encode.1} parent=11 // pred_fallthru
        _
      // Predicated region
      $region33: #{mimi_encode.1} parent=11 // pred_check
        %p827 = pneg %p225
      $region34: #{mimi_encode.1} parent=11 // pred_check_branch
        %829 = sbr.rel (%p827) target = $region36
      $region35: #{mimi_encode.1} parent=11 // pred_region
        _
      $region36: #{mimi_encode.1} parent=11 // pred_fallthru
        _
      // Predicated region
      $region37: #{mimi_encode.1} parent=11 // pred_check
        %p830 = pneg %p246
      $region38: #{mimi_encode.1} parent=11 // pred_check_branch
        %832 = sbr.rel (%p830) target = $region40
      $region39: #{mimi_encode.1} parent=11 // pred_region
        _
      $region40: #{mimi_encode.1} parent=11 // pred_fallthru
        _
      // Predicated region
      $region41: #{mimi_encode.1} parent=11 // pred_check
        %p833 = pneg %p267
      $region42: #{mimi_encode.1} parent=11 // pred_check_branch
        %835 = sbr.rel (%p833) target = $region44
      $region43: #{mimi_encode.1} parent=11 // pred_region
        _
      $region44: #{mimi_encode.1} parent=11 // pred_fallthru
        _
      // Predicated region
      $region45: #{mimi_encode.1} parent=11 // pred_check
        %p836 = pneg %p288
      $region46: #{mimi_encode.1} parent=11 // pred_check_branch
        %838 = sbr.rel (%p836) target = $region48
      $region47: #{mimi_encode.1} parent=11 // pred_region
        _
      $region48: #{mimi_encode.1} parent=11 // pred_fallthru
        _
      // Predicated region
      $region49: #{mimi_encode.1} parent=11 // pred_check
        %p839 = pneg %p309
      $region50: #{mimi_encode.1} parent=11 // pred_check_branch
        %841 = sbr.rel (%p839) target = $region52
      $region51: #{mimi_encode.1} parent=11 // pred_region
        _
      $region52: #{mimi_encode.1} parent=11 // pred_fallthru
        _
      // Predicated region
      $region53: #{mimi_encode.1} parent=11 // pred_check
        %p842 = pneg %p330
      $region54: #{mimi_encode.1} parent=11 // pred_check_branch
        %844 = sbr.rel (%p842) target = $region56
      $region55: #{mimi_encode.1} parent=11 // pred_region
        _
      $region56: #{mimi_encode.1} parent=11 // pred_fallthru
        _
      // Predicated region
      $region57: #{mimi_encode.1} parent=11 // pred_check
        %p845 = pneg %p351
      $region58: #{mimi_encode.1} parent=11 // pred_check_branch
        %847 = sbr.rel (%p845) target = $region60
      $region59: #{mimi_encode.1} parent=11 // pred_region
        _
      $region60: #{mimi_encode.1} parent=11 // pred_fallthru
        _
      // Predicated region
      $region61: #{mimi_encode.1} parent=11 // pred_check
        %p848 = pneg %p372
      $region62: #{mimi_encode.1} parent=11 // pred_check_branch
        %850 = sbr.rel (%p848) target = $region64
      $region63: #{mimi_encode.1} parent=11 // pred_region
        _
      $region64: #{mimi_encode.1} parent=11 // pred_fallthru
        _
      // Predicated region
      $region65: #{mimi_encode.1} parent=11 // pred_check
        %p851 = pneg %p393
      $region66: #{mimi_encode.1} parent=11 // pred_check_branch
        %853 = sbr.rel (%p851) target = $region68
      $region67: #{mimi_encode.1} parent=11 // pred_region
        _
      $region68: #{mimi_encode.1} parent=11 // pred_fallthru
        _
      // Predicated region
      $region69: #{mimi_encode.1} parent=11 // pred_check
        %p854 = pneg %p414
      $region70: #{mimi_encode.1} parent=11 // pred_check_branch
        %856 = sbr.rel (%p854) target = $region72
      $region71: #{mimi_encode.1} parent=11 // pred_region
        _
      $region72: #{mimi_encode.1} parent=11 // pred_fallthru
        _
      // Predicated region
      $region73: #{mimi_encode.1} parent=11 // pred_check
        %p857 = pneg %p435
      $region74: #{mimi_encode.1} parent=11 // pred_check_branch
        %859 = sbr.rel (%p857) target = $region76
      $region75: #{mimi_encode.1} parent=11 // pred_region
        _
      $region76: #{mimi_encode.1} parent=11 // pred_fallthru
        _
      // Predicated region
      $region77: #{mimi_encode.1} parent=11 // pred_check
        %p860 = pneg %p456
      $region78: #{mimi_encode.1} parent=11 // pred_check_branch
        %862 = sbr.rel (%p860) target = $region80
      $region79: #{mimi_encode.1} parent=11 // pred_region
        _
      $region80: #{mimi_encode.1} parent=11 // pred_fallthru
        _
      // Predicated region
      $region81: #{mimi_encode.1} parent=11 // pred_check
        %p863 = pneg %p477
      $region82: #{mimi_encode.1} parent=11 // pred_check_branch
        %865 = sbr.rel (%p863) target = $region84
      $region83: #{mimi_encode.1} parent=11 // pred_region
        _
      $region84: #{mimi_encode.1} parent=11 // pred_fallthru
        _
      // Predicated region
      $region85: #{mimi_encode.1} parent=11 // pred_check
        %p866 = pneg %p498
      $region86: #{mimi_encode.1} parent=11 // pred_check_branch
        %868 = sbr.rel (%p866) target = $region88
      $region87: #{mimi_encode.1} parent=11 // pred_region
        _
      $region88: #{mimi_encode.1} parent=11 // pred_fallthru
        _
      // Predicated region
      $region89: #{mimi_encode.1} parent=11 // pred_check
        %p869 = pneg %p519
      $region90: #{mimi_encode.1} parent=11 // pred_check_branch
        %871 = sbr.rel (%p869) target = $region92
      $region91: #{mimi_encode.1} parent=11 // pred_region
        _
      $region92: #{mimi_encode.1} parent=11 // pred_fallthru
        _
      // Predicated region
      $region93: #{mimi_encode.1} parent=11 // pred_check
        %p872 = pneg %p540
      $region94: #{mimi_encode.1} parent=11 // pred_check_branch
        %874 = sbr.rel (%p872) target = $region96
      $region95: #{mimi_encode.1} parent=11 // pred_region
        _
      $region96: #{mimi_encode.1} parent=11 // pred_fallthru
        _
      // Predicated region
      $region97: #{mimi_encode.1} parent=11 // pred_check
        %p875 = pneg %p561
      $region98: #{mimi_encode.1} parent=11 // pred_check_branch
        %877 = sbr.rel (%p875) target = $region100
      $region99: #{mimi_encode.1} parent=11 // pred_region
        _
      $region100: #{mimi_encode.1} parent=11 // pred_fallthru
        _
      // Predicated region
      $region101: #{mimi_encode.1} parent=11 // pred_check
        %p878 = pneg %p582
      $region102: #{mimi_encode.1} parent=11 // pred_check_branch
        %880 = sbr.rel (%p878) target = $region104
      $region103: #{mimi_encode.1} parent=11 // pred_region
        _
      $region104: #{mimi_encode.1} parent=11 // pred_fallthru
        _
      // Predicated region
      $region105: #{mimi_encode.1} parent=11 // pred_check
        %p881 = pneg %p603
      $region106: #{mimi_encode.1} parent=11 // pred_check_branch
        %883 = sbr.rel (%p881) target = $region108
      $region107: #{mimi_encode.1} parent=11 // pred_region
        _
      $region108: #{mimi_encode.1} parent=11 // pred_fallthru
        _
      // Predicated region
      $region109: #{mimi_encode.1} parent=11 // pred_check
        %p884 = pneg %p624
      $region110: #{mimi_encode.1} parent=11 // pred_check_branch
        %886 = sbr.rel (%p884) target = $region112
      $region111: #{mimi_encode.1} parent=11 // pred_region
        _
      $region112: #{mimi_encode.1} parent=11 // pred_fallthru
        _
      // Predicated region
      $region113: #{mimi_encode.1} parent=11 // pred_check
        %p887 = pneg %p645
      $region114: #{mimi_encode.1} parent=11 // pred_check_branch
        %889 = sbr.rel (%p887) target = $region116
      $region115: #{mimi_encode.1} parent=11 // pred_region
        _
      $region116: #{mimi_encode.1} parent=11 // pred_fallthru
        _
      // Predicated region
      $region117: #{mimi_encode.1} parent=11 // pred_check
        %p890 = pneg %p666
      $region118: #{mimi_encode.1} parent=11 // pred_check_branch
        %892 = sbr.rel (%p890) target = $region120
      $region119: #{mimi_encode.1} parent=11 // pred_region
        _
      $region120: #{mimi_encode.1} parent=11 // pred_fallthru
        _
      // Predicated region
      $region121: #{mimi_encode.1} parent=11 // pred_check
        %p893 = pneg %p687
      $region122: #{mimi_encode.1} parent=11 // pred_check_branch
        %895 = sbr.rel (%p893) target = $region124
      $region123: #{mimi_encode.1} parent=11 // pred_region
        _
      $region124: #{mimi_encode.1} parent=11 // pred_fallthru
        _
      // Predicated region
      $region125: #{mimi_encode.1} parent=11 // pred_check
        %p896 = pneg %p708
      $region126: #{mimi_encode.1} parent=11 // pred_check_branch
        %898 = sbr.rel (%p896) target = $region128
      $region127: #{mimi_encode.1} parent=11 // pred_region
        _
      $region128: #{mimi_encode.1} parent=11 // pred_fallthru
        _
      // Predicated region
      $region129: #{mimi_encode.1} parent=11 // pred_check
        %p899 = pneg %p729
      $region130: #{mimi_encode.1} parent=11 // pred_check_branch
        %901 = sbr.rel (%p899) target = $region132
      $region131: #{mimi_encode.1} parent=11 // pred_region
        _
      $region132: #{mimi_encode.1} parent=11 // pred_fallthru
        _
      // Predicated region
      $region133: #{mimi_encode.1} parent=11 // pred_check
        %p902 = pneg %p750
      $region134: #{mimi_encode.1} parent=11 // pred_check_branch
        %904 = sbr.rel (%p902) target = $region136
      $region135: #{mimi_encode.1} parent=11 // pred_region
        _
      $region136: #{mimi_encode.1} parent=11 // pred_fallthru
        _
      // Predicated region
      $region137: #{mimi_encode.1} parent=11 // pred_check
        %p905 = pneg %p771
      $region138: #{mimi_encode.1} parent=11 // pred_check_branch
        %907 = sbr.rel (%p905) target = $region140
      $region139: #{mimi_encode.1} parent=11 // pred_region
        _
      $region140: #{mimi_encode.1} parent=11 // pred_fallthru
        _
    $region12: #{mimi_encode.1} parent=5 // pred_fallthru
      _
    %p908 = scmp.lt.s32.totalorder %s73, 2
    // Predicated region
    $region141: #{mimi_encode.1} parent=5 // pred_check
      %p909 = pneg %p908
    $region142: #{mimi_encode.1} parent=5 // pred_check_branch
      %911 = sbr.rel (%p909) target = $region144
    $region143: #{mimi_encode.1} parent=5 // pred_region
      // Predicated region
      $region145: #{mimi_encode.1} parent=143 // pred_check
        %p912 = pneg %p93
      $region146: #{mimi_encode.1} parent=143 // pred_check_branch
        %914 = sbr.rel (%p912) target = $region148
      $region147: #{mimi_encode.1} parent=143 // pred_region
        %p915 = scmp.lt.s32.totalorder %s73, 1
        %s916 = scalar_select %p915, %s73, 1
        %s917 = smul.addr %s916, 16
        %s918 = smul.addr %s917, 8
        %s919 = scalar_lea.vmem %s1, %s918
      $region148: #{mimi_encode.1} parent=143 // pred_fallthru
        _
    $region144: #{mimi_encode.1} parent=5 // pred_fallthru
      _
    %p920 = scmp.le.s32.totalorder 1, %s73
    %p921 = scmp.lt.s32.totalorder %s73, 3
    %p922 = pnand %p920, %p921
    %p923 = pneg %p922
    // Predicated region
    $region149: #{mimi_encode.1} parent=5 // pred_check
      _
    $region150: #{mimi_encode.1} parent=5 // pred_check_branch
      %925 = sbr.rel (%p922) target = $region152
    $region151: #{mimi_encode.1} parent=5 // pred_region
      %s926 = ssub.s32 %s73, 1
      %p927 = scmp.lt.s32.totalorder %s78, 1
      %s928 = scalar_select %p927, %s78, 1
      %s929 = smul.addr %s928, 16
      %s930 = smul.addr %s929, 8
      %s931 = scalar_lea.vmem %s1, %s930
      %p932 = pneg %p99
      %p933 = pneg %p96
      %p934 = pneg %p120
      %p935 = pneg %p117
      %p936 = pneg %p141
      %p937 = pneg %p138
      %p938 = pneg %p162
      %p939 = pneg %p159
      %p940 = pneg %p183
      %p941 = pneg %p180
      %p942 = pneg %p204
      %p943 = pneg %p201
      %p944 = pneg %p225
      %p945 = pneg %p222
      %p946 = pneg %p246
      %p947 = pneg %p243
      %p948 = pneg %p267
      %p949 = pneg %p264
      %p950 = pneg %p288
      %p951 = pneg %p285
      %p952 = pneg %p309
      %p953 = pneg %p306
      %p954 = pneg %p330
      %p955 = pneg %p327
      %p956 = pneg %p351
      %p957 = pneg %p348
      %p958 = pneg %p372
      %p959 = pneg %p369
      %p960 = pneg %p393
      %p961 = pneg %p390
      %p962 = pneg %p414
      %p963 = pneg %p411
      %p964 = pneg %p435
      %p965 = pneg %p432
      %p966 = pneg %p456
      %p967 = pneg %p453
      %p968 = pneg %p477
      %p969 = pneg %p474
      %p970 = pneg %p498
      %p971 = pneg %p495
      %p972 = pneg %p519
      %p973 = pneg %p516
      %p974 = pneg %p540
      %p975 = pneg %p537
      %p976 = pneg %p561
      %p977 = pneg %p558
      %p978 = pneg %p582
      %p979 = pneg %p579
      %p980 = pneg %p603
      %p981 = pneg %p600
      %p982 = pneg %p624
      %p983 = pneg %p621
      %p984 = pneg %p645
      %p985 = pneg %p642
      %p986 = pneg %p666
      %p987 = pneg %p663
      %p988 = pneg %p687
      %p989 = pneg %p684
      %p990 = pneg %p708
      %p991 = pneg %p705
      %p992 = pneg %p729
      %p993 = pneg %p726
      %p994 = pneg %p750
      %p995 = pneg %p747
      %p996 = pneg %p771
      %p997 = pneg %p768
      %p998 = pneg %p797
      %p999 = pneg %p794
      %p1000 = scmp.lt.s32.totalorder %s78, 1
      %s1001 = scalar_select %p1000, %s78, 1
      %s1002 = smul.addr %s1001, 8
      %s1003 = scalar_lea.vmem %s67, %s1002
      %p1004 = scmp.lt.s32.totalorder %s78, 1
      %s1005 = scalar_select %p1004, %s78, 1
      %s1006 = smul.addr %s1005, 16
      %s1007 = smul.addr %s1006, 8
      %s1008 = scalar_lea.vmem %s1, %s1007
      %p1009 = scmp.lt.s32.totalorder %s78, 1
      %s1010 = scalar_select %p1009, %s78, 1
      %s1011 = smul.addr %s1010, 8
      %s1012 = scalar_lea.vmem %s67, %s1011
      %v1014 = vld [vmem:[%s3] sm:$0x1]
      %v1015 = vld [vmem:[%s5] sm:$0xff]
      %v1016 = vld [vmem:[%s5 + $0x8] sm:$0xff]
      %v1017 = vld [vmem:[%s5 + $0x10] sm:$0xff]
      %v1018 = vld [vmem:[%s5 + $0x18] sm:$0xff]
      %v1019 = vld [vmem:[%s5 + $0x20] sm:$0xff]
      %v1020 = vld [vmem:[%s5 + $0x28] sm:$0xff]
      %v1021 = vld [vmem:[%s5 + $0x30] sm:$0xff]
      %v1022 = vld [vmem:[%s5 + $0x38] sm:$0xff]
      %v1023 = vld [vmem:[%s7] sm:$0x1]
      %v1024 = vld [vmem:[%s9] sm:$0xff]
      %v1025 = vld [vmem:[%s9 + $0x8] sm:$0xff]
      %v1026 = vld [vmem:[%s9 + $0x10] sm:$0xff]
      %v1027 = vld [vmem:[%s9 + $0x18] sm:$0xff]
      %v1028 = vld [vmem:[%s9 + $0x20] sm:$0xff]
      %v1029 = vld [vmem:[%s9 + $0x28] sm:$0xff]
      %v1030 = vld [vmem:[%s11] sm:$0x1]
      %v1031 = vld [vmem:[%s13] sm:$0xff]
      %v1032 = vld [vmem:[%s15] sm:$0x1]
      %v1033 = vld [vmem:[%s17] sm:$0x1]
      %v1034 = vld [vmem:[%s19] sm:$0xff]
      %v1035 = vld [vmem:[%s19 + $0x8] sm:$0xff]
      %v1036 = vld [vmem:[%s19 + $0x10] sm:$0xff]
      %v1037 = vld [vmem:[%s19 + $0x18] sm:$0xff]
      %v1038 = vld [vmem:[%s19 + $0x20] sm:$0xff]
      %v1039 = vld [vmem:[%s19 + $0x28] sm:$0xff]
      %v1040 = vld [vmem:[%s19 + $0x30] sm:$0xff]
      %v1041 = vld [vmem:[%s19 + $0x38] sm:$0xff]
      %v1042 = vld [vmem:[%s19 + $0x40] sm:$0xff]
      %v1043 = vld [vmem:[%s19 + $0x48] sm:$0xff]
      %v1044 = vld [vmem:[%s19 + $0x50] sm:$0xff]
      %v1045 = vld [vmem:[%s19 + $0x58] sm:$0xff]
      %v1046 = vld [vmem:[%s19 + $0x60] sm:$0xff]
      %v1047 = vld [vmem:[%s19 + $0x68] sm:$0xff]
      %v1048 = vld [vmem:[%s19 + $0x70] sm:$0xff]
      %v1049 = vld [vmem:[%s19 + $0x78] sm:$0xff]
      %v1050 = vld [vmem:[%s19 + $0x80] sm:$0xff]
      %v1051 = vld [vmem:[%s19 + $0x88] sm:$0xff]
      %v1052 = vld [vmem:[%s19 + $0x90] sm:$0xff]
      %v1053 = vld [vmem:[%s19 + $0x98] sm:$0xff]
      %v1054 = vld [vmem:[%s19 + $0xa0] sm:$0xff]
      %v1055 = vld [vmem:[%s19 + $0xa8] sm:$0xff]
      %v1056 = vld [vmem:[%s19 + $0xb0] sm:$0xff]
      %v1057 = vld [vmem:[%s19 + $0xb8] sm:$0xff]
      %v1058 = vld [vmem:[%s19 + $0xc0] sm:$0xff]
      %v1059 = vld [vmem:[%s19 + $0xc8] sm:$0xff]
      %v1060 = vld [vmem:[%s19 + $0xd0] sm:$0xff]
      %v1061 = vld [vmem:[%s19 + $0xd8] sm:$0xff]
      %v1062 = vld [vmem:[%s19 + $0xe0] sm:$0xff]
      %v1063 = vld [vmem:[%s19 + $0xe8] sm:$0xff]
      %v1064 = vld [vmem:[%s19 + $0xf0] sm:$0xff]
      %v1065 = vld [vmem:[%s19 + $0xf8] sm:$0xff]
      %v1066 = vld [vmem:[%s21] sm:$0x1]
      %v1067 = vld [vmem:[%s23] sm:$0xff]
      %v1068 = vld [vmem:[%s23 + $0x8] sm:$0xff]
      %v1069 = vld [vmem:[%s23 + $0x10] sm:$0xff]
      %v1070 = vld [vmem:[%s23 + $0x18] sm:$0xff]
      %v1071 = vld [vmem:[%s23 + $0x20] sm:$0xff]
      %v1072 = vld [vmem:[%s23 + $0x28] sm:$0xff]
      %v1073 = vld [vmem:[%s23 + $0x30] sm:$0xff]
      %v1074 = vld [vmem:[%s23 + $0x38] sm:$0xff]
      %v1075 = vld [vmem:[%s23 + $0x40] sm:$0xff]
      %v1076 = vld [vmem:[%s23 + $0x48] sm:$0xff]
      %v1077 = vld [vmem:[%s23 + $0x50] sm:$0xff]
      %v1078 = vld [vmem:[%s23 + $0x58] sm:$0xff]
      %v1079 = vld [vmem:[%s25] sm:$0x1]
      %v1080 = vld [vmem:[%s27] sm:$0xff]
      %v1081 = vld [vmem:[%s27 + $0x8] sm:$0xff]
      %v1082 = vld [vmem:[%s29] sm:$0x1]
      %v1083 = vld [vmem:[%s31] sm:$0x1]
      %v1084 = vld [vmem:[%s33] sm:$0x1]
      %v1085 = vld [vmem:[%s35] sm:$0x1]
      %v1086 = vld [vmem:[%s35 + $0x1] sm:$0x1]
      %v1087 = vld [vmem:[%s35 + $0x2] sm:$0x1]
      %v1088 = vld [vmem:[%s35 + $0x3] sm:$0x1]
      %v1089 = vld [vmem:[%s37] sm:$0xff]
      %v1090 = vld [vmem:[%s37 + $0x8] sm:$0xff]
      %v1091 = vld [vmem:[%s37 + $0x10] sm:$0xff]
      %v1092 = vld [vmem:[%s37 + $0x18] sm:$0xff]
      %v1093 = vld [vmem:[%s37 + $0x20] sm:$0xff]
      %v1094 = vld [vmem:[%s37 + $0x28] sm:$0xff]
      %v1095 = vld [vmem:[%s37 + $0x30] sm:$0xff]
      %v1096 = vld [vmem:[%s37 + $0x38] sm:$0xff]
      %v1097 = vld [vmem:[%s37 + $0x40] sm:$0xff]
      %v1098 = vld [vmem:[%s37 + $0x48] sm:$0xff]
      %v1099 = vld [vmem:[%s37 + $0x50] sm:$0xff]
      %v1100 = vld [vmem:[%s37 + $0x58] sm:$0xff]
      %v1101 = vld [vmem:[%s37 + $0x60] sm:$0xff]
      %v1102 = vld [vmem:[%s37 + $0x68] sm:$0xff]
      %v1103 = vld [vmem:[%s37 + $0x70] sm:$0xff]
      %v1104 = vld [vmem:[%s37 + $0x78] sm:$0xff]
      %v1105 = vld [vmem:[%s37 + $0x80] sm:$0xff]
      %v1106 = vld [vmem:[%s37 + $0x88] sm:$0xff]
      %v1107 = vld [vmem:[%s37 + $0x90] sm:$0xff]
      %v1108 = vld [vmem:[%s37 + $0x98] sm:$0xff]
      %v1109 = vld [vmem:[%s37 + $0xa0] sm:$0xff]
      %v1110 = vld [vmem:[%s37 + $0xa8] sm:$0xff]
      %v1111 = vld [vmem:[%s37 + $0xb0] sm:$0xff]
      %v1112 = vld [vmem:[%s37 + $0xb8] sm:$0xff]
      %v1113 = vld [vmem:[%s37 + $0xc0] sm:$0xff]
      %v1114 = vld [vmem:[%s37 + $0xc8] sm:$0xff]
      %v1115 = vld [vmem:[%s37 + $0xd0] sm:$0xff]
      %v1116 = vld [vmem:[%s37 + $0xd8] sm:$0xff]
      %v1117 = vld [vmem:[%s37 + $0xe0] sm:$0xff]
      %v1118 = vld [vmem:[%s37 + $0xe8] sm:$0xff]
      %v1119 = vld [vmem:[%s37 + $0xf0] sm:$0xff]
      %v1120 = vld [vmem:[%s37 + $0xf8] sm:$0xff]
      %v1121 = vld [vmem:[%s39] sm:$0x1]
      %v1122 = vld [vmem:[%s41] sm:$0x7f]
      %v1123 = vld [vmem:[%s43] sm:$0x1]
      %v1124 = vld [vmem:[%s45] sm:$0xff]
      %v1125 = vld [vmem:[%s45 + $0x8] sm:$0xff]
      %v1126 = vld [vmem:[%s45 + $0x10] sm:$0xff]
      %v1127 = vld [vmem:[%s45 + $0x18] sm:$0xff]
      %v1128 = vld [vmem:[%s45 + $0x20] sm:$0xff]
      %v1129 = vld [vmem:[%s45 + $0x28] sm:$0xff]
      %v1130 = vld [vmem:[%s45 + $0x30] sm:$0xff]
      %v1131 = vld [vmem:[%s45 + $0x38] sm:$0xff]
      %v1132 = vld [vmem:[%s45 + $0x40] sm:$0xff]
      %v1133 = vld [vmem:[%s45 + $0x48] sm:$0xff]
      %v1134 = vld [vmem:[%s45 + $0x50] sm:$0xff]
      %v1135 = vld [vmem:[%s45 + $0x58] sm:$0xff]
      %v1136 = vld [vmem:[%s45 + $0x60] sm:$0xff]
      %v1137 = vld [vmem:[%s45 + $0x68] sm:$0xff]
      %v1138 = vld [vmem:[%s45 + $0x70] sm:$0xff]
      %v1139 = vld [vmem:[%s45 + $0x78] sm:$0xff]
      %v1140 = vld [vmem:[%s45 + $0x80] sm:$0xff]
      %v1141 = vld [vmem:[%s45 + $0x88] sm:$0xff]
      %v1142 = vld [vmem:[%s45 + $0x90] sm:$0xff]
      %v1143 = vld [vmem:[%s45 + $0x98] sm:$0xff]
      %v1144 = vld [vmem:[%s45 + $0xa0] sm:$0xff]
      %v1145 = vld [vmem:[%s45 + $0xa8] sm:$0xff]
      %v1146 = vld [vmem:[%s45 + $0xb0] sm:$0xff]
      %v1147 = vld [vmem:[%s45 + $0xb8] sm:$0xff]
      %v1148 = vld [vmem:[%s47] sm:$0x1]
      %v1149 = vld [vmem:[%s49] sm:$0xff]
      %v1150 = vld [vmem:[%s49 + $0x8] sm:$0xff]
      %v1151 = vld [vmem:[%s49 + $0x10] sm:$0xff]
      %v1152 = vld [vmem:[%s49 + $0x18] sm:$0xff]
      %v1153 = vld [vmem:[%s49 + $0x20] sm:$0xff]
      %v1154 = vld [vmem:[%s49 + $0x28] sm:$0xff]
      %v1155 = vld [vmem:[%s49 + $0x30] sm:$0xff]
      %v1156 = vld [vmem:[%s49 + $0x38] sm:$0xff]
      %v1157 = vld [vmem:[%s49 + $0x40] sm:$0xff]
      %v1158 = vld [vmem:[%s49 + $0x48] sm:$0xff]
      %v1159 = vld [vmem:[%s49 + $0x50] sm:$0xff]
      %v1160 = vld [vmem:[%s49 + $0x58] sm:$0xff]
      %v1161 = vld [vmem:[%s49 + $0x60] sm:$0xff]
      %v1162 = vld [vmem:[%s49 + $0x68] sm:$0xff]
      %v1163 = vld [vmem:[%s49 + $0x70] sm:$0xff]
      %v1164 = vld [vmem:[%s49 + $0x78] sm:$0xff]
      %v1165 = vld [vmem:[%s51] sm:$0x1]
      %v1166 = vld [vmem:[%s53] sm:$0x1]
      %v1167 = vld [vmem:[%s55] sm:$0x1]
      %v1168 = vld [vmem:[%s57] sm:$0x1]
      %v1169 = vld [vmem:[%s59] sm:$0xff]
      %v1170 = vld [vmem:[%s59 + $0x8] sm:$0xff]
      %v1171 = vld [vmem:[%s59 + $0x10] sm:$0xff]
      %v1172 = vld [vmem:[%s59 + $0x18] sm:$0xff]
      %v1173 = vld [vmem:[%s61] sm:$0xff]
      %v1174 = vld [vmem:[%s61 + $0x8] sm:$0xff]
      %v1175 = vld [vmem:[%s61 + $0x10] sm:$0xff]
      %v1176 = vld [vmem:[%s61 + $0x18] sm:$0xff]
      %v1177 = vld [vmem:[%s61 + $0x20] sm:$0xff]
      %v1178 = vld [vmem:[%s61 + $0x28] sm:$0xff]
      %v1179 = vld [vmem:[%s61 + $0x30] sm:$0xff]
      %v1180 = vld [vmem:[%s61 + $0x38] sm:$0xff]
      %v1181 = vld [vmem:[%s63] sm:$0xff]
      %v1182 = vld [vmem:[%s63 + $0x8] sm:$0xff]
      %v1183 = vld [vmem:[%s63 + $0x10] sm:$0xff]
      %v1184 = vld [vmem:[%s63 + $0x18] sm:$0xff]
      %v1185 = vld [vmem:[%s65] sm:$0xff]
      %v1186 = vld [vmem:[%s65 + $0x8] sm:$0xff]
      %v1187 = vld [vmem:[%s65 + $0x10] sm:$0xff]
      %v1188 = vld [vmem:[%s65 + $0x18] sm:$0xff]
      %v1189 = vld [vmem:[%s1008] sm:$0xff]
      %v1190 = vld [vmem:[%s1008 + $0x8] sm:$0xff]
      %v1191 = vld [vmem:[%s1008 + $0x10] sm:$0xff]
      %v1192 = vld [vmem:[%s1008 + $0x18] sm:$0xff]
      %v1193 = vld [vmem:[%s1008 + $0x20] sm:$0xff]
      %v1194 = vld [vmem:[%s1008 + $0x28] sm:$0xff]
      %v1195 = vld [vmem:[%s1008 + $0x30] sm:$0xff]
      %v1196 = vld [vmem:[%s1008 + $0x38] sm:$0xff]
      %v1197 = vld [vmem:[%s1008 + $0x40] sm:$0xff]
      %v1198 = vld [vmem:[%s1008 + $0x48] sm:$0xff]
      %v1199 = vld [vmem:[%s1008 + $0x50] sm:$0xff]
      %v1200 = vld [vmem:[%s1008 + $0x58] sm:$0xff]
      %v1201 = vld [vmem:[%s1008 + $0x60] sm:$0xff]
      %v1202 = vld [vmem:[%s1008 + $0x68] sm:$0xff]
      %v1203 = vld [vmem:[%s1008 + $0x70] sm:$0xff]
      %v1204 = vld [vmem:[%s1008 + $0x78] sm:$0xff]
      %vm1221 = vcmask 1045504
      %v1222 = vrot.slane %v1189, 2
      %v1223 = vrot.slane %v1190, 2
      %v1224 = vsel %vm1221, %v1222, %v1223
      %v1225 = vrot.slane %v1191, 2
      %v1226 = vsel %vm1221, %v1223, %v1225
      %v1227 = vrot.slane %v1192, 2
      %v1228 = vsel %vm1221, %v1225, %v1227
      %v1229 = vrot.slane %v1193, 2
      %v1230 = vsel %vm1221, %v1227, %v1229
      %v1231 = vrot.slane %v1194, 2
      %v1232 = vsel %vm1221, %v1229, %v1231
      %v1233 = vrot.slane %v1195, 2
      %v1234 = vsel %vm1221, %v1231, %v1233
      %v1235 = vrot.slane %v1196, 2
      %v1236 = vsel %vm1221, %v1233, %v1235
      %v1237 = vrot.slane %v1197, 2
      %v1238 = vsel %vm1221, %v1235, %v1237
      %v1239 = vrot.slane %v1198, 2
      %v1240 = vsel %vm1221, %v1237, %v1239
      %v1241 = vrot.slane %v1199, 2
      %v1242 = vsel %vm1221, %v1239, %v1241
      %v1243 = vrot.slane %v1200, 2
      %v1244 = vsel %vm1221, %v1241, %v1243
      %v1245 = vrot.slane %v1201, 2
      %v1246 = vsel %vm1221, %v1243, %v1245
      %v1247 = vrot.slane %v1202, 2
      %v1248 = vsel %vm1221, %v1245, %v1247
      %v1249 = vrot.slane %v1203, 2
      %v1250 = vsel %vm1221, %v1247, %v1249
      %v1251 = vrot.slane %v1204, 2
      %v1252 = vsel %vm1221, %v1249, %v1251
      %v1254 = vsel %vm1221, 0.0, %v1222
      %1256 = vset.pattern.permute.xlu0 0
      %1257 = vperm.xlu0 %1256, %v1254
      %v1258 = vpop.permute.xlu0 %1257
      %1260 = vset.pattern.permute.xlu0 0
      %1261 = vperm.xlu0 %1260, %v1224
      %v1262 = vpop.permute.xlu0 %1261
      %1264 = vset.pattern.permute.xlu0 0
      %1265 = vperm.xlu0 %1264, %v1226
      %v1266 = vpop.permute.xlu0 %1265
      %1268 = vset.pattern.permute.xlu0 0
      %1269 = vperm.xlu0 %1268, %v1228
      %v1270 = vpop.permute.xlu0 %1269
      %1272 = vset.pattern.permute.xlu0 0
      %1273 = vperm.xlu0 %1272, %v1230
      %v1274 = vpop.permute.xlu0 %1273
      %1276 = vset.pattern.permute.xlu0 0
      %1277 = vperm.xlu0 %1276, %v1232
      %v1278 = vpop.permute.xlu0 %1277
      %1280 = vset.pattern.permute.xlu0 0
      %1281 = vperm.xlu0 %1280, %v1234
      %v1282 = vpop.permute.xlu0 %1281
      %1284 = vset.pattern.permute.xlu0 0
      %1285 = vperm.xlu0 %1284, %v1236
      %v1286 = vpop.permute.xlu0 %1285
      %1288 = vset.pattern.permute.xlu0 0
      %1289 = vperm.xlu0 %1288, %v1238
      %v1290 = vpop.permute.xlu0 %1289
      %1292 = vset.pattern.permute.xlu0 0
      %1293 = vperm.xlu0 %1292, %v1240
      %v1294 = vpop.permute.xlu0 %1293
      %1296 = vset.pattern.permute.xlu0 0
      %1297 = vperm.xlu0 %1296, %v1242
      %v1298 = vpop.permute.xlu0 %1297
      %1300 = vset.pattern.permute.xlu0 0
      %1301 = vperm.xlu0 %1300, %v1244
      %v1302 = vpop.permute.xlu0 %1301
      %1304 = vset.pattern.permute.xlu0 0
      %1305 = vperm.xlu0 %1304, %v1246
      %v1306 = vpop.permute.xlu0 %1305
      %1308 = vset.pattern.permute.xlu0 0
      %1309 = vperm.xlu0 %1308, %v1248
      %v1310 = vpop.permute.xlu0 %1309
      %1312 = vset.pattern.permute.xlu0 0
      %1313 = vperm.xlu0 %1312, %v1250
      %v1314 = vpop.permute.xlu0 %1313
      %1316 = vset.pattern.permute.xlu0 0
      %1317 = vperm.xlu0 %1316, %v1252
      %v1318 = vpop.permute.xlu0 %1317
      %v1320 = vlaneseq
      %v1321 = vshrl.u32 %v1320, 7
      %v1322 = vsub.s32 0, %v1321
      %v1323 = vrot.slane %v1122, %v1322
      %v1324 = vmul.f32 %v1258, %v1323
      %v1325 = vmul.f32 %v1262, %v1323
      %v1326 = vmul.f32 %v1266, %v1323
      %v1327 = vmul.f32 %v1270, %v1323
      %v1328 = vmul.f32 %v1274, %v1323
      %v1329 = vmul.f32 %v1278, %v1323
      %v1330 = vmul.f32 %v1282, %v1323
      %v1331 = vmul.f32 %v1286, %v1323
      %v1332 = vmul.f32 %v1290, %v1323
      %v1333 = vmul.f32 %v1294, %v1323
      %v1334 = vmul.f32 %v1298, %v1323
      %v1335 = vmul.f32 %v1302, %v1323
      %v1336 = vmul.f32 %v1306, %v1323
      %v1337 = vmul.f32 %v1310, %v1323
      %v1338 = vmul.f32 %v1314, %v1323
      %v1339 = vmul.f32 %v1318, %v1323
      %v1340 = vadd.f32 %v1324, 0.0
      %v1341 = vadd.f32 %v1325, 0.0
      %v1342 = vadd.f32 %v1326, 0.0
      %v1343 = vadd.f32 %v1327, 0.0
      %v1344 = vadd.f32 %v1328, 0.0
      %v1345 = vadd.f32 %v1329, 0.0
      %v1346 = vadd.f32 %v1330, 0.0
      %v1347 = vadd.f32 %v1331, 0.0
      %v1348 = vadd.f32 %v1332, 0.0
      %v1349 = vadd.f32 %v1333, 0.0
      %v1350 = vadd.f32 %v1334, 0.0
      %v1351 = vadd.f32 %v1335, 0.0
      %v1352 = vadd.f32 %v1336, 0.0
      %v1353 = vadd.f32 %v1337, 0.0
      %v1354 = vadd.f32 %v1338, 0.0
      %v1355 = vadd.f32 %v1339, 0.0
      %1356 = vset.pattern.permute.xlu0 0
      %1357 = vperm.xlu0 %1356, %v1251
      %v1358 = vpop.permute.xlu0 %1357
      %v1360 = vlaneseq
      %v1361 = vshrl.u32 %v1360, 7
      %v1362 = vsub.s32 1, %v1361
      %v1363 = vrot.slane %v1122, %v1362
      %v1364 = vmul.f32 %v1258, %v1363
      %v1365 = vmul.f32 %v1262, %v1363
      %v1366 = vmul.f32 %v1266, %v1363
      %v1367 = vmul.f32 %v1270, %v1363
      %v1368 = vmul.f32 %v1274, %v1363
      %v1369 = vmul.f32 %v1278, %v1363
      %v1370 = vmul.f32 %v1282, %v1363
      %v1371 = vmul.f32 %v1286, %v1363
      %v1372 = vmul.f32 %v1290, %v1363
      %v1373 = vmul.f32 %v1294, %v1363
      %v1374 = vmul.f32 %v1298, %v1363
      %v1375 = vmul.f32 %v1302, %v1363
      %v1376 = vmul.f32 %v1306, %v1363
      %v1377 = vmul.f32 %v1310, %v1363
      %v1378 = vmul.f32 %v1314, %v1363
      %v1379 = vmul.f32 %v1318, %v1363
      %v1380 = vmul.f32 %v1358, %v1363
      %vm1398 = vcmask 1046528
      %v1399 = vrot.slane %v1364, 1
      %v1400 = vrot.slane %v1365, 1
      %v1401 = vsel %vm1398, %v1399, %v1400
      %v1402 = vrot.slane %v1366, 1
      %v1403 = vsel %vm1398, %v1400, %v1402
      %v1404 = vrot.slane %v1367, 1
      %v1405 = vsel %vm1398, %v1402, %v1404
      %v1406 = vrot.slane %v1368, 1
      %v1407 = vsel %vm1398, %v1404, %v1406
      %v1408 = vrot.slane %v1369, 1
      %v1409 = vsel %vm1398, %v1406, %v1408
      %v1410 = vrot.slane %v1370, 1
      %v1411 = vsel %vm1398, %v1408, %v1410
      %v1412 = vrot.slane %v1371, 1
      %v1413 = vsel %vm1398, %v1410, %v1412
      %v1414 = vrot.slane %v1372, 1
      %v1415 = vsel %vm1398, %v1412, %v1414
      %v1416 = vrot.slane %v1373, 1
      %v1417 = vsel %vm1398, %v1414, %v1416
      %v1418 = vrot.slane %v1374, 1
      %v1419 = vsel %vm1398, %v1416, %v1418
      %v1420 = vrot.slane %v1375, 1
      %v1421 = vsel %vm1398, %v1418, %v1420
      %v1422 = vrot.slane %v1376, 1
      %v1423 = vsel %vm1398, %v1420, %v1422
      %v1424 = vrot.slane %v1377, 1
      %v1425 = vsel %vm1398, %v1422, %v1424
      %v1426 = vrot.slane %v1378, 1
      %v1427 = vsel %vm1398, %v1424, %v1426
      %v1428 = vrot.slane %v1379, 1
      %v1429 = vsel %vm1398, %v1426, %v1428
      %v1430 = vrot.slane %v1380, 1
      %v1431 = vsel %vm1398, %v1428, %v1430
      %v1448 = vadd.f32 %v1340, %v1401
      %v1449 = vadd.f32 %v1341, %v1403
      %v1450 = vadd.f32 %v1342, %v1405
      %v1451 = vadd.f32 %v1343, %v1407
      %v1452 = vadd.f32 %v1344, %v1409
      %v1453 = vadd.f32 %v1345, %v1411
      %v1454 = vadd.f32 %v1346, %v1413
      %v1455 = vadd.f32 %v1347, %v1415
      %v1456 = vadd.f32 %v1348, %v1417
      %v1457 = vadd.f32 %v1349, %v1419
      %v1458 = vadd.f32 %v1350, %v1421
      %v1459 = vadd.f32 %v1351, %v1423
      %v1460 = vadd.f32 %v1352, %v1425
      %v1461 = vadd.f32 %v1353, %v1427
      %v1462 = vadd.f32 %v1354, %v1429
      %v1463 = vadd.f32 %v1355, %v1431
      %v1464 = vlaneseq
      %v1465 = vshrl.u32 %v1464, 7
      %v1466 = vsub.s32 2, %v1465
      %v1467 = vrot.slane %v1122, %v1466
      %v1468 = vmul.f32 %v1258, %v1467
      %v1469 = vmul.f32 %v1262, %v1467
      %v1470 = vmul.f32 %v1266, %v1467
      %v1471 = vmul.f32 %v1270, %v1467
      %v1472 = vmul.f32 %v1274, %v1467
      %v1473 = vmul.f32 %v1278, %v1467
      %v1474 = vmul.f32 %v1282, %v1467
      %v1475 = vmul.f32 %v1286, %v1467
      %v1476 = vmul.f32 %v1290, %v1467
      %v1477 = vmul.f32 %v1294, %v1467
      %v1478 = vmul.f32 %v1298, %v1467
      %v1479 = vmul.f32 %v1302, %v1467
      %v1480 = vmul.f32 %v1306, %v1467
      %v1481 = vmul.f32 %v1310, %v1467
      %v1482 = vmul.f32 %v1314, %v1467
      %v1483 = vmul.f32 %v1318, %v1467
      %v1484 = vmul.f32 %v1358, %v1467
      %v1502 = vrot.slane %v1468, 2
      %v1503 = vrot.slane %v1469, 2
      %v1504 = vsel %vm1221, %v1502, %v1503
      %v1505 = vrot.slane %v1470, 2
      %v1506 = vsel %vm1221, %v1503, %v1505
      %v1507 = vrot.slane %v1471, 2
      %v1508 = vsel %vm1221, %v1505, %v1507
      %v1509 = vrot.slane %v1472, 2
      %v1510 = vsel %vm1221, %v1507, %v1509
      %v1511 = vrot.slane %v1473, 2
      %v1512 = vsel %vm1221, %v1509, %v1511
      %v1513 = vrot.slane %v1474, 2
      %v1514 = vsel %vm1221, %v1511, %v1513
      %v1515 = vrot.slane %v1475, 2
      %v1516 = vsel %vm1221, %v1513, %v1515
      %v1517 = vrot.slane %v1476, 2
      %v1518 = vsel %vm1221, %v1515, %v1517
      %v1519 = vrot.slane %v1477, 2
      %v1520 = vsel %vm1221, %v1517, %v1519
      %v1521 = vrot.slane %v1478, 2
      %v1522 = vsel %vm1221, %v1519, %v1521
      %v1523 = vrot.slane %v1479, 2
      %v1524 = vsel %vm1221, %v1521, %v1523
      %v1525 = vrot.slane %v1480, 2
      %v1526 = vsel %vm1221, %v1523, %v1525
      %v1527 = vrot.slane %v1481, 2
      %v1528 = vsel %vm1221, %v1525, %v1527
      %v1529 = vrot.slane %v1482, 2
      %v1530 = vsel %vm1221, %v1527, %v1529
      %v1531 = vrot.slane %v1483, 2
      %v1532 = vsel %vm1221, %v1529, %v1531
      %v1533 = vrot.slane %v1484, 2
      %v1534 = vsel %vm1221, %v1531, %v1533
      %v1551 = vadd.f32 %v1448, %v1504
      %v1552 = vadd.f32 %v1449, %v1506
      %v1553 = vadd.f32 %v1450, %v1508
      %v1554 = vadd.f32 %v1451, %v1510
      %v1555 = vadd.f32 %v1452, %v1512
      %v1556 = vadd.f32 %v1453, %v1514
      %v1557 = vadd.f32 %v1454, %v1516
      %v1558 = vadd.f32 %v1455, %v1518
      %v1559 = vadd.f32 %v1456, %v1520
      %v1560 = vadd.f32 %v1457, %v1522
      %v1561 = vadd.f32 %v1458, %v1524
      %v1562 = vadd.f32 %v1459, %v1526
      %v1563 = vadd.f32 %v1460, %v1528
      %v1564 = vadd.f32 %v1461, %v1530
      %v1565 = vadd.f32 %v1462, %v1532
      %v1566 = vadd.f32 %v1463, %v1534
      %v1567 = vlaneseq
      %v1568 = vshrl.u32 %v1567, 7
      %v1569 = vsub.s32 3, %v1568
      %v1570 = vrot.slane %v1122, %v1569
      %v1571 = vmul.f32 %v1258, %v1570
      %v1572 = vmul.f32 %v1262, %v1570
      %v1573 = vmul.f32 %v1266, %v1570
      %v1574 = vmul.f32 %v1270, %v1570
      %v1575 = vmul.f32 %v1274, %v1570
      %v1576 = vmul.f32 %v1278, %v1570
      %v1577 = vmul.f32 %v1282, %v1570
      %v1578 = vmul.f32 %v1286, %v1570
      %v1579 = vmul.f32 %v1290, %v1570
      %v1580 = vmul.f32 %v1294, %v1570
      %v1581 = vmul.f32 %v1298, %v1570
      %v1582 = vmul.f32 %v1302, %v1570
      %v1583 = vmul.f32 %v1306, %v1570
      %v1584 = vmul.f32 %v1310, %v1570
      %v1585 = vmul.f32 %v1314, %v1570
      %v1586 = vmul.f32 %v1318, %v1570
      %v1587 = vmul.f32 %v1358, %v1570
      %vm1605 = vcmask 1044480
      %v1606 = vrot.slane %v1571, 3
      %v1607 = vrot.slane %v1572, 3
      %v1608 = vsel %vm1605, %v1606, %v1607
      %v1609 = vrot.slane %v1573, 3
      %v1610 = vsel %vm1605, %v1607, %v1609
      %v1611 = vrot.slane %v1574, 3
      %v1612 = vsel %vm1605, %v1609, %v1611
      %v1613 = vrot.slane %v1575, 3
      %v1614 = vsel %vm1605, %v1611, %v1613
      %v1615 = vrot.slane %v1576, 3
      %v1616 = vsel %vm1605, %v1613, %v1615
      %v1617 = vrot.slane %v1577, 3
      %v1618 = vsel %vm1605, %v1615, %v1617
      %v1619 = vrot.slane %v1578, 3
      %v1620 = vsel %vm1605, %v1617, %v1619
      %v1621 = vrot.slane %v1579, 3
      %v1622 = vsel %vm1605, %v1619, %v1621
      %v1623 = vrot.slane %v1580, 3
      %v1624 = vsel %vm1605, %v1621, %v1623
      %v1625 = vrot.slane %v1581, 3
      %v1626 = vsel %vm1605, %v1623, %v1625
      %v1627 = vrot.slane %v1582, 3
      %v1628 = vsel %vm1605, %v1625, %v1627
      %v1629 = vrot.slane %v1583, 3
      %v1630 = vsel %vm1605, %v1627, %v1629
      %v1631 = vrot.slane %v1584, 3
      %v1632 = vsel %vm1605, %v1629, %v1631
      %v1633 = vrot.slane %v1585, 3
      %v1634 = vsel %vm1605, %v1631, %v1633
      %v1635 = vrot.slane %v1586, 3
      %v1636 = vsel %vm1605, %v1633, %v1635
      %v1637 = vrot.slane %v1587, 3
      %v1638 = vsel %vm1605, %v1635, %v1637
      %v1655 = vadd.f32 %v1551, %v1608
      %v1656 = vadd.f32 %v1552, %v1610
      %v1657 = vadd.f32 %v1553, %v1612
      %v1658 = vadd.f32 %v1554, %v1614
      %v1659 = vadd.f32 %v1555, %v1616
      %v1660 = vadd.f32 %v1556, %v1618
      %v1661 = vadd.f32 %v1557, %v1620
      %v1662 = vadd.f32 %v1558, %v1622
      %v1663 = vadd.f32 %v1559, %v1624
      %v1664 = vadd.f32 %v1560, %v1626
      %v1665 = vadd.f32 %v1561, %v1628
      %v1666 = vadd.f32 %v1562, %v1630
      %v1667 = vadd.f32 %v1563, %v1632
      %v1668 = vadd.f32 %v1564, %v1634
      %v1669 = vadd.f32 %v1565, %v1636
      %v1670 = vadd.f32 %v1566, %v1638
      %v1671 = vlaneseq
      %v1672 = vshrl.u32 %v1671, 7
      %v1673 = vsub.s32 4, %v1672
      %v1674 = vrot.slane %v1122, %v1673
      %v1675 = vmul.f32 %v1258, %v1674
      %v1676 = vmul.f32 %v1262, %v1674
      %v1677 = vmul.f32 %v1266, %v1674
      %v1678 = vmul.f32 %v1270, %v1674
      %v1679 = vmul.f32 %v1274, %v1674
      %v1680 = vmul.f32 %v1278, %v1674
      %v1681 = vmul.f32 %v1282, %v1674
      %v1682 = vmul.f32 %v1286, %v1674
      %v1683 = vmul.f32 %v1290, %v1674
      %v1684 = vmul.f32 %v1294, %v1674
      %v1685 = vmul.f32 %v1298, %v1674
      %v1686 = vmul.f32 %v1302, %v1674
      %v1687 = vmul.f32 %v1306, %v1674
      %v1688 = vmul.f32 %v1310, %v1674
      %v1689 = vmul.f32 %v1314, %v1674
      %v1690 = vmul.f32 %v1318, %v1674
      %v1691 = vmul.f32 %v1358, %v1674
      %vm1709 = vcmask 1043456
      %v1710 = vrot.slane %v1675, 4
      %v1711 = vrot.slane %v1676, 4
      %v1712 = vsel %vm1709, %v1710, %v1711
      %v1713 = vrot.slane %v1677, 4
      %v1714 = vsel %vm1709, %v1711, %v1713
      %v1715 = vrot.slane %v1678, 4
      %v1716 = vsel %vm1709, %v1713, %v1715
      %v1717 = vrot.slane %v1679, 4
      %v1718 = vsel %vm1709, %v1715, %v1717
      %v1719 = vrot.slane %v1680, 4
      %v1720 = vsel %vm1709, %v1717, %v1719
      %v1721 = vrot.slane %v1681, 4
      %v1722 = vsel %vm1709, %v1719, %v1721
      %v1723 = vrot.slane %v1682, 4
      %v1724 = vsel %vm1709, %v1721, %v1723
      %v1725 = vrot.slane %v1683, 4
      %v1726 = vsel %vm1709, %v1723, %v1725
      %v1727 = vrot.slane %v1684, 4
      %v1728 = vsel %vm1709, %v1725, %v1727
      %v1729 = vrot.slane %v1685, 4
      %v1730 = vsel %vm1709, %v1727, %v1729
      %v1731 = vrot.slane %v1686, 4
      %v1732 = vsel %vm1709, %v1729, %v1731
      %v1733 = vrot.slane %v1687, 4
      %v1734 = vsel %vm1709, %v1731, %v1733
      %v1735 = vrot.slane %v1688, 4
      %v1736 = vsel %vm1709, %v1733, %v1735
      %v1737 = vrot.slane %v1689, 4
      %v1738 = vsel %vm1709, %v1735, %v1737
      %v1739 = vrot.slane %v1690, 4
      %v1740 = vsel %vm1709, %v1737, %v1739
      %v1741 = vrot.slane %v1691, 4
      %v1742 = vsel %vm1709, %v1739, %v1741
      %v1759 = vadd.f32 %v1655, %v1712
      %v1760 = vadd.f32 %v1656, %v1714
      %v1761 = vadd.f32 %v1657, %v1716
      %v1762 = vadd.f32 %v1658, %v1718
      %v1763 = vadd.f32 %v1659, %v1720
      %v1764 = vadd.f32 %v1660, %v1722
      %v1765 = vadd.f32 %v1661, %v1724
      %v1766 = vadd.f32 %v1662, %v1726
      %v1767 = vadd.f32 %v1663, %v1728
      %v1768 = vadd.f32 %v1664, %v1730
      %v1769 = vadd.f32 %v1665, %v1732
      %v1770 = vadd.f32 %v1666, %v1734
      %v1771 = vadd.f32 %v1667, %v1736
      %v1772 = vadd.f32 %v1668, %v1738
      %v1773 = vadd.f32 %v1669, %v1740
      %v1774 = vadd.f32 %v1670, %v1742
      %v1775 = vlaneseq
      %v1776 = vshrl.u32 %v1775, 7
      %v1777 = vsub.s32 5, %v1776
      %v1778 = vrot.slane %v1122, %v1777
      %v1779 = vmul.f32 %v1258, %v1778
      %v1780 = vmul.f32 %v1262, %v1778
      %v1781 = vmul.f32 %v1266, %v1778
      %v1782 = vmul.f32 %v1270, %v1778
      %v1783 = vmul.f32 %v1274, %v1778
      %v1784 = vmul.f32 %v1278, %v1778
      %v1785 = vmul.f32 %v1282, %v1778
      %v1786 = vmul.f32 %v1286, %v1778
      %v1787 = vmul.f32 %v1290, %v1778
      %v1788 = vmul.f32 %v1294, %v1778
      %v1789 = vmul.f32 %v1298, %v1778
      %v1790 = vmul.f32 %v1302, %v1778
      %v1791 = vmul.f32 %v1306, %v1778
      %v1792 = vmul.f32 %v1310, %v1778
      %v1793 = vmul.f32 %v1314, %v1778
      %v1794 = vmul.f32 %v1318, %v1778
      %v1795 = vmul.f32 %v1358, %v1778
      %vm1813 = vcmask 1042432
      %v1814 = vrot.slane %v1779, 5
      %v1815 = vrot.slane %v1780, 5
      %v1816 = vsel %vm1813, %v1814, %v1815
      %v1817 = vrot.slane %v1781, 5
      %v1818 = vsel %vm1813, %v1815, %v1817
      %v1819 = vrot.slane %v1782, 5
      %v1820 = vsel %vm1813, %v1817, %v1819
      %v1821 = vrot.slane %v1783, 5
      %v1822 = vsel %vm1813, %v1819, %v1821
      %v1823 = vrot.slane %v1784, 5
      %v1824 = vsel %vm1813, %v1821, %v1823
      %v1825 = vrot.slane %v1785, 5
      %v1826 = vsel %vm1813, %v1823, %v1825
      %v1827 = vrot.slane %v1786, 5
      %v1828 = vsel %vm1813, %v1825, %v1827
      %v1829 = vrot.slane %v1787, 5
      %v1830 = vsel %vm1813, %v1827, %v1829
      %v1831 = vrot.slane %v1788, 5
      %v1832 = vsel %vm1813, %v1829, %v1831
      %v1833 = vrot.slane %v1789, 5
      %v1834 = vsel %vm1813, %v1831, %v1833
      %v1835 = vrot.slane %v1790, 5
      %v1836 = vsel %vm1813, %v1833, %v1835
      %v1837 = vrot.slane %v1791, 5
      %v1838 = vsel %vm1813, %v1835, %v1837
      %v1839 = vrot.slane %v1792, 5
      %v1840 = vsel %vm1813, %v1837, %v1839
      %v1841 = vrot.slane %v1793, 5
      %v1842 = vsel %vm1813, %v1839, %v1841
      %v1843 = vrot.slane %v1794, 5
      %v1844 = vsel %vm1813, %v1841, %v1843
      %v1845 = vrot.slane %v1795, 5
      %v1846 = vsel %vm1813, %v1843, %v1845
      %v1863 = vadd.f32 %v1759, %v1816
      %v1864 = vadd.f32 %v1760, %v1818
      %v1865 = vadd.f32 %v1761, %v1820
      %v1866 = vadd.f32 %v1762, %v1822
      %v1867 = vadd.f32 %v1763, %v1824
      %v1868 = vadd.f32 %v1764, %v1826
      %v1869 = vadd.f32 %v1765, %v1828
      %v1870 = vadd.f32 %v1766, %v1830
      %v1871 = vadd.f32 %v1767, %v1832
      %v1872 = vadd.f32 %v1768, %v1834
      %v1873 = vadd.f32 %v1769, %v1836
      %v1874 = vadd.f32 %v1770, %v1838
      %v1875 = vadd.f32 %v1771, %v1840
      %v1876 = vadd.f32 %v1772, %v1842
      %v1877 = vadd.f32 %v1773, %v1844
      %v1878 = vadd.f32 %v1774, %v1846
      %v1879 = vlaneseq
      %v1880 = vshrl.u32 %v1879, 7
      %v1881 = vsub.s32 6, %v1880
      %v1882 = vrot.slane %v1122, %v1881
      %v1883 = vmul.f32 %v1258, %v1882
      %v1884 = vmul.f32 %v1262, %v1882
      %v1885 = vmul.f32 %v1266, %v1882
      %v1886 = vmul.f32 %v1270, %v1882
      %v1887 = vmul.f32 %v1274, %v1882
      %v1888 = vmul.f32 %v1278, %v1882
      %v1889 = vmul.f32 %v1282, %v1882
      %v1890 = vmul.f32 %v1286, %v1882
      %v1891 = vmul.f32 %v1290, %v1882
      %v1892 = vmul.f32 %v1294, %v1882
      %v1893 = vmul.f32 %v1298, %v1882
      %v1894 = vmul.f32 %v1302, %v1882
      %v1895 = vmul.f32 %v1306, %v1882
      %v1896 = vmul.f32 %v1310, %v1882
      %v1897 = vmul.f32 %v1314, %v1882
      %v1898 = vmul.f32 %v1318, %v1882
      %v1899 = vmul.f32 %v1358, %v1882
      %vm1917 = vcmask 1041408
      %v1918 = vrot.slane %v1883, 6
      %v1919 = vrot.slane %v1884, 6
      %v1920 = vsel %vm1917, %v1918, %v1919
      %v1921 = vrot.slane %v1885, 6
      %v1922 = vsel %vm1917, %v1919, %v1921
      %v1923 = vrot.slane %v1886, 6
      %v1924 = vsel %vm1917, %v1921, %v1923
      %v1925 = vrot.slane %v1887, 6
      %v1926 = vsel %vm1917, %v1923, %v1925
      %v1927 = vrot.slane %v1888, 6
      %v1928 = vsel %vm1917, %v1925, %v1927
      %v1929 = vrot.slane %v1889, 6
      %v1930 = vsel %vm1917, %v1927, %v1929
      %v1931 = vrot.slane %v1890, 6
      %v1932 = vsel %vm1917, %v1929, %v1931
      %v1933 = vrot.slane %v1891, 6
      %v1934 = vsel %vm1917, %v1931, %v1933
      %v1935 = vrot.slane %v1892, 6
      %v1936 = vsel %vm1917, %v1933, %v1935
      %v1937 = vrot.slane %v1893, 6
      %v1938 = vsel %vm1917, %v1935, %v1937
      %v1939 = vrot.slane %v1894, 6
      %v1940 = vsel %vm1917, %v1937, %v1939
      %v1941 = vrot.slane %v1895, 6
      %v1942 = vsel %vm1917, %v1939, %v1941
      %v1943 = vrot.slane %v1896, 6
      %v1944 = vsel %vm1917, %v1941, %v1943
      %v1945 = vrot.slane %v1897, 6
      %v1946 = vsel %vm1917, %v1943, %v1945
      %v1947 = vrot.slane %v1898, 6
      %v1948 = vsel %vm1917, %v1945, %v1947
      %v1949 = vrot.slane %v1899, 6
      %v1950 = vsel %vm1917, %v1947, %v1949
      %v1967 = vadd.f32 %v1863, %v1920
      %v1968 = vadd.f32 %v1864, %v1922
      %v1969 = vadd.f32 %v1865, %v1924
      %v1970 = vadd.f32 %v1866, %v1926
      %v1971 = vadd.f32 %v1867, %v1928
      %v1972 = vadd.f32 %v1868, %v1930
      %v1973 = vadd.f32 %v1869, %v1932
      %v1974 = vadd.f32 %v1870, %v1934
      %v1975 = vadd.f32 %v1871, %v1936
      %v1976 = vadd.f32 %v1872, %v1938
      %v1977 = vadd.f32 %v1873, %v1940
      %v1978 = vadd.f32 %v1874, %v1942
      %v1979 = vadd.f32 %v1875, %v1944
      %v1980 = vadd.f32 %v1876, %v1946
      %v1981 = vadd.f32 %v1877, %v1948
      %v1982 = vadd.f32 %v1878, %v1950
      %v1984 = vlaneseq
      %v1985 = vshrl.u32 %v1984, 7
      %v1986 = vsub.s32 0, %v1985
      %v1987 = vrot.slane %v1121, %v1986
      %v1989 = vadd.f32 %v1967, %v1987
      %v1990 = vadd.f32 %v1968, %v1987
      %v1991 = vadd.f32 %v1969, %v1987
      %v1992 = vadd.f32 %v1970, %v1987
      %v1993 = vadd.f32 %v1971, %v1987
      %v1994 = vadd.f32 %v1972, %v1987
      %v1995 = vadd.f32 %v1973, %v1987
      %v1996 = vadd.f32 %v1974, %v1987
      %v1997 = vadd.f32 %v1975, %v1987
      %v1998 = vadd.f32 %v1976, %v1987
      %v1999 = vadd.f32 %v1977, %v1987
      %v2000 = vadd.f32 %v1978, %v1987
      %v2001 = vadd.f32 %v1979, %v1987
      %v2002 = vadd.f32 %v1980, %v1987
      %v2003 = vadd.f32 %v1981, %v1987
      %v2004 = vadd.f32 %v1982, %v1987
      %vm2005 = vcmp.gt.f32.partialorder %v1989, 0.0
      %vm2006 = vcmp.gt.f32.partialorder %v1990, 0.0
      %vm2007 = vcmp.gt.f32.partialorder %v1991, 0.0
      %vm2008 = vcmp.gt.f32.partialorder %v1992, 0.0
      %vm2009 = vcmp.gt.f32.partialorder %v1993, 0.0
      %vm2010 = vcmp.gt.f32.partialorder %v1994, 0.0
      %vm2011 = vcmp.gt.f32.partialorder %v1995, 0.0
      %vm2012 = vcmp.gt.f32.partialorder %v1996, 0.0
      %vm2013 = vcmp.gt.f32.partialorder %v1997, 0.0
      %vm2014 = vcmp.gt.f32.partialorder %v1998, 0.0
      %vm2015 = vcmp.gt.f32.partialorder %v1999, 0.0
      %vm2016 = vcmp.gt.f32.partialorder %v2000, 0.0
      %vm2017 = vcmp.gt.f32.partialorder %v2001, 0.0
      %vm2018 = vcmp.gt.f32.partialorder %v2002, 0.0
      %vm2019 = vcmp.gt.f32.partialorder %v2003, 0.0
      %vm2020 = vcmp.gt.f32.partialorder %v2004, 0.0
      %v2021 = vmul.f32 %v1989, 1.442695
      %v2022 = vpow.pop %v2021
      %v2023 = vmul.f32 %v1990, 1.442695
      %v2024 = vpow.pop %v2023
      %v2025 = vmul.f32 %v1991, 1.442695
      %v2026 = vpow.pop %v2025
      %v2027 = vmul.f32 %v1992, 1.442695
      %v2028 = vpow.pop %v2027
      %v2029 = vmul.f32 %v1993, 1.442695
      %v2030 = vpow.pop %v2029
      %v2031 = vmul.f32 %v1994, 1.442695
      %v2032 = vpow.pop %v2031
      %v2033 = vmul.f32 %v1995, 1.442695
      %v2034 = vpow.pop %v2033
      %v2035 = vmul.f32 %v1996, 1.442695
      %v2036 = vpow.pop %v2035
      %v2037 = vmul.f32 %v1997, 1.442695
      %v2038 = vpow.pop %v2037
      %v2039 = vmul.f32 %v1998, 1.442695
      %v2040 = vpow.pop %v2039
      %v2041 = vmul.f32 %v1999, 1.442695
      %v2042 = vpow.pop %v2041
      %v2043 = vmul.f32 %v2000, 1.442695
      %v2044 = vpow.pop %v2043
      %v2045 = vmul.f32 %v2001, 1.442695
      %v2046 = vpow.pop %v2045
      %v2047 = vmul.f32 %v2002, 1.442695
      %v2048 = vpow.pop %v2047
      %v2049 = vmul.f32 %v2003, 1.442695
      %v2050 = vpow.pop %v2049
      %v2051 = vmul.f32 %v2004, 1.442695
      %v2052 = vpow.pop %v2051
      %v2053 = vsub.f32 %v2022, 1.0
      %v2054 = vsub.f32 %v2024, 1.0
      %v2055 = vsub.f32 %v2026, 1.0
      %v2056 = vsub.f32 %v2028, 1.0
      %v2057 = vsub.f32 %v2030, 1.0
      %v2058 = vsub.f32 %v2032, 1.0
      %v2059 = vsub.f32 %v2034, 1.0
      %v2060 = vsub.f32 %v2036, 1.0
      %v2061 = vsub.f32 %v2038, 1.0
      %v2062 = vsub.f32 %v2040, 1.0
      %v2063 = vsub.f32 %v2042, 1.0
      %v2064 = vsub.f32 %v2044, 1.0
      %v2065 = vsub.f32 %v2046, 1.0
      %v2066 = vsub.f32 %v2048, 1.0
      %v2067 = vsub.f32 %v2050, 1.0
      %v2068 = vsub.f32 %v2052, 1.0
      %v2069 = vsel %vm2005, %v1989, %v2053
      %v2070 = vsel %vm2006, %v1990, %v2054
      %v2071 = vsel %vm2007, %v1991, %v2055
      %v2072 = vsel %vm2008, %v1992, %v2056
      %v2073 = vsel %vm2009, %v1993, %v2057
      %v2074 = vsel %vm2010, %v1994, %v2058
      %v2075 = vsel %vm2011, %v1995, %v2059
      %v2076 = vsel %vm2012, %v1996, %v2060
      %v2077 = vsel %vm2013, %v1997, %v2061
      %v2078 = vsel %vm2014, %v1998, %v2062
      %v2079 = vsel %vm2015, %v1999, %v2063
      %v2080 = vsel %vm2016, %v2000, %v2064
      %v2081 = vsel %vm2017, %v2001, %v2065
      %v2082 = vsel %vm2018, %v2002, %v2066
      %v2083 = vsel %vm2019, %v2003, %v2067
      %v2084 = vsel %vm2020, %v2004, %v2068
      %v2101 = vrot.slane %v2069, 6
      %v2102 = vrot.slane %v2070, 6
      %v2103 = vsel %vm1917, %v2101, %v2102
      %v2104 = vrot.slane %v2071, 6
      %v2105 = vsel %vm1917, %v2102, %v2104
      %v2106 = vrot.slane %v2072, 6
      %v2107 = vsel %vm1917, %v2104, %v2106
      %v2108 = vrot.slane %v2073, 6
      %v2109 = vsel %vm1917, %v2106, %v2108
      %v2110 = vrot.slane %v2074, 6
      %v2111 = vsel %vm1917, %v2108, %v2110
      %v2112 = vrot.slane %v2075, 6
      %v2113 = vsel %vm1917, %v2110, %v2112
      %v2114 = vrot.slane %v2076, 6
      %v2115 = vsel %vm1917, %v2112, %v2114
      %v2116 = vrot.slane %v2077, 6
      %v2117 = vsel %vm1917, %v2114, %v2116
      %v2118 = vrot.slane %v2078, 6
      %v2119 = vsel %vm1917, %v2116, %v2118
      %v2120 = vrot.slane %v2079, 6
      %v2121 = vsel %vm1917, %v2118, %v2120
      %v2122 = vrot.slane %v2080, 6
      %v2123 = vsel %vm1917, %v2120, %v2122
      %v2124 = vrot.slane %v2081, 6
      %v2125 = vsel %vm1917, %v2122, %v2124
      %v2126 = vrot.slane %v2082, 6
      %v2127 = vsel %vm1917, %v2124, %v2126
      %v2128 = vrot.slane %v2083, 6
      %v2129 = vsel %vm1917, %v2126, %v2128
      %v2130 = vrot.slane %v2084, 6
      %v2131 = vsel %vm1917, %v2128, %v2130
      %v2148 = vsel %vm1917, 0.0, %v2101
      %v2150 = vrot.slane %v2148, 1
      %v2151 = vrot.slane %v2103, 1
      %v2152 = vsel %vm1398, %v2150, %v2151
      %v2153 = vrot.slane %v2105, 1
      %v2154 = vsel %vm1398, %v2151, %v2153
      %v2155 = vrot.slane %v2107, 1
      %v2156 = vsel %vm1398, %v2153, %v2155
      %v2157 = vrot.slane %v2109, 1
      %v2158 = vsel %vm1398, %v2155, %v2157
      %v2159 = vrot.slane %v2111, 1
      %v2160 = vsel %vm1398, %v2157, %v2159
      %v2161 = vrot.slane %v2113, 1
      %v2162 = vsel %vm1398, %v2159, %v2161
      %v2163 = vrot.slane %v2115, 1
      %v2164 = vsel %vm1398, %v2161, %v2163
      %v2165 = vrot.slane %v2117, 1
      %v2166 = vsel %vm1398, %v2163, %v2165
      %v2167 = vrot.slane %v2119, 1
      %v2168 = vsel %vm1398, %v2165, %v2167
      %v2169 = vrot.slane %v2121, 1
      %v2170 = vsel %vm1398, %v2167, %v2169
      %v2171 = vrot.slane %v2123, 1
      %v2172 = vsel %vm1398, %v2169, %v2171
      %v2173 = vrot.slane %v2125, 1
      %v2174 = vsel %vm1398, %v2171, %v2173
      %v2175 = vrot.slane %v2127, 1
      %v2176 = vsel %vm1398, %v2173, %v2175
      %v2177 = vrot.slane %v2129, 1
      %v2178 = vsel %vm1398, %v2175, %v2177
      %v2179 = vrot.slane %v2131, 1
      %v2180 = vsel %vm1398, %v2177, %v2179
      %v2181 = vrot.slane %v2130, 1
      %v2182 = vsel %vm1398, %v2179, %v2181
      %2183 = vrot.lane.b32.xlu0 %v2152, 16
      %v2184 = vpop.permute.xlu0 %2183
      %2185 = vrot.lane.b32.xlu0 %v2154, 16
      %v2186 = vpop.permute.xlu0 %2185
      %2187 = vrot.lane.b32.xlu0 %v2156, 16
      %v2188 = vpop.permute.xlu0 %2187
      %2189 = vrot.lane.b32.xlu0 %v2158, 16
      %v2190 = vpop.permute.xlu0 %2189
      %2191 = vrot.lane.b32.xlu0 %v2160, 16
      %v2192 = vpop.permute.xlu0 %2191
      %2193 = vrot.lane.b32.xlu0 %v2162, 16
      %v2194 = vpop.permute.xlu0 %2193
      %2195 = vrot.lane.b32.xlu0 %v2164, 16
      %v2196 = vpop.permute.xlu0 %2195
      %2197 = vrot.lane.b32.xlu0 %v2166, 16
      %v2198 = vpop.permute.xlu0 %2197
      %2199 = vrot.lane.b32.xlu0 %v2168, 16
      %v2200 = vpop.permute.xlu0 %2199
      %2201 = vrot.lane.b32.xlu0 %v2170, 16
      %v2202 = vpop.permute.xlu0 %2201
      %2203 = vrot.lane.b32.xlu0 %v2172, 16
      %v2204 = vpop.permute.xlu0 %2203
      %2205 = vrot.lane.b32.xlu0 %v2174, 16
      %v2206 = vpop.permute.xlu0 %2205
      %2207 = vrot.lane.b32.xlu0 %v2176, 16
      %v2208 = vpop.permute.xlu0 %2207
      %2209 = vrot.lane.b32.xlu0 %v2178, 16
      %v2210 = vpop.permute.xlu0 %2209
      %2211 = vrot.lane.b32.xlu0 %v2180, 16
      %v2212 = vpop.permute.xlu0 %2211
      %2213 = vrot.lane.b32.xlu0 %v2182, 16
      %v2214 = vpop.permute.xlu0 %2213
      %v2231 = vrot.slane %v2148, 2
      %v2232 = vrot.slane %v2103, 2
      %v2233 = vsel %vm1221, %v2231, %v2232
      %v2234 = vrot.slane %v2105, 2
      %v2235 = vsel %vm1221, %v2232, %v2234
      %v2236 = vrot.slane %v2107, 2
      %v2237 = vsel %vm1221, %v2234, %v2236
      %v2238 = vrot.slane %v2109, 2
      %v2239 = vsel %vm1221, %v2236, %v2238
      %v2240 = vrot.slane %v2111, 2
      %v2241 = vsel %vm1221, %v2238, %v2240
      %v2242 = vrot.slane %v2113, 2
      %v2243 = vsel %vm1221, %v2240, %v2242
      %v2244 = vrot.slane %v2115, 2
      %v2245 = vsel %vm1221, %v2242, %v2244
      %v2246 = vrot.slane %v2117, 2
      %v2247 = vsel %vm1221, %v2244, %v2246
      %v2248 = vrot.slane %v2119, 2
      %v2249 = vsel %vm1221, %v2246, %v2248
      %v2250 = vrot.slane %v2121, 2
      %v2251 = vsel %vm1221, %v2248, %v2250
      %v2252 = vrot.slane %v2123, 2
      %v2253 = vsel %vm1221, %v2250, %v2252
      %v2254 = vrot.slane %v2125, 2
      %v2255 = vsel %vm1221, %v2252, %v2254
      %v2256 = vrot.slane %v2127, 2
      %v2257 = vsel %vm1221, %v2254, %v2256
      %v2258 = vrot.slane %v2129, 2
      %v2259 = vsel %vm1221, %v2256, %v2258
      %v2260 = vrot.slane %v2131, 2
      %v2261 = vsel %vm1221, %v2258, %v2260
      %v2262 = vrot.slane %v2130, 2
      %v2263 = vsel %vm1221, %v2260, %v2262
      %2264 = vrot.lane.b32.xlu0 %v2233, 32
      %v2265 = vpop.permute.xlu0 %2264
      %2266 = vrot.lane.b32.xlu0 %v2235, 32
      %v2267 = vpop.permute.xlu0 %2266
      %2268 = vrot.lane.b32.xlu0 %v2237, 32
      %v2269 = vpop.permute.xlu0 %2268
      %2270 = vrot.lane.b32.xlu0 %v2239, 32
      %v2271 = vpop.permute.xlu0 %2270
      %2272 = vrot.lane.b32.xlu0 %v2241, 32
      %v2273 = vpop.permute.xlu0 %2272
      %2274 = vrot.lane.b32.xlu0 %v2243, 32
      %v2275 = vpop.permute.xlu0 %2274
      %2276 = vrot.lane.b32.xlu0 %v2245, 32
      %v2277 = vpop.permute.xlu0 %2276
      %2278 = vrot.lane.b32.xlu0 %v2247, 32
      %v2279 = vpop.permute.xlu0 %2278
      %2280 = vrot.lane.b32.xlu0 %v2249, 32
      %v2281 = vpop.permute.xlu0 %2280
      %2282 = vrot.lane.b32.xlu0 %v2251, 32
      %v2283 = vpop.permute.xlu0 %2282
      %2284 = vrot.lane.b32.xlu0 %v2253, 32
      %v2285 = vpop.permute.xlu0 %2284
      %2286 = vrot.lane.b32.xlu0 %v2255, 32
      %v2287 = vpop.permute.xlu0 %2286
      %2288 = vrot.lane.b32.xlu0 %v2257, 32
      %v2289 = vpop.permute.xlu0 %2288
      %2290 = vrot.lane.b32.xlu0 %v2259, 32
      %v2291 = vpop.permute.xlu0 %2290
      %2292 = vrot.lane.b32.xlu0 %v2261, 32
      %v2293 = vpop.permute.xlu0 %2292
      %2294 = vrot.lane.b32.xlu0 %v2263, 32
      %v2295 = vpop.permute.xlu0 %2294
      %vm2312 = vcmask 130048
      %v2313 = vsel %vm2312, %v2148, %v2184
      %v2314 = vsel %vm2312, %v2103, %v2186
      %v2315 = vsel %vm2312, %v2105, %v2188
      %v2316 = vsel %vm2312, %v2107, %v2190
      %v2317 = vsel %vm2312, %v2109, %v2192
      %v2318 = vsel %vm2312, %v2111, %v2194
      %v2319 = vsel %vm2312, %v2113, %v2196
      %v2320 = vsel %vm2312, %v2115, %v2198
      %v2321 = vsel %vm2312, %v2117, %v2200
      %v2322 = vsel %vm2312, %v2119, %v2202
      %v2323 = vsel %vm2312, %v2121, %v2204
      %v2324 = vsel %vm2312, %v2123, %v2206
      %v2325 = vsel %vm2312, %v2125, %v2208
      %v2326 = vsel %vm2312, %v2127, %v2210
      %v2327 = vsel %vm2312, %v2129, %v2212
      %v2328 = vsel %vm2312, %v2131, %v2214
      %vm2329 = vcmask 261120
      %v2330 = vsel %vm2329, %v2313, %v2265
      %v2331 = vsel %vm2329, %v2314, %v2267
      %v2332 = vsel %vm2329, %v2315, %v2269
      %v2333 = vsel %vm2329, %v2316, %v2271
      %v2334 = vsel %vm2329, %v2317, %v2273
      %v2335 = vsel %vm2329, %v2318, %v2275
      %v2336 = vsel %vm2329, %v2319, %v2277
      %v2337 = vsel %vm2329, %v2320, %v2279
      %v2338 = vsel %vm2329, %v2321, %v2281
      %v2339 = vsel %vm2329, %v2322, %v2283
      %v2340 = vsel %vm2329, %v2323, %v2285
      %v2341 = vsel %vm2329, %v2324, %v2287
      %v2342 = vsel %vm2329, %v2325, %v2289
      %v2343 = vsel %vm2329, %v2326, %v2291
      %v2344 = vsel %vm2329, %v2327, %v2293
      %v2345 = vsel %vm2329, %v2328, %v2295
      %v2346 = vpack.c.bf16 %v2331, %v2330
      %v2347 = vpack.c.bf16 %v2333, %v2332
      %v2348 = vpack.c.bf16 %v2335, %v2334
      %v2349 = vpack.c.bf16 %v2337, %v2336
      %v2350 = vpack.c.bf16 %v2339, %v2338
      %v2351 = vpack.c.bf16 %v2341, %v2340
      %v2352 = vpack.c.bf16 %v2343, %v2342
      %v2353 = vpack.c.bf16 %v2345, %v2344
      %v2354 = vpack.c.bf16 %v1025, %v1024
      %v2355 = vpack.c.bf16 %v1027, %v1026
      %v2356 = vpack.c.bf16 %v1029, %v1028
      %v2358 = vlaneseq
      %v2359 = vshrl.u32 %v2358, 7
      %v2360 = vsub.s32 0, %v2359
      %v2361 = vrot.slane %v1023, %v2360
      %vm2363 = vcmask 392192
      %v2365 = vsel %vm2363, %v2346, 0
      %v2368 = vsel %vm2363, %v2347, 0
      %v2371 = vsel %vm2363, %v2348, 0
      %v2374 = vsel %vm2363, %v2349, 0
      %v2377 = vsel %vm2363, %v2350, 0
      %v2380 = vsel %vm2363, %v2351, 0
      %v2383 = vsel %vm2363, %v2352, 0
      %v2386 = vsel %vm2363, %v2353, 0
      %2388 = vmatprep.subr.bf16.mxu0 0
      %2389 = vmatpush1.bf16.msra.mxu0 %v2354
      %2390 = vmatprep.subr.bf16.mxu0 0
      %2391 = vmatpush1.bf16.msra.mxu0 %v2355
      %2392 = vmatprep.subr.bf16.mxu0 0
      %2393 = vmatpush1.bf16.msra.mxu0 %v2356
      %2394 = vmatprep.subr.bf16.mxu0 0
      %2395 = vmatpush1.bf16.msra.mxu0 0
      %2396 = vmatprep.subr.bf16.mxu0 0
      %2397 = vmatpush1.bf16.msra.mxu0 0
      %2398 = vmatprep.subr.bf16.mxu0 0
      %2399 = vmatpush1.bf16.msra.mxu0 0
      %2400 = vmatprep.subr.bf16.mxu0 0
      %2401 = vmatpush1.bf16.msra.mxu0 0
      %2402 = vmatprep.subr.bf16.mxu0 0
      %2403 = vmatpush1.bf16.msra.mxu0 0
      %2404 = vmatprep.subr.bf16.mxu0 0
      %2405 = vmatpush1.bf16.msra.mxu0 0
      %2406 = vmatprep.subr.bf16.mxu0 0
      %2407 = vmatpush1.bf16.msra.mxu0 0
      %2408 = vmatprep.subr.bf16.mxu0 0
      %2409 = vmatpush1.bf16.msra.mxu0 0
      %2410 = vmatprep.subr.bf16.mxu0 0
      %2411 = vmatpush1.bf16.msra.mxu0 0
      %2412 = vmatprep.subr.bf16.mxu0 0
      %2413 = vmatpush1.bf16.msra.mxu0 0
      %2414 = vmatprep.subr.bf16.mxu0 0
      %2415 = vmatpush1.bf16.msra.mxu0 0
      %2416 = vmatprep.subr.bf16.mxu0 0
      %2417 = vmatpush1.bf16.msra.mxu0 0
      %2418 = vmatprep.subr.bf16.mxu0 0
      %2419 = vmatpush1.bf16.msra.mxu0 0
      %2420 = vmatprep.mubr.bf16.mxu0 0
      %2421 = vmatmul.mubr.bf16.gmra.mrb[0].mxu0 %v2365
      %v2422 = vpop.f32.mrb[0].mxu0
      %v2423 = vadd.f32 %v2361, %v2422
      %v2424 = vpop.f32.mrb[0].mxu0
      %v2425 = vpop.f32.mrb[0].mxu0
      %v2426 = vadd.f32 %v2361, %v2425
      %v2427 = vpop.f32.mrb[0].mxu0
      %2428 = vmatprep.mubr.bf16.mxu0 0
      %2429 = vmatmul.mubr.bf16.gmra.mrb[0].mxu0 %v2368
      %v2430 = vpop.f32.mrb[0].mxu0
      %v2431 = vadd.f32 %v2361, %v2430
      %v2432 = vpop.f32.mrb[0].mxu0
      %v2433 = vpop.f32.mrb[0].mxu0
      %v2434 = vadd.f32 %v2361, %v2433
      %v2435 = vpop.f32.mrb[0].mxu0
      %2436 = vmatprep.mubr.bf16.mxu0 0
      %2437 = vmatmul.mubr.bf16.gmra.mrb[0].mxu0 %v2371
      %v2438 = vpop.f32.mrb[0].mxu0
      %v2439 = vadd.f32 %v2361, %v2438
      %v2440 = vpop.f32.mrb[0].mxu0
      %v2441 = vpop.f32.mrb[0].mxu0
      %v2442 = vadd.f32 %v2361, %v2441
      %v2443 = vpop.f32.mrb[0].mxu0
      %2444 = vmatprep.mubr.bf16.mxu0 0
      %2445 = vmatmul.mubr.bf16.gmra.mrb[0].mxu0 %v2374
      %v2446 = vpop.f32.mrb[0].mxu0
      %v2447 = vadd.f32 %v2361, %v2446
      %v2448 = vpop.f32.mrb[0].mxu0
      %v2449 = vpop.f32.mrb[0].mxu0
      %v2450 = vadd.f32 %v2361, %v2449
      %v2451 = vpop.f32.mrb[0].mxu0
      %2452 = vmatprep.mubr.bf16.mxu0 0
      %2453 = vmatmul.mubr.bf16.gmra.mrb[0].mxu0 %v2377
      %v2454 = vpop.f32.mrb[0].mxu0
      %v2455 = vadd.f32 %v2361, %v2454
      %v2456 = vpop.f32.mrb[0].mxu0
      %v2457 = vpop.f32.mrb[0].mxu0
      %v2458 = vadd.f32 %v2361, %v2457
      %v2459 = vpop.f32.mrb[0].mxu0
      %2460 = vmatprep.mubr.bf16.mxu0 0
      %2461 = vmatmul.mubr.bf16.gmra.mrb[0].mxu0 %v2380
      %v2462 = vpop.f32.mrb[0].mxu0
      %v2463 = vadd.f32 %v2361, %v2462
      %v2464 = vpop.f32.mrb[0].mxu0
      %v2465 = vpop.f32.mrb[0].mxu0
      %v2466 = vadd.f32 %v2361, %v2465
      %v2467 = vpop.f32.mrb[0].mxu0
      %2468 = vmatprep.mubr.bf16.mxu0 0
      %2469 = vmatmul.mubr.bf16.gmra.mrb[0].mxu0 %v2383
      %v2470 = vpop.f32.mrb[0].mxu0
      %v2471 = vadd.f32 %v2361, %v2470
      %v2472 = vpop.f32.mrb[0].mxu0
      %v2473 = vpop.f32.mrb[0].mxu0
      %v2474 = vadd.f32 %v2361, %v2473
      %v2475 = vpop.f32.mrb[0].mxu0
      %2476 = vmatprep.mubr.bf16.mxu0 0
      %2477 = vmatmul.mubr.bf16.gmra.mrb[0].mxu0 %v2386
      %v2478 = vpop.f32.mrb[0].mxu0
      %v2479 = vadd.f32 %v2361, %v2478
      %v2480 = vpop.f32.mrb[0].mxu0
      %v2481 = vpop.f32.mrb[0].mxu0
      %v2482 = vadd.f32 %v2361, %v2481
      %v2483 = vpop.f32.mrb[0].mxu0
      %2484 = vdwg.mxu0
      %vm2485 = vcmp.gt.f32.partialorder %v2423, 0.0
      %vm2486 = vcmp.gt.f32.partialorder %v2426, 0.0
      %vm2487 = vcmp.gt.f32.partialorder %v2431, 0.0
      %vm2488 = vcmp.gt.f32.partialorder %v2434, 0.0
      %vm2489 = vcmp.gt.f32.partialorder %v2439, 0.0
      %vm2490 = vcmp.gt.f32.partialorder %v2442, 0.0
      %vm2491 = vcmp.gt.f32.partialorder %v2447, 0.0
      %vm2492 = vcmp.gt.f32.partialorder %v2450, 0.0
      %vm2493 = vcmp.gt.f32.partialorder %v2455, 0.0
      %vm2494 = vcmp.gt.f32.partialorder %v2458, 0.0
      %vm2495 = vcmp.gt.f32.partialorder %v2463, 0.0
      %vm2496 = vcmp.gt.f32.partialorder %v2466, 0.0
      %vm2497 = vcmp.gt.f32.partialorder %v2471, 0.0
      %vm2498 = vcmp.gt.f32.partialorder %v2474, 0.0
      %vm2499 = vcmp.gt.f32.partialorder %v2479, 0.0
      %vm2500 = vcmp.gt.f32.partialorder %v2482, 0.0
      %v2501 = vmul.f32 %v2423, 1.442695
      %v2502 = vpow.pop %v2501
      %v2503 = vmul.f32 %v2426, 1.442695
      %v2504 = vpow.pop %v2503
      %v2505 = vmul.f32 %v2431, 1.442695
      %v2506 = vpow.pop %v2505
      %v2507 = vmul.f32 %v2434, 1.442695
      %v2508 = vpow.pop %v2507
      %v2509 = vmul.f32 %v2439, 1.442695
      %v2510 = vpow.pop %v2509
      %v2511 = vmul.f32 %v2442, 1.442695
      %v2512 = vpow.pop %v2511
      %v2513 = vmul.f32 %v2447, 1.442695
      %v2514 = vpow.pop %v2513
      %v2515 = vmul.f32 %v2450, 1.442695
      %v2516 = vpow.pop %v2515
      %v2517 = vmul.f32 %v2455, 1.442695
      %v2518 = vpow.pop %v2517
      %v2519 = vmul.f32 %v2458, 1.442695
      %v2520 = vpow.pop %v2519
      %v2521 = vmul.f32 %v2463, 1.442695
      %v2522 = vpow.pop %v2521
      %v2523 = vmul.f32 %v2466, 1.442695
      %v2524 = vpow.pop %v2523
      %v2525 = vmul.f32 %v2471, 1.442695
      %v2526 = vpow.pop %v2525
      %v2527 = vmul.f32 %v2474, 1.442695
      %v2528 = vpow.pop %v2527
      %v2529 = vmul.f32 %v2479, 1.442695
      %v2530 = vpow.pop %v2529
      %v2531 = vmul.f32 %v2482, 1.442695
      %v2532 = vpow.pop %v2531
      %v2533 = vsub.f32 %v2502, 1.0
      %v2534 = vsub.f32 %v2504, 1.0
      %v2535 = vsub.f32 %v2506, 1.0
      %v2536 = vsub.f32 %v2508, 1.0
      %v2537 = vsub.f32 %v2510, 1.0
      %v2538 = vsub.f32 %v2512, 1.0
      %v2539 = vsub.f32 %v2514, 1.0
      %v2540 = vsub.f32 %v2516, 1.0
      %v2541 = vsub.f32 %v2518, 1.0
      %v2542 = vsub.f32 %v2520, 1.0
      %v2543 = vsub.f32 %v2522, 1.0
      %v2544 = vsub.f32 %v2524, 1.0
      %v2545 = vsub.f32 %v2526, 1.0
      %v2546 = vsub.f32 %v2528, 1.0
      %v2547 = vsub.f32 %v2530, 1.0
      %v2548 = vsub.f32 %v2532, 1.0
      %v2549 = vsel %vm2485, %v2423, %v2533
      %v2550 = vsel %vm2486, %v2426, %v2534
      %v2551 = vsel %vm2487, %v2431, %v2535
      %v2552 = vsel %vm2488, %v2434, %v2536
      %v2553 = vsel %vm2489, %v2439, %v2537
      %v2554 = vsel %vm2490, %v2442, %v2538
      %v2555 = vsel %vm2491, %v2447, %v2539
      %v2556 = vsel %vm2492, %v2450, %v2540
      %v2557 = vsel %vm2493, %v2455, %v2541
      %v2558 = vsel %vm2494, %v2458, %v2542
      %v2559 = vsel %vm2495, %v2463, %v2543
      %v2560 = vsel %vm2496, %v2466, %v2544
      %v2561 = vsel %vm2497, %v2471, %v2545
      %v2562 = vsel %vm2498, %v2474, %v2546
      %v2563 = vsel %vm2499, %v2479, %v2547
      %v2564 = vsel %vm2500, %v2482, %v2548
      %v2565 = vpack.c.bf16 %v2550, %v2549
      %v2566 = vpack.c.bf16 %v2552, %v2551
      %v2567 = vpack.c.bf16 %v2554, %v2553
      %v2568 = vpack.c.bf16 %v2556, %v2555
      %v2569 = vpack.c.bf16 %v2558, %v2557
      %v2570 = vpack.c.bf16 %v2560, %v2559
      %v2571 = vpack.c.bf16 %v2562, %v2561
      %v2572 = vpack.c.bf16 %v2564, %v2563
      %v2573 = vpack.c.bf16 %v1031, %v1031
      %v2575 = vlaneseq
      %v2576 = vshrl.u32 %v2575, 7
      %v2577 = vsub.s32 0, %v2576
      %v2578 = vrot.slane %v1030, %v2577
      %vm2580 = vcmask 64512
      %v2582 = vsel %vm2580, %v2565, 0
      %v2585 = vsel %vm2580, %v2566, 0
      %v2588 = vsel %vm2580, %v2567, 0
      %v2591 = vsel %vm2580, %v2568, 0
      %v2594 = vsel %vm2580, %v2569, 0
      %v2597 = vsel %vm2580, %v2570, 0
      %v2600 = vsel %vm2580, %v2571, 0
      %v2603 = vsel %vm2580, %v2572, 0
      %v2606 = vsel %vm1709, %v2573, 0
      %2608 = vmatprep.subr.bf16.mxu0 0
      %2609 = vmatpush1.bf16.msra.mxu0 %v2606
      %2610 = vmatprep.subr.bf16.mxu0 0
      %2611 = vmatpush1.bf16.msra.mxu0 0
      %2612 = vmatprep.subr.bf16.mxu0 0
      %2613 = vmatpush1.bf16.msra.mxu0 0
      %2614 = vmatprep.subr.bf16.mxu0 0
      %2615 = vmatpush1.bf16.msra.mxu0 0
      %2616 = vmatprep.subr.bf16.mxu0 0
      %2617 = vmatpush1.bf16.msra.mxu0 0
      %2618 = vmatprep.subr.bf16.mxu0 0
      %2619 = vmatpush1.bf16.msra.mxu0 0
      %2620 = vmatprep.subr.bf16.mxu0 0
      %2621 = vmatpush1.bf16.msra.mxu0 0
      %2622 = vmatprep.subr.bf16.mxu0 0
      %2623 = vmatpush1.bf16.msra.mxu0 0
      %2624 = vmatprep.subr.bf16.mxu0 0
      %2625 = vmatpush1.bf16.msra.mxu0 0
      %2626 = vmatprep.subr.bf16.mxu0 0
      %2627 = vmatpush1.bf16.msra.mxu0 0
      %2628 = vmatprep.subr.bf16.mxu0 0
      %2629 = vmatpush1.bf16.msra.mxu0 0
      %2630 = vmatprep.subr.bf16.mxu0 0
      %2631 = vmatpush1.bf16.msra.mxu0 0
      %2632 = vmatprep.subr.bf16.mxu0 0
      %2633 = vmatpush1.bf16.msra.mxu0 0
      %2634 = vmatprep.subr.bf16.mxu0 0
      %2635 = vmatpush1.bf16.msra.mxu0 0
      %2636 = vmatprep.subr.bf16.mxu0 0
      %2637 = vmatpush1.bf16.msra.mxu0 0
      %2638 = vmatprep.subr.bf16.mxu0 0
      %2639 = vmatpush1.bf16.msra.mxu0 0
      %2640 = vmatprep.mubr.bf16.mxu0 0
      %2641 = vmatmul.mubr.bf16.gmra.mrb[0].mxu0 %v2582
      %v2642 = vpop.f32.mrb[0].mxu0
      %v2643 = vadd.f32 %v2578, %v2642
      %v2644 = vpop.f32.mrb[0].mxu0
      %v2645 = vpop.f32.mrb[0].mxu0
      %v2646 = vadd.f32 %v2578, %v2645
      %v2647 = vpop.f32.mrb[0].mxu0
      %2648 = vmatprep.mubr.bf16.mxu0 0
      %2649 = vmatmul.mubr.bf16.gmra.mrb[0].mxu0 %v2585
      %v2650 = vpop.f32.mrb[0].mxu0
      %v2651 = vadd.f32 %v2578, %v2650
      %v2652 = vpop.f32.mrb[0].mxu0
      %v2653 = vpop.f32.mrb[0].mxu0
      %v2654 = vadd.f32 %v2578, %v2653
      %v2655 = vpop.f32.mrb[0].mxu0
      %2656 = vmatprep.mubr.bf16.mxu0 0
      %2657 = vmatmul.mubr.bf16.gmra.mrb[0].mxu0 %v2588
      %v2658 = vpop.f32.mrb[0].mxu0
      %v2659 = vadd.f32 %v2578, %v2658
      %v2660 = vpop.f32.mrb[0].mxu0
      %v2661 = vpop.f32.mrb[0].mxu0
      %v2662 = vadd.f32 %v2578, %v2661
      %v2663 = vpop.f32.mrb[0].mxu0
      %2664 = vmatprep.mubr.bf16.mxu0 0
      %2665 = vmatmul.mubr.bf16.gmra.mrb[0].mxu0 %v2591
      %v2666 = vpop.f32.mrb[0].mxu0
      %v2667 = vadd.f32 %v2578, %v2666
      %v2668 = vpop.f32.mrb[0].mxu0
      %v2669 = vpop.f32.mrb[0].mxu0
      %v2670 = vadd.f32 %v2578, %v2669
      %v2671 = vpop.f32.mrb[0].mxu0
      %2672 = vmatprep.mubr.bf16.mxu0 0
      %2673 = vmatmul.mubr.bf16.gmra.mrb[0].mxu0 %v2594
      %v2674 = vpop.f32.mrb[0].mxu0
      %v2675 = vadd.f32 %v2578, %v2674
      %v2676 = vpop.f32.mrb[0].mxu0
      %v2677 = vpop.f32.mrb[0].mxu0
      %v2678 = vadd.f32 %v2578, %v2677
      %v2679 = vpop.f32.mrb[0].mxu0
      %2680 = vmatprep.mubr.bf16.mxu0 0
      %2681 = vmatmul.mubr.bf16.gmra.mrb[0].mxu0 %v2597
      %v2682 = vpop.f32.mrb[0].mxu0
      %v2683 = vadd.f32 %v2578, %v2682
      %v2684 = vpop.f32.mrb[0].mxu0
      %v2685 = vpop.f32.mrb[0].mxu0
      %v2686 = vadd.f32 %v2578, %v2685
      %v2687 = vpop.f32.mrb[0].mxu0
      %2688 = vmatprep.mubr.bf16.mxu0 0
      %2689 = vmatmul.mubr.bf16.gmra.mrb[0].mxu0 %v2600
      %v2690 = vpop.f32.mrb[0].mxu0
      %v2691 = vadd.f32 %v2578, %v2690
      %v2692 = vpop.f32.mrb[0].mxu0
      %v2693 = vpop.f32.mrb[0].mxu0
      %v2694 = vadd.f32 %v2578, %v2693
      %v2695 = vpop.f32.mrb[0].mxu0
      %2696 = vmatprep.mubr.bf16.mxu0 0
      %2697 = vmatmul.mubr.bf16.gmra.mrb[0].mxu0 %v2603
      %v2698 = vpop.f32.mrb[0].mxu0
      %v2699 = vadd.f32 %v2578, %v2698
      %v2700 = vpop.f32.mrb[0].mxu0
      %v2701 = vpop.f32.mrb[0].mxu0
      %v2702 = vadd.f32 %v2578, %v2701
      %v2703 = vpop.f32.mrb[0].mxu0
      %2704 = vdwg.mxu0
      %v2705 = vadd.f32 %v1989, %v2643
      %v2706 = vadd.f32 %v1990, %v2646
      %v2707 = vadd.f32 %v1991, %v2651
      %v2708 = vadd.f32 %v1992, %v2654
      %v2709 = vadd.f32 %v1993, %v2659
      %v2710 = vadd.f32 %v1994, %v2662
      %v2711 = vadd.f32 %v1995, %v2667
      %v2712 = vadd.f32 %v1996, %v2670
      %v2713 = vadd.f32 %v1997, %v2675
      %v2714 = vadd.f32 %v1998, %v2678
      %v2715 = vadd.f32 %v1999, %v2683
      %v2716 = vadd.f32 %v2000, %v2686
      %v2717 = vadd.f32 %v2001, %v2691
      %v2718 = vadd.f32 %v2002, %v2694
      %v2719 = vadd.f32 %v2003, %v2699
      %v2720 = vadd.f32 %v2004, %v2702
      %vm2721 = vcmp.gt.f32.partialorder %v2705, 0.0
      %vm2722 = vcmp.gt.f32.partialorder %v2706, 0.0
      %vm2723 = vcmp.gt.f32.partialorder %v2707, 0.0
      %vm2724 = vcmp.gt.f32.partialorder %v2708, 0.0
      %vm2725 = vcmp.gt.f32.partialorder %v2709, 0.0
      %vm2726 = vcmp.gt.f32.partialorder %v2710, 0.0
      %vm2727 = vcmp.gt.f32.partialorder %v2711, 0.0
      %vm2728 = vcmp.gt.f32.partialorder %v2712, 0.0
      %vm2729 = vcmp.gt.f32.partialorder %v2713, 0.0
      %vm2730 = vcmp.gt.f32.partialorder %v2714, 0.0
      %vm2731 = vcmp.gt.f32.partialorder %v2715, 0.0
      %vm2732 = vcmp.gt.f32.partialorder %v2716, 0.0
      %vm2733 = vcmp.gt.f32.partialorder %v2717, 0.0
      %vm2734 = vcmp.gt.f32.partialorder %v2718, 0.0
      %vm2735 = vcmp.gt.f32.partialorder %v2719, 0.0
      %vm2736 = vcmp.gt.f32.partialorder %v2720, 0.0
      %v2737 = vmul.f32 %v2705, 1.442695
      %v2738 = vpow.pop %v2737
      %v2739 = vmul.f32 %v2706, 1.442695
      %v2740 = vpow.pop %v2739
      %v2741 = vmul.f32 %v2707, 1.442695
      %v2742 = vpow.pop %v2741
      %v2743 = vmul.f32 %v2708, 1.442695
      %v2744 = vpow.pop %v2743
      %v2745 = vmul.f32 %v2709, 1.442695
      %v2746 = vpow.pop %v2745
      %v2747 = vmul.f32 %v2710, 1.442695
      %v2748 = vpow.pop %v2747
      %v2749 = vmul.f32 %v2711, 1.442695
      %v2750 = vpow.pop %v2749
      %v2751 = vmul.f32 %v2712, 1.442695
      %v2752 = vpow.pop %v2751
      %v2753 = vmul.f32 %v2713, 1.442695
      %v2754 = vpow.pop %v2753
      %v2755 = vmul.f32 %v2714, 1.442695
      %v2756 = vpow.pop %v2755
      %v2757 = vmul.f32 %v2715, 1.442695
      %v2758 = vpow.pop %v2757
      %v2759 = vmul.f32 %v2716, 1.442695
      %v2760 = vpow.pop %v2759
      %v2761 = vmul.f32 %v2717, 1.442695
      %v2762 = vpow.pop %v2761
      %v2763 = vmul.f32 %v2718, 1.442695
      %v2764 = vpow.pop %v2763
      %v2765 = vmul.f32 %v2719, 1.442695
      %v2766 = vpow.pop %v2765
      %v2767 = vmul.f32 %v2720, 1.442695
      %v2768 = vpow.pop %v2767
      %v2769 = vsub.f32 %v2738, 1.0
      %v2770 = vsub.f32 %v2740, 1.0
      %v2771 = vsub.f32 %v2742, 1.0
      %v2772 = vsub.f32 %v2744, 1.0
      %v2773 = vsub.f32 %v2746, 1.0
      %v2774 = vsub.f32 %v2748, 1.0
      %v2775 = vsub.f32 %v2750, 1.0
      %v2776 = vsub.f32 %v2752, 1.0
      %v2777 = vsub.f32 %v2754, 1.0
      %v2778 = vsub.f32 %v2756, 1.0
      %v2779 = vsub.f32 %v2758, 1.0
      %v2780 = vsub.f32 %v2760, 1.0
      %v2781 = vsub.f32 %v2762, 1.0
      %v2782 = vsub.f32 %v2764, 1.0
      %v2783 = vsub.f32 %v2766, 1.0
      %v2784 = vsub.f32 %v2768, 1.0
      %v2785 = vsel %vm2721, %v2705, %v2769
      %v2786 = vsel %vm2722, %v2706, %v2770
      %v2787 = vsel %vm2723, %v2707, %v2771
      %v2788 = vsel %vm2724, %v2708, %v2772
      %v2789 = vsel %vm2725, %v2709, %v2773
      %v2790 = vsel %vm2726, %v2710, %v2774
      %v2791 = vsel %vm2727, %v2711, %v2775
      %v2792 = vsel %vm2728, %v2712, %v2776
      %v2793 = vsel %vm2729, %v2713, %v2777
      %v2794 = vsel %vm2730, %v2714, %v2778
      %v2795 = vsel %vm2731, %v2715, %v2779
      %v2796 = vsel %vm2732, %v2716, %v2780
      %v2797 = vsel %vm2733, %v2717, %v2781
      %v2798 = vsel %vm2734, %v2718, %v2782
      %v2799 = vsel %vm2735, %v2719, %v2783
      %v2800 = vsel %vm2736, %v2720, %v2784
      %v2817 = vrot.slane %v2785, 6
      %v2818 = vrot.slane %v2786, 6
      %v2819 = vsel %vm1917, %v2817, %v2818
      %v2820 = vrot.slane %v2787, 6
      %v2821 = vsel %vm1917, %v2818, %v2820
      %v2822 = vrot.slane %v2788, 6
      %v2823 = vsel %vm1917, %v2820, %v2822
      %v2824 = vrot.slane %v2789, 6
      %v2825 = vsel %vm1917, %v2822, %v2824
      %v2826 = vrot.slane %v2790, 6
      %v2827 = vsel %vm1917, %v2824, %v2826
      %v2828 = vrot.slane %v2791, 6
      %v2829 = vsel %vm1917, %v2826, %v2828
      %v2830 = vrot.slane %v2792, 6
      %v2831 = vsel %vm1917, %v2828, %v2830
      %v2832 = vrot.slane %v2793, 6
      %v2833 = vsel %vm1917, %v2830, %v2832
      %v2834 = vrot.slane %v2794, 6
      %v2835 = vsel %vm1917, %v2832, %v2834
      %v2836 = vrot.slane %v2795, 6
      %v2837 = vsel %vm1917, %v2834, %v2836
      %v2838 = vrot.slane %v2796, 6
      %v2839 = vsel %vm1917, %v2836, %v2838
      %v2840 = vrot.slane %v2797, 6
      %v2841 = vsel %vm1917, %v2838, %v2840
      %v2842 = vrot.slane %v2798, 6
      %v2843 = vsel %vm1917, %v2840, %v2842
      %v2844 = vrot.slane %v2799, 6
      %v2845 = vsel %vm1917, %v2842, %v2844
      %v2846 = vrot.slane %v2800, 6
      %v2847 = vsel %vm1917, %v2844, %v2846
      %v2864 = vsel %vm1917, 0.0, %v2817
      %v2866 = vrot.slane %v2864, 1
      %v2867 = vrot.slane %v2819, 1
      %v2868 = vsel %vm1398, %v2866, %v2867
      %v2869 = vrot.slane %v2821, 1
      %v2870 = vsel %vm1398, %v2867, %v2869
      %v2871 = vrot.slane %v2823, 1
      %v2872 = vsel %vm1398, %v2869, %v2871
      %v2873 = vrot.slane %v2825, 1
      %v2874 = vsel %vm1398, %v2871, %v2873
      %v2875 = vrot.slane %v2827, 1
      %v2876 = vsel %vm1398, %v2873, %v2875
      %v2877 = vrot.slane %v2829, 1
      %v2878 = vsel %vm1398, %v2875, %v2877
      %v2879 = vrot.slane %v2831, 1
      %v2880 = vsel %vm1398, %v2877, %v2879
      %v2881 = vrot.slane %v2833, 1
      %v2882 = vsel %vm1398, %v2879, %v2881
      %v2883 = vrot.slane %v2835, 1
      %v2884 = vsel %vm1398, %v2881, %v2883
      %v2885 = vrot.slane %v2837, 1
      %v2886 = vsel %vm1398, %v2883, %v2885
      %v2887 = vrot.slane %v2839, 1
      %v2888 = vsel %vm1398, %v2885, %v2887
      %v2889 = vrot.slane %v2841, 1
      %v2890 = vsel %vm1398, %v2887, %v2889
      %v2891 = vrot.slane %v2843, 1
      %v2892 = vsel %vm1398, %v2889, %v2891
      %v2893 = vrot.slane %v2845, 1
      %v2894 = vsel %vm1398, %v2891, %v2893
      %v2895 = vrot.slane %v2847, 1
      %v2896 = vsel %vm1398, %v2893, %v2895
      %2897 = vrot.lane.b32.xlu0 %v2868, 16
      %v2898 = vpop.permute.xlu0 %2897
      %2899 = vrot.lane.b32.xlu0 %v2870, 16
      %v2900 = vpop.permute.xlu0 %2899
      %2901 = vrot.lane.b32.xlu0 %v2872, 16
      %v2902 = vpop.permute.xlu0 %2901
      %2903 = vrot.lane.b32.xlu0 %v2874, 16
      %v2904 = vpop.permute.xlu0 %2903
      %2905 = vrot.lane.b32.xlu0 %v2876, 16
      %v2906 = vpop.permute.xlu0 %2905
      %2907 = vrot.lane.b32.xlu0 %v2878, 16
      %v2908 = vpop.permute.xlu0 %2907
      %2909 = vrot.lane.b32.xlu0 %v2880, 16
      %v2910 = vpop.permute.xlu0 %2909
      %2911 = vrot.lane.b32.xlu0 %v2882, 16
      %v2912 = vpop.permute.xlu0 %2911
      %2913 = vrot.lane.b32.xlu0 %v2884, 16
      %v2914 = vpop.permute.xlu0 %2913
      %2915 = vrot.lane.b32.xlu0 %v2886, 16
      %v2916 = vpop.permute.xlu0 %2915
      %2917 = vrot.lane.b32.xlu0 %v2888, 16
      %v2918 = vpop.permute.xlu0 %2917
      %2919 = vrot.lane.b32.xlu0 %v2890, 16
      %v2920 = vpop.permute.xlu0 %2919
      %2921 = vrot.lane.b32.xlu0 %v2892, 16
      %v2922 = vpop.permute.xlu0 %2921
      %2923 = vrot.lane.b32.xlu0 %v2894, 16
      %v2924 = vpop.permute.xlu0 %2923
      %2925 = vrot.lane.b32.xlu0 %v2896, 16
      %v2926 = vpop.permute.xlu0 %2925
      %2927 = vrot.lane.b32.xlu0 %v2895, 16
      %v2928 = vpop.permute.xlu0 %2927
      %v2945 = vrot.slane %v2864, 2
      %v2946 = vrot.slane %v2819, 2
      %v2947 = vsel %vm1221, %v2945, %v2946
      %v2948 = vrot.slane %v2821, 2
      %v2949 = vsel %vm1221, %v2946, %v2948
      %v2950 = vrot.slane %v2823, 2
      %v2951 = vsel %vm1221, %v2948, %v2950
      %v2952 = vrot.slane %v2825, 2
      %v2953 = vsel %vm1221, %v2950, %v2952
      %v2954 = vrot.slane %v2827, 2
      %v2955 = vsel %vm1221, %v2952, %v2954
      %v2956 = vrot.slane %v2829, 2
      %v2957 = vsel %vm1221, %v2954, %v2956
      %v2958 = vrot.slane %v2831, 2
      %v2959 = vsel %vm1221, %v2956, %v2958
      %v2960 = vrot.slane %v2833, 2
      %v2961 = vsel %vm1221, %v2958, %v2960
      %v2962 = vrot.slane %v2835, 2
      %v2963 = vsel %vm1221, %v2960, %v2962
      %v2964 = vrot.slane %v2837, 2
      %v2965 = vsel %vm1221, %v2962, %v2964
      %v2966 = vrot.slane %v2839, 2
      %v2967 = vsel %vm1221, %v2964, %v2966
      %v2968 = vrot.slane %v2841, 2
      %v2969 = vsel %vm1221, %v2966, %v2968
      %v2970 = vrot.slane %v2843, 2
      %v2971 = vsel %vm1221, %v2968, %v2970
      %v2972 = vrot.slane %v2845, 2
      %v2973 = vsel %vm1221, %v2970, %v2972
      %v2974 = vrot.slane %v2847, 2
      %v2975 = vsel %vm1221, %v2972, %v2974
      %v2976 = vrot.slane %v2846, 2
      %v2977 = vsel %vm1221, %v2974, %v2976
      %2978 = vrot.lane.b32.xlu0 %v2947, 32
      %v2979 = vpop.permute.xlu0 %2978
      %2980 = vrot.lane.b32.xlu0 %v2949, 32
      %v2981 = vpop.permute.xlu0 %2980
      %2982 = vrot.lane.b32.xlu0 %v2951, 32
      %v2983 = vpop.permute.xlu0 %2982
      %2984 = vrot.lane.b32.xlu0 %v2953, 32
      %v2985 = vpop.permute.xlu0 %2984
      %2986 = vrot.lane.b32.xlu0 %v2955, 32
      %v2987 = vpop.permute.xlu0 %2986
      %2988 = vrot.lane.b32.xlu0 %v2957, 32
      %v2989 = vpop.permute.xlu0 %2988
      %2990 = vrot.lane.b32.xlu0 %v2959, 32
      %v2991 = vpop.permute.xlu0 %2990
      %2992 = vrot.lane.b32.xlu0 %v2961, 32
      %v2993 = vpop.permute.xlu0 %2992
      %2994 = vrot.lane.b32.xlu0 %v2963, 32
      %v2995 = vpop.permute.xlu0 %2994
      %2996 = vrot.lane.b32.xlu0 %v2965, 32
      %v2997 = vpop.permute.xlu0 %2996
      %2998 = vrot.lane.b32.xlu0 %v2967, 32
      %v2999 = vpop.permute.xlu0 %2998
      %3000 = vrot.lane.b32.xlu0 %v2969, 32
      %v3001 = vpop.permute.xlu0 %3000
      %3002 = vrot.lane.b32.xlu0 %v2971, 32
      %v3003 = vpop.permute.xlu0 %3002
      %3004 = vrot.lane.b32.xlu0 %v2973, 32
      %v3005 = vpop.permute.xlu0 %3004
      %3006 = vrot.lane.b32.xlu0 %v2975, 32
      %v3007 = vpop.permute.xlu0 %3006
      %3008 = vrot.lane.b32.xlu0 %v2977, 32
      %v3009 = vpop.permute.xlu0 %3008
      %v3026 = vrot.slane %v2864, 3
      %v3027 = vrot.slane %v2819, 3
      %v3028 = vsel %vm1605, %v3026, %v3027
      %v3029 = vrot.slane %v2821, 3
      %v3030 = vsel %vm1605, %v3027, %v3029
      %v3031 = vrot.slane %v2823, 3
      %v3032 = vsel %vm1605, %v3029, %v3031
      %v3033 = vrot.slane %v2825, 3
      %v3034 = vsel %vm1605, %v3031, %v3033
      %v3035 = vrot.slane %v2827, 3
      %v3036 = vsel %vm1605, %v3033, %v3035
      %v3037 = vrot.slane %v2829, 3
      %v3038 = vsel %vm1605, %v3035, %v3037
      %v3039 = vrot.slane %v2831, 3
      %v3040 = vsel %vm1605, %v3037, %v3039
      %v3041 = vrot.slane %v2833, 3
      %v3042 = vsel %vm1605, %v3039, %v3041
      %v3043 = vrot.slane %v2835, 3
      %v3044 = vsel %vm1605, %v3041, %v3043
      %v3045 = vrot.slane %v2837, 3
      %v3046 = vsel %vm1605, %v3043, %v3045
      %v3047 = vrot.slane %v2839, 3
      %v3048 = vsel %vm1605, %v3045, %v3047
      %v3049 = vrot.slane %v2841, 3
      %v3050 = vsel %vm1605, %v3047, %v3049
      %v3051 = vrot.slane %v2843, 3
      %v3052 = vsel %vm1605, %v3049, %v3051
      %v3053 = vrot.slane %v2845, 3
      %v3054 = vsel %vm1605, %v3051, %v3053
      %v3055 = vrot.slane %v2847, 3
      %v3056 = vsel %vm1605, %v3053, %v3055
      %v3057 = vrot.slane %v2846, 3
      %v3058 = vsel %vm1605, %v3055, %v3057
      %3059 = vrot.lane.b32.xlu0 %v3028, 48
      %v3060 = vpop.permute.xlu0 %3059
      %3061 = vrot.lane.b32.xlu0 %v3030, 48
      %v3062 = vpop.permute.xlu0 %3061
      %3063 = vrot.lane.b32.xlu0 %v3032, 48
      %v3064 = vpop.permute.xlu0 %3063
      %3065 = vrot.lane.b32.xlu0 %v3034, 48
      %v3066 = vpop.permute.xlu0 %3065
      %3067 = vrot.lane.b32.xlu0 %v3036, 48
      %v3068 = vpop.permute.xlu0 %3067
      %3069 = vrot.lane.b32.xlu0 %v3038, 48
      %v3070 = vpop.permute.xlu0 %3069
      %3071 = vrot.lane.b32.xlu0 %v3040, 48
      %v3072 = vpop.permute.xlu0 %3071
      %3073 = vrot.lane.b32.xlu0 %v3042, 48
      %v3074 = vpop.permute.xlu0 %3073
      %3075 = vrot.lane.b32.xlu0 %v3044, 48
      %v3076 = vpop.permute.xlu0 %3075
      %3077 = vrot.lane.b32.xlu0 %v3046, 48
      %v3078 = vpop.permute.xlu0 %3077
      %3079 = vrot.lane.b32.xlu0 %v3048, 48
      %v3080 = vpop.permute.xlu0 %3079
      %3081 = vrot.lane.b32.xlu0 %v3050, 48
      %v3082 = vpop.permute.xlu0 %3081
      %3083 = vrot.lane.b32.xlu0 %v3052, 48
      %v3084 = vpop.permute.xlu0 %3083
      %3085 = vrot.lane.b32.xlu0 %v3054, 48
      %v3086 = vpop.permute.xlu0 %3085
      %3087 = vrot.lane.b32.xlu0 %v3056, 48
      %v3088 = vpop.permute.xlu0 %3087
      %3089 = vrot.lane.b32.xlu0 %v3058, 48
      %v3090 = vpop.permute.xlu0 %3089
      %v3107 = vsel %vm2312, %v2864, %v2898
      %v3108 = vsel %vm2312, %v2819, %v2900
      %v3109 = vsel %vm2312, %v2821, %v2902
      %v3110 = vsel %vm2312, %v2823, %v2904
      %v3111 = vsel %vm2312, %v2825, %v2906
      %v3112 = vsel %vm2312, %v2827, %v2908
      %v3113 = vsel %vm2312, %v2829, %v2910
      %v3114 = vsel %vm2312, %v2831, %v2912
      %v3115 = vsel %vm2312, %v2833, %v2914
      %v3116 = vsel %vm2312, %v2835, %v2916
      %v3117 = vsel %vm2312, %v2837, %v2918
      %v3118 = vsel %vm2312, %v2839, %v2920
      %v3119 = vsel %vm2312, %v2841, %v2922
      %v3120 = vsel %vm2312, %v2843, %v2924
      %v3121 = vsel %vm2312, %v2845, %v2926
      %v3122 = vsel %vm2312, %v2847, %v2928
      %v3123 = vsel %vm2329, %v3107, %v2979
      %v3124 = vsel %vm2329, %v3108, %v2981
      %v3125 = vsel %vm2329, %v3109, %v2983
      %v3126 = vsel %vm2329, %v3110, %v2985
      %v3127 = vsel %vm2329, %v3111, %v2987
      %v3128 = vsel %vm2329, %v3112, %v2989
      %v3129 = vsel %vm2329, %v3113, %v2991
      %v3130 = vsel %vm2329, %v3114, %v2993
      %v3131 = vsel %vm2329, %v3115, %v2995
      %v3132 = vsel %vm2329, %v3116, %v2997
      %v3133 = vsel %vm2329, %v3117, %v2999
      %v3134 = vsel %vm2329, %v3118, %v3001
      %v3135 = vsel %vm2329, %v3119, %v3003
      %v3136 = vsel %vm2329, %v3120, %v3005
      %v3137 = vsel %vm2329, %v3121, %v3007
      %v3138 = vsel %vm2329, %v3122, %v3009
      %v3139 = vsel %vm2363, %v3123, %v3060
      %v3140 = vsel %vm2363, %v3124, %v3062
      %v3141 = vsel %vm2363, %v3125, %v3064
      %v3142 = vsel %vm2363, %v3126, %v3066
      %v3143 = vsel %vm2363, %v3127, %v3068
      %v3144 = vsel %vm2363, %v3128, %v3070
      %v3145 = vsel %vm2363, %v3129, %v3072
      %v3146 = vsel %vm2363, %v3130, %v3074
      %v3147 = vsel %vm2363, %v3131, %v3076
      %v3148 = vsel %vm2363, %v3132, %v3078
      %v3149 = vsel %vm2363, %v3133, %v3080
      %v3150 = vsel %vm2363, %v3134, %v3082
      %v3151 = vsel %vm2363, %v3135, %v3084
      %v3152 = vsel %vm2363, %v3136, %v3086
      %v3153 = vsel %vm2363, %v3137, %v3088
      %v3154 = vsel %vm2363, %v3138, %v3090
      %v3155 = vlaneseq
      %v3156 = vshrl.u32 %v3155, 7
      %v3157 = vadd.s32 %v3156, 8
      %v3158 = vadd.s32 %v3156, 16
      %v3159 = vadd.s32 %v3156, 24
      %v3160 = vadd.s32 %v3156, 32
      %v3161 = vadd.s32 %v3156, 40
      %v3162 = vadd.s32 %v3156, 48
      %v3163 = vadd.s32 %v3156, 56
      %v3164 = vlaneseq
      %v3165 = vand.u32 %v3164, 127
      %v3166 = vmul.u32 %v3156, 2
      %v3167 = vmul.u32 %v3157, 2
      %v3168 = vmul.u32 %v3158, 2
      %v3169 = vmul.u32 %v3159, 2
      %v3170 = vmul.u32 %v3160, 2
      %v3171 = vmul.u32 %v3161, 2
      %v3172 = vmul.u32 %v3162, 2
      %v3173 = vmul.u32 %v3163, 2
      %vm3174 = vcmp.eq.s32.totalorder %v3165, %v3166
      %vm3175 = vcmp.eq.s32.totalorder %v3165, %v3167
      %vm3176 = vcmp.eq.s32.totalorder %v3165, %v3168
      %vm3177 = vcmp.eq.s32.totalorder %v3165, %v3169
      %vm3178 = vcmp.eq.s32.totalorder %v3165, %v3170
      %vm3179 = vcmp.eq.s32.totalorder %v3165, %v3171
      %vm3180 = vcmp.eq.s32.totalorder %v3165, %v3172
      %vm3181 = vcmp.eq.s32.totalorder %v3165, %v3173
      %v3182 = vsel %vm3174, 1, 0
      %v3183 = vsel %vm3175, 1, 0
      %v3184 = vsel %vm3176, 1, 0
      %v3185 = vsel %vm3177, 1, 0
      %v3186 = vsel %vm3178, 1, 0
      %v3187 = vsel %vm3179, 1, 0
      %v3188 = vsel %vm3180, 1, 0
      %v3189 = vsel %vm3181, 1, 0
      %v3190 = vcvt.s32.f32 %v3182
      %v3191 = vcvt.s32.f32 %v3183
      %v3192 = vcvt.s32.f32 %v3184
      %v3193 = vcvt.s32.f32 %v3185
      %v3194 = vcvt.s32.f32 %v3186
      %v3195 = vcvt.s32.f32 %v3187
      %v3196 = vcvt.s32.f32 %v3188
      %v3197 = vcvt.s32.f32 %v3189
      %v3198 = vpack.c.bf16 %v3191, %v3190
      %v3199 = vpack.c.bf16 %v3193, %v3192
      %v3200 = vpack.c.bf16 %v3195, %v3194
      %v3201 = vpack.c.bf16 %v3197, %v3196
      %v3202 = vpack.c.bf16 %v3140, %v3139
      %v3203 = vpack.c.bf16 %v3142, %v3141
      %v3204 = vpack.c.bf16 %v3144, %v3143
      %v3205 = vpack.c.bf16 %v3146, %v3145
      %v3206 = vpack.c.bf16 %v3148, %v3147
      %v3207 = vpack.c.bf16 %v3150, %v3149
      %v3208 = vpack.c.bf16 %v3152, %v3151
      %v3209 = vpack.c.bf16 %v3154, %v3153
      %vm3210 = vcmask 1039360
      %v3212 = vsel %vm3210, %v3198, 0
      %v3215 = vsel %vm3210, %v3199, 0
      %v3218 = vsel %vm3210, %v3200, 0
      %v3221 = vsel %vm3210, %v3201, 0
      %vm3223 = vcmask 1047552
      %v3224 = vsel %vm1398, 4294967295, 65535
      %v3225 = vsel %vm3223, %v3224, 0
      %v3227 = vand.u32 %v3209, %v3225
      %3229 = vmatprep.subr.bf16.mxu0 0
      %3230 = vmatpush1.bf16.msra.mxu0 %v3202
      %3231 = vmatprep.subr.bf16.mxu0 0
      %3232 = vmatpush1.bf16.msra.mxu0 %v3203
      %3233 = vmatprep.subr.bf16.mxu0 0
      %3234 = vmatpush1.bf16.msra.mxu0 %v3204
      %3235 = vmatprep.subr.bf16.mxu0 0
      %3236 = vmatpush1.bf16.msra.mxu0 %v3205
      %3237 = vmatprep.subr.bf16.mxu0 0
      %3238 = vmatpush1.bf16.msra.mxu0 %v3206
      %3239 = vmatprep.subr.bf16.mxu0 0
      %3240 = vmatpush1.bf16.msra.mxu0 %v3207
      %3241 = vmatprep.subr.bf16.mxu0 0
      %3242 = vmatpush1.bf16.msra.mxu0 %v3208
      %3243 = vmatprep.subr.bf16.mxu0 0
      %3244 = vmatpush1.bf16.msra.mxu0 %v3227
      %3245 = vmatprep.subr.bf16.mxu0 0
      %3246 = vmatpush1.bf16.msra.mxu0 0
      %3247 = vmatprep.subr.bf16.mxu0 0
      %3248 = vmatpush1.bf16.msra.mxu0 0
      %3249 = vmatprep.subr.bf16.mxu0 0
      %3250 = vmatpush1.bf16.msra.mxu0 0
      %3251 = vmatprep.subr.bf16.mxu0 0
      %3252 = vmatpush1.bf16.msra.mxu0 0
      %3253 = vmatprep.subr.bf16.mxu0 0
      %3254 = vmatpush1.bf16.msra.mxu0 0
      %3255 = vmatprep.subr.bf16.mxu0 0
      %3256 = vmatpush1.bf16.msra.mxu0 0
      %3257 = vmatprep.subr.bf16.mxu0 0
      %3258 = vmatpush1.bf16.msra.mxu0 0
      %3259 = vmatprep.subr.bf16.mxu0 0
      %3260 = vmatpush1.bf16.msra.mxu0 0
      %3261 = vmatprep.mubr.bf16.mxu0 0
      %3262 = vmatmul.mubr.bf16.gmra.mrb[0].mxu0 %v3212
      %v3263 = vpop.f32.mrb[0].mxu0
      %v3264 = vadd.f32 0.0, %v3263
      %v3265 = vpop.f32.mrb[0].mxu0
      %v3266 = vpop.f32.mrb[0].mxu0
      %v3267 = vadd.f32 0.0, %v3266
      %v3268 = vpop.f32.mrb[0].mxu0
      %3269 = vmatprep.mubr.bf16.mxu0 0
      %3270 = vmatmul.mubr.bf16.gmra.mrb[0].mxu0 %v3215
      %v3271 = vpop.f32.mrb[0].mxu0
      %v3272 = vadd.f32 0.0, %v3271
      %v3273 = vpop.f32.mrb[0].mxu0
      %v3274 = vpop.f32.mrb[0].mxu0
      %v3275 = vadd.f32 0.0, %v3274
      %v3276 = vpop.f32.mrb[0].mxu0
      %3277 = vmatprep.mubr.bf16.mxu0 0
      %3278 = vmatmul.mubr.bf16.gmra.mrb[0].mxu0 %v3218
      %v3279 = vpop.f32.mrb[0].mxu0
      %v3280 = vadd.f32 0.0, %v3279
      %v3281 = vpop.f32.mrb[0].mxu0
      %v3282 = vpop.f32.mrb[0].mxu0
      %v3283 = vadd.f32 0.0, %v3282
      %v3284 = vpop.f32.mrb[0].mxu0
      %3285 = vmatprep.mubr.bf16.mxu0 0
      %3286 = vmatmul.mubr.bf16.gmra.mrb[0].mxu0 %v3221
      %v3287 = vpop.f32.mrb[0].mxu0
      %v3288 = vadd.f32 0.0, %v3287
      %v3289 = vpop.f32.mrb[0].mxu0
      %v3290 = vpop.f32.mrb[0].mxu0
      %v3291 = vadd.f32 0.0, %v3290
      %v3292 = vpop.f32.mrb[0].mxu0
      %3293 = vdwg.mxu0
      %v3294 = vpack.c.bf16 %v3267, %v3264
      %v3295 = vpack.c.bf16 %v3275, %v3272
      %v3296 = vpack.c.bf16 %v3283, %v3280
      %v3297 = vpack.c.bf16 %v3291, %v3288
      %v3298 = vpack.c.bf16 %v1016, %v1015
      %v3299 = vpack.c.bf16 %v1018, %v1017
      %v3300 = vpack.c.bf16 %v1020, %v1019
      %v3301 = vpack.c.bf16 %v1022, %v1021
      %v3303 = vlaneseq
      %v3304 = vshrl.u32 %v3303, 7
      %v3305 = vsub.s32 0, %v3304
      %v3306 = vrot.slane %v1014, %v3305
      %vm3308 = vcmask 523264
      %v3310 = vsel %vm3308, %v3294, 0
      %v3313 = vsel %vm3308, %v3295, 0
      %v3316 = vsel %vm3308, %v3296, 0
      %v3319 = vsel %vm3308, %v3297, 0
      %3321 = vmatprep.subr.bf16.mxu0 0
      %3322 = vmatpush1.bf16.msra.mxu0 %v3298
      %3323 = vmatprep.subr.bf16.mxu0 0
      %3324 = vmatpush1.bf16.msra.mxu0 %v3299
      %3325 = vmatprep.subr.bf16.mxu0 0
      %3326 = vmatpush1.bf16.msra.mxu0 %v3300
      %3327 = vmatprep.subr.bf16.mxu0 0
      %3328 = vmatpush1.bf16.msra.mxu0 %v3301
      %3329 = vmatprep.subr.bf16.mxu0 0
      %3330 = vmatpush1.bf16.msra.mxu0 0
      %3331 = vmatprep.subr.bf16.mxu0 0
      %3332 = vmatpush1.bf16.msra.mxu0 0
      %3333 = vmatprep.subr.bf16.mxu0 0
      %3334 = vmatpush1.bf16.msra.mxu0 0
      %3335 = vmatprep.subr.bf16.mxu0 0
      %3336 = vmatpush1.bf16.msra.mxu0 0
      %3337 = vmatprep.subr.bf16.mxu0 0
      %3338 = vmatpush1.bf16.msra.mxu0 0
      %3339 = vmatprep.subr.bf16.mxu0 0
      %3340 = vmatpush1.bf16.msra.mxu0 0
      %3341 = vmatprep.subr.bf16.mxu0 0
      %3342 = vmatpush1.bf16.msra.mxu0 0
      %3343 = vmatprep.subr.bf16.mxu0 0
      %3344 = vmatpush1.bf16.msra.mxu0 0
      %3345 = vmatprep.subr.bf16.mxu0 0
      %3346 = vmatpush1.bf16.msra.mxu0 0
      %3347 = vmatprep.subr.bf16.mxu0 0
      %3348 = vmatpush1.bf16.msra.mxu0 0
      %3349 = vmatprep.subr.bf16.mxu0 0
      %3350 = vmatpush1.bf16.msra.mxu0 0
      %3351 = vmatprep.subr.bf16.mxu0 0
      %3352 = vmatpush1.bf16.msra.mxu0 0
      %3353 = vmatprep.mubr.bf16.mxu0 0
      %3354 = vmatmul.mubr.bf16.gmra.mrb[0].mxu0 %v3310
      %v3355 = vpop.f32.mrb[0].mxu0
      %v3356 = vadd.f32 %v3306, %v3355
      %v3357 = vpop.f32.mrb[0].mxu0
      %v3358 = vpop.f32.mrb[0].mxu0
      %v3359 = vadd.f32 %v3306, %v3358
      %v3360 = vpop.f32.mrb[0].mxu0
      %3361 = vmatprep.mubr.bf16.mxu0 0
      %3362 = vmatmul.mubr.bf16.gmra.mrb[0].mxu0 %v3313
      %v3363 = vpop.f32.mrb[0].mxu0
      %v3364 = vadd.f32 %v3306, %v3363
      %v3365 = vpop.f32.mrb[0].mxu0
      %v3366 = vpop.f32.mrb[0].mxu0
      %v3367 = vadd.f32 %v3306, %v3366
      %v3368 = vpop.f32.mrb[0].mxu0
      %3369 = vmatprep.mubr.bf16.mxu0 0
      %3370 = vmatmul.mubr.bf16.gmra.mrb[0].mxu0 %v3316
      %v3371 = vpop.f32.mrb[0].mxu0
      %v3372 = vadd.f32 %v3306, %v3371
      %v3373 = vpop.f32.mrb[0].mxu0
      %v3374 = vpop.f32.mrb[0].mxu0
      %v3375 = vadd.f32 %v3306, %v3374
      %v3376 = vpop.f32.mrb[0].mxu0
      %3377 = vmatprep.mubr.bf16.mxu0 0
      %3378 = vmatmul.mubr.bf16.gmra.mrb[0].mxu0 %v3319
      %v3379 = vpop.f32.mrb[0].mxu0
      %v3380 = vadd.f32 %v3306, %v3379
      %v3381 = vpop.f32.mrb[0].mxu0
      %v3382 = vpop.f32.mrb[0].mxu0
      %v3383 = vadd.f32 %v3306, %v3382
      %v3384 = vpop.f32.mrb[0].mxu0
      %3385 = vdwg.mxu0
      %vm3386 = vcmp.gt.f32.partialorder %v3356, 0.0
      %vm3387 = vcmp.gt.f32.partialorder %v3359, 0.0
      %vm3388 = vcmp.gt.f32.partialorder %v3364, 0.0
      %vm3389 = vcmp.gt.f32.partialorder %v3367, 0.0
      %vm3390 = vcmp.gt.f32.partialorder %v3372, 0.0
      %vm3391 = vcmp.gt.f32.partialorder %v3375, 0.0
      %vm3392 = vcmp.gt.f32.partialorder %v3380, 0.0
      %vm3393 = vcmp.gt.f32.partialorder %v3383, 0.0
      %v3394 = vmul.f32 %v3356, 1.442695
      %v3395 = vpow.pop %v3394
      %v3396 = vmul.f32 %v3359, 1.442695
      %v3397 = vpow.pop %v3396
      %v3398 = vmul.f32 %v3364, 1.442695
      %v3399 = vpow.pop %v3398
      %v3400 = vmul.f32 %v3367, 1.442695
      %v3401 = vpow.pop %v3400
      %v3402 = vmul.f32 %v3372, 1.442695
      %v3403 = vpow.pop %v3402
      %v3404 = vmul.f32 %v3375, 1.442695
      %v3405 = vpow.pop %v3404
      %v3406 = vmul.f32 %v3380, 1.442695
      %v3407 = vpow.pop %v3406
      %v3408 = vmul.f32 %v3383, 1.442695
      %v3409 = vpow.pop %v3408
      %v3410 = vsub.f32 %v3395, 1.0
      %v3411 = vsub.f32 %v3397, 1.0
      %v3412 = vsub.f32 %v3399, 1.0
      %v3413 = vsub.f32 %v3401, 1.0
      %v3414 = vsub.f32 %v3403, 1.0
      %v3415 = vsub.f32 %v3405, 1.0
      %v3416 = vsub.f32 %v3407, 1.0
      %v3417 = vsub.f32 %v3409, 1.0
      %v3418 = vsel %vm3386, %v3356, %v3410
      %v3419 = vsel %vm3387, %v3359, %v3411
      %v3420 = vsel %vm3388, %v3364, %v3412
      %v3421 = vsel %vm3389, %v3367, %v3413
      %v3422 = vsel %vm3390, %v3372, %v3414
      %v3423 = vsel %vm3391, %v3375, %v3415
      %v3424 = vsel %vm3392, %v3380, %v3416
      %v3425 = vsel %vm3393, %v3383, %v3417
      %v3434 = vrot.slane %v3418, 6
      %v3435 = vrot.slane %v3419, 6
      %v3436 = vsel %vm1917, %v3434, %v3435
      %v3437 = vrot.slane %v3420, 6
      %v3438 = vsel %vm1917, %v3435, %v3437
      %v3439 = vrot.slane %v3421, 6
      %v3440 = vsel %vm1917, %v3437, %v3439
      %v3441 = vrot.slane %v3422, 6
      %v3442 = vsel %vm1917, %v3439, %v3441
      %v3443 = vrot.slane %v3423, 6
      %v3444 = vsel %vm1917, %v3441, %v3443
      %v3445 = vrot.slane %v3424, 6
      %v3446 = vsel %vm1917, %v3443, %v3445
      %v3447 = vrot.slane %v3425, 6
      %v3448 = vsel %vm1917, %v3445, %v3447
      %v3457 = vsel %vm1917, 0.0, %v3434
      %v3459 = vrot.slane %v3457, 1
      %v3460 = vrot.slane %v3436, 1
      %v3461 = vsel %vm1398, %v3459, %v3460
      %v3462 = vrot.slane %v3438, 1
      %v3463 = vsel %vm1398, %v3460, %v3462
      %v3464 = vrot.slane %v3440, 1
      %v3465 = vsel %vm1398, %v3462, %v3464
      %v3466 = vrot.slane %v3442, 1
      %v3467 = vsel %vm1398, %v3464, %v3466
      %v3468 = vrot.slane %v3444, 1
      %v3469 = vsel %vm1398, %v3466, %v3468
      %v3470 = vrot.slane %v3446, 1
      %v3471 = vsel %vm1398, %v3468, %v3470
      %v3472 = vrot.slane %v3448, 1
      %v3473 = vsel %vm1398, %v3470, %v3472
      %v3474 = vrot.slane %v3447, 1
      %v3475 = vsel %vm1398, %v3472, %v3474
      %3476 = vrot.lane.b32.xlu0 %v3461, 32
      %v3477 = vpop.permute.xlu0 %3476
      %3478 = vrot.lane.b32.xlu0 %v3463, 32
      %v3479 = vpop.permute.xlu0 %3478
      %3480 = vrot.lane.b32.xlu0 %v3465, 32
      %v3481 = vpop.permute.xlu0 %3480
      %3482 = vrot.lane.b32.xlu0 %v3467, 32
      %v3483 = vpop.permute.xlu0 %3482
      %3484 = vrot.lane.b32.xlu0 %v3469, 32
      %v3485 = vpop.permute.xlu0 %3484
      %3486 = vrot.lane.b32.xlu0 %v3471, 32
      %v3487 = vpop.permute.xlu0 %3486
      %3488 = vrot.lane.b32.xlu0 %v3473, 32
      %v3489 = vpop.permute.xlu0 %3488
      %3490 = vrot.lane.b32.xlu0 %v3475, 32
      %v3491 = vpop.permute.xlu0 %3490
      %v3500 = vrot.slane %v3457, 2
      %v3501 = vrot.slane %v3436, 2
      %v3502 = vsel %vm1221, %v3500, %v3501
      %v3503 = vrot.slane %v3438, 2
      %v3504 = vsel %vm1221, %v3501, %v3503
      %v3505 = vrot.slane %v3440, 2
      %v3506 = vsel %vm1221, %v3503, %v3505
      %v3507 = vrot.slane %v3442, 2
      %v3508 = vsel %vm1221, %v3505, %v3507
      %v3509 = vrot.slane %v3444, 2
      %v3510 = vsel %vm1221, %v3507, %v3509
      %v3511 = vrot.slane %v3446, 2
      %v3512 = vsel %vm1221, %v3509, %v3511
      %v3513 = vrot.slane %v3448, 2
      %v3514 = vsel %vm1221, %v3511, %v3513
      %v3515 = vrot.slane %v3447, 2
      %v3516 = vsel %vm1221, %v3513, %v3515
      %3517 = vrot.lane.b32.xlu0 %v3502, 64
      %v3518 = vpop.permute.xlu0 %3517
      %3519 = vrot.lane.b32.xlu0 %v3504, 64
      %v3520 = vpop.permute.xlu0 %3519
      %3521 = vrot.lane.b32.xlu0 %v3506, 64
      %v3522 = vpop.permute.xlu0 %3521
      %3523 = vrot.lane.b32.xlu0 %v3508, 64
      %v3524 = vpop.permute.xlu0 %3523
      %3525 = vrot.lane.b32.xlu0 %v3510, 64
      %v3526 = vpop.permute.xlu0 %3525
      %3527 = vrot.lane.b32.xlu0 %v3512, 64
      %v3528 = vpop.permute.xlu0 %3527
      %3529 = vrot.lane.b32.xlu0 %v3514, 64
      %v3530 = vpop.permute.xlu0 %3529
      %3531 = vrot.lane.b32.xlu0 %v3516, 64
      %v3532 = vpop.permute.xlu0 %3531
      %v3541 = vsel %vm2329, %v3457, %v3477
      %v3542 = vsel %vm2329, %v3436, %v3479
      %v3543 = vsel %vm2329, %v3438, %v3481
      %v3544 = vsel %vm2329, %v3440, %v3483
      %v3545 = vsel %vm2329, %v3442, %v3485
      %v3546 = vsel %vm2329, %v3444, %v3487
      %v3547 = vsel %vm2329, %v3446, %v3489
      %v3548 = vsel %vm2329, %v3448, %v3491
      %v3549 = vsel %vm3308, %v3541, %v3518
      %v3550 = vsel %vm3308, %v3542, %v3520
      %v3551 = vsel %vm3308, %v3543, %v3522
      %v3552 = vsel %vm3308, %v3544, %v3524
      %v3553 = vsel %vm3308, %v3545, %v3526
      %v3554 = vsel %vm3308, %v3546, %v3528
      %v3555 = vsel %vm3308, %v3547, %v3530
      %v3556 = vsel %vm3308, %v3548, %v3532
      %v3557 = vpack.c.bf16 %v3550, %v3549
      %v3558 = vpack.c.bf16 %v3552, %v3551
      %v3559 = vpack.c.bf16 %v3554, %v3553
      %v3560 = vpack.c.bf16 %v3556, %v3555
      %v3561 = vpack.c.bf16 %v1068, %v1067
      %v3562 = vpack.c.bf16 %v1070, %v1069
      %v3563 = vpack.c.bf16 %v1072, %v1071
      %v3564 = vpack.c.bf16 %v1074, %v1073
      %v3565 = vpack.c.bf16 %v1076, %v1075
      %v3566 = vpack.c.bf16 %v1078, %v1077
      %v3568 = vlaneseq
      %v3569 = vshrl.u32 %v3568, 7
      %v3570 = vsub.s32 0, %v3569
      %v3571 = vrot.slane %v1066, %v3570
      %vm3573 = vcmask 785408
      %v3575 = vsel %vm3573, %v3557, 0
      %v3578 = vsel %vm3573, %v3558, 0
      %v3581 = vsel %vm3573, %v3559, 0
      %v3584 = vsel %vm3573, %v3560, 0
      %3586 = vmatprep.subr.bf16.mxu0 0
      %3587 = vmatpush1.bf16.msra.mxu0 %v3561
      %3588 = vmatprep.subr.bf16.mxu0 0
      %3589 = vmatpush1.bf16.msra.mxu0 %v3562
      %3590 = vmatprep.subr.bf16.mxu0 0
      %3591 = vmatpush1.bf16.msra.mxu0 %v3563
      %3592 = vmatprep.subr.bf16.mxu0 0
      %3593 = vmatpush1.bf16.msra.mxu0 %v3564
      %3594 = vmatprep.subr.bf16.mxu0 0
      %3595 = vmatpush1.bf16.msra.mxu0 %v3565
      %3596 = vmatprep.subr.bf16.mxu0 0
      %3597 = vmatpush1.bf16.msra.mxu0 %v3566
      %3598 = vmatprep.subr.bf16.mxu0 0
      %3599 = vmatpush1.bf16.msra.mxu0 0
      %3600 = vmatprep.subr.bf16.mxu0 0
      %3601 = vmatpush1.bf16.msra.mxu0 0
      %3602 = vmatprep.subr.bf16.mxu0 0
      %3603 = vmatpush1.bf16.msra.mxu0 0
      %3604 = vmatprep.subr.bf16.mxu0 0
      %3605 = vmatpush1.bf16.msra.mxu0 0
      %3606 = vmatprep.subr.bf16.mxu0 0
      %3607 = vmatpush1.bf16.msra.mxu0 0
      %3608 = vmatprep.subr.bf16.mxu0 0
      %3609 = vmatpush1.bf16.msra.mxu0 0
      %3610 = vmatprep.subr.bf16.mxu0 0
      %3611 = vmatpush1.bf16.msra.mxu0 0
      %3612 = vmatprep.subr.bf16.mxu0 0
      %3613 = vmatpush1.bf16.msra.mxu0 0
      %3614 = vmatprep.subr.bf16.mxu0 0
      %3615 = vmatpush1.bf16.msra.mxu0 0
      %3616 = vmatprep.subr.bf16.mxu0 0
      %3617 = vmatpush1.bf16.msra.mxu0 0
      %3618 = vmatprep.mubr.bf16.mxu0 0
      %3619 = vmatmul.mubr.bf16.gmra.mrb[0].mxu0 %v3575
      %v3620 = vpop.f32.mrb[0].mxu0
      %v3621 = vadd.f32 %v3571, %v3620
      %v3622 = vpop.f32.mrb[0].mxu0
      %v3623 = vpop.f32.mrb[0].mxu0
      %v3624 = vadd.f32 %v3571, %v3623
      %v3625 = vpop.f32.mrb[0].mxu0
      %3626 = vmatprep.mubr.bf16.mxu0 0
      %3627 = vmatmul.mubr.bf16.gmra.mrb[0].mxu0 %v3578
      %v3628 = vpop.f32.mrb[0].mxu0
      %v3629 = vadd.f32 %v3571, %v3628
      %v3630 = vpop.f32.mrb[0].mxu0
      %v3631 = vpop.f32.mrb[0].mxu0
      %v3632 = vadd.f32 %v3571, %v3631
      %v3633 = vpop.f32.mrb[0].mxu0
      %3634 = vmatprep.mubr.bf16.mxu0 0
      %3635 = vmatmul.mubr.bf16.gmra.mrb[0].mxu0 %v3581
      %v3636 = vpop.f32.mrb[0].mxu0
      %v3637 = vadd.f32 %v3571, %v3636
      %v3638 = vpop.f32.mrb[0].mxu0
      %v3639 = vpop.f32.mrb[0].mxu0
      %v3640 = vadd.f32 %v3571, %v3639
      %v3641 = vpop.f32.mrb[0].mxu0
      %3642 = vmatprep.mubr.bf16.mxu0 0
      %3643 = vmatmul.mubr.bf16.gmra.mrb[0].mxu0 %v3584
      %v3644 = vpop.f32.mrb[0].mxu0
      %v3645 = vadd.f32 %v3571, %v3644
      %v3646 = vpop.f32.mrb[0].mxu0
      %v3647 = vpop.f32.mrb[0].mxu0
      %v3648 = vadd.f32 %v3571, %v3647
      %v3649 = vpop.f32.mrb[0].mxu0
      %3650 = vdwg.mxu0
      %vm3651 = vcmp.gt.f32.partialorder %v3621, 0.0
      %vm3652 = vcmp.gt.f32.partialorder %v3624, 0.0
      %vm3653 = vcmp.gt.f32.partialorder %v3629, 0.0
      %vm3654 = vcmp.gt.f32.partialorder %v3632, 0.0
      %vm3655 = vcmp.gt.f32.partialorder %v3637, 0.0
      %vm3656 = vcmp.gt.f32.partialorder %v3640, 0.0
      %vm3657 = vcmp.gt.f32.partialorder %v3645, 0.0
      %vm3658 = vcmp.gt.f32.partialorder %v3648, 0.0
      %v3659 = vmul.f32 %v3621, 1.442695
      %v3660 = vpow.pop %v3659
      %v3661 = vmul.f32 %v3624, 1.442695
      %v3662 = vpow.pop %v3661
      %v3663 = vmul.f32 %v3629, 1.442695
      %v3664 = vpow.pop %v3663
      %v3665 = vmul.f32 %v3632, 1.442695
      %v3666 = vpow.pop %v3665
      %v3667 = vmul.f32 %v3637, 1.442695
      %v3668 = vpow.pop %v3667
      %v3669 = vmul.f32 %v3640, 1.442695
      %v3670 = vpow.pop %v3669
      %v3671 = vmul.f32 %v3645, 1.442695
      %v3672 = vpow.pop %v3671
      %v3673 = vmul.f32 %v3648, 1.442695
      %v3674 = vpow.pop %v3673
      %v3675 = vsub.f32 %v3660, 1.0
      %v3676 = vsub.f32 %v3662, 1.0
      %v3677 = vsub.f32 %v3664, 1.0
      %v3678 = vsub.f32 %v3666, 1.0
      %v3679 = vsub.f32 %v3668, 1.0
      %v3680 = vsub.f32 %v3670, 1.0
      %v3681 = vsub.f32 %v3672, 1.0
      %v3682 = vsub.f32 %v3674, 1.0
      %v3683 = vsel %vm3651, %v3621, %v3675
      %v3684 = vsel %vm3652, %v3624, %v3676
      %v3685 = vsel %vm3653, %v3629, %v3677
      %v3686 = vsel %vm3654, %v3632, %v3678
      %v3687 = vsel %vm3655, %v3637, %v3679
      %v3688 = vsel %vm3656, %v3640, %v3680
      %v3689 = vsel %vm3657, %v3645, %v3681
      %v3690 = vsel %vm3658, %v3648, %v3682
      %v3691 = vpack.c.bf16 %v3684, %v3683
      %v3692 = vpack.c.bf16 %v3686, %v3685
      %v3693 = vpack.c.bf16 %v3688, %v3687
      %v3694 = vpack.c.bf16 %v3690, %v3689
      %v3695 = vpack.c.bf16 %v1081, %v1080
      %v3697 = vlaneseq
      %v3698 = vshrl.u32 %v3697, 7
      %v3699 = vsub.s32 0, %v3698
      %v3700 = vrot.slane %v1079, %v3699
      %v3703 = vsel %vm2312, %v3691, 0
      %v3706 = vsel %vm2312, %v3692, 0
      %v3709 = vsel %vm2312, %v3693, 0
      %v3712 = vsel %vm2312, %v3694, 0
      %3714 = vmatprep.subr.bf16.mxu0 0
      %3715 = vmatpush1.bf16.msra.mxu0 %v3695
      %3716 = vmatprep.subr.bf16.mxu0 0
      %3717 = vmatpush1.bf16.msra.mxu0 0
      %3718 = vmatprep.subr.bf16.mxu0 0
      %3719 = vmatpush1.bf16.msra.mxu0 0
      %3720 = vmatprep.subr.bf16.mxu0 0
      %3721 = vmatpush1.bf16.msra.mxu0 0
      %3722 = vmatprep.subr.bf16.mxu0 0
      %3723 = vmatpush1.bf16.msra.mxu0 0
      %3724 = vmatprep.subr.bf16.mxu0 0
      %3725 = vmatpush1.bf16.msra.mxu0 0
      %3726 = vmatprep.subr.bf16.mxu0 0
      %3727 = vmatpush1.bf16.msra.mxu0 0
      %3728 = vmatprep.subr.bf16.mxu0 0
      %3729 = vmatpush1.bf16.msra.mxu0 0
      %3730 = vmatprep.subr.bf16.mxu0 0
      %3731 = vmatpush1.bf16.msra.mxu0 0
      %3732 = vmatprep.subr.bf16.mxu0 0
      %3733 = vmatpush1.bf16.msra.mxu0 0
      %3734 = vmatprep.subr.bf16.mxu0 0
      %3735 = vmatpush1.bf16.msra.mxu0 0
      %3736 = vmatprep.subr.bf16.mxu0 0
      %3737 = vmatpush1.bf16.msra.mxu0 0
      %3738 = vmatprep.subr.bf16.mxu0 0
      %3739 = vmatpush1.bf16.msra.mxu0 0
      %3740 = vmatprep.subr.bf16.mxu0 0
      %3741 = vmatpush1.bf16.msra.mxu0 0
      %3742 = vmatprep.subr.bf16.mxu0 0
      %3743 = vmatpush1.bf16.msra.mxu0 0
      %3744 = vmatprep.subr.bf16.mxu0 0
      %3745 = vmatpush1.bf16.msra.mxu0 0
      %3746 = vmatprep.mubr.bf16.mxu0 0
      %3747 = vmatmul.mubr.bf16.gmra.mrb[0].mxu0 %v3703
      %v3748 = vpop.f32.mrb[0].mxu0
      %v3749 = vadd.f32 %v3700, %v3748
      %v3750 = vpop.f32.mrb[0].mxu0
      %v3751 = vpop.f32.mrb[0].mxu0
      %v3752 = vadd.f32 %v3700, %v3751
      %v3753 = vpop.f32.mrb[0].mxu0
      %3754 = vmatprep.mubr.bf16.mxu0 0
      %3755 = vmatmul.mubr.bf16.gmra.mrb[0].mxu0 %v3706
      %v3756 = vpop.f32.mrb[0].mxu0
      %v3757 = vadd.f32 %v3700, %v3756
      %v3758 = vpop.f32.mrb[0].mxu0
      %v3759 = vpop.f32.mrb[0].mxu0
      %v3760 = vadd.f32 %v3700, %v3759
      %v3761 = vpop.f32.mrb[0].mxu0
      %3762 = vmatprep.mubr.bf16.mxu0 0
      %3763 = vmatmul.mubr.bf16.gmra.mrb[0].mxu0 %v3709
      %v3764 = vpop.f32.mrb[0].mxu0
      %v3765 = vadd.f32 %v3700, %v3764
      %v3766 = vpop.f32.mrb[0].mxu0
      %v3767 = vpop.f32.mrb[0].mxu0
      %v3768 = vadd.f32 %v3700, %v3767
      %v3769 = vpop.f32.mrb[0].mxu0
      %3770 = vmatprep.mubr.bf16.mxu0 0
      %3771 = vmatmul.mubr.bf16.gmra.mrb[0].mxu0 %v3712
      %v3772 = vpop.f32.mrb[0].mxu0
      %v3773 = vadd.f32 %v3700, %v3772
      %v3774 = vpop.f32.mrb[0].mxu0
      %v3775 = vpop.f32.mrb[0].mxu0
      %v3776 = vadd.f32 %v3700, %v3775
      %v3777 = vpop.f32.mrb[0].mxu0
      %3778 = vdwg.mxu0
      %v3779 = vadd.f32 %v3356, %v3749
      %v3780 = vadd.f32 %v3359, %v3752
      %v3781 = vadd.f32 %v3364, %v3757
      %v3782 = vadd.f32 %v3367, %v3760
      %v3783 = vadd.f32 %v3372, %v3765
      %v3784 = vadd.f32 %v3375, %v3768
      %v3785 = vadd.f32 %v3380, %v3773
      %v3786 = vadd.f32 %v3383, %v3776
      %vm3787 = vcmp.gt.f32.partialorder %v3779, 0.0
      %vm3788 = vcmp.gt.f32.partialorder %v3780, 0.0
      %vm3789 = vcmp.gt.f32.partialorder %v3781, 0.0
      %vm3790 = vcmp.gt.f32.partialorder %v3782, 0.0
      %vm3791 = vcmp.gt.f32.partialorder %v3783, 0.0
      %vm3792 = vcmp.gt.f32.partialorder %v3784, 0.0
      %vm3793 = vcmp.gt.f32.partialorder %v3785, 0.0
      %vm3794 = vcmp.gt.f32.partialorder %v3786, 0.0
      %v3795 = vmul.f32 %v3779, 1.442695
      %v3796 = vpow.pop %v3795
      %v3797 = vmul.f32 %v3780, 1.442695
      %v3798 = vpow.pop %v3797
      %v3799 = vmul.f32 %v3781, 1.442695
      %v3800 = vpow.pop %v3799
      %v3801 = vmul.f32 %v3782, 1.442695
      %v3802 = vpow.pop %v3801
      %v3803 = vmul.f32 %v3783, 1.442695
      %v3804 = vpow.pop %v3803
      %v3805 = vmul.f32 %v3784, 1.442695
      %v3806 = vpow.pop %v3805
      %v3807 = vmul.f32 %v3785, 1.442695
      %v3808 = vpow.pop %v3807
      %v3809 = vmul.f32 %v3786, 1.442695
      %v3810 = vpow.pop %v3809
      %v3811 = vsub.f32 %v3796, 1.0
      %v3812 = vsub.f32 %v3798, 1.0
      %v3813 = vsub.f32 %v3800, 1.0
      %v3814 = vsub.f32 %v3802, 1.0
      %v3815 = vsub.f32 %v3804, 1.0
      %v3816 = vsub.f32 %v3806, 1.0
      %v3817 = vsub.f32 %v3808, 1.0
      %v3818 = vsub.f32 %v3810, 1.0
      %v3819 = vsel %vm3787, %v3779, %v3811
      %v3820 = vsel %vm3788, %v3780, %v3812
      %v3821 = vsel %vm3789, %v3781, %v3813
      %v3822 = vsel %vm3790, %v3782, %v3814
      %v3823 = vsel %vm3791, %v3783, %v3815
      %v3824 = vsel %vm3792, %v3784, %v3816
      %v3825 = vsel %vm3793, %v3785, %v3817
      %v3826 = vsel %vm3794, %v3786, %v3818
      %v3835 = vrot.slane %v3819, 4
      %v3836 = vrot.slane %v3820, 4
      %v3837 = vsel %vm1709, %v3835, %v3836
      %v3838 = vrot.slane %v3821, 4
      %v3839 = vsel %vm1709, %v3836, %v3838
      %v3840 = vrot.slane %v3822, 4
      %v3841 = vsel %vm1709, %v3838, %v3840
      %v3842 = vrot.slane %v3823, 4
      %v3843 = vsel %vm1709, %v3840, %v3842
      %v3844 = vrot.slane %v3824, 4
      %v3845 = vsel %vm1709, %v3842, %v3844
      %v3846 = vrot.slane %v3825, 4
      %v3847 = vsel %vm1709, %v3844, %v3846
      %v3848 = vrot.slane %v3826, 4
      %v3849 = vsel %vm1709, %v3846, %v3848
      %v3858 = vsel %vm1709, 0.0, %v3835
      %v3860 = vrot.slane %v3858, 1
      %v3861 = vrot.slane %v3837, 1
      %v3862 = vsel %vm1398, %v3860, %v3861
      %v3863 = vrot.slane %v3839, 1
      %v3864 = vsel %vm1398, %v3861, %v3863
      %v3865 = vrot.slane %v3841, 1
      %v3866 = vsel %vm1398, %v3863, %v3865
      %v3867 = vrot.slane %v3843, 1
      %v3868 = vsel %vm1398, %v3865, %v3867
      %v3869 = vrot.slane %v3845, 1
      %v3870 = vsel %vm1398, %v3867, %v3869
      %v3871 = vrot.slane %v3847, 1
      %v3872 = vsel %vm1398, %v3869, %v3871
      %v3873 = vrot.slane %v3849, 1
      %v3874 = vsel %vm1398, %v3871, %v3873
      %3875 = vrot.lane.b32.xlu0 %v3862, 32
      %v3876 = vpop.permute.xlu0 %3875
      %3877 = vrot.lane.b32.xlu0 %v3864, 32
      %v3878 = vpop.permute.xlu0 %3877
      %3879 = vrot.lane.b32.xlu0 %v3866, 32
      %v3880 = vpop.permute.xlu0 %3879
      %3881 = vrot.lane.b32.xlu0 %v3868, 32
      %v3882 = vpop.permute.xlu0 %3881
      %3883 = vrot.lane.b32.xlu0 %v3870, 32
      %v3884 = vpop.permute.xlu0 %3883
      %3885 = vrot.lane.b32.xlu0 %v3872, 32
      %v3886 = vpop.permute.xlu0 %3885
      %3887 = vrot.lane.b32.xlu0 %v3874, 32
      %v3888 = vpop.permute.xlu0 %3887
      %3889 = vrot.lane.b32.xlu0 %v3873, 32
      %v3890 = vpop.permute.xlu0 %3889
      %v3899 = vrot.slane %v3858, 2
      %v3900 = vrot.slane %v3837, 2
      %v3901 = vsel %vm1221, %v3899, %v3900
      %v3902 = vrot.slane %v3839, 2
      %v3903 = vsel %vm1221, %v3900, %v3902
      %v3904 = vrot.slane %v3841, 2
      %v3905 = vsel %vm1221, %v3902, %v3904
      %v3906 = vrot.slane %v3843, 2
      %v3907 = vsel %vm1221, %v3904, %v3906
      %v3908 = vrot.slane %v3845, 2
      %v3909 = vsel %vm1221, %v3906, %v3908
      %v3910 = vrot.slane %v3847, 2
      %v3911 = vsel %vm1221, %v3908, %v3910
      %v3912 = vrot.slane %v3849, 2
      %v3913 = vsel %vm1221, %v3910, %v3912
      %3914 = vrot.lane.b32.xlu0 %v3901, 64
      %v3915 = vpop.permute.xlu0 %3914
      %3916 = vrot.lane.b32.xlu0 %v3903, 64
      %v3917 = vpop.permute.xlu0 %3916
      %3918 = vrot.lane.b32.xlu0 %v3905, 64
      %v3919 = vpop.permute.xlu0 %3918
      %3920 = vrot.lane.b32.xlu0 %v3907, 64
      %v3921 = vpop.permute.xlu0 %3920
      %3922 = vrot.lane.b32.xlu0 %v3909, 64
      %v3923 = vpop.permute.xlu0 %3922
      %3924 = vrot.lane.b32.xlu0 %v3911, 64
      %v3925 = vpop.permute.xlu0 %3924
      %3926 = vrot.lane.b32.xlu0 %v3913, 64
      %v3927 = vpop.permute.xlu0 %3926
      %3928 = vrot.lane.b32.xlu0 %v3912, 64
      %v3929 = vpop.permute.xlu0 %3928
      %v3938 = vrot.slane %v3858, 3
      %v3939 = vrot.slane %v3837, 3
      %v3940 = vsel %vm1605, %v3938, %v3939
      %v3941 = vrot.slane %v3839, 3
      %v3942 = vsel %vm1605, %v3939, %v3941
      %v3943 = vrot.slane %v3841, 3
      %v3944 = vsel %vm1605, %v3941, %v3943
      %v3945 = vrot.slane %v3843, 3
      %v3946 = vsel %vm1605, %v3943, %v3945
      %v3947 = vrot.slane %v3845, 3
      %v3948 = vsel %vm1605, %v3945, %v3947
      %v3949 = vrot.slane %v3847, 3
      %v3950 = vsel %vm1605, %v3947, %v3949
      %v3951 = vrot.slane %v3849, 3
      %v3952 = vsel %vm1605, %v3949, %v3951
      %3953 = vrot.lane.b32.xlu0 %v3940, 96
      %v3954 = vpop.permute.xlu0 %3953
      %3955 = vrot.lane.b32.xlu0 %v3942, 96
      %v3956 = vpop.permute.xlu0 %3955
      %3957 = vrot.lane.b32.xlu0 %v3944, 96
      %v3958 = vpop.permute.xlu0 %3957
      %3959 = vrot.lane.b32.xlu0 %v3946, 96
      %v3960 = vpop.permute.xlu0 %3959
      %3961 = vrot.lane.b32.xlu0 %v3948, 96
      %v3962 = vpop.permute.xlu0 %3961
      %3963 = vrot.lane.b32.xlu0 %v3950, 96
      %v3964 = vpop.permute.xlu0 %3963
      %3965 = vrot.lane.b32.xlu0 %v3952, 96
      %v3966 = vpop.permute.xlu0 %3965
      %3967 = vrot.lane.b32.xlu0 %v3951, 96
      %v3968 = vpop.permute.xlu0 %3967
      %v3977 = vrot.slane %v3858, 4
      %v3978 = vrot.slane %v3837, 4
      %v3979 = vsel %vm1709, %v3977, %v3978
      %v3980 = vrot.slane %v3839, 4
      %v3981 = vsel %vm1709, %v3978, %v3980
      %v3982 = vrot.slane %v3841, 4
      %v3983 = vsel %vm1709, %v3980, %v3982
      %v3984 = vrot.slane %v3843, 4
      %v3985 = vsel %vm1709, %v3982, %v3984
      %v3986 = vrot.slane %v3845, 4
      %v3987 = vsel %vm1709, %v3984, %v3986
      %v3988 = vrot.slane %v3847, 4
      %v3989 = vsel %vm1709, %v3986, %v3988
      %v3990 = vrot.slane %v3849, 4
      %v3991 = vsel %vm1709, %v3988, %v3990
      %v3992 = vrot.slane %v3848, 4
      %v3993 = vsel %vm1709, %v3990, %v3992
      %v4002 = vrot.slane %v3858, 5
      %v4003 = vrot.slane %v3837, 5
      %v4004 = vsel %vm1813, %v4002, %v4003
      %v4005 = vrot.slane %v3839, 5
      %v4006 = vsel %vm1813, %v4003, %v4005
      %v4007 = vrot.slane %v3841, 5
      %v4008 = vsel %vm1813, %v4005, %v4007
      %v4009 = vrot.slane %v3843, 5
      %v4010 = vsel %vm1813, %v4007, %v4009
      %v4011 = vrot.slane %v3845, 5
      %v4012 = vsel %vm1813, %v4009, %v4011
      %v4013 = vrot.slane %v3847, 5
      %v4014 = vsel %vm1813, %v4011, %v4013
      %v4015 = vrot.slane %v3849, 5
      %v4016 = vsel %vm1813, %v4013, %v4015
      %v4017 = vrot.slane %v3848, 5
      %v4018 = vsel %vm1813, %v4015, %v4017
      %4019 = vrot.lane.b32.xlu0 %v4004, 32
      %v4020 = vpop.permute.xlu0 %4019
      %4021 = vrot.lane.b32.xlu0 %v4006, 32
      %v4022 = vpop.permute.xlu0 %4021
      %4023 = vrot.lane.b32.xlu0 %v4008, 32
      %v4024 = vpop.permute.xlu0 %4023
      %4025 = vrot.lane.b32.xlu0 %v4010, 32
      %v4026 = vpop.permute.xlu0 %4025
      %4027 = vrot.lane.b32.xlu0 %v4012, 32
      %v4028 = vpop.permute.xlu0 %4027
      %4029 = vrot.lane.b32.xlu0 %v4014, 32
      %v4030 = vpop.permute.xlu0 %4029
      %4031 = vrot.lane.b32.xlu0 %v4016, 32
      %v4032 = vpop.permute.xlu0 %4031
      %4033 = vrot.lane.b32.xlu0 %v4018, 32
      %v4034 = vpop.permute.xlu0 %4033
      %v4043 = vrot.slane %v3858, 6
      %v4044 = vrot.slane %v3837, 6
      %v4045 = vsel %vm1917, %v4043, %v4044
      %v4046 = vrot.slane %v3839, 6
      %v4047 = vsel %vm1917, %v4044, %v4046
      %v4048 = vrot.slane %v3841, 6
      %v4049 = vsel %vm1917, %v4046, %v4048
      %v4050 = vrot.slane %v3843, 6
      %v4051 = vsel %vm1917, %v4048, %v4050
      %v4052 = vrot.slane %v3845, 6
      %v4053 = vsel %vm1917, %v4050, %v4052
      %v4054 = vrot.slane %v3847, 6
      %v4055 = vsel %vm1917, %v4052, %v4054
      %v4056 = vrot.slane %v3849, 6
      %v4057 = vsel %vm1917, %v4054, %v4056
      %v4058 = vrot.slane %v3848, 6
      %v4059 = vsel %vm1917, %v4056, %v4058
      %4060 = vrot.lane.b32.xlu0 %v4045, 64
      %v4061 = vpop.permute.xlu0 %4060
      %4062 = vrot.lane.b32.xlu0 %v4047, 64
      %v4063 = vpop.permute.xlu0 %4062
      %4064 = vrot.lane.b32.xlu0 %v4049, 64
      %v4065 = vpop.permute.xlu0 %4064
      %4066 = vrot.lane.b32.xlu0 %v4051, 64
      %v4067 = vpop.permute.xlu0 %4066
      %4068 = vrot.lane.b32.xlu0 %v4053, 64
      %v4069 = vpop.permute.xlu0 %4068
      %4070 = vrot.lane.b32.xlu0 %v4055, 64
      %v4071 = vpop.permute.xlu0 %4070
      %4072 = vrot.lane.b32.xlu0 %v4057, 64
      %v4073 = vpop.permute.xlu0 %4072
      %4074 = vrot.lane.b32.xlu0 %v4059, 64
      %v4075 = vpop.permute.xlu0 %4074
      %vm4084 = vcmask 1040384
      %v4085 = vrot.slane %v3858, 7
      %v4086 = vrot.slane %v3837, 7
      %v4087 = vsel %vm4084, %v4085, %v4086
      %v4088 = vrot.slane %v3839, 7
      %v4089 = vsel %vm4084, %v4086, %v4088
      %v4090 = vrot.slane %v3841, 7
      %v4091 = vsel %vm4084, %v4088, %v4090
      %v4092 = vrot.slane %v3843, 7
      %v4093 = vsel %vm4084, %v4090, %v4092
      %v4094 = vrot.slane %v3845, 7
      %v4095 = vsel %vm4084, %v4092, %v4094
      %v4096 = vrot.slane %v3847, 7
      %v4097 = vsel %vm4084, %v4094, %v4096
      %v4098 = vrot.slane %v3849, 7
      %v4099 = vsel %vm4084, %v4096, %v4098
      %v4100 = vrot.slane %v3848, 7
      %v4101 = vsel %vm4084, %v4098, %v4100
      %4102 = vrot.lane.b32.xlu0 %v4087, 96
      %v4103 = vpop.permute.xlu0 %4102
      %4104 = vrot.lane.b32.xlu0 %v4089, 96
      %v4105 = vpop.permute.xlu0 %4104
      %4106 = vrot.lane.b32.xlu0 %v4091, 96
      %v4107 = vpop.permute.xlu0 %4106
      %4108 = vrot.lane.b32.xlu0 %v4093, 96
      %v4109 = vpop.permute.xlu0 %4108
      %4110 = vrot.lane.b32.xlu0 %v4095, 96
      %v4111 = vpop.permute.xlu0 %4110
      %4112 = vrot.lane.b32.xlu0 %v4097, 96
      %v4113 = vpop.permute.xlu0 %4112
      %4114 = vrot.lane.b32.xlu0 %v4099, 96
      %v4115 = vpop.permute.xlu0 %4114
      %4116 = vrot.lane.b32.xlu0 %v4101, 96
      %v4117 = vpop.permute.xlu0 %4116
      %v4126 = vsel %vm2329, %v3858, %v3876
      %v4127 = vsel %vm2329, %v3837, %v3878
      %v4128 = vsel %vm2329, %v3839, %v3880
      %v4129 = vsel %vm2329, %v3841, %v3882
      %v4130 = vsel %vm2329, %v3843, %v3884
      %v4131 = vsel %vm2329, %v3845, %v3886
      %v4132 = vsel %vm2329, %v3847, %v3888
      %v4133 = vsel %vm2329, %v3849, %v3890
      %v4134 = vsel %vm3308, %v4126, %v3915
      %v4135 = vsel %vm3308, %v4127, %v3917
      %v4136 = vsel %vm3308, %v4128, %v3919
      %v4137 = vsel %vm3308, %v4129, %v3921
      %v4138 = vsel %vm3308, %v4130, %v3923
      %v4139 = vsel %vm3308, %v4131, %v3925
      %v4140 = vsel %vm3308, %v4132, %v3927
      %v4141 = vsel %vm3308, %v4133, %v3929
      %v4142 = vsel %vm3573, %v4134, %v3954
      %v4143 = vsel %vm3573, %v4135, %v3956
      %v4144 = vsel %vm3573, %v4136, %v3958
      %v4145 = vsel %vm3573, %v4137, %v3960
      %v4146 = vsel %vm3573, %v4138, %v3962
      %v4147 = vsel %vm3573, %v4139, %v3964
      %v4148 = vsel %vm3573, %v4140, %v3966
      %v4149 = vsel %vm3573, %v4141, %v3968
      %v4150 = vsel %vm2329, %v3979, %v4020
      %v4151 = vsel %vm2329, %v3981, %v4022
      %v4152 = vsel %vm2329, %v3983, %v4024
      %v4153 = vsel %vm2329, %v3985, %v4026
      %v4154 = vsel %vm2329, %v3987, %v4028
      %v4155 = vsel %vm2329, %v3989, %v4030
      %v4156 = vsel %vm2329, %v3991, %v4032
      %v4157 = vsel %vm2329, %v3993, %v4034
      %v4158 = vsel %vm3308, %v4150, %v4061
      %v4159 = vsel %vm3308, %v4151, %v4063
      %v4160 = vsel %vm3308, %v4152, %v4065
      %v4161 = vsel %vm3308, %v4153, %v4067
      %v4162 = vsel %vm3308, %v4154, %v4069
      %v4163 = vsel %vm3308, %v4155, %v4071
      %v4164 = vsel %vm3308, %v4156, %v4073
      %v4165 = vsel %vm3308, %v4157, %v4075
      %v4166 = vsel %vm3573, %v4158, %v4103
      %v4167 = vsel %vm3573, %v4159, %v4105
      %v4168 = vsel %vm3573, %v4160, %v4107
      %v4169 = vsel %vm3573, %v4161, %v4109
      %v4170 = vsel %vm3573, %v4162, %v4111
      %v4171 = vsel %vm3573, %v4163, %v4113
      %v4172 = vsel %vm3573, %v4164, %v4115
      %v4173 = vsel %vm3573, %v4165, %v4117
      %v4174 = vmul.u32 %v3156, 4
      %v4175 = vmul.u32 %v3157, 4
      %vm4176 = vcmp.eq.s32.totalorder %v3165, %v4174
      %vm4177 = vcmp.eq.s32.totalorder %v3165, %v4175
      %v4178 = vsel %vm4176, 1, 0
      %v4179 = vsel %vm4177, 1, 0
      %v4180 = vcvt.s32.f32 %v4178
      %v4181 = vcvt.s32.f32 %v4179
      %v4182 = vpack.c.bf16 %v4181, %v4180
      %v4183 = vpack.c.bf16 %v4143, %v4142
      %v4184 = vpack.c.bf16 %v4167, %v4166
      %v4185 = vpack.c.bf16 %v4145, %v4144
      %v4186 = vpack.c.bf16 %v4169, %v4168
      %v4187 = vpack.c.bf16 %v4147, %v4146
      %v4188 = vpack.c.bf16 %v4171, %v4170
      %v4189 = vpack.c.bf16 %v4149, %v4148
      %v4190 = vpack.c.bf16 %v4173, %v4172
      %vm4191 = vcmask 498688
      %v4193 = vsel %vm4191, %v4182, 0
      %v4195 = vsel %vm1221, 4294967295, 65535
      %v4196 = vsel %vm1398, %v4195, 0
      %v4198 = vand.u32 %v4189, %v4196
      %v4201 = vand.u32 %v4190, %v4196
      %4203 = vmatprep.subr.bf16.mxu0 %v4184
      %4204 = vmatpush1.bf16.msra.mxu0 %v4183
      %4205 = vmatprep.subr.bf16.mxu0 %v4186
      %4206 = vmatpush1.bf16.msra.mxu0 %v4185
      %4207 = vmatprep.subr.bf16.mxu0 %v4188
      %4208 = vmatpush1.bf16.msra.mxu0 %v4187
      %4209 = vmatprep.subr.bf16.mxu0 %v4201
      %4210 = vmatpush1.bf16.msra.mxu0 %v4198
      %4211 = vmatprep.subr.bf16.mxu0 0
      %4212 = vmatpush1.bf16.msra.mxu0 0
      %4213 = vmatprep.subr.bf16.mxu0 0
      %4214 = vmatpush1.bf16.msra.mxu0 0
      %4215 = vmatprep.subr.bf16.mxu0 0
      %4216 = vmatpush1.bf16.msra.mxu0 0
      %4217 = vmatprep.subr.bf16.mxu0 0
      %4218 = vmatpush1.bf16.msra.mxu0 0
      %4219 = vmatprep.subr.bf16.mxu0 0
      %4220 = vmatpush1.bf16.msra.mxu0 0
      %4221 = vmatprep.subr.bf16.mxu0 0
      %4222 = vmatpush1.bf16.msra.mxu0 0
      %4223 = vmatprep.subr.bf16.mxu0 0
      %4224 = vmatpush1.bf16.msra.mxu0 0
      %4225 = vmatprep.subr.bf16.mxu0 0
      %4226 = vmatpush1.bf16.msra.mxu0 0
      %4227 = vmatprep.subr.bf16.mxu0 0
      %4228 = vmatpush1.bf16.msra.mxu0 0
      %4229 = vmatprep.subr.bf16.mxu0 0
      %4230 = vmatpush1.bf16.msra.mxu0 0
      %4231 = vmatprep.subr.bf16.mxu0 0
      %4232 = vmatpush1.bf16.msra.mxu0 0
      %4233 = vmatprep.subr.bf16.mxu0 0
      %4234 = vmatpush1.bf16.msra.mxu0 0
      %4235 = vmatprep.mubr.bf16.mxu0 0
      %4236 = vmatmul.mubr.bf16.gmra.mrb[0].mxu0 %v4193
      %v4237 = vpop.f32.mrb[0].mxu0
      %v4238 = vadd.f32 0.0, %v4237
      %v4239 = vpop.f32.mrb[0].mxu0
      %v4240 = vadd.f32 0.0, %v4239
      %v4241 = vpop.f32.mrb[0].mxu0
      %v4242 = vadd.f32 0.0, %v4241
      %v4243 = vpop.f32.mrb[0].mxu0
      %v4244 = vadd.f32 0.0, %v4243
      %4245 = vdwg.mxu0
      %v4246 = vpack.c.bf16 %v4242, %v4238
      %v4247 = vpack.c.bf16 %v4244, %v4240
      %v4248 = vpack.c.bf16 %v1035, %v1034
      %v4249 = vpack.c.bf16 %v1037, %v1036
      %v4250 = vpack.c.bf16 %v1039, %v1038
      %v4251 = vpack.c.bf16 %v1041, %v1040
      %v4252 = vpack.c.bf16 %v1043, %v1042
      %v4253 = vpack.c.bf16 %v1045, %v1044
      %v4254 = vpack.c.bf16 %v1047, %v1046
      %v4255 = vpack.c.bf16 %v1049, %v1048
      %v4256 = vpack.c.bf16 %v1051, %v1050
      %v4257 = vpack.c.bf16 %v1053, %v1052
      %v4258 = vpack.c.bf16 %v1055, %v1054
      %v4259 = vpack.c.bf16 %v1057, %v1056
      %v4260 = vpack.c.bf16 %v1059, %v1058
      %v4261 = vpack.c.bf16 %v1061, %v1060
      %v4262 = vpack.c.bf16 %v1063, %v1062
      %v4263 = vpack.c.bf16 %v1065, %v1064
      %v4265 = vlaneseq
      %v4266 = vshrl.u32 %v4265, 7
      %v4267 = vsub.s32 0, %v4266
      %v4268 = vrot.slane %v1033, %v4267
      %4270 = vmatprep.subr.bf16.mxu0 0
      %4271 = vmatpush1.bf16.msra.mxu0 %v4248
      %4272 = vmatprep.subr.bf16.mxu0 0
      %4273 = vmatpush1.bf16.msra.mxu0 %v4249
      %4274 = vmatprep.subr.bf16.mxu0 0
      %4275 = vmatpush1.bf16.msra.mxu0 %v4250
      %4276 = vmatprep.subr.bf16.mxu0 0
      %4277 = vmatpush1.bf16.msra.mxu0 %v4251
      %4278 = vmatprep.subr.bf16.mxu0 0
      %4279 = vmatpush1.bf16.msra.mxu0 %v4252
      %4280 = vmatprep.subr.bf16.mxu0 0
      %4281 = vmatpush1.bf16.msra.mxu0 %v4253
      %4282 = vmatprep.subr.bf16.mxu0 0
      %4283 = vmatpush1.bf16.msra.mxu0 %v4254
      %4284 = vmatprep.subr.bf16.mxu0 0
      %4285 = vmatpush1.bf16.msra.mxu0 %v4255
      %4286 = vmatprep.subr.bf16.mxu0 0
      %4287 = vmatpush1.bf16.msra.mxu0 %v4256
      %4288 = vmatprep.subr.bf16.mxu0 0
      %4289 = vmatpush1.bf16.msra.mxu0 %v4257
      %4290 = vmatprep.subr.bf16.mxu0 0
      %4291 = vmatpush1.bf16.msra.mxu0 %v4258
      %4292 = vmatprep.subr.bf16.mxu0 0
      %4293 = vmatpush1.bf16.msra.mxu0 %v4259
      %4294 = vmatprep.subr.bf16.mxu0 0
      %4295 = vmatpush1.bf16.msra.mxu0 %v4260
      %4296 = vmatprep.subr.bf16.mxu0 0
      %4297 = vmatpush1.bf16.msra.mxu0 %v4261
      %4298 = vmatprep.subr.bf16.mxu0 0
      %4299 = vmatpush1.bf16.msra.mxu0 %v4262
      %4300 = vmatprep.subr.bf16.mxu0 0
      %4301 = vmatpush1.bf16.msra.mxu0 %v4263
      %4302 = vmatprep.mubr.bf16.mxu0 %v4247
      %4303 = vmatmul.mubr.bf16.gmra.mrb[0].mxu0 %v4246
      %v4304 = vpop.f32.mrb[0].mxu0
      %v4305 = vadd.f32 %v4268, %v4304
      %v4306 = vpop.f32.mrb[0].mxu0
      %v4307 = vpop.f32.mrb[0].mxu0
      %v4308 = vadd.f32 %v4268, %v4307
      %v4309 = vpop.f32.mrb[0].mxu0
      %4310 = vdwg.mxu0
      %vm4311 = vcmp.gt.f32.partialorder %v4305, 0.0
      %vm4312 = vcmp.gt.f32.partialorder %v4308, 0.0
      %v4313 = vmul.f32 %v4305, 1.442695
      %v4314 = vpow.pop %v4313
      %v4315 = vmul.f32 %v4308, 1.442695
      %v4316 = vpow.pop %v4315
      %v4317 = vsub.f32 %v4314, 1.0
      %v4318 = vsub.f32 %v4316, 1.0
      %v4319 = vsel %vm4311, %v4305, %v4317
      %v4320 = vsel %vm4312, %v4308, %v4318
      %v4323 = vrot.slane %v4319, 6
      %v4324 = vrot.slane %v4320, 6
      %v4325 = vsel %vm1917, %v4323, %v4324
      %v4328 = vsel %vm1917, 0.0, %v4323
      %v4330 = vrot.slane %v4328, 1
      %v4331 = vrot.slane %v4325, 1
      %v4332 = vsel %vm1398, %v4330, %v4331
      %v4333 = vrot.slane %v4324, 1
      %v4334 = vsel %vm1398, %v4331, %v4333
      %4335 = vrot.lane.b32.xlu0 %v4332, 64
      %v4336 = vpop.permute.xlu0 %4335
      %4337 = vrot.lane.b32.xlu0 %v4334, 64
      %v4338 = vpop.permute.xlu0 %4337
      %v4341 = vrot.slane %v4328, 2
      %v4342 = vrot.slane %v4325, 2
      %v4343 = vsel %vm1221, %v4341, %v4342
      %v4344 = vrot.slane %v4324, 2
      %v4345 = vsel %vm1221, %v4342, %v4344
      %v4348 = vsel %vm3308, %v4328, %v4336
      %v4349 = vsel %vm3308, %v4325, %v4338
      %v4350 = vpack.c.bf16 %v4349, %v4348
      %v4351 = vpack.c.bf16 %v4345, %v4343
      %v4352 = vpack.c.bf16 %v1125, %v1124
      %v4353 = vpack.c.bf16 %v1127, %v1126
      %v4354 = vpack.c.bf16 %v1129, %v1128
      %v4355 = vpack.c.bf16 %v1131, %v1130
      %v4356 = vpack.c.bf16 %v1133, %v1132
      %v4357 = vpack.c.bf16 %v1135, %v1134
      %v4358 = vpack.c.bf16 %v1137, %v1136
      %v4359 = vpack.c.bf16 %v1139, %v1138
      %v4360 = vpack.c.bf16 %v1141, %v1140
      %v4361 = vpack.c.bf16 %v1143, %v1142
      %v4362 = vpack.c.bf16 %v1145, %v1144
      %v4363 = vpack.c.bf16 %v1147, %v1146
      %v4365 = vlaneseq
      %v4366 = vshrl.u32 %v4365, 7
      %v4367 = vsub.s32 0, %v4366
      %v4368 = vrot.slane %v1123, %v4367
      %v4371 = vsel %vm3308, %v4351, 0
      %4373 = vmatprep.subr.bf16.mxu0 0
      %4374 = vmatpush1.bf16.msra.mxu0 %v4352
      %4375 = vmatprep.subr.bf16.mxu0 0
      %4376 = vmatpush1.bf16.msra.mxu0 %v4353
      %4377 = vmatprep.subr.bf16.mxu0 0
      %4378 = vmatpush1.bf16.msra.mxu0 %v4354
      %4379 = vmatprep.subr.bf16.mxu0 0
      %4380 = vmatpush1.bf16.msra.mxu0 %v4355
      %4381 = vmatprep.subr.bf16.mxu0 0
      %4382 = vmatpush1.bf16.msra.mxu0 %v4356
      %4383 = vmatprep.subr.bf16.mxu0 0
      %4384 = vmatpush1.bf16.msra.mxu0 %v4357
      %4385 = vmatprep.subr.bf16.mxu0 0
      %4386 = vmatpush1.bf16.msra.mxu0 %v4358
      %4387 = vmatprep.subr.bf16.mxu0 0
      %4388 = vmatpush1.bf16.msra.mxu0 %v4359
      %4389 = vmatprep.subr.bf16.mxu0 0
      %4390 = vmatpush1.bf16.msra.mxu0 %v4360
      %4391 = vmatprep.subr.bf16.mxu0 0
      %4392 = vmatpush1.bf16.msra.mxu0 %v4361
      %4393 = vmatprep.subr.bf16.mxu0 0
      %4394 = vmatpush1.bf16.msra.mxu0 %v4362
      %4395 = vmatprep.subr.bf16.mxu0 0
      %4396 = vmatpush1.bf16.msra.mxu0 %v4363
      %4397 = vmatprep.subr.bf16.mxu0 0
      %4398 = vmatpush1.bf16.msra.mxu0 0
      %4399 = vmatprep.subr.bf16.mxu0 0
      %4400 = vmatpush1.bf16.msra.mxu0 0
      %4401 = vmatprep.subr.bf16.mxu0 0
      %4402 = vmatpush1.bf16.msra.mxu0 0
      %4403 = vmatprep.subr.bf16.mxu0 0
      %4404 = vmatpush1.bf16.msra.mxu0 0
      %4405 = vmatprep.mubr.bf16.mxu0 %v4371
      %4406 = vmatmul.mubr.bf16.gmra.mrb[0].mxu0 %v4350
      %v4407 = vpop.f32.mrb[0].mxu0
      %v4408 = vadd.f32 %v4368, %v4407
      %v4409 = vpop.f32.mrb[0].mxu0
      %v4410 = vpop.f32.mrb[0].mxu0
      %v4411 = vadd.f32 %v4368, %v4410
      %v4412 = vpop.f32.mrb[0].mxu0
      %4413 = vdwg.mxu0
      %v4416 = vrot.slane %v4408, 6
      %v4417 = vrot.slane %v4411, 6
      %v4418 = vsel %vm1917, %v4416, %v4417
      %v4421 = vsel %vm1917, 0.0, %v4416
      %v4423 = vrot.slane %v4421, 1
      %v4424 = vrot.slane %v4418, 1
      %v4425 = vsel %vm1398, %v4423, %v4424
      %4426 = vrot.lane.b32.xlu0 %v4425, 32
      %v4427 = vpop.permute.xlu0 %4426
      %4428 = vrot.lane.b32.xlu0 %v4424, 32
      %v4429 = vpop.permute.xlu0 %4428
      %v4432 = vrot.slane %v4421, 2
      %v4433 = vrot.slane %v4418, 2
      %v4434 = vsel %vm1221, %v4432, %v4433
      %v4435 = vrot.slane %v4417, 2
      %v4436 = vsel %vm1221, %v4433, %v4435
      %4437 = vrot.lane.b32.xlu0 %v4434, 64
      %v4438 = vpop.permute.xlu0 %4437
      %4439 = vrot.lane.b32.xlu0 %v4436, 64
      %v4440 = vpop.permute.xlu0 %4439
      %v4443 = vrot.slane %v4421, 3
      %v4444 = vrot.slane %v4418, 3
      %v4445 = vsel %vm1605, %v4443, %v4444
      %v4446 = vrot.slane %v4417, 3
      %v4447 = vsel %vm1605, %v4444, %v4446
      %4448 = vrot.lane.b32.xlu0 %v4445, 96
      %v4449 = vpop.permute.xlu0 %4448
      %4450 = vrot.lane.b32.xlu0 %v4447, 96
      %v4451 = vpop.permute.xlu0 %4450
      %v4454 = vsel %vm2329, %v4421, %v4427
      %v4455 = vsel %vm2329, %v4418, %v4429
      %v4456 = vsel %vm3308, %v4454, %v4438
      %v4457 = vsel %vm3308, %v4455, %v4440
      %v4458 = vsel %vm3573, %v4456, %v4449
      %v4459 = vsel %vm3573, %v4457, %v4451
      %v4460 = vpack.c.bf16 %v3190, %v3190
      %v4461 = vpack.c.bf16 %v4459, %v4458
      %vm4462 = vcmask 121856
      %v4464 = vsel %vm4462, %v4460, 0
      %v4467 = vand.u32 %v4461, %v3225
      %4469 = vmatprep.subr.bf16.mxu0 0
      %4470 = vmatpush1.bf16.msra.mxu0 %v4467
      %4471 = vmatprep.subr.bf16.mxu0 0
      %4472 = vmatpush1.bf16.msra.mxu0 0
      %4473 = vmatprep.subr.bf16.mxu0 0
      %4474 = vmatpush1.bf16.msra.mxu0 0
      %4475 = vmatprep.subr.bf16.mxu0 0
      %4476 = vmatpush1.bf16.msra.mxu0 0
      %4477 = vmatprep.subr.bf16.mxu0 0
      %4478 = vmatpush1.bf16.msra.mxu0 0
      %4479 = vmatprep.subr.bf16.mxu0 0
      %4480 = vmatpush1.bf16.msra.mxu0 0
      %4481 = vmatprep.subr.bf16.mxu0 0
      %4482 = vmatpush1.bf16.msra.mxu0 0
      %4483 = vmatprep.subr.bf16.mxu0 0
      %4484 = vmatpush1.bf16.msra.mxu0 0
      %4485 = vmatprep.subr.bf16.mxu0 0
      %4486 = vmatpush1.bf16.msra.mxu0 0
      %4487 = vmatprep.subr.bf16.mxu0 0
      %4488 = vmatpush1.bf16.msra.mxu0 0
      %4489 = vmatprep.subr.bf16.mxu0 0
      %4490 = vmatpush1.bf16.msra.mxu0 0
      %4491 = vmatprep.subr.bf16.mxu0 0
      %4492 = vmatpush1.bf16.msra.mxu0 0
      %4493 = vmatprep.subr.bf16.mxu0 0
      %4494 = vmatpush1.bf16.msra.mxu0 0
      %4495 = vmatprep.subr.bf16.mxu0 0
      %4496 = vmatpush1.bf16.msra.mxu0 0
      %4497 = vmatprep.subr.bf16.mxu0 0
      %4498 = vmatpush1.bf16.msra.mxu0 0
      %4499 = vmatprep.subr.bf16.mxu0 0
      %4500 = vmatpush1.bf16.msra.mxu0 0
      %4501 = vmatprep.mubr.bf16.mxu0 0
      %4502 = vmatmul.mubr.bf16.gmra.mrb[0].mxu0 %v4464
      %v4503 = vpop.f32.mrb[0].mxu0
      %v4504 = vadd.f32 0.0, %v4503
      %v4505 = vpop.f32.mrb[0].mxu0
      %v4506 = vpop.f32.mrb[0].mxu0
      %v4507 = vpop.f32.mrb[0].mxu0
      %4508 = vdwg.mxu0
      %v4509 = vpack.c.bf16 %v4504, %v4504
      %v4510 = vpack.c.bf16 %v1150, %v1149
      %v4511 = vpack.c.bf16 %v1152, %v1151
      %v4512 = vpack.c.bf16 %v1154, %v1153
      %v4513 = vpack.c.bf16 %v1156, %v1155
      %v4514 = vpack.c.bf16 %v1158, %v1157
      %v4515 = vpack.c.bf16 %v1160, %v1159
      %v4516 = vpack.c.bf16 %v1162, %v1161
      %v4517 = vpack.c.bf16 %v1164, %v1163
      %v4519 = vlaneseq
      %v4520 = vshrl.u32 %v4519, 7
      %v4521 = vsub.s32 0, %v4520
      %v4522 = vrot.slane %v1148, %v4521
      %4524 = vmatprep.subr.bf16.mxu0 0
      %4525 = vmatpush1.bf16.msra.mxu0 %v4510
      %4526 = vmatprep.subr.bf16.mxu0 0
      %4527 = vmatpush1.bf16.msra.mxu0 %v4511
      %4528 = vmatprep.subr.bf16.mxu0 0
      %4529 = vmatpush1.bf16.msra.mxu0 %v4512
      %4530 = vmatprep.subr.bf16.mxu0 0
      %4531 = vmatpush1.bf16.msra.mxu0 %v4513
      %4532 = vmatprep.subr.bf16.mxu0 0
      %4533 = vmatpush1.bf16.msra.mxu0 %v4514
      %4534 = vmatprep.subr.bf16.mxu0 0
      %4535 = vmatpush1.bf16.msra.mxu0 %v4515
      %4536 = vmatprep.subr.bf16.mxu0 0
      %4537 = vmatpush1.bf16.msra.mxu0 %v4516
      %4538 = vmatprep.subr.bf16.mxu0 0
      %4539 = vmatpush1.bf16.msra.mxu0 %v4517
      %4540 = vmatprep.subr.bf16.mxu0 0
      %4541 = vmatpush1.bf16.msra.mxu0 0
      %4542 = vmatprep.subr.bf16.mxu0 0
      %4543 = vmatpush1.bf16.msra.mxu0 0
      %4544 = vmatprep.subr.bf16.mxu0 0
      %4545 = vmatpush1.bf16.msra.mxu0 0
      %4546 = vmatprep.subr.bf16.mxu0 0
      %4547 = vmatpush1.bf16.msra.mxu0 0
      %4548 = vmatprep.subr.bf16.mxu0 0
      %4549 = vmatpush1.bf16.msra.mxu0 0
      %4550 = vmatprep.subr.bf16.mxu0 0
      %4551 = vmatpush1.bf16.msra.mxu0 0
      %4552 = vmatprep.subr.bf16.mxu0 0
      %4553 = vmatpush1.bf16.msra.mxu0 0
      %4554 = vmatprep.subr.bf16.mxu0 0
      %4555 = vmatpush1.bf16.msra.mxu0 0
      %4556 = vmatprep.mubr.bf16.mxu0 0
      %4557 = vmatmul.mubr.bf16.gmra.mrb[0].mxu0 %v4509
      %v4558 = vpop.f32.mrb[0].mxu0
      %v4559 = vadd.f32 %v4522, %v4558
      %v4560 = vpop.f32.mrb[0].mxu0
      %v4561 = vpop.f32.mrb[0].mxu0
      %v4562 = vpop.f32.mrb[0].mxu0
      %4563 = vdwg.mxu0
      %v4564 = vsel %vm2329, %v4559, 0.0
      %4565 = vadd.xlane.f32.xlu0 %v4564
      %v4566 = vpop.xlane.xlu0 %4565
      %v4567 = vrcp.pop 32.0
      %v4568 = vmul.f32 %v4566, %v4567
      %v4569 = vsub.f32 %v4559, %v4568
      %v4570 = vmul.f32 %v4569, %v4569
      %v4571 = vsel %vm2329, %v4570, 0.0
      %4572 = vadd.xlane.f32.xlu0 %v4571
      %v4573 = vpop.xlane.xlu0 %4572
      %v4574 = vmul.f32 %v4573, %v4567
      %v4575 = vadd.f32 %v4574, 1e-05
      %v4576 = vrsqrt.pop %v4575
      %v4577 = vmul.f32 %v4569, %v4576
      %v4579 = vlaneseq
      %v4580 = vshrl.u32 %v4579, 7
      %v4581 = vsub.s32 0, %v4580
      %v4582 = vrot.slane %v1166, %v4581
      %v4584 = vmul.f32 %v4577, %v4582
      %v4586 = vlaneseq
      %v4587 = vshrl.u32 %v4586, 7
      %v4588 = vsub.s32 0, %v4587
      %v4589 = vrot.slane %v1165, %v4588
      %v4591 = vadd.f32 %v4584, %v4589
      %v4592 = vpack.c.bf16 %v4591, %v4591
      %v4593 = vpack.c.bf16 %v1186, %v1185
      %v4594 = vpack.c.bf16 %v1188, %v1187
      %v4596 = vlaneseq
      %v4597 = vshrl.u32 %v4596, 7
      %v4598 = vsub.s32 0, %v4597
      %v4599 = vrot.slane %v1084, %v4598
      %v4602 = vsel %vm2329, %v4592, 0
      %4604 = vmatprep.subr.bf16.mxu0 0
      %4605 = vmatpush1.bf16.msra.mxu0 %v4593
      %4606 = vmatprep.subr.bf16.mxu0 0
      %4607 = vmatpush1.bf16.msra.mxu0 %v4594
      %4608 = vmatprep.subr.bf16.mxu0 0
      %4609 = vmatpush1.bf16.msra.mxu0 0
      %4610 = vmatprep.subr.bf16.mxu0 0
      %4611 = vmatpush1.bf16.msra.mxu0 0
      %4612 = vmatprep.subr.bf16.mxu0 0
      %4613 = vmatpush1.bf16.msra.mxu0 0
      %4614 = vmatprep.subr.bf16.mxu0 0
      %4615 = vmatpush1.bf16.msra.mxu0 0
      %4616 = vmatprep.subr.bf16.mxu0 0
      %4617 = vmatpush1.bf16.msra.mxu0 0
      %4618 = vmatprep.subr.bf16.mxu0 0
      %4619 = vmatpush1.bf16.msra.mxu0 0
      %4620 = vmatprep.subr.bf16.mxu0 0
      %4621 = vmatpush1.bf16.msra.mxu0 0
      %4622 = vmatprep.subr.bf16.mxu0 0
      %4623 = vmatpush1.bf16.msra.mxu0 0
      %4624 = vmatprep.subr.bf16.mxu0 0
      %4625 = vmatpush1.bf16.msra.mxu0 0
      %4626 = vmatprep.subr.bf16.mxu0 0
      %4627 = vmatpush1.bf16.msra.mxu0 0
      %4628 = vmatprep.subr.bf16.mxu0 0
      %4629 = vmatpush1.bf16.msra.mxu0 0
      %4630 = vmatprep.subr.bf16.mxu0 0
      %4631 = vmatpush1.bf16.msra.mxu0 0
      %4632 = vmatprep.subr.bf16.mxu0 0
      %4633 = vmatpush1.bf16.msra.mxu0 0
      %4634 = vmatprep.subr.bf16.mxu0 0
      %4635 = vmatpush1.bf16.msra.mxu0 0
      %4636 = vmatprep.mubr.bf16.mxu0 0
      %4637 = vmatmul.mubr.bf16.gmra.mrb[0].mxu0 %v4602
      %v4638 = vpop.f32.mrb[0].mxu0
      %v4639 = vadd.f32 %v4599, %v4638
      %v4640 = vpop.f32.mrb[0].mxu0
      %v4641 = vpop.f32.mrb[0].mxu0
      %v4642 = vpop.f32.mrb[0].mxu0
      %4643 = vdwg.mxu0
      %vm4644 = vcmp.le.s32.totalorder %v3165, %v3156
      %v4645 = vpack.c.bf16 %v4639, %v4639
      %4647 = vrot.lane.b32.xlu0 %v4645, 96
      %v4648 = vpop.permute.xlu0 %4647
      %v4650 = vsel %vm2312, %v4645, 0
      %v4653 = vsel %vm2312, %v4648, 0
      %4655 = vmatprep.subr.bf16.mxu0 0
      %4656 = vmatpush1.bf16.xpose.msra.mxu0 %v4653
      %4657 = vmatprep.subr.bf16.mxu0 0
      %4658 = vmatpush1.bf16.xpose.msra.mxu0 0
      %4659 = vmatprep.subr.bf16.mxu0 0
      %4660 = vmatpush1.bf16.xpose.msra.mxu0 0
      %4661 = vmatprep.subr.bf16.mxu0 0
      %4662 = vmatpush1.bf16.xpose.msra.mxu0 0
      %4663 = vmatprep.subr.bf16.mxu0 0
      %4664 = vmatpush1.bf16.xpose.msra.mxu0 0
      %4665 = vmatprep.subr.bf16.mxu0 0
      %4666 = vmatpush1.bf16.xpose.msra.mxu0 0
      %4667 = vmatprep.subr.bf16.mxu0 0
      %4668 = vmatpush1.bf16.xpose.msra.mxu0 0
      %4669 = vmatprep.subr.bf16.mxu0 0
      %4670 = vmatpush1.bf16.xpose.msra.mxu0 0
      %4671 = vmatprep.subr.bf16.mxu0 0
      %4672 = vmatpush1.bf16.xpose.msra.mxu0 0
      %4673 = vmatprep.subr.bf16.mxu0 0
      %4674 = vmatpush1.bf16.xpose.msra.mxu0 0
      %4675 = vmatprep.subr.bf16.mxu0 0
      %4676 = vmatpush1.bf16.xpose.msra.mxu0 0
      %4677 = vmatprep.subr.bf16.mxu0 0
      %4678 = vmatpush1.bf16.xpose.msra.mxu0 0
      %4679 = vmatprep.subr.bf16.mxu0 0
      %4680 = vmatpush1.bf16.xpose.msra.mxu0 0
      %4681 = vmatprep.subr.bf16.mxu0 0
      %4682 = vmatpush1.bf16.xpose.msra.mxu0 0
      %4683 = vmatprep.subr.bf16.mxu0 0
      %4684 = vmatpush1.bf16.xpose.msra.mxu0 0
      %4685 = vmatprep.subr.bf16.mxu0 0
      %4686 = vmatpush1.bf16.xpose.msra.mxu0 0
      %4687 = vmatprep.mubr.bf16.mxu0 0
      %4688 = vmatmul.mubr.bf16.gmra.mrb[0].mxu0 %v4650
      %v4689 = vpop.f32.mrb[0].mxu0
      %v4690 = vadd.f32 0.0, %v4689
      %v4691 = vpop.f32.mrb[0].mxu0
      %v4692 = vpop.f32.mrb[0].mxu0
      %v4693 = vpop.f32.mrb[0].mxu0
      %4694 = vdwg.mxu0
      %v4695 = vmul.f32 %v4690, 0.25
      %v4696 = vsel %vm4644, %v4695, -1e+30
      %v4697 = vsel %vm2580, %v4696, -inf
      %4698 = vmax.xlane.f32.xlu0 %v4697
      %v4699 = vpop.xlane.xlu0 %4698
      %v4700 = vsub.f32 %v4696, %v4699
      %v4701 = vmul.f32 %v4700, 1.442695
      %v4702 = vpow.pop %v4701
      %v4703 = vsel %vm2580, %v4702, 0.0
      %4704 = vadd.xlane.f32.xlu0 %v4703
      %v4705 = vpop.xlane.xlu0 %4704
      %v4706 = vrcp.pop %v4705
      %v4707 = vmul.f32 %v4702, %v4706
      %v4708 = vpack.c.bf16 %v4707, %v4707
      %4709 = vrot.lane.b32.xlu0 %v4645, 64
      %v4710 = vpop.permute.xlu0 %4709
      %v4712 = vsel %vm2580, %v4708, 0
      %v4715 = vsel %vm1709, %v4710, 0
      %4717 = vmatprep.subr.bf16.mxu0 0
      %4718 = vmatpush1.bf16.msra.mxu0 %v4715
      %4719 = vmatprep.subr.bf16.mxu0 0
      %4720 = vmatpush1.bf16.msra.mxu0 0
      %4721 = vmatprep.subr.bf16.mxu0 0
      %4722 = vmatpush1.bf16.msra.mxu0 0
      %4723 = vmatprep.subr.bf16.mxu0 0
      %4724 = vmatpush1.bf16.msra.mxu0 0
      %4725 = vmatprep.subr.bf16.mxu0 0
      %4726 = vmatpush1.bf16.msra.mxu0 0
      %4727 = vmatprep.subr.bf16.mxu0 0
      %4728 = vmatpush1.bf16.msra.mxu0 0
      %4729 = vmatprep.subr.bf16.mxu0 0
      %4730 = vmatpush1.bf16.msra.mxu0 0
      %4731 = vmatprep.subr.bf16.mxu0 0
      %4732 = vmatpush1.bf16.msra.mxu0 0
      %4733 = vmatprep.subr.bf16.mxu0 0
      %4734 = vmatpush1.bf16.msra.mxu0 0
      %4735 = vmatprep.subr.bf16.mxu0 0
      %4736 = vmatpush1.bf16.msra.mxu0 0
      %4737 = vmatprep.subr.bf16.mxu0 0
      %4738 = vmatpush1.bf16.msra.mxu0 0
      %4739 = vmatprep.subr.bf16.mxu0 0
      %4740 = vmatpush1.bf16.msra.mxu0 0
      %4741 = vmatprep.subr.bf16.mxu0 0
      %4742 = vmatpush1.bf16.msra.mxu0 0
      %4743 = vmatprep.subr.bf16.mxu0 0
      %4744 = vmatpush1.bf16.msra.mxu0 0
      %4745 = vmatprep.subr.bf16.mxu0 0
      %4746 = vmatpush1.bf16.msra.mxu0 0
      %4747 = vmatprep.subr.bf16.mxu0 0
      %4748 = vmatpush1.bf16.msra.mxu0 0
      %4749 = vmatprep.mubr.bf16.mxu0 0
      %4750 = vmatmul.mubr.bf16.gmra.mrb[0].mxu0 %v4712
      %v4751 = vpop.f32.mrb[0].mxu0
      %v4752 = vadd.f32 0.0, %v4751
      %v4753 = vpop.f32.mrb[0].mxu0
      %v4754 = vpop.f32.mrb[0].mxu0
      %v4755 = vpop.f32.mrb[0].mxu0
      %4756 = vdwg.mxu0
      %v4757 = vpack.c.bf16 %v4752, %v4752
      %v4758 = vpack.c.bf16 %v1182, %v1181
      %4759 = vrot.lane.b32.xlu0 %v4645, 112
      %v4760 = vpop.permute.xlu0 %4759
      %4761 = vrot.lane.b32.xlu0 %v4645, 80
      %v4762 = vpop.permute.xlu0 %4761
      %v4764 = vsel %vm2312, %v4760, 0
      %v4767 = vsel %vm2312, %v4762, 0
      %4769 = vmatprep.subr.bf16.mxu0 0
      %4770 = vmatpush1.bf16.xpose.msra.mxu0 %v4767
      %4771 = vmatprep.subr.bf16.mxu0 0
      %4772 = vmatpush1.bf16.xpose.msra.mxu0 0
      %4773 = vmatprep.subr.bf16.mxu0 0
      %4774 = vmatpush1.bf16.xpose.msra.mxu0 0
      %4775 = vmatprep.subr.bf16.mxu0 0
      %4776 = vmatpush1.bf16.xpose.msra.mxu0 0
      %4777 = vmatprep.subr.bf16.mxu0 0
      %4778 = vmatpush1.bf16.xpose.msra.mxu0 0
      %4779 = vmatprep.subr.bf16.mxu0 0
      %4780 = vmatpush1.bf16.xpose.msra.mxu0 0
      %4781 = vmatprep.subr.bf16.mxu0 0
      %4782 = vmatpush1.bf16.xpose.msra.mxu0 0
      %4783 = vmatprep.subr.bf16.mxu0 0
      %4784 = vmatpush1.bf16.xpose.msra.mxu0 0
      %4785 = vmatprep.subr.bf16.mxu0 0
      %4786 = vmatpush1.bf16.xpose.msra.mxu0 0
      %4787 = vmatprep.subr.bf16.mxu0 0
      %4788 = vmatpush1.bf16.xpose.msra.mxu0 0
      %4789 = vmatprep.subr.bf16.mxu0 0
      %4790 = vmatpush1.bf16.xpose.msra.mxu0 0
      %4791 = vmatprep.subr.bf16.mxu0 0
      %4792 = vmatpush1.bf16.xpose.msra.mxu0 0
      %4793 = vmatprep.subr.bf16.mxu0 0
      %4794 = vmatpush1.bf16.xpose.msra.mxu0 0
      %4795 = vmatprep.subr.bf16.mxu0 0
      %4796 = vmatpush1.bf16.xpose.msra.mxu0 0
      %4797 = vmatprep.subr.bf16.mxu0 0
      %4798 = vmatpush1.bf16.xpose.msra.mxu0 0
      %4799 = vmatprep.subr.bf16.mxu0 0
      %4800 = vmatpush1.bf16.xpose.msra.mxu0 0
      %4801 = vmatprep.mubr.bf16.mxu0 0
      %4802 = vmatmul.mubr.bf16.gmra.mrb[0].mxu0 %v4764
      %v4803 = vpop.f32.mrb[0].mxu0
      %v4804 = vadd.f32 0.0, %v4803
      %v4805 = vpop.f32.mrb[0].mxu0
      %v4806 = vpop.f32.mrb[0].mxu0
      %v4807 = vpop.f32.mrb[0].mxu0
      %4808 = vdwg.mxu0
      %v4809 = vmul.f32 %v4804, 0.25
      %v4810 = vsel %vm4644, %v4809, -1e+30
      %v4811 = vsel %vm2580, %v4810, -inf
      %4812 = vmax.xlane.f32.xlu0 %v4811
      %v4813 = vpop.xlane.xlu0 %4812
      %v4814 = vsub.f32 %v4810, %v4813
      %v4815 = vmul.f32 %v4814, 1.442695
      %v4816 = vpow.pop %v4815
      %v4817 = vsel %vm2580, %v4816, 0.0
      %4818 = vadd.xlane.f32.xlu0 %v4817
      %v4819 = vpop.xlane.xlu0 %4818
      %v4820 = vrcp.pop %v4819
      %v4821 = vmul.f32 %v4816, %v4820
      %v4822 = vpack.c.bf16 %v4821, %v4821
      %4823 = vrot.lane.b32.xlu0 %v4645, 48
      %v4824 = vpop.permute.xlu0 %4823
      %v4826 = vsel %vm2580, %v4822, 0
      %v4829 = vsel %vm1709, %v4824, 0
      %4831 = vmatprep.subr.bf16.mxu0 0
      %4832 = vmatpush1.bf16.msra.mxu0 %v4829
      %4833 = vmatprep.subr.bf16.mxu0 0
      %4834 = vmatpush1.bf16.msra.mxu0 0
      %4835 = vmatprep.subr.bf16.mxu0 0
      %4836 = vmatpush1.bf16.msra.mxu0 0
      %4837 = vmatprep.subr.bf16.mxu0 0
      %4838 = vmatpush1.bf16.msra.mxu0 0
      %4839 = vmatprep.subr.bf16.mxu0 0
      %4840 = vmatpush1.bf16.msra.mxu0 0
      %4841 = vmatprep.subr.bf16.mxu0 0
      %4842 = vmatpush1.bf16.msra.mxu0 0
      %4843 = vmatprep.subr.bf16.mxu0 0
      %4844 = vmatpush1.bf16.msra.mxu0 0
      %4845 = vmatprep.subr.bf16.mxu0 0
      %4846 = vmatpush1.bf16.msra.mxu0 0
      %4847 = vmatprep.subr.bf16.mxu0 0
      %4848 = vmatpush1.bf16.msra.mxu0 0
      %4849 = vmatprep.subr.bf16.mxu0 0
      %4850 = vmatpush1.bf16.msra.mxu0 0
      %4851 = vmatprep.subr.bf16.mxu0 0
      %4852 = vmatpush1.bf16.msra.mxu0 0
      %4853 = vmatprep.subr.bf16.mxu0 0
      %4854 = vmatpush1.bf16.msra.mxu0 0
      %4855 = vmatprep.subr.bf16.mxu0 0
      %4856 = vmatpush1.bf16.msra.mxu0 0
      %4857 = vmatprep.subr.bf16.mxu0 0
      %4858 = vmatpush1.bf16.msra.mxu0 0
      %4859 = vmatprep.subr.bf16.mxu0 0
      %4860 = vmatpush1.bf16.msra.mxu0 0
      %4861 = vmatprep.subr.bf16.mxu0 0
      %4862 = vmatpush1.bf16.msra.mxu0 0
      %4863 = vmatprep.mubr.bf16.mxu0 0
      %4864 = vmatmul.mubr.bf16.gmra.mrb[0].mxu0 %v4826
      %v4865 = vpop.f32.mrb[0].mxu0
      %v4866 = vadd.f32 0.0, %v4865
      %v4867 = vpop.f32.mrb[0].mxu0
      %v4868 = vpop.f32.mrb[0].mxu0
      %v4869 = vpop.f32.mrb[0].mxu0
      %4870 = vdwg.mxu0
      %v4871 = vpack.c.bf16 %v4866, %v4866
      %v4872 = vpack.c.bf16 %v1184, %v1183
      %v4874 = vsel %vm2312, %v4871, 0
      %4876 = vmatprep.subr.bf16.mxu0 0
      %4877 = vmatpush1.bf16.msra.mxu0 %v4872
      %4878 = vmatprep.subr.bf16.mxu0 0
      %4879 = vmatpush1.bf16.msra.mxu0 0
      %4880 = vmatprep.subr.bf16.mxu0 0
      %4881 = vmatpush1.bf16.msra.mxu0 0
      %4882 = vmatprep.subr.bf16.mxu0 0
      %4883 = vmatpush1.bf16.msra.mxu0 0
      %4884 = vmatprep.subr.bf16.mxu0 0
      %4885 = vmatpush1.bf16.msra.mxu0 0
      %4886 = vmatprep.subr.bf16.mxu0 0
      %4887 = vmatpush1.bf16.msra.mxu0 0
      %4888 = vmatprep.subr.bf16.mxu0 0
      %4889 = vmatpush1.bf16.msra.mxu0 0
      %4890 = vmatprep.subr.bf16.mxu0 0
      %4891 = vmatpush1.bf16.msra.mxu0 0
      %4892 = vmatprep.subr.bf16.mxu0 0
      %4893 = vmatpush1.bf16.msra.mxu0 0
      %4894 = vmatprep.subr.bf16.mxu0 0
      %4895 = vmatpush1.bf16.msra.mxu0 0
      %4896 = vmatprep.subr.bf16.mxu0 0
      %4897 = vmatpush1.bf16.msra.mxu0 0
      %4898 = vmatprep.subr.bf16.mxu0 0
      %4899 = vmatpush1.bf16.msra.mxu0 0
      %4900 = vmatprep.subr.bf16.mxu0 0
      %4901 = vmatpush1.bf16.msra.mxu0 0
      %4902 = vmatprep.subr.bf16.mxu0 0
      %4903 = vmatpush1.bf16.msra.mxu0 0
      %4904 = vmatprep.subr.bf16.mxu0 0
      %4905 = vmatpush1.bf16.msra.mxu0 0
      %4906 = vmatprep.subr.bf16.mxu0 0
      %4907 = vmatpush1.bf16.msra.mxu0 0
      %4908 = vmatprep.mubr.bf16.mxu0 0
      %4909 = vmatmul.mubr.bf16.gmra.mrb[0].mxu0 %v4874
      %v4910 = vpop.f32.mrb[0].mxu0
      %v4911 = vadd.f32 0.0, %v4910
      %v4912 = vpop.f32.mrb[0].mxu0
      %v4913 = vpop.f32.mrb[0].mxu0
      %v4914 = vpop.f32.mrb[0].mxu0
      %4915 = vdwg.mxu0
      %v4917 = vsel %vm2312, %v4757, 0
      %4919 = vmatprep.subr.bf16.mxu0 0
      %4920 = vmatpush1.bf16.msra.mxu0 %v4758
      %4921 = vmatprep.subr.bf16.mxu0 0
      %4922 = vmatpush1.bf16.msra.mxu0 0
      %4923 = vmatprep.subr.bf16.mxu0 0
      %4924 = vmatpush1.bf16.msra.mxu0 0
      %4925 = vmatprep.subr.bf16.mxu0 0
      %4926 = vmatpush1.bf16.msra.mxu0 0
      %4927 = vmatprep.subr.bf16.mxu0 0
      %4928 = vmatpush1.bf16.msra.mxu0 0
      %4929 = vmatprep.subr.bf16.mxu0 0
      %4930 = vmatpush1.bf16.msra.mxu0 0
      %4931 = vmatprep.subr.bf16.mxu0 0
      %4932 = vmatpush1.bf16.msra.mxu0 0
      %4933 = vmatprep.subr.bf16.mxu0 0
      %4934 = vmatpush1.bf16.msra.mxu0 0
      %4935 = vmatprep.subr.bf16.mxu0 0
      %4936 = vmatpush1.bf16.msra.mxu0 0
      %4937 = vmatprep.subr.bf16.mxu0 0
      %4938 = vmatpush1.bf16.msra.mxu0 0
      %4939 = vmatprep.subr.bf16.mxu0 0
      %4940 = vmatpush1.bf16.msra.mxu0 0
      %4941 = vmatprep.subr.bf16.mxu0 0
      %4942 = vmatpush1.bf16.msra.mxu0 0
      %4943 = vmatprep.subr.bf16.mxu0 0
      %4944 = vmatpush1.bf16.msra.mxu0 0
      %4945 = vmatprep.subr.bf16.mxu0 0
      %4946 = vmatpush1.bf16.msra.mxu0 0
      %4947 = vmatprep.subr.bf16.mxu0 0
      %4948 = vmatpush1.bf16.msra.mxu0 0
      %4949 = vmatprep.subr.bf16.mxu0 0
      %4950 = vmatpush1.bf16.msra.mxu0 0
      %4951 = vmatprep.mubr.bf16.mxu0 0
      %4952 = vmatmul.mubr.bf16.gmra.mrb[0].mxu0 %v4917
      %v4953 = vpop.f32.mrb[0].mxu0
      %v4954 = vadd.f32 %v4911, %v4953
      %v4955 = vpop.f32.mrb[0].mxu0
      %v4956 = vpop.f32.mrb[0].mxu0
      %v4957 = vpop.f32.mrb[0].mxu0
      %4958 = vdwg.mxu0
      %v4959 = vadd.f32 %v4559, %v4954
      %v4961 = vlaneseq
      %v4962 = vshrl.u32 %v4961, 7
      %v4963 = vsub.s32 0, %v4962
      %v4964 = vrot.slane %v1083, %v4963
      %v4966 = vadd.f32 %v4959, %v4964
      %v4967 = vsel %vm2329, %v4966, 0.0
      %4968 = vadd.xlane.f32.xlu0 %v4967
      %v4969 = vpop.xlane.xlu0 %4968
      %v4970 = vmul.f32 %v4969, %v4567
      %v4971 = vsub.f32 %v4966, %v4970
      %v4972 = vmul.f32 %v4971, %v4971
      %v4973 = vsel %vm2329, %v4972, 0.0
      %4974 = vadd.xlane.f32.xlu0 %v4973
      %v4975 = vpop.xlane.xlu0 %4974
      %v4976 = vmul.f32 %v4975, %v4567
      %v4977 = vadd.f32 %v4976, 1e-05
      %v4978 = vrsqrt.pop %v4977
      %v4979 = vmul.f32 %v4971, %v4978
      %v4981 = vlaneseq
      %v4982 = vshrl.u32 %v4981, 7
      %v4983 = vsub.s32 0, %v4982
      %v4984 = vrot.slane %v1168, %v4983
      %v4986 = vmul.f32 %v4979, %v4984
      %v4988 = vlaneseq
      %v4989 = vshrl.u32 %v4988, 7
      %v4990 = vsub.s32 0, %v4989
      %v4991 = vrot.slane %v1167, %v4990
      %v4993 = vadd.f32 %v4986, %v4991
      %v4994 = vpack.c.bf16 %v4993, %v4993
      %v4995 = vpack.c.bf16 %v1170, %v1169
      %v4996 = vpack.c.bf16 %v1172, %v1171
      %v4998 = vlaneseq
      %v4999 = vshrl.u32 %v4998, 7
      %v5000 = vsub.s32 0, %v4999
      %v5001 = vrot.slane %v1032, %v5000
      %v5004 = vsel %vm2329, %v4994, 0
      %5006 = vmatprep.subr.bf16.mxu0 0
      %5007 = vmatpush1.bf16.msra.mxu0 %v4995
      %5008 = vmatprep.subr.bf16.mxu0 0
      %5009 = vmatpush1.bf16.msra.mxu0 %v4996
      %5010 = vmatprep.subr.bf16.mxu0 0
      %5011 = vmatpush1.bf16.msra.mxu0 0
      %5012 = vmatprep.subr.bf16.mxu0 0
      %5013 = vmatpush1.bf16.msra.mxu0 0
      %5014 = vmatprep.subr.bf16.mxu0 0
      %5015 = vmatpush1.bf16.msra.mxu0 0
      %5016 = vmatprep.subr.bf16.mxu0 0
      %5017 = vmatpush1.bf16.msra.mxu0 0
      %5018 = vmatprep.subr.bf16.mxu0 0
      %5019 = vmatpush1.bf16.msra.mxu0 0
      %5020 = vmatprep.subr.bf16.mxu0 0
      %5021 = vmatpush1.bf16.msra.mxu0 0
      %5022 = vmatprep.subr.bf16.mxu0 0
      %5023 = vmatpush1.bf16.msra.mxu0 0
      %5024 = vmatprep.subr.bf16.mxu0 0
      %5025 = vmatpush1.bf16.msra.mxu0 0
      %5026 = vmatprep.subr.bf16.mxu0 0
      %5027 = vmatpush1.bf16.msra.mxu0 0
      %5028 = vmatprep.subr.bf16.mxu0 0
      %5029 = vmatpush1.bf16.msra.mxu0 0
      %5030 = vmatprep.subr.bf16.mxu0 0
      %5031 = vmatpush1.bf16.msra.mxu0 0
      %5032 = vmatprep.subr.bf16.mxu0 0
      %5033 = vmatpush1.bf16.msra.mxu0 0
      %5034 = vmatprep.subr.bf16.mxu0 0
      %5035 = vmatpush1.bf16.msra.mxu0 0
      %5036 = vmatprep.subr.bf16.mxu0 0
      %5037 = vmatpush1.bf16.msra.mxu0 0
      %5038 = vmatprep.mubr.bf16.mxu0 0
      %5039 = vmatmul.mubr.bf16.gmra.mrb[0].mxu0 %v5004
      %v5040 = vpop.f32.mrb[0].mxu0
      %v5041 = vadd.f32 %v5001, %v5040
      %v5042 = vpop.f32.mrb[0].mxu0
      %v5043 = vpop.f32.mrb[0].mxu0
      %v5044 = vpop.f32.mrb[0].mxu0
      %5045 = vdwg.mxu0
      %v5046 = vmul.f32 %v5041, %v5041
      %v5047 = vmul.f32 %v5041, %v5046
      %v5048 = vmul.f32 %v5047, 0.044715
      %v5049 = vadd.f32 %v5041, %v5048
      %v5050 = vmul.f32 %v5049, 0.7978846
      %v5051 = vtanh.pop %v5050
      %v5052 = vadd.f32 %v5051, 1.0
      %v5053 = vmul.f32 %v5052, 0.5
      %v5054 = vmul.f32 %v5041, %v5053
      %v5055 = vpack.c.bf16 %v5054, %v5054
      %v5056 = vpack.c.bf16 %v1174, %v1173
      %v5057 = vpack.c.bf16 %v1176, %v1175
      %v5058 = vpack.c.bf16 %v1178, %v1177
      %v5059 = vpack.c.bf16 %v1180, %v1179
      %v5061 = vlaneseq
      %v5062 = vshrl.u32 %v5061, 7
      %v5063 = vsub.s32 0, %v5062
      %v5064 = vrot.slane %v1082, %v5063
      %v5067 = vsel %vm3308, %v5055, 0
      %5069 = vmatprep.subr.bf16.mxu0 0
      %5070 = vmatpush1.bf16.msra.mxu0 %v5056
      %5071 = vmatprep.subr.bf16.mxu0 0
      %5072 = vmatpush1.bf16.msra.mxu0 %v5057
      %5073 = vmatprep.subr.bf16.mxu0 0
      %5074 = vmatpush1.bf16.msra.mxu0 %v5058
      %5075 = vmatprep.subr.bf16.mxu0 0
      %5076 = vmatpush1.bf16.msra.mxu0 %v5059
      %5077 = vmatprep.subr.bf16.mxu0 0
      %5078 = vmatpush1.bf16.msra.mxu0 0
      %5079 = vmatprep.subr.bf16.mxu0 0
      %5080 = vmatpush1.bf16.msra.mxu0 0
      %5081 = vmatprep.subr.bf16.mxu0 0
      %5082 = vmatpush1.bf16.msra.mxu0 0
      %5083 = vmatprep.subr.bf16.mxu0 0
      %5084 = vmatpush1.bf16.msra.mxu0 0
      %5085 = vmatprep.subr.bf16.mxu0 0
      %5086 = vmatpush1.bf16.msra.mxu0 0
      %5087 = vmatprep.subr.bf16.mxu0 0
      %5088 = vmatpush1.bf16.msra.mxu0 0
      %5089 = vmatprep.subr.bf16.mxu0 0
      %5090 = vmatpush1.bf16.msra.mxu0 0
      %5091 = vmatprep.subr.bf16.mxu0 0
      %5092 = vmatpush1.bf16.msra.mxu0 0
      %5093 = vmatprep.subr.bf16.mxu0 0
      %5094 = vmatpush1.bf16.msra.mxu0 0
      %5095 = vmatprep.subr.bf16.mxu0 0
      %5096 = vmatpush1.bf16.msra.mxu0 0
      %5097 = vmatprep.subr.bf16.mxu0 0
      %5098 = vmatpush1.bf16.msra.mxu0 0
      %5099 = vmatprep.subr.bf16.mxu0 0
      %5100 = vmatpush1.bf16.msra.mxu0 0
      %5101 = vmatprep.mubr.bf16.mxu0 0
      %5102 = vmatmul.mubr.bf16.gmra.mrb[0].mxu0 %v5067
      %v5103 = vpop.f32.mrb[0].mxu0
      %v5104 = vadd.f32 %v5064, %v5103
      %v5105 = vpop.f32.mrb[0].mxu0
      %v5106 = vpop.f32.mrb[0].mxu0
      %v5107 = vpop.f32.mrb[0].mxu0
      %5108 = vdwg.mxu0
      %v5109 = vadd.f32 %v4966, %v5104
      %v5110 = vcvt.s32.f32 %v3165
      %v5112 = vsel %vm2329, %v5109, 0
      %v5115 = vsel %vm2329, %v1089, 0
      %v5118 = vsel %vm2329, %v1090, 0
      %v5121 = vsel %vm2329, %v1091, 0
      %v5124 = vsel %vm2329, %v1092, 0
      %v5127 = vsel %vm2329, %v1093, 0
      %v5130 = vsel %vm2329, %v1094, 0
      %v5133 = vsel %vm2329, %v1095, 0
      %v5136 = vsel %vm2329, %v1096, 0
      %5138 = vmatprep.subr.mxu0 0.0
      %5139 = vmatpush1.xpose.msra.mxu0 %v5115
      %5140 = vmatprep.subr.mxu0 0.0
      %5141 = vmatpush1.xpose.msra.mxu0 %v5118
      %5142 = vmatprep.subr.mxu0 0.0
      %5143 = vmatpush1.xpose.msra.mxu0 %v5121
      %5144 = vmatprep.subr.mxu0 0.0
      %5145 = vmatpush1.xpose.msra.mxu0 %v5124
      %5146 = vmatprep.subr.mxu0 0.0
      %5147 = vmatpush1.xpose.msra.mxu0 %v5127
      %5148 = vmatprep.subr.mxu0 0.0
      %5149 = vmatpush1.xpose.msra.mxu0 %v5130
      %5150 = vmatprep.subr.mxu0 0.0
      %5151 = vmatpush1.xpose.msra.mxu0 %v5133
      %5152 = vmatprep.subr.mxu0 0.0
      %5153 = vmatpush1.xpose.msra.mxu0 %v5136
      %5154 = vmatprep.subr.mxu0 0.0
      %5155 = vmatpush1.xpose.msra.mxu0 0.0
      %5156 = vmatprep.subr.mxu0 0.0
      %5157 = vmatpush1.xpose.msra.mxu0 0.0
      %5158 = vmatprep.subr.mxu0 0.0
      %5159 = vmatpush1.xpose.msra.mxu0 0.0
      %5160 = vmatprep.subr.mxu0 0.0
      %5161 = vmatpush1.xpose.msra.mxu0 0.0
      %5162 = vmatprep.subr.mxu0 0.0
      %5163 = vmatpush1.xpose.msra.mxu0 0.0
      %5164 = vmatprep.subr.mxu0 0.0
      %5165 = vmatpush1.xpose.msra.mxu0 0.0
      %5166 = vmatprep.subr.mxu0 0.0
      %5167 = vmatpush1.xpose.msra.mxu0 0.0
      %5168 = vmatprep.subr.mxu0 0.0
      %5169 = vmatpush1.xpose.msra.mxu0 0.0
      %5170 = vmatprep.subr.mxu0 0.0
      %5171 = vmatpush1.xpose.msra.mxu0 0.0
      %5172 = vmatprep.subr.mxu0 0.0
      %5173 = vmatpush1.xpose.msra.mxu0 0.0
      %5174 = vmatprep.subr.mxu0 0.0
      %5175 = vmatpush1.xpose.msra.mxu0 0.0
      %5176 = vmatprep.subr.mxu0 0.0
      %5177 = vmatpush1.xpose.msra.mxu0 0.0
      %5178 = vmatprep.subr.mxu0 0.0
      %5179 = vmatpush1.xpose.msra.mxu0 0.0
      %5180 = vmatprep.subr.mxu0 0.0
      %5181 = vmatpush1.xpose.msra.mxu0 0.0
      %5182 = vmatprep.subr.mxu0 0.0
      %5183 = vmatpush1.xpose.msra.mxu0 0.0
      %5184 = vmatprep.subr.mxu0 0.0
      %5185 = vmatpush1.xpose.msra.mxu0 0.0
      %5186 = vmatprep.subr.mxu0 0.0
      %5187 = vmatpush1.xpose.msra.mxu0 0.0
      %5188 = vmatprep.subr.mxu0 0.0
      %5189 = vmatpush1.xpose.msra.mxu0 0.0
      %5190 = vmatprep.subr.mxu0 0.0
      %5191 = vmatpush1.xpose.msra.mxu0 0.0
      %5192 = vmatprep.subr.mxu0 0.0
      %5193 = vmatpush1.xpose.msra.mxu0 0.0
      %5194 = vmatprep.subr.mxu0 0.0
      %5195 = vmatpush1.xpose.msra.mxu0 0.0
      %5196 = vmatprep.subr.mxu0 0.0
      %5197 = vmatpush1.xpose.msra.mxu0 0.0
      %5198 = vmatprep.subr.mxu0 0.0
      %5199 = vmatpush1.xpose.msra.mxu0 0.0
      %5200 = vmatprep.subr.mxu0 0.0
      %5201 = vmatpush1.xpose.msra.mxu0 0.0
      %5202 = vmatprep.mubr.f32.mxu0 0.0
      %5203 = vmatmul.mubr.f32.gmra.mrb[0].mxu0 %v5112
      %v5204 = vpop.f32.mrb[0].mxu0
      %v5205 = vadd.f32 0.0, %v5204
      %v5206 = vpop.f32.mrb[0].mxu0
      %5207 = vdwg.mxu0
      %v5208 = vmul.f32 %v5205, 2.0
      %v5210 = vlaneseq
      %v5211 = vshrl.u32 %v5210, 7
      %v5212 = vsub.s32 0, %v5211
      %v5213 = vrot.slane %v1085, %v5212
      %v5215 = vsub.f32 %v5213, %v5208
      %v5216 = vsel %vm3308, %v5215, inf
      %5217 = vmin.xlane.f32.xlu0 %v5216
      %v5218 = vpop.xlane.xlu0 %5217
      %vm5219 = vcmp.le.f32.partialorder %v5215, %v5218
      %v5220 = vsel %vm5219, %v5110, 64.0
      %v5221 = vsel %vm3308, %v5220, inf
      %5222 = vmin.xlane.f32.xlu0 %v5221
      %v5223 = vpop.xlane.xlu0 %5222
      %vm5224 = vcmp.eq.f32.partialorder %v5110, %v5223
      %v5225 = vsel %vm5224, 1, 0
      %v5226 = vcvt.s32.f32 %v5225
      %v5228 = vsel %vm3308, %v5226, 0
      %5230 = vmatprep.subr.mxu0 0.0
      %5231 = vmatpush1.msra.mxu0 %v1089
      %5232 = vmatprep.subr.mxu0 0.0
      %5233 = vmatpush1.msra.mxu0 %v1090
      %5234 = vmatprep.subr.mxu0 0.0
      %5235 = vmatpush1.msra.mxu0 %v1091
      %5236 = vmatprep.subr.mxu0 0.0
      %5237 = vmatpush1.msra.mxu0 %v1092
      %5238 = vmatprep.subr.mxu0 0.0
      %5239 = vmatpush1.msra.mxu0 %v1093
      %5240 = vmatprep.subr.mxu0 0.0
      %5241 = vmatpush1.msra.mxu0 %v1094
      %5242 = vmatprep.subr.mxu0 0.0
      %5243 = vmatpush1.msra.mxu0 %v1095
      %5244 = vmatprep.subr.mxu0 0.0
      %5245 = vmatpush1.msra.mxu0 %v1096
      %5246 = vmatprep.subr.mxu0 0.0
      %5247 = vmatpush1.msra.mxu0 0.0
      %5248 = vmatprep.subr.mxu0 0.0
      %5249 = vmatpush1.msra.mxu0 0.0
      %5250 = vmatprep.subr.mxu0 0.0
      %5251 = vmatpush1.msra.mxu0 0.0
      %5252 = vmatprep.subr.mxu0 0.0
      %5253 = vmatpush1.msra.mxu0 0.0
      %5254 = vmatprep.subr.mxu0 0.0
      %5255 = vmatpush1.msra.mxu0 0.0
      %5256 = vmatprep.subr.mxu0 0.0
      %5257 = vmatpush1.msra.mxu0 0.0
      %5258 = vmatprep.subr.mxu0 0.0
      %5259 = vmatpush1.msra.mxu0 0.0
      %5260 = vmatprep.subr.mxu0 0.0
      %5261 = vmatpush1.msra.mxu0 0.0
      %5262 = vmatprep.subr.mxu0 0.0
      %5263 = vmatpush1.msra.mxu0 0.0
      %5264 = vmatprep.subr.mxu0 0.0
      %5265 = vmatpush1.msra.mxu0 0.0
      %5266 = vmatprep.subr.mxu0 0.0
      %5267 = vmatpush1.msra.mxu0 0.0
      %5268 = vmatprep.subr.mxu0 0.0
      %5269 = vmatpush1.msra.mxu0 0.0
      %5270 = vmatprep.subr.mxu0 0.0
      %5271 = vmatpush1.msra.mxu0 0.0
      %5272 = vmatprep.subr.mxu0 0.0
      %5273 = vmatpush1.msra.mxu0 0.0
      %5274 = vmatprep.subr.mxu0 0.0
      %5275 = vmatpush1.msra.mxu0 0.0
      %5276 = vmatprep.subr.mxu0 0.0
      %5277 = vmatpush1.msra.mxu0 0.0
      %5278 = vmatprep.subr.mxu0 0.0
      %5279 = vmatpush1.msra.mxu0 0.0
      %5280 = vmatprep.subr.mxu0 0.0
      %5281 = vmatpush1.msra.mxu0 0.0
      %5282 = vmatprep.subr.mxu0 0.0
      %5283 = vmatpush1.msra.mxu0 0.0
      %5284 = vmatprep.subr.mxu0 0.0
      %5285 = vmatpush1.msra.mxu0 0.0
      %5286 = vmatprep.subr.mxu0 0.0
      %5287 = vmatpush1.msra.mxu0 0.0
      %5288 = vmatprep.subr.mxu0 0.0
      %5289 = vmatpush1.msra.mxu0 0.0
      %5290 = vmatprep.subr.mxu0 0.0
      %5291 = vmatpush1.msra.mxu0 0.0
      %5292 = vmatprep.subr.mxu0 0.0
      %5293 = vmatpush1.msra.mxu0 0.0
      %5294 = vmatprep.mubr.f32.mxu0 0.0
      %5295 = vmatmul.mubr.f32.gmra.mrb[0].mxu0 %v5228
      %v5296 = vpop.f32.mrb[0].mxu0
      %v5297 = vadd.f32 0.0, %v5296
      %v5298 = vpop.f32.mrb[0].mxu0
      %5299 = vdwg.mxu0
      %v5300 = vsub.f32 %v5109, %v5297
      %vm5301 = vcmp.eq.s32.totalorder %v3165, 0
      %v5302 = vsel %vm5301, %v5223, 0.0
      %v5304 = vsel %vm2329, %v5300, 0
      %v5307 = vsel %vm2329, %v1097, 0
      %v5310 = vsel %vm2329, %v1098, 0
      %v5313 = vsel %vm2329, %v1099, 0
      %v5316 = vsel %vm2329, %v1100, 0
      %v5319 = vsel %vm2329, %v1101, 0
      %v5322 = vsel %vm2329, %v1102, 0
      %v5325 = vsel %vm2329, %v1103, 0
      %v5328 = vsel %vm2329, %v1104, 0
      %5330 = vmatprep.subr.mxu0 0.0
      %5331 = vmatpush1.xpose.msra.mxu0 %v5307
      %5332 = vmatprep.subr.mxu0 0.0
      %5333 = vmatpush1.xpose.msra.mxu0 %v5310
      %5334 = vmatprep.subr.mxu0 0.0
      %5335 = vmatpush1.xpose.msra.mxu0 %v5313
      %5336 = vmatprep.subr.mxu0 0.0
      %5337 = vmatpush1.xpose.msra.mxu0 %v5316
      %5338 = vmatprep.subr.mxu0 0.0
      %5339 = vmatpush1.xpose.msra.mxu0 %v5319
      %5340 = vmatprep.subr.mxu0 0.0
      %5341 = vmatpush1.xpose.msra.mxu0 %v5322
      %5342 = vmatprep.subr.mxu0 0.0
      %5343 = vmatpush1.xpose.msra.mxu0 %v5325
      %5344 = vmatprep.subr.mxu0 0.0
      %5345 = vmatpush1.xpose.msra.mxu0 %v5328
      %5346 = vmatprep.subr.mxu0 0.0
      %5347 = vmatpush1.xpose.msra.mxu0 0.0
      %5348 = vmatprep.subr.mxu0 0.0
      %5349 = vmatpush1.xpose.msra.mxu0 0.0
      %5350 = vmatprep.subr.mxu0 0.0
      %5351 = vmatpush1.xpose.msra.mxu0 0.0
      %5352 = vmatprep.subr.mxu0 0.0
      %5353 = vmatpush1.xpose.msra.mxu0 0.0
      %5354 = vmatprep.subr.mxu0 0.0
      %5355 = vmatpush1.xpose.msra.mxu0 0.0
      %5356 = vmatprep.subr.mxu0 0.0
      %5357 = vmatpush1.xpose.msra.mxu0 0.0
      %5358 = vmatprep.subr.mxu0 0.0
      %5359 = vmatpush1.xpose.msra.mxu0 0.0
      %5360 = vmatprep.subr.mxu0 0.0
      %5361 = vmatpush1.xpose.msra.mxu0 0.0
      %5362 = vmatprep.subr.mxu0 0.0
      %5363 = vmatpush1.xpose.msra.mxu0 0.0
      %5364 = vmatprep.subr.mxu0 0.0
      %5365 = vmatpush1.xpose.msra.mxu0 0.0
      %5366 = vmatprep.subr.mxu0 0.0
      %5367 = vmatpush1.xpose.msra.mxu0 0.0
      %5368 = vmatprep.subr.mxu0 0.0
      %5369 = vmatpush1.xpose.msra.mxu0 0.0
      %5370 = vmatprep.subr.mxu0 0.0
      %5371 = vmatpush1.xpose.msra.mxu0 0.0
      %5372 = vmatprep.subr.mxu0 0.0
      %5373 = vmatpush1.xpose.msra.mxu0 0.0
      %5374 = vmatprep.subr.mxu0 0.0
      %5375 = vmatpush1.xpose.msra.mxu0 0.0
      %5376 = vmatprep.subr.mxu0 0.0
      %5377 = vmatpush1.xpose.msra.mxu0 0.0
      %5378 = vmatprep.subr.mxu0 0.0
      %5379 = vmatpush1.xpose.msra.mxu0 0.0
      %5380 = vmatprep.subr.mxu0 0.0
      %5381 = vmatpush1.xpose.msra.mxu0 0.0
      %5382 = vmatprep.subr.mxu0 0.0
      %5383 = vmatpush1.xpose.msra.mxu0 0.0
      %5384 = vmatprep.subr.mxu0 0.0
      %5385 = vmatpush1.xpose.msra.mxu0 0.0
      %5386 = vmatprep.subr.mxu0 0.0
      %5387 = vmatpush1.xpose.msra.mxu0 0.0
      %5388 = vmatprep.subr.mxu0 0.0
      %5389 = vmatpush1.xpose.msra.mxu0 0.0
      %5390 = vmatprep.subr.mxu0 0.0
      %5391 = vmatpush1.xpose.msra.mxu0 0.0
      %5392 = vmatprep.subr.mxu0 0.0
      %5393 = vmatpush1.xpose.msra.mxu0 0.0
      %5394 = vmatprep.mubr.f32.mxu0 0.0
      %5395 = vmatmul.mubr.f32.gmra.mrb[0].mxu0 %v5304
      %v5396 = vpop.f32.mrb[0].mxu0
      %v5397 = vadd.f32 0.0, %v5396
      %v5398 = vpop.f32.mrb[0].mxu0
      %5399 = vdwg.mxu0
      %v5400 = vmul.f32 %v5397, 2.0
      %v5402 = vlaneseq
      %v5403 = vshrl.u32 %v5402, 7
      %v5404 = vsub.s32 0, %v5403
      %v5405 = vrot.slane %v1086, %v5404
      %v5407 = vsub.f32 %v5405, %v5400
      %v5408 = vsel %vm3308, %v5407, inf
      %5409 = vmin.xlane.f32.xlu0 %v5408
      %v5410 = vpop.xlane.xlu0 %5409
      %vm5411 = vcmp.le.f32.partialorder %v5407, %v5410
      %v5412 = vsel %vm5411, %v5110, 64.0
      %v5413 = vsel %vm3308, %v5412, inf
      %5414 = vmin.xlane.f32.xlu0 %v5413
      %v5415 = vpop.xlane.xlu0 %5414
      %vm5416 = vcmp.eq.f32.partialorder %v5110, %v5415
      %v5417 = vsel %vm5416, 1, 0
      %v5418 = vcvt.s32.f32 %v5417
      %v5420 = vsel %vm3308, %v5418, 0
      %5422 = vmatprep.subr.mxu0 0.0
      %5423 = vmatpush1.msra.mxu0 %v1097
      %5424 = vmatprep.subr.mxu0 0.0
      %5425 = vmatpush1.msra.mxu0 %v1098
      %5426 = vmatprep.subr.mxu0 0.0
      %5427 = vmatpush1.msra.mxu0 %v1099
      %5428 = vmatprep.subr.mxu0 0.0
      %5429 = vmatpush1.msra.mxu0 %v1100
      %5430 = vmatprep.subr.mxu0 0.0
      %5431 = vmatpush1.msra.mxu0 %v1101
      %5432 = vmatprep.subr.mxu0 0.0
      %5433 = vmatpush1.msra.mxu0 %v1102
      %5434 = vmatprep.subr.mxu0 0.0
      %5435 = vmatpush1.msra.mxu0 %v1103
      %5436 = vmatprep.subr.mxu0 0.0
      %5437 = vmatpush1.msra.mxu0 %v1104
      %5438 = vmatprep.subr.mxu0 0.0
      %5439 = vmatpush1.msra.mxu0 0.0
      %5440 = vmatprep.subr.mxu0 0.0
      %5441 = vmatpush1.msra.mxu0 0.0
      %5442 = vmatprep.subr.mxu0 0.0
      %5443 = vmatpush1.msra.mxu0 0.0
      %5444 = vmatprep.subr.mxu0 0.0
      %5445 = vmatpush1.msra.mxu0 0.0
      %5446 = vmatprep.subr.mxu0 0.0
      %5447 = vmatpush1.msra.mxu0 0.0
      %5448 = vmatprep.subr.mxu0 0.0
      %5449 = vmatpush1.msra.mxu0 0.0
      %5450 = vmatprep.subr.mxu0 0.0
      %5451 = vmatpush1.msra.mxu0 0.0
      %5452 = vmatprep.subr.mxu0 0.0
      %5453 = vmatpush1.msra.mxu0 0.0
      %5454 = vmatprep.subr.mxu0 0.0
      %5455 = vmatpush1.msra.mxu0 0.0
      %5456 = vmatprep.subr.mxu0 0.0
      %5457 = vmatpush1.msra.mxu0 0.0
      %5458 = vmatprep.subr.mxu0 0.0
      %5459 = vmatpush1.msra.mxu0 0.0
      %5460 = vmatprep.subr.mxu0 0.0
      %5461 = vmatpush1.msra.mxu0 0.0
      %5462 = vmatprep.subr.mxu0 0.0
      %5463 = vmatpush1.msra.mxu0 0.0
      %5464 = vmatprep.subr.mxu0 0.0
      %5465 = vmatpush1.msra.mxu0 0.0
      %5466 = vmatprep.subr.mxu0 0.0
      %5467 = vmatpush1.msra.mxu0 0.0
      %5468 = vmatprep.subr.mxu0 0.0
      %5469 = vmatpush1.msra.mxu0 0.0
      %5470 = vmatprep.subr.mxu0 0.0
      %5471 = vmatpush1.msra.mxu0 0.0
      %5472 = vmatprep.subr.mxu0 0.0
      %5473 = vmatpush1.msra.mxu0 0.0
      %5474 = vmatprep.subr.mxu0 0.0
      %5475 = vmatpush1.msra.mxu0 0.0
      %5476 = vmatprep.subr.mxu0 0.0
      %5477 = vmatpush1.msra.mxu0 0.0
      %5478 = vmatprep.subr.mxu0 0.0
      %5479 = vmatpush1.msra.mxu0 0.0
      %5480 = vmatprep.subr.mxu0 0.0
      %5481 = vmatpush1.msra.mxu0 0.0
      %5482 = vmatprep.subr.mxu0 0.0
      %5483 = vmatpush1.msra.mxu0 0.0
      %5484 = vmatprep.subr.mxu0 0.0
      %5485 = vmatpush1.msra.mxu0 0.0
      %5486 = vmatprep.mubr.f32.mxu0 0.0
      %5487 = vmatmul.mubr.f32.gmra.mrb[0].mxu0 %v5420
      %v5488 = vpop.f32.mrb[0].mxu0
      %v5489 = vadd.f32 0.0, %v5488
      %v5490 = vpop.f32.mrb[0].mxu0
      %5491 = vdwg.mxu0
      %v5492 = vsub.f32 %v5300, %v5489
      %vm5493 = vcmp.eq.s32.totalorder %v3165, 1
      %v5494 = vsel %vm5493, %v5415, %v5302
      %v5496 = vsel %vm2329, %v5492, 0
      %v5499 = vsel %vm2329, %v1105, 0
      %v5502 = vsel %vm2329, %v1106, 0
      %v5505 = vsel %vm2329, %v1107, 0
      %v5508 = vsel %vm2329, %v1108, 0
      %v5511 = vsel %vm2329, %v1109, 0
      %v5514 = vsel %vm2329, %v1110, 0
      %v5517 = vsel %vm2329, %v1111, 0
      %v5520 = vsel %vm2329, %v1112, 0
      %5522 = vmatprep.subr.mxu0 0.0
      %5523 = vmatpush1.xpose.msra.mxu0 %v5499
      %5524 = vmatprep.subr.mxu0 0.0
      %5525 = vmatpush1.xpose.msra.mxu0 %v5502
      %5526 = vmatprep.subr.mxu0 0.0
      %5527 = vmatpush1.xpose.msra.mxu0 %v5505
      %5528 = vmatprep.subr.mxu0 0.0
      %5529 = vmatpush1.xpose.msra.mxu0 %v5508
      %5530 = vmatprep.subr.mxu0 0.0
      %5531 = vmatpush1.xpose.msra.mxu0 %v5511
      %5532 = vmatprep.subr.mxu0 0.0
      %5533 = vmatpush1.xpose.msra.mxu0 %v5514
      %5534 = vmatprep.subr.mxu0 0.0
      %5535 = vmatpush1.xpose.msra.mxu0 %v5517
      %5536 = vmatprep.subr.mxu0 0.0
      %5537 = vmatpush1.xpose.msra.mxu0 %v5520
      %5538 = vmatprep.subr.mxu0 0.0
      %5539 = vmatpush1.xpose.msra.mxu0 0.0
      %5540 = vmatprep.subr.mxu0 0.0
      %5541 = vmatpush1.xpose.msra.mxu0 0.0
      %5542 = vmatprep.subr.mxu0 0.0
      %5543 = vmatpush1.xpose.msra.mxu0 0.0
      %5544 = vmatprep.subr.mxu0 0.0
      %5545 = vmatpush1.xpose.msra.mxu0 0.0
      %5546 = vmatprep.subr.mxu0 0.0
      %5547 = vmatpush1.xpose.msra.mxu0 0.0
      %5548 = vmatprep.subr.mxu0 0.0
      %5549 = vmatpush1.xpose.msra.mxu0 0.0
      %5550 = vmatprep.subr.mxu0 0.0
      %5551 = vmatpush1.xpose.msra.mxu0 0.0
      %5552 = vmatprep.subr.mxu0 0.0
      %5553 = vmatpush1.xpose.msra.mxu0 0.0
      %5554 = vmatprep.subr.mxu0 0.0
      %5555 = vmatpush1.xpose.msra.mxu0 0.0
      %5556 = vmatprep.subr.mxu0 0.0
      %5557 = vmatpush1.xpose.msra.mxu0 0.0
      %5558 = vmatprep.subr.mxu0 0.0
      %5559 = vmatpush1.xpose.msra.mxu0 0.0
      %5560 = vmatprep.subr.mxu0 0.0
      %5561 = vmatpush1.xpose.msra.mxu0 0.0
      %5562 = vmatprep.subr.mxu0 0.0
      %5563 = vmatpush1.xpose.msra.mxu0 0.0
      %5564 = vmatprep.subr.mxu0 0.0
      %5565 = vmatpush1.xpose.msra.mxu0 0.0
      %5566 = vmatprep.subr.mxu0 0.0
      %5567 = vmatpush1.xpose.msra.mxu0 0.0
      %5568 = vmatprep.subr.mxu0 0.0
      %5569 = vmatpush1.xpose.msra.mxu0 0.0
      %5570 = vmatprep.subr.mxu0 0.0
      %5571 = vmatpush1.xpose.msra.mxu0 0.0
      %5572 = vmatprep.subr.mxu0 0.0
      %5573 = vmatpush1.xpose.msra.mxu0 0.0
      %5574 = vmatprep.subr.mxu0 0.0
      %5575 = vmatpush1.xpose.msra.mxu0 0.0
      %5576 = vmatprep.subr.mxu0 0.0
      %5577 = vmatpush1.xpose.msra.mxu0 0.0
      %5578 = vmatprep.subr.mxu0 0.0
      %5579 = vmatpush1.xpose.msra.mxu0 0.0
      %5580 = vmatprep.subr.mxu0 0.0
      %5581 = vmatpush1.xpose.msra.mxu0 0.0
      %5582 = vmatprep.subr.mxu0 0.0
      %5583 = vmatpush1.xpose.msra.mxu0 0.0
      %5584 = vmatprep.subr.mxu0 0.0
      %5585 = vmatpush1.xpose.msra.mxu0 0.0
      %5586 = vmatprep.mubr.f32.mxu0 0.0
      %5587 = vmatmul.mubr.f32.gmra.mrb[0].mxu0 %v5496
      %v5588 = vpop.f32.mrb[0].mxu0
      %v5589 = vadd.f32 0.0, %v5588
      %v5590 = vpop.f32.mrb[0].mxu0
      %5591 = vdwg.mxu0
      %v5592 = vmul.f32 %v5589, 2.0
      %v5594 = vlaneseq
      %v5595 = vshrl.u32 %v5594, 7
      %v5596 = vsub.s32 0, %v5595
      %v5597 = vrot.slane %v1087, %v5596
      %v5599 = vsub.f32 %v5597, %v5592
      %v5600 = vsel %vm3308, %v5599, inf
      %5601 = vmin.xlane.f32.xlu0 %v5600
      %v5602 = vpop.xlane.xlu0 %5601
      %vm5603 = vcmp.le.f32.partialorder %v5599, %v5602
      %v5604 = vsel %vm5603, %v5110, 64.0
      %v5605 = vsel %vm3308, %v5604, inf
      %5606 = vmin.xlane.f32.xlu0 %v5605
      %v5607 = vpop.xlane.xlu0 %5606
      %vm5608 = vcmp.eq.f32.partialorder %v5110, %v5607
      %v5609 = vsel %vm5608, 1, 0
      %v5610 = vcvt.s32.f32 %v5609
      %v5612 = vsel %vm3308, %v5610, 0
      %5614 = vmatprep.subr.mxu0 0.0
      %5615 = vmatpush1.msra.mxu0 %v1105
      %5616 = vmatprep.subr.mxu0 0.0
      %5617 = vmatpush1.msra.mxu0 %v1106
      %5618 = vmatprep.subr.mxu0 0.0
      %5619 = vmatpush1.msra.mxu0 %v1107
      %5620 = vmatprep.subr.mxu0 0.0
      %5621 = vmatpush1.msra.mxu0 %v1108
      %5622 = vmatprep.subr.mxu0 0.0
      %5623 = vmatpush1.msra.mxu0 %v1109
      %5624 = vmatprep.subr.mxu0 0.0
      %5625 = vmatpush1.msra.mxu0 %v1110
      %5626 = vmatprep.subr.mxu0 0.0
      %5627 = vmatpush1.msra.mxu0 %v1111
      %5628 = vmatprep.subr.mxu0 0.0
      %5629 = vmatpush1.msra.mxu0 %v1112
      %5630 = vmatprep.subr.mxu0 0.0
      %5631 = vmatpush1.msra.mxu0 0.0
      %5632 = vmatprep.subr.mxu0 0.0
      %5633 = vmatpush1.msra.mxu0 0.0
      %5634 = vmatprep.subr.mxu0 0.0
      %5635 = vmatpush1.msra.mxu0 0.0
      %5636 = vmatprep.subr.mxu0 0.0
      %5637 = vmatpush1.msra.mxu0 0.0
      %5638 = vmatprep.subr.mxu0 0.0
      %5639 = vmatpush1.msra.mxu0 0.0
      %5640 = vmatprep.subr.mxu0 0.0
      %5641 = vmatpush1.msra.mxu0 0.0
      %5642 = vmatprep.subr.mxu0 0.0
      %5643 = vmatpush1.msra.mxu0 0.0
      %5644 = vmatprep.subr.mxu0 0.0
      %5645 = vmatpush1.msra.mxu0 0.0
      %5646 = vmatprep.subr.mxu0 0.0
      %5647 = vmatpush1.msra.mxu0 0.0
      %5648 = vmatprep.subr.mxu0 0.0
      %5649 = vmatpush1.msra.mxu0 0.0
      %5650 = vmatprep.subr.mxu0 0.0
      %5651 = vmatpush1.msra.mxu0 0.0
      %5652 = vmatprep.subr.mxu0 0.0
      %5653 = vmatpush1.msra.mxu0 0.0
      %5654 = vmatprep.subr.mxu0 0.0
      %5655 = vmatpush1.msra.mxu0 0.0
      %5656 = vmatprep.subr.mxu0 0.0
      %5657 = vmatpush1.msra.mxu0 0.0
      %5658 = vmatprep.subr.mxu0 0.0
      %5659 = vmatpush1.msra.mxu0 0.0
      %5660 = vmatprep.subr.mxu0 0.0
      %5661 = vmatpush1.msra.mxu0 0.0
      %5662 = vmatprep.subr.mxu0 0.0
      %5663 = vmatpush1.msra.mxu0 0.0
      %5664 = vmatprep.subr.mxu0 0.0
      %5665 = vmatpush1.msra.mxu0 0.0
      %5666 = vmatprep.subr.mxu0 0.0
      %5667 = vmatpush1.msra.mxu0 0.0
      %5668 = vmatprep.subr.mxu0 0.0
      %5669 = vmatpush1.msra.mxu0 0.0
      %5670 = vmatprep.subr.mxu0 0.0
      %5671 = vmatpush1.msra.mxu0 0.0
      %5672 = vmatprep.subr.mxu0 0.0
      %5673 = vmatpush1.msra.mxu0 0.0
      %5674 = vmatprep.subr.mxu0 0.0
      %5675 = vmatpush1.msra.mxu0 0.0
      %5676 = vmatprep.subr.mxu0 0.0
      %5677 = vmatpush1.msra.mxu0 0.0
      %5678 = vmatprep.mubr.f32.mxu0 0.0
      %5679 = vmatmul.mubr.f32.gmra.mrb[0].mxu0 %v5612
      %v5680 = vpop.f32.mrb[0].mxu0
      %v5681 = vadd.f32 0.0, %v5680
      %v5682 = vpop.f32.mrb[0].mxu0
      %5683 = vdwg.mxu0
      %v5684 = vsub.f32 %v5492, %v5681
      %vm5685 = vcmp.eq.s32.totalorder %v3165, 2
      %v5686 = vsel %vm5685, %v5607, %v5494
      %v5688 = vsel %vm2329, %v5684, 0
      %v5691 = vsel %vm2329, %v1113, 0
      %v5694 = vsel %vm2329, %v1114, 0
      %v5697 = vsel %vm2329, %v1115, 0
      %v5700 = vsel %vm2329, %v1116, 0
      %v5703 = vsel %vm2329, %v1117, 0
      %v5706 = vsel %vm2329, %v1118, 0
      %v5709 = vsel %vm2329, %v1119, 0
      %v5712 = vsel %vm2329, %v1120, 0
      %5714 = vmatprep.subr.mxu0 0.0
      %5715 = vmatpush1.xpose.msra.mxu0 %v5691
      %5716 = vmatprep.subr.mxu0 0.0
      %5717 = vmatpush1.xpose.msra.mxu0 %v5694
      %5718 = vmatprep.subr.mxu0 0.0
      %5719 = vmatpush1.xpose.msra.mxu0 %v5697
      %5720 = vmatprep.subr.mxu0 0.0
      %5721 = vmatpush1.xpose.msra.mxu0 %v5700
      %5722 = vmatprep.subr.mxu0 0.0
      %5723 = vmatpush1.xpose.msra.mxu0 %v5703
      %5724 = vmatprep.subr.mxu0 0.0
      %5725 = vmatpush1.xpose.msra.mxu0 %v5706
      %5726 = vmatprep.subr.mxu0 0.0
      %5727 = vmatpush1.xpose.msra.mxu0 %v5709
      %5728 = vmatprep.subr.mxu0 0.0
      %5729 = vmatpush1.xpose.msra.mxu0 %v5712
      %5730 = vmatprep.subr.mxu0 0.0
      %5731 = vmatpush1.xpose.msra.mxu0 0.0
      %5732 = vmatprep.subr.mxu0 0.0
      %5733 = vmatpush1.xpose.msra.mxu0 0.0
      %5734 = vmatprep.subr.mxu0 0.0
      %5735 = vmatpush1.xpose.msra.mxu0 0.0
      %5736 = vmatprep.subr.mxu0 0.0
      %5737 = vmatpush1.xpose.msra.mxu0 0.0
      %5738 = vmatprep.subr.mxu0 0.0
      %5739 = vmatpush1.xpose.msra.mxu0 0.0
      %5740 = vmatprep.subr.mxu0 0.0
      %5741 = vmatpush1.xpose.msra.mxu0 0.0
      %5742 = vmatprep.subr.mxu0 0.0
      %5743 = vmatpush1.xpose.msra.mxu0 0.0
      %5744 = vmatprep.subr.mxu0 0.0
      %5745 = vmatpush1.xpose.msra.mxu0 0.0
      %5746 = vmatprep.subr.mxu0 0.0
      %5747 = vmatpush1.xpose.msra.mxu0 0.0
      %5748 = vmatprep.subr.mxu0 0.0
      %5749 = vmatpush1.xpose.msra.mxu0 0.0
      %5750 = vmatprep.subr.mxu0 0.0
      %5751 = vmatpush1.xpose.msra.mxu0 0.0
      %5752 = vmatprep.subr.mxu0 0.0
      %5753 = vmatpush1.xpose.msra.mxu0 0.0
      %5754 = vmatprep.subr.mxu0 0.0
      %5755 = vmatpush1.xpose.msra.mxu0 0.0
      %5756 = vmatprep.subr.mxu0 0.0
      %5757 = vmatpush1.xpose.msra.mxu0 0.0
      %5758 = vmatprep.subr.mxu0 0.0
      %5759 = vmatpush1.xpose.msra.mxu0 0.0
      %5760 = vmatprep.subr.mxu0 0.0
      %5761 = vmatpush1.xpose.msra.mxu0 0.0
      %5762 = vmatprep.subr.mxu0 0.0
      %5763 = vmatpush1.xpose.msra.mxu0 0.0
      %5764 = vmatprep.subr.mxu0 0.0
      %5765 = vmatpush1.xpose.msra.mxu0 0.0
      %5766 = vmatprep.subr.mxu0 0.0
      %5767 = vmatpush1.xpose.msra.mxu0 0.0
      %5768 = vmatprep.subr.mxu0 0.0
      %5769 = vmatpush1.xpose.msra.mxu0 0.0
      %5770 = vmatprep.subr.mxu0 0.0
      %5771 = vmatpush1.xpose.msra.mxu0 0.0
      %5772 = vmatprep.subr.mxu0 0.0
      %5773 = vmatpush1.xpose.msra.mxu0 0.0
      %5774 = vmatprep.subr.mxu0 0.0
      %5775 = vmatpush1.xpose.msra.mxu0 0.0
      %5776 = vmatprep.subr.mxu0 0.0
      %5777 = vmatpush1.xpose.msra.mxu0 0.0
      %5778 = vmatprep.mubr.f32.mxu0 0.0
      %5779 = vmatmul.mubr.f32.gmra.mrb[0].mxu0 %v5688
      %v5780 = vpop.f32.mrb[0].mxu0
      %v5781 = vadd.f32 0.0, %v5780
      %v5782 = vpop.f32.mrb[0].mxu0
      %5783 = vdwg.mxu0
      %v5784 = vmul.f32 %v5781, 2.0
      %v5786 = vlaneseq
      %v5787 = vshrl.u32 %v5786, 7
      %v5788 = vsub.s32 0, %v5787
      %v5789 = vrot.slane %v1088, %v5788
      %v5791 = vsub.f32 %v5789, %v5784
      %v5792 = vsel %vm3308, %v5791, inf
      %5793 = vmin.xlane.f32.xlu0 %v5792
      %v5794 = vpop.xlane.xlu0 %5793
      %vm5795 = vcmp.le.f32.partialorder %v5791, %v5794
      %v5796 = vsel %vm5795, %v5110, 64.0
      %v5797 = vsel %vm3308, %v5796, inf
      %5798 = vmin.xlane.f32.xlu0 %v5797
      %v5799 = vpop.xlane.xlu0 %5798
      %vm5800 = vcmp.eq.s32.totalorder %v3165, 3
      %v5801 = vsel %vm5800, %v5799, %v5686
      %v5802 = vcvt.f32.s32.to.zero.pseudo %v5801
      %vm5803 = vcmask 31744
      %5804 = vst.msk [vmem:[%s1012] sm:$0xff] %vm5803, %v5802
      %p5805 = scmp.lt.s32.totalorder %s78, 1
      %s5806 = scalar_select %p5805, %s78, 1
      %s5807 = smul.addr %s5806, 8
      %s5808 = scalar_lea.vmem %s67, %s5807
      // Predicated region
      $region153: #{mimi_encode.1} parent=151 // pred_check
        %p5809 = pneg %p794
      $region154: #{mimi_encode.1} parent=151 // pred_check_branch
        %5811 = sbr.rel (%p5809) target = $region156
      $region155: #{mimi_encode.1} parent=151 // pred_region
        _
      $region156: #{mimi_encode.1} parent=151 // pred_fallthru
        _
    $region152: #{mimi_encode.1} parent=5 // pred_fallthru
      _
    %p5812 = scmp.le.s32.totalorder 2, %s73
    // Predicated region
    $region157: #{mimi_encode.1} parent=5 // pred_check
      %p5813 = pneg %p5812
    $region158: #{mimi_encode.1} parent=5 // pred_check_branch
      %5815 = sbr.rel (%p5813) target = $region160
    $region159: #{mimi_encode.1} parent=5 // pred_region
      %s5816 = ssub.s32 %s73, 2
      // Predicated region
      $region161: #{mimi_encode.1} parent=159 // pred_check
        %p5817 = pneg %p800
      $region162: #{mimi_encode.1} parent=159 // pred_check_branch
        %5819 = sbr.rel (%p5817) target = $region164
      $region163: #{mimi_encode.1} parent=159 // pred_region
        %p5820 = scmp.lt.s32.totalorder %s79, 1
        %s5821 = scalar_select %p5820, %s79, 1
        %s5822 = smul.addr %s5821, 8
        %s5823 = scalar_lea.vmem %s67, %s5822
      $region164: #{mimi_encode.1} parent=159 // pred_fallthru
        _
    $region160: #{mimi_encode.1} parent=5 // pred_fallthru
      _
  $region6: #{mimi_encode.1} parent=0 // loop_footer
    %s77 = sadd.s32 1, %s73
  $region7: #{mimi_encode.1} parent=0 // loop_footer_branch
    %72 = sbr.rel target = $region3
  $region8: #{mimi_encode.1} parent=0 // loop_exit
    _

</llo_original>
